<compile_context>
chip_gen: v6e
topology: v6e:2x2x1
jax: 0.10.0
libtpu: 0.0.40
codegen_flags: <defaults>
</compile_context>

<pallas_src>
import numpy as np
import jax
import jax.numpy as jnp
from jax.experimental import pallas as pl
from jax.experimental.pallas import tpu as pltpu


# ---------------------------------------------------------------------------------
# Static network geometry (fixed by the PyTorch module: 3x32x32 input, 6272 = 32*14*14)
# ---------------------------------------------------------------------------------
H_IN = 32                      # input height == width
FRAME = H_IN * H_IN            # 1024-lane flattened spatial frame (8 * 128)
PAD = 128                      # extra lanes so shifted window reads stay in bounds
FRAME_PAD = FRAME + PAD        # 1152 = 9 * 128
C_IN = 3
C1_OUT = 32
C2_OUT = 32
K1 = 9 * C_IN                  # 27  im2col contraction depth, conv1
K2 = 9 * C1_OUT                # 288 im2col contraction depth, conv2
POOL_HW = 14
POOL_OUT = POOL_HW * POOL_HW   # 196
N_FLAT = C2_OUT * POOL_OUT     # 6272

# The flattened-frame shift trick wraps at row boundaries: conv outputs in the last
# two rows/columns of each frame are wrap-around garbage. It is correct ONLY for this
# exact 32 -> conv3x3 -> 30 -> conv3x3 -> 28 -> maxpool2x2 -> 14 geometry, because the
# maxpool shifts {0,1,32,33} and the E selection rows ((2i)*32 + 2j, i,j <= 13) never
# read a wrap-contaminated position. Keep this assert if the geometry ever changes.
assert H_IN - 4 == 2 * POOL_HW and N_FLAT == 6272


# ---------------------------------------------------------------------------------
# Fused kernel: conv1 -> relu -> conv2 -> relu -> maxpool -> flatten -> l1 -> relu -> l2
# Grid = (B,), one image per step; all intermediates stay in VMEM.
# ---------------------------------------------------------------------------------
def fused_cnn_kernel(x_ref, w1_ref, b1_ref, w2_ref, b2_ref, e_ref,
                     l1w_ref, l1b_ref, l2w_ref, l2b_ref, o_ref,
                     a1_ref, a2_ref, rhs1_ref, rhs2_ref, flat_ref):
    # x_ref   : (1, 3, 1152) f32   image in (C, H*W) frame, zero padded to 1152 lanes
    # w1_ref  : (32, 27)  f32      [cout, tap*3 + cin]        b1_ref: (32, 1) f32
    # w2_ref  : (32, 288) bf16     [cout, tap*32 + cin]       b2_ref: (32, 1) f32
    # e_ref   : (1024, 196) bf16   0/1 selection: frame (2i)*32+2j -> column i*14+j
    # l1w_ref : (6272, 128) bf16   l1b_ref: (1, 128) f32
    # l2w_ref : (128, n_out) f32   l2b_ref: (1, n_out) f32
    # o_ref   : (1, 1, n_out) f32  logits for this image
    # scratch : a1 (32,1152) bf16, a2 (32,1152) bf16, rhs1 (27,1024) f32,
    #           rhs2 (288,1024) bf16, flat (1,6272) f32
    f32 = jnp.float32
    bf16 = jnp.bfloat16

    # Keep the 128-lane pad regions finite (zero) every step — 4 vreg stores.
    # (Not guarded by program_id(0)==0 on purpose: scratch is per-core under
    # "parallel" megacore split, so a step-0-only init would skip core 1.)
    a1_ref[:, FRAME:] = jnp.zeros((C1_OUT, PAD), bf16)
    a2_ref[:, FRAME:] = jnp.zeros((C2_OUT, PAD), bf16)

    # ---- conv1 as ONE im2col matmul: (32, 27) x (27, 1024) ----
    # rhs1 row (tap*3 + cin) = input channel cin, frame shifted by dy*32 + dx.
    for dy in range(3):
        for dx in range(3):
            t = dy * 3 + dx
            rhs1_ref[t * C_IN:(t + 1) * C_IN, :] = \
                x_ref[0, :, pl.ds(dy * H_IN + dx, FRAME)]
    acc1 = jnp.dot(w1_ref[...], rhs1_ref[...], preferred_element_type=f32)
    a1_ref[:, :FRAME] = jnp.maximum(acc1 + b1_ref[...], 0.0).astype(bf16)

    # ---- conv2 as ONE im2col matmul: (32, 288) x (288, 1024), bf16 operands ----
    # rhs2 rows (tap*32 .. tap*32+31) = all 32 conv1 channels, frame shifted.
    for dy in range(3):
        for dx in range(3):
            t = dy * 3 + dx
            rhs2_ref[t * C1_OUT:(t + 1) * C1_OUT, :] = \
                a1_ref[:, pl.ds(dy * H_IN + dx, FRAME)]
    acc2 = jnp.dot(w2_ref[...], rhs2_ref[...], preferred_element_type=f32)
    a2_ref[:, :FRAME] = jnp.maximum(acc2 + b2_ref[...], 0.0).astype(bf16)

    # ---- 2x2 maxpool: max over frame shifts {0, 1, 32, 33} ----
    pooled = jnp.maximum(
        jnp.maximum(a2_ref[:, pl.ds(0, FRAME)], a2_ref[:, pl.ds(1, FRAME)]),
        jnp.maximum(a2_ref[:, pl.ds(H_IN, FRAME)], a2_ref[:, pl.ds(H_IN + 1, FRAME)]))

    # ---- stride-2 decimation + NCHW ordering: (32,1024)x(1024,196) with 0/1 E ----
    # E is 0/1 so this is an exact selection even in bf16.
    feats = jnp.dot(pooled, e_ref[...], preferred_element_type=f32)   # (32, 196) f32

    # ---- flatten: row c of feats -> lanes [c*196, (c+1)*196) of a single row ----
    # (the sublane->lane merge has to go through memory; 32 small masked stores)
    for c in range(C2_OUT):
        flat_ref[:, c * POOL_OUT:(c + 1) * POOL_OUT] = feats[c:c + 1, :]

    # ---- classifier: (1,6272)x(6272,128) + b -> relu -> (1,128)x(128,n_out) + b ----
    h = jnp.dot(flat_ref[...].astype(bf16), l1w_ref[...], preferred_element_type=f32)
    h = jnp.maximum(h + l1b_ref[...], 0.0)
    out = jnp.dot(h, l2w_ref[...], preferred_element_type=f32) + l2b_ref[...]
    o_ref[0, :, :] = out.astype(o_ref.dtype)


def cnn_forward_pallas(x_nchw, prep):
    B = x_nchw.shape[0]
    n_hidden = prep["l1_wt"].shape[1]
    n_out = prep["l2_wt"].shape[1]

    # (B, 3, 32, 32) -> (B, 3, 1024) frame, zero-padded to 1152 lanes (cheap glue).
    x_frame = x_nchw.astype(jnp.float32).reshape(B, C_IN, FRAME)
    x_frame = jnp.pad(x_frame, ((0, 0), (0, 0), (0, PAD)))

    out = pl.pallas_call(
        fused_cnn_kernel,
        out_shape=jax.ShapeDtypeStruct((B, 1, n_out), jnp.float32),
        grid_spec=pltpu.PrefetchScalarGridSpec(
            num_scalar_prefetch=0,
            grid=(B,),
            in_specs=[
                pl.BlockSpec((1, C_IN, FRAME_PAD), lambda b: (b, 0, 0)),   # image
                pl.BlockSpec((C1_OUT, K1), lambda b: (0, 0)),              # w1 (resident)
                pl.BlockSpec((C1_OUT, 1), lambda b: (0, 0)),               # b1
                pl.BlockSpec((C2_OUT, K2), lambda b: (0, 0)),              # w2
                pl.BlockSpec((C2_OUT, 1), lambda b: (0, 0)),               # b2
                pl.BlockSpec((FRAME, POOL_OUT), lambda b: (0, 0)),         # E
                pl.BlockSpec((N_FLAT, n_hidden), lambda b: (0, 0)),        # l1 weight
                pl.BlockSpec((1, n_hidden), lambda b: (0, 0)),             # l1 bias
                pl.BlockSpec((n_hidden, n_out), lambda b: (0, 0)),         # l2 weight
                pl.BlockSpec((1, n_out), lambda b: (0, 0)),                # l2 bias
            ],
            out_specs=pl.BlockSpec((1, 1, n_out), lambda b: (b, 0, 0)),
            scratch_shapes=[
                pltpu.VMEM((C1_OUT, FRAME_PAD), jnp.bfloat16),   # a1 (conv1 act)
                pltpu.VMEM((C2_OUT, FRAME_PAD), jnp.bfloat16),   # a2 (conv2 act)
                pltpu.VMEM((K1, FRAME), jnp.float32),            # conv1 im2col
                pltpu.VMEM((K2, FRAME), jnp.bfloat16),           # conv2 im2col
                pltpu.VMEM((1, N_FLAT), jnp.float32),            # flat feature row
            ],
        ),
        compiler_params=pltpu.CompilerParams(
            dimension_semantics=("parallel",)),   # v7x: images split across both TCs
    )(x_frame, prep["w1_mat"], prep["b1_col"], prep["w2_mat"], prep["b2_col"],
      prep["e_sel"], prep["l1_wt"], prep["l1_b"], prep["l2_wt"], prep["l2_b"])
    return out.reshape(B, n_out)


# ---------------------------------------------------------------------------------
# Parameters (deterministic, PyTorch-default-like uniform init) + one-time prep.
# ---------------------------------------------------------------------------------
def init_params(key, n_hidden=128, n_output=10):
    def uinit(k, shape, fan_in):
        bound = 1.0 / float(np.sqrt(fan_in))
        return jax.random.uniform(k, shape, jnp.float32, -bound, bound)

    ks = jax.random.split(key, 8)
    return {
        "conv1_w": uinit(ks[0], (C1_OUT, C_IN, 3, 3), C_IN * 9),   # (Cout, Cin, kH, kW)
        "conv1_b": uinit(ks[1], (C1_OUT,), C_IN * 9),
        "conv2_w": uinit(ks[2], (C2_OUT, C1_OUT, 3, 3), C1_OUT * 9),
        "conv2_b": uinit(ks[3], (C2_OUT,), C1_OUT * 9),
        "l1_w": uinit(ks[4], (n_hidden, N_FLAT), N_FLAT),          # (out, in)
        "l1_b": uinit(ks[5], (n_hidden,), N_FLAT),
        "l2_w": uinit(ks[6], (n_output, n_hidden), n_hidden),
        "l2_b": uinit(ks[7], (n_output,), n_hidden),
    }


def prepare_pallas_params(params):
    """One-time (hoisted) repacking of weights into kernel-friendly layouts."""
    # conv taps packed for the im2col matmuls: column index = tap*Cin + cin, where
    # tap = dy*3 + dx, matching the order the kernel builds the im2col RHS rows in.
    w1_mat = jnp.transpose(params["conv1_w"], (0, 2, 3, 1)).reshape(C1_OUT, K1)
    w2_mat = jnp.transpose(params["conv2_w"], (0, 2, 3, 1)).reshape(C2_OUT, K2)

    # 0/1 selection matrix: pooled frame position (2i)*32 + 2j -> column i*14 + j.
    # Non-selected frame positions map to all-zero rows so they never leak into
    # outputs (the pads are kept zero so 0 * NaN cannot occur either).
    e_np = np.zeros((FRAME, POOL_OUT), np.float32)
    ii, jj = np.meshgrid(np.arange(POOL_HW), np.arange(POOL_HW), indexing="ij")
    e_np[((2 * ii) * H_IN + 2 * jj).reshape(-1), (ii * POOL_HW + jj).reshape(-1)] = 1.0

    return {
        "w1_mat": w1_mat.astype(jnp.float32),            # tiny; keep f32
        "b1_col": params["conv1_b"].reshape(C1_OUT, 1),
        "w2_mat": w2_mat.astype(jnp.bfloat16),           # bf16 operand streaming
        "b2_col": params["conv2_b"].reshape(C2_OUT, 1),
        "e_sel": jnp.asarray(e_np).astype(jnp.bfloat16), # 0/1 -> exact in bf16
        # Feature order out of the kernel is PyTorch NCHW flatten order
        # (c*196 + i*14 + j), so l1 needs no column permutation.
        "l1_wt": params["l1_w"].T.astype(jnp.bfloat16),  # (6272, n_hidden), 1.6 MB
        "l1_b": params["l1_b"].reshape(1, -1),
        "l2_wt": params["l2_w"].T,                       # (n_hidden, n_output) f32
        "l2_b": params["l2_b"].reshape(1, -1),
    }


# ---------------------------------------------------------------------------------
# Pure-JAX reference replicating the PyTorch forward exactly (f32, NCHW).
# ---------------------------------------------------------------------------------
def cnn_forward_reference(x_nchw, params):
    x = x_nchw.astype(jnp.float32)
    dn = ("NCHW", "OIHW", "NCHW")
    y = jax.lax.conv_general_dilated(x, params["conv1_w"], (1, 1), "VALID",
                                     dimension_numbers=dn)
    y = jnp.maximum(y + params["conv1_b"][None, :, None, None], 0.0)
    y = jax.lax.conv_general_dilated(y, params["conv2_w"], (1, 1), "VALID",
                                     dimension_numbers=dn)
    y = jnp.maximum(y + params["conv2_b"][None, :, None, None], 0.0)
    B, C, H, W = y.shape
    y = y.reshape(B, C, H // 2, 2, W // 2, 2).max(axis=(3, 5))
    y = y.reshape(B, -1)                           # NCHW flatten
    y = jnp.maximum(y @ params["l1_w"].T + params["l1_b"], 0.0)
    y = y @ params["l2_w"].T + params["l2_b"]
    return y


if __name__ == "__main__":
    n_hidden = 128
    n_output = 10  # synthetic stand-in for len(set(labels1))

    key = jax.random.PRNGKey(0)
    k_x, k_p = jax.random.split(key)
    # 6272 = 32 * 14 * 14 forces 3x32x32 inputs; keep batch small.
    x = jax.random.normal(k_x, (2, 3, 32, 32), jnp.float32)
    params = init_params(k_p, n_hidden=n_hidden, n_output=n_output)
    prep = prepare_pallas_params(params)   # hoisted: once, not per forward call

    fwd = jax.jit(cnn_forward_pallas)
    out = jax.block_until_ready(fwd(x, prep))

    ref = jax.block_until_ready(cnn_forward_reference(x, params))
    assert out.shape == (2, n_output), out.shape
    max_err = float(jnp.max(jnp.abs(out - ref)))
    # bf16 operand streaming (f32 accumulation) keeps us comfortably inside the
    # original 1e-2 tolerance for this init/input scale.
    assert bool(jnp.allclose(out, ref, atol=1e-2, rtol=1e-2)), (
        "mismatch vs reference: max abs diff " + str(max_err))

    print("KERNEL_OK")
</pallas_src>

<mosaic_0001>
module attributes {stable_mosaic.version = 11 : i64} {
  func.func @fused_cnn_kernel(%arg0: i32, %arg1: memref<1x3x1152xf32, #tpu.memory_space<vmem>>, %arg2: memref<32x27xf32, #tpu.memory_space<vmem>>, %arg3: memref<32x1xf32, #tpu.memory_space<vmem>>, %arg4: memref<32x288xbf16, #tpu.memory_space<vmem>>, %arg5: memref<32x1xf32, #tpu.memory_space<vmem>>, %arg6: memref<1024x196xbf16, #tpu.memory_space<vmem>>, %arg7: memref<6272x128xbf16, #tpu.memory_space<vmem>>, %arg8: memref<1x128xf32, #tpu.memory_space<vmem>>, %arg9: memref<128x10xf32, #tpu.memory_space<vmem>>, %arg10: memref<1x10xf32, #tpu.memory_space<vmem>>, %arg11: memref<1x1x10xf32, #tpu.memory_space<vmem>>, %arg12: memref<32x1152xbf16, #tpu.memory_space<vmem>>, %arg13: memref<32x1152xbf16, #tpu.memory_space<vmem>>, %arg14: memref<27x1024xf32, #tpu.memory_space<vmem>>, %arg15: memref<288x1024xbf16, #tpu.memory_space<vmem>>, %arg16: memref<1x6272xf32, #tpu.memory_space<vmem>>) attributes {dimension_semantics = [#tpu.dimension_semantics<parallel>], iteration_bounds = array<i64: 2>, scalar_prefetch = 0 : i64, scratch_operands = 5 : i64, tpu.core_type = #tpu.core_type<tc>, window_params = [{transform_indices = @transform_0, window_bounds = array<i64: 1, 3, 1152>}, {pipeline_mode = #tpu.pipeline_mode<synchronous>, transform_indices = @transform_1, window_bounds = array<i64: 32, 27>}, {pipeline_mode = #tpu.pipeline_mode<synchronous>, transform_indices = @transform_2, window_bounds = array<i64: 32, 1>}, {pipeline_mode = #tpu.pipeline_mode<synchronous>, transform_indices = @transform_3, window_bounds = array<i64: 32, 288>}, {pipeline_mode = #tpu.pipeline_mode<synchronous>, transform_indices = @transform_4, window_bounds = array<i64: 32, 1>}, {pipeline_mode = #tpu.pipeline_mode<synchronous>, transform_indices = @transform_5, window_bounds = array<i64: 1024, 196>}, {pipeline_mode = #tpu.pipeline_mode<synchronous>, transform_indices = @transform_6, window_bounds = array<i64: 6272, 128>}, {pipeline_mode = #tpu.pipeline_mode<synchronous>, transform_indices = @transform_7, window_bounds = array<i64: 1, 128>}, {pipeline_mode = #tpu.pipeline_mode<synchronous>, transform_indices = @transform_8, window_bounds = array<i64: 128, 10>}, {pipeline_mode = #tpu.pipeline_mode<synchronous>, transform_indices = @transform_9, window_bounds = array<i64: 1, 10>}, {transform_indices = @transform_10, window_bounds = array<i64: 1, 1, 10>}]} {
    %cst = arith.constant 0.000000e+00 : bf16
    %0 = vector.broadcast %cst : bf16 to vector<32x128xbf16>
    %c0 = arith.constant 0 : index
    %c1024 = arith.constant 1024 : index
    %1 = vector.load %arg12[%c0, %c1024] : memref<32x1152xbf16, #tpu.memory_space<vmem>>, vector<32x128xbf16>
    tpu.vector_store %arg12[%c0, %c1024], %0 {strides = array<i32>} : memref<32x1152xbf16, #tpu.memory_space<vmem>>, vector<32x128xbf16>,
    %cst_0 = arith.constant 0.000000e+00 : bf16
    %2 = vector.broadcast %cst_0 : bf16 to vector<32x128xbf16>
    %c0_1 = arith.constant 0 : index
    %c1024_2 = arith.constant 1024 : index
    %3 = vector.load %arg13[%c0_1, %c1024_2] : memref<32x1152xbf16, #tpu.memory_space<vmem>>, vector<32x128xbf16>
    tpu.vector_store %arg13[%c0_1, %c1024_2], %2 {strides = array<i32>} : memref<32x1152xbf16, #tpu.memory_space<vmem>>, vector<32x128xbf16>,
    %c0_3 = arith.constant 0 : index
    %c0_4 = arith.constant 0 : index
    %c0_5 = arith.constant 0 : index
    %4 = vector.load %arg1[%c0_3, %c0_4, %c0_5] : memref<1x3x1152xf32, #tpu.memory_space<vmem>>, vector<1x3x1024xf32>
    %5 = vector.shape_cast %4 : vector<1x3x1024xf32> to vector<3x1024xf32>
    %c0_6 = arith.constant 0 : index
    %c0_7 = arith.constant 0 : index
    %6 = vector.load %arg14[%c0_6, %c0_7] : memref<27x1024xf32, #tpu.memory_space<vmem>>, vector<3x1024xf32>
    tpu.vector_store %arg14[%c0_6, %c0_7], %5 {strides = array<i32>} : memref<27x1024xf32, #tpu.memory_space<vmem>>, vector<3x1024xf32>,
    %c0_8 = arith.constant 0 : index
    %c0_9 = arith.constant 0 : index
    %c1 = arith.constant 1 : index
    %7 = vector.load %arg1[%c0_8, %c0_9, %c1] : memref<1x3x1152xf32, #tpu.memory_space<vmem>>, vector<1x3x1024xf32>
    %8 = vector.shape_cast %7 : vector<1x3x1024xf32> to vector<3x1024xf32>
    %c3 = arith.constant 3 : index
    %c0_10 = arith.constant 0 : index
    %9 = vector.load %arg14[%c3, %c0_10] : memref<27x1024xf32, #tpu.memory_space<vmem>>, vector<3x1024xf32>
    tpu.vector_store %arg14[%c3, %c0_10], %8 {strides = array<i32>} : memref<27x1024xf32, #tpu.memory_space<vmem>>, vector<3x1024xf32>,
    %c0_11 = arith.constant 0 : index
    %c0_12 = arith.constant 0 : index
    %c2 = arith.constant 2 : index
    %10 = vector.load %arg1[%c0_11, %c0_12, %c2] : memref<1x3x1152xf32, #tpu.memory_space<vmem>>, vector<1x3x1024xf32>
    %11 = vector.shape_cast %10 : vector<1x3x1024xf32> to vector<3x1024xf32>
    %c6 = arith.constant 6 : index
    %c0_13 = arith.constant 0 : index
    %12 = vector.load %arg14[%c6, %c0_13] : memref<27x1024xf32, #tpu.memory_space<vmem>>, vector<3x1024xf32>
    tpu.vector_store %arg14[%c6, %c0_13], %11 {strides = array<i32>} : memref<27x1024xf32, #tpu.memory_space<vmem>>, vector<3x1024xf32>,
    %c0_14 = arith.constant 0 : index
    %c0_15 = arith.constant 0 : index
    %c32 = arith.constant 32 : index
    %13 = vector.load %arg1[%c0_14, %c0_15, %c32] : memref<1x3x1152xf32, #tpu.memory_space<vmem>>, vector<1x3x1024xf32>
    %14 = vector.shape_cast %13 : vector<1x3x1024xf32> to vector<3x1024xf32>
    %c9 = arith.constant 9 : index
    %c0_16 = arith.constant 0 : index
    %15 = vector.load %arg14[%c9, %c0_16] : memref<27x1024xf32, #tpu.memory_space<vmem>>, vector<3x1024xf32>
    tpu.vector_store %arg14[%c9, %c0_16], %14 {strides = array<i32>} : memref<27x1024xf32, #tpu.memory_space<vmem>>, vector<3x1024xf32>,
    %c0_17 = arith.constant 0 : index
    %c0_18 = arith.constant 0 : index
    %c33 = arith.constant 33 : index
    %16 = vector.load %arg1[%c0_17, %c0_18, %c33] : memref<1x3x1152xf32, #tpu.memory_space<vmem>>, vector<1x3x1024xf32>
    %17 = vector.shape_cast %16 : vector<1x3x1024xf32> to vector<3x1024xf32>
    %c12 = arith.constant 12 : index
    %c0_19 = arith.constant 0 : index
    %18 = vector.load %arg14[%c12, %c0_19] : memref<27x1024xf32, #tpu.memory_space<vmem>>, vector<3x1024xf32>
    tpu.vector_store %arg14[%c12, %c0_19], %17 {strides = array<i32>} : memref<27x1024xf32, #tpu.memory_space<vmem>>, vector<3x1024xf32>,
    %c0_20 = arith.constant 0 : index
    %c0_21 = arith.constant 0 : index
    %c34 = arith.constant 34 : index
    %19 = vector.load %arg1[%c0_20, %c0_21, %c34] : memref<1x3x1152xf32, #tpu.memory_space<vmem>>, vector<1x3x1024xf32>
    %20 = vector.shape_cast %19 : vector<1x3x1024xf32> to vector<3x1024xf32>
    %c15 = arith.constant 15 : index
    %c0_22 = arith.constant 0 : index
    %21 = vector.load %arg14[%c15, %c0_22] : memref<27x1024xf32, #tpu.memory_space<vmem>>, vector<3x1024xf32>
    tpu.vector_store %arg14[%c15, %c0_22], %20 {strides = array<i32>} : memref<27x1024xf32, #tpu.memory_space<vmem>>, vector<3x1024xf32>,
    %c0_23 = arith.constant 0 : index
    %c0_24 = arith.constant 0 : index
    %c64 = arith.constant 64 : index
    %22 = vector.load %arg1[%c0_23, %c0_24, %c64] : memref<1x3x1152xf32, #tpu.memory_space<vmem>>, vector<1x3x1024xf32>
    %23 = vector.shape_cast %22 : vector<1x3x1024xf32> to vector<3x1024xf32>
    %c18 = arith.constant 18 : index
    %c0_25 = arith.constant 0 : index
    %24 = vector.load %arg14[%c18, %c0_25] : memref<27x1024xf32, #tpu.memory_space<vmem>>, vector<3x1024xf32>
    tpu.vector_store %arg14[%c18, %c0_25], %23 {strides = array<i32>} : memref<27x1024xf32, #tpu.memory_space<vmem>>, vector<3x1024xf32>,
    %c0_26 = arith.constant 0 : index
    %c0_27 = arith.constant 0 : index
    %c65 = arith.constant 65 : index
    %25 = vector.load %arg1[%c0_26, %c0_27, %c65] : memref<1x3x1152xf32, #tpu.memory_space<vmem>>, vector<1x3x1024xf32>
    %26 = vector.shape_cast %25 : vector<1x3x1024xf32> to vector<3x1024xf32>
    %c21 = arith.constant 21 : index
    %c0_28 = arith.constant 0 : index
    %27 = vector.load %arg14[%c21, %c0_28] : memref<27x1024xf32, #tpu.memory_space<vmem>>, vector<3x1024xf32>
    tpu.vector_store %arg14[%c21, %c0_28], %26 {strides = array<i32>} : memref<27x1024xf32, #tpu.memory_space<vmem>>, vector<3x1024xf32>,
    %c0_29 = arith.constant 0 : index
    %c0_30 = arith.constant 0 : index
    %c66 = arith.constant 66 : index
    %28 = vector.load %arg1[%c0_29, %c0_30, %c66] : memref<1x3x1152xf32, #tpu.memory_space<vmem>>, vector<1x3x1024xf32>
    %29 = vector.shape_cast %28 : vector<1x3x1024xf32> to vector<3x1024xf32>
    %c24 = arith.constant 24 : index
    %c0_31 = arith.constant 0 : index
    %30 = vector.load %arg14[%c24, %c0_31] : memref<27x1024xf32, #tpu.memory_space<vmem>>, vector<3x1024xf32>
    tpu.vector_store %arg14[%c24, %c0_31], %29 {strides = array<i32>} : memref<27x1024xf32, #tpu.memory_space<vmem>>, vector<3x1024xf32>,
    %c0_32 = arith.constant 0 : index
    %c0_33 = arith.constant 0 : index
    %31 = vector.load %arg2[%c0_32, %c0_33] : memref<32x27xf32, #tpu.memory_space<vmem>>, vector<32x27xf32>
    %c0_34 = arith.constant 0 : index
    %c0_35 = arith.constant 0 : index
    %32 = vector.load %arg14[%c0_34, %c0_35] : memref<27x1024xf32, #tpu.memory_space<vmem>>, vector<27x1024xf32>
    %cst_36 = arith.constant dense<0.000000e+00> : vector<32x1024xf32>
    %33 = tpu.matmul %31, %32, %cst_36 {dimension_numbers = #tpu.dot_dimension_numbers<[1], [0], [0], [1], [0, 0, 1, 1], [], []>} : vector<32x27xf32>, vector<27x1024xf32>, vector<32x1024xf32> -> vector<32x1024xf32>
    %c0_37 = arith.constant 0 : index
    %c0_38 = arith.constant 0 : index
    %34 = vector.load %arg3[%c0_37, %c0_38] : memref<32x1xf32, #tpu.memory_space<vmem>>, vector<32x1xf32>
    %35 = vector.broadcast %34 : vector<32x1xf32> to vector<32x1024xf32>
    %36 = arith.addf %33, %35 : vector<32x1024xf32>
    %cst_39 = arith.constant 0.000000e+00 : f32
    %37 = vector.broadcast %cst_39 : f32 to vector<32x1024xf32>
    %38 = arith.maximumf %36, %37 : vector<32x1024xf32>
    %39 = arith.truncf %38 : vector<32x1024xf32> to vector<32x1024xbf16>
    %c0_40 = arith.constant 0 : index
    %c0_41 = arith.constant 0 : index
    %40 = vector.load %arg12[%c0_40, %c0_41] : memref<32x1152xbf16, #tpu.memory_space<vmem>>, vector<32x1024xbf16>
    tpu.vector_store %arg12[%c0_40, %c0_41], %39 {strides = array<i32>} : memref<32x1152xbf16, #tpu.memory_space<vmem>>, vector<32x1024xbf16>,
    %c0_42 = arith.constant 0 : index
    %c0_43 = arith.constant 0 : index
    %41 = vector.load %arg12[%c0_42, %c0_43] : memref<32x1152xbf16, #tpu.memory_space<vmem>>, vector<32x1024xbf16>
    %c0_44 = arith.constant 0 : index
    %c0_45 = arith.constant 0 : index
    %42 = vector.load %arg15[%c0_44, %c0_45] : memref<288x1024xbf16, #tpu.memory_space<vmem>>, vector<32x1024xbf16>
    tpu.vector_store %arg15[%c0_44, %c0_45], %41 {strides = array<i32>} : memref<288x1024xbf16, #tpu.memory_space<vmem>>, vector<32x1024xbf16>,
    %c0_46 = arith.constant 0 : index
    %c1_47 = arith.constant 1 : index
    %43 = vector.load %arg12[%c0_46, %c1_47] : memref<32x1152xbf16, #tpu.memory_space<vmem>>, vector<32x1024xbf16>
    %c32_48 = arith.constant 32 : index
    %c0_49 = arith.constant 0 : index
    %44 = vector.load %arg15[%c32_48, %c0_49] : memref<288x1024xbf16, #tpu.memory_space<vmem>>, vector<32x1024xbf16>
    tpu.vector_store %arg15[%c32_48, %c0_49], %43 {strides = array<i32>} : memref<288x1024xbf16, #tpu.memory_space<vmem>>, vector<32x1024xbf16>,
    %c0_50 = arith.constant 0 : index
    %c2_51 = arith.constant 2 : index
    %45 = vector.load %arg12[%c0_50, %c2_51] : memref<32x1152xbf16, #tpu.memory_space<vmem>>, vector<32x1024xbf16>
    %c64_52 = arith.constant 64 : index
    %c0_53 = arith.constant 0 : index
    %46 = vector.load %arg15[%c64_52, %c0_53] : memref<288x1024xbf16, #tpu.memory_space<vmem>>, vector<32x1024xbf16>
    tpu.vector_store %arg15[%c64_52, %c0_53], %45 {strides = array<i32>} : memref<288x1024xbf16, #tpu.memory_space<vmem>>, vector<32x1024xbf16>,
    %c0_54 = arith.constant 0 : index
    %c32_55 = arith.constant 32 : index
    %47 = vector.load %arg12[%c0_54, %c32_55] : memref<32x1152xbf16, #tpu.memory_space<vmem>>, vector<32x1024xbf16>
    %c96 = arith.constant 96 : index
    %c0_56 = arith.constant 0 : index
    %48 = vector.load %arg15[%c96, %c0_56] : memref<288x1024xbf16, #tpu.memory_space<vmem>>, vector<32x1024xbf16>
    tpu.vector_store %arg15[%c96, %c0_56], %47 {strides = array<i32>} : memref<288x1024xbf16, #tpu.memory_space<vmem>>, vector<32x1024xbf16>,
    %c0_57 = arith.constant 0 : index
    %c33_58 = arith.constant 33 : index
    %49 = vector.load %arg12[%c0_57, %c33_58] : memref<32x1152xbf16, #tpu.memory_space<vmem>>, vector<32x1024xbf16>
    %c128 = arith.constant 128 : index
    %c0_59 = arith.constant 0 : index
    %50 = vector.load %arg15[%c128, %c0_59] : memref<288x1024xbf16, #tpu.memory_space<vmem>>, vector<32x1024xbf16>
    tpu.vector_store %arg15[%c128, %c0_59], %49 {strides = array<i32>} : memref<288x1024xbf16, #tpu.memory_space<vmem>>, vector<32x1024xbf16>,
    %c0_60 = arith.constant 0 : index
    %c34_61 = arith.constant 34 : index
    %51 = vector.load %arg12[%c0_60, %c34_61] : memref<32x1152xbf16, #tpu.memory_space<vmem>>, vector<32x1024xbf16>
    %c160 = arith.constant 160 : index
    %c0_62 = arith.constant 0 : index
    %52 = vector.load %arg15[%c160, %c0_62] : memref<288x1024xbf16, #tpu.memory_space<vmem>>, vector<32x1024xbf16>
    tpu.vector_store %arg15[%c160, %c0_62], %51 {strides = array<i32>} : memref<288x1024xbf16, #tpu.memory_space<vmem>>, vector<32x1024xbf16>,
    %c0_63 = arith.constant 0 : index
    %c64_64 = arith.constant 64 : index
    %53 = vector.load %arg12[%c0_63, %c64_64] : memref<32x1152xbf16, #tpu.memory_space<vmem>>, vector<32x1024xbf16>
    %c192 = arith.constant 192 : index
    %c0_65 = arith.constant 0 : index
    %54 = vector.load %arg15[%c192, %c0_65] : memref<288x1024xbf16, #tpu.memory_space<vmem>>, vector<32x1024xbf16>
    tpu.vector_store %arg15[%c192, %c0_65], %53 {strides = array<i32>} : memref<288x1024xbf16, #tpu.memory_space<vmem>>, vector<32x1024xbf16>,
    %c0_66 = arith.constant 0 : index
    %c65_67 = arith.constant 65 : index
    %55 = vector.load %arg12[%c0_66, %c65_67] : memref<32x1152xbf16, #tpu.memory_space<vmem>>, vector<32x1024xbf16>
    %c224 = arith.constant 224 : index
    %c0_68 = arith.constant 0 : index
    %56 = vector.load %arg15[%c224, %c0_68] : memref<288x1024xbf16, #tpu.memory_space<vmem>>, vector<32x1024xbf16>
    tpu.vector_store %arg15[%c224, %c0_68], %55 {strides = array<i32>} : memref<288x1024xbf16, #tpu.memory_space<vmem>>, vector<32x1024xbf16>,
    %c0_69 = arith.constant 0 : index
    %c66_70 = arith.constant 66 : index
    %57 = vector.load %arg12[%c0_69, %c66_70] : memref<32x1152xbf16, #tpu.memory_space<vmem>>, vector<32x1024xbf16>
    %c256 = arith.constant 256 : index
    %c0_71 = arith.constant 0 : index
    %58 = vector.load %arg15[%c256, %c0_71] : memref<288x1024xbf16, #tpu.memory_space<vmem>>, vector<32x1024xbf16>
    tpu.vector_store %arg15[%c256, %c0_71], %57 {strides = array<i32>} : memref<288x1024xbf16, #tpu.memory_space<vmem>>, vector<32x1024xbf16>,
    %c0_72 = arith.constant 0 : index
    %c0_73 = arith.constant 0 : index
    %59 = vector.load %arg4[%c0_72, %c0_73] : memref<32x288xbf16, #tpu.memory_space<vmem>>, vector<32x288xbf16>
    %c0_74 = arith.constant 0 : index
    %c0_75 = arith.constant 0 : index
    %60 = vector.load %arg15[%c0_74, %c0_75] : memref<288x1024xbf16, #tpu.memory_space<vmem>>, vector<288x1024xbf16>
    %cst_76 = arith.constant dense<0.000000e+00> : vector<32x1024xf32>
    %61 = tpu.matmul %59, %60, %cst_76 {dimension_numbers = #tpu.dot_dimension_numbers<[1], [0], [0], [1], [0, 0, 1, 1], [], []>} : vector<32x288xbf16>, vector<288x1024xbf16>, vector<32x1024xf32> -> vector<32x1024xf32>
    %c0_77 = arith.constant 0 : index
    %c0_78 = arith.constant 0 : index
    %62 = vector.load %arg5[%c0_77, %c0_78] : memref<32x1xf32, #tpu.memory_space<vmem>>, vector<32x1xf32>
    %63 = vector.broadcast %62 : vector<32x1xf32> to vector<32x1024xf32>
    %64 = arith.addf %61, %63 : vector<32x1024xf32>
    %cst_79 = arith.constant 0.000000e+00 : f32
    %65 = vector.broadcast %cst_79 : f32 to vector<32x1024xf32>
    %66 = arith.maximumf %64, %65 : vector<32x1024xf32>
    %67 = arith.truncf %66 : vector<32x1024xf32> to vector<32x1024xbf16>
    %c0_80 = arith.constant 0 : index
    %c0_81 = arith.constant 0 : index
    %68 = vector.load %arg13[%c0_80, %c0_81] : memref<32x1152xbf16, #tpu.memory_space<vmem>>, vector<32x1024xbf16>
    tpu.vector_store %arg13[%c0_80, %c0_81], %67 {strides = array<i32>} : memref<32x1152xbf16, #tpu.memory_space<vmem>>, vector<32x1024xbf16>,
    %c0_82 = arith.constant 0 : index
    %c0_83 = arith.constant 0 : index
    %69 = vector.load %arg13[%c0_82, %c0_83] : memref<32x1152xbf16, #tpu.memory_space<vmem>>, vector<32x1024xbf16>
    %c0_84 = arith.constant 0 : index
    %c1_85 = arith.constant 1 : index
    %70 = vector.load %arg13[%c0_84, %c1_85] : memref<32x1152xbf16, #tpu.memory_space<vmem>>, vector<32x1024xbf16>
    %71 = arith.maximumf %69, %70 : vector<32x1024xbf16>
    %c0_86 = arith.constant 0 : index
    %c32_87 = arith.constant 32 : index
    %72 = vector.load %arg13[%c0_86, %c32_87] : memref<32x1152xbf16, #tpu.memory_space<vmem>>, vector<32x1024xbf16>
    %c0_88 = arith.constant 0 : index
    %c33_89 = arith.constant 33 : index
    %73 = vector.load %arg13[%c0_88, %c33_89] : memref<32x1152xbf16, #tpu.memory_space<vmem>>, vector<32x1024xbf16>
    %74 = arith.maximumf %72, %73 : vector<32x1024xbf16>
    %75 = arith.maximumf %71, %74 : vector<32x1024xbf16>
    %c0_90 = arith.constant 0 : index
    %c0_91 = arith.constant 0 : index
    %76 = vector.load %arg6[%c0_90, %c0_91] : memref<1024x196xbf16, #tpu.memory_space<vmem>>, vector<1024x196xbf16>
    %cst_92 = arith.constant dense<0.000000e+00> : vector<32x196xf32>
    %77 = tpu.matmul %75, %76, %cst_92 {dimension_numbers = #tpu.dot_dimension_numbers<[1], [0], [0], [1], [0, 0, 1, 1], [], []>} : vector<32x1024xbf16>, vector<1024x196xbf16>, vector<32x196xf32> -> vector<32x196xf32>
    %78 = vector.extract_strided_slice %77 {offsets = [0, 0], sizes = [1, 196], strides = [1, 1]} : vector<32x196xf32> to vector<1x196xf32>
    %c0_93 = arith.constant 0 : index
    %c0_94 = arith.constant 0 : index
    %79 = vector.load %arg16[%c0_93, %c0_94] : memref<1x6272xf32, #tpu.memory_space<vmem>>, vector<1x196xf32>
    tpu.vector_store %arg16[%c0_93, %c0_94], %78 {strides = array<i32>} : memref<1x6272xf32, #tpu.memory_space<vmem>>, vector<1x196xf32>,
    %80 = vector.extract_strided_slice %77 {offsets = [1, 0], sizes = [1, 196], strides = [1, 1]} : vector<32x196xf32> to vector<1x196xf32>
    %c0_95 = arith.constant 0 : index
    %c196 = arith.constant 196 : index
    %81 = vector.load %arg16[%c0_95, %c196] : memref<1x6272xf32, #tpu.memory_space<vmem>>, vector<1x196xf32>
    tpu.vector_store %arg16[%c0_95, %c196], %80 {strides = array<i32>} : memref<1x6272xf32, #tpu.memory_space<vmem>>, vector<1x196xf32>,
    %82 = vector.extract_strided_slice %77 {offsets = [2, 0], sizes = [1, 196], strides = [1, 1]} : vector<32x196xf32> to vector<1x196xf32>
    %c0_96 = arith.constant 0 : index
    %c392 = arith.constant 392 : index
    %83 = vector.load %arg16[%c0_96, %c392] : memref<1x6272xf32, #tpu.memory_space<vmem>>, vector<1x196xf32>
    tpu.vector_store %arg16[%c0_96, %c392], %82 {strides = array<i32>} : memref<1x6272xf32, #tpu.memory_space<vmem>>, vector<1x196xf32>,
    %84 = vector.extract_strided_slice %77 {offsets = [3, 0], sizes = [1, 196], strides = [1, 1]} : vector<32x196xf32> to vector<1x196xf32>
    %c0_97 = arith.constant 0 : index
    %c588 = arith.constant 588 : index
    %85 = vector.load %arg16[%c0_97, %c588] : memref<1x6272xf32, #tpu.memory_space<vmem>>, vector<1x196xf32>
    tpu.vector_store %arg16[%c0_97, %c588], %84 {strides = array<i32>} : memref<1x6272xf32, #tpu.memory_space<vmem>>, vector<1x196xf32>,
    %86 = vector.extract_strided_slice %77 {offsets = [4, 0], sizes = [1, 196], strides = [1, 1]} : vector<32x196xf32> to vector<1x196xf32>
    %c0_98 = arith.constant 0 : index
    %c784 = arith.constant 784 : index
    %87 = vector.load %arg16[%c0_98, %c784] : memref<1x6272xf32, #tpu.memory_space<vmem>>, vector<1x196xf32>
    tpu.vector_store %arg16[%c0_98, %c784], %86 {strides = array<i32>} : memref<1x6272xf32, #tpu.memory_space<vmem>>, vector<1x196xf32>,
    %88 = vector.extract_strided_slice %77 {offsets = [5, 0], sizes = [1, 196], strides = [1, 1]} : vector<32x196xf32> to vector<1x196xf32>
    %c0_99 = arith.constant 0 : index
    %c980 = arith.constant 980 : index
    %89 = vector.load %arg16[%c0_99, %c980] : memref<1x6272xf32, #tpu.memory_space<vmem>>, vector<1x196xf32>
    tpu.vector_store %arg16[%c0_99, %c980], %88 {strides = array<i32>} : memref<1x6272xf32, #tpu.memory_space<vmem>>, vector<1x196xf32>,
    %90 = vector.extract_strided_slice %77 {offsets = [6, 0], sizes = [1, 196], strides = [1, 1]} : vector<32x196xf32> to vector<1x196xf32>
    %c0_100 = arith.constant 0 : index
    %c1176 = arith.constant 1176 : index
    %91 = vector.load %arg16[%c0_100, %c1176] : memref<1x6272xf32, #tpu.memory_space<vmem>>, vector<1x196xf32>
    tpu.vector_store %arg16[%c0_100, %c1176], %90 {strides = array<i32>} : memref<1x6272xf32, #tpu.memory_space<vmem>>, vector<1x196xf32>,
    %92 = vector.extract_strided_slice %77 {offsets = [7, 0], sizes = [1, 196], strides = [1, 1]} : vector<32x196xf32> to vector<1x196xf32>
    %c0_101 = arith.constant 0 : index
    %c1372 = arith.constant 1372 : index
    %93 = vector.load %arg16[%c0_101, %c1372] : memref<1x6272xf32, #tpu.memory_space<vmem>>, vector<1x196xf32>
    tpu.vector_store %arg16[%c0_101, %c1372], %92 {strides = array<i32>} : memref<1x6272xf32, #tpu.memory_space<vmem>>, vector<1x196xf32>,
    %94 = vector.extract_strided_slice %77 {offsets = [8, 0], sizes = [1, 196], strides = [1, 1]} : vector<32x196xf32> to vector<1x196xf32>
    %c0_102 = arith.constant 0 : index
    %c1568 = arith.constant 1568 : index
    %95 = vector.load %arg16[%c0_102, %c1568] : memref<1x6272xf32, #tpu.memory_space<vmem>>, vector<1x196xf32>
    tpu.vector_store %arg16[%c0_102, %c1568], %94 {strides = array<i32>} : memref<1x6272xf32, #tpu.memory_space<vmem>>, vector<1x196xf32>,
    %96 = vector.extract_strided_slice %77 {offsets = [9, 0], sizes = [1, 196], strides = [1, 1]} : vector<32x196xf32> to vector<1x196xf32>
    %c0_103 = arith.constant 0 : index
    %c1764 = arith.constant 1764 : index
    %97 = vector.load %arg16[%c0_103, %c1764] : memref<1x6272xf32, #tpu.memory_space<vmem>>, vector<1x196xf32>
    tpu.vector_store %arg16[%c0_103, %c1764], %96 {strides = array<i32>} : memref<1x6272xf32, #tpu.memory_space<vmem>>, vector<1x196xf32>,
    %98 = vector.extract_strided_slice %77 {offsets = [10, 0], sizes = [1, 196], strides = [1, 1]} : vector<32x196xf32> to vector<1x196xf32>
    %c0_104 = arith.constant 0 : index
    %c1960 = arith.constant 1960 : index
    %99 = vector.load %arg16[%c0_104, %c1960] : memref<1x6272xf32, #tpu.memory_space<vmem>>, vector<1x196xf32>
    tpu.vector_store %arg16[%c0_104, %c1960], %98 {strides = array<i32>} : memref<1x6272xf32, #tpu.memory_space<vmem>>, vector<1x196xf32>,
    %100 = vector.extract_strided_slice %77 {offsets = [11, 0], sizes = [1, 196], strides = [1, 1]} : vector<32x196xf32> to vector<1x196xf32>
    %c0_105 = arith.constant 0 : index
    %c2156 = arith.constant 2156 : index
    %101 = vector.load %arg16[%c0_105, %c2156] : memref<1x6272xf32, #tpu.memory_space<vmem>>, vector<1x196xf32>
    tpu.vector_store %arg16[%c0_105, %c2156], %100 {strides = array<i32>} : memref<1x6272xf32, #tpu.memory_space<vmem>>, vector<1x196xf32>,
    %102 = vector.extract_strided_slice %77 {offsets = [12, 0], sizes = [1, 196], strides = [1, 1]} : vector<32x196xf32> to vector<1x196xf32>
    %c0_106 = arith.constant 0 : index
    %c2352 = arith.constant 2352 : index
    %103 = vector.load %arg16[%c0_106, %c2352] : memref<1x6272xf32, #tpu.memory_space<vmem>>, vector<1x196xf32>
    tpu.vector_store %arg16[%c0_106, %c2352], %102 {strides = array<i32>} : memref<1x6272xf32, #tpu.memory_space<vmem>>, vector<1x196xf32>,
    %104 = vector.extract_strided_slice %77 {offsets = [13, 0], sizes = [1, 196], strides = [1, 1]} : vector<32x196xf32> to vector<1x196xf32>
    %c0_107 = arith.constant 0 : index
    %c2548 = arith.constant 2548 : index
    %105 = vector.load %arg16[%c0_107, %c2548] : memref<1x6272xf32, #tpu.memory_space<vmem>>, vector<1x196xf32>
    tpu.vector_store %arg16[%c0_107, %c2548], %104 {strides = array<i32>} : memref<1x6272xf32, #tpu.memory_space<vmem>>, vector<1x196xf32>,
    %106 = vector.extract_strided_slice %77 {offsets = [14, 0], sizes = [1, 196], strides = [1, 1]} : vector<32x196xf32> to vector<1x196xf32>
    %c0_108 = arith.constant 0 : index
    %c2744 = arith.constant 2744 : index
    %107 = vector.load %arg16[%c0_108, %c2744] : memref<1x6272xf32, #tpu.memory_space<vmem>>, vector<1x196xf32>
    tpu.vector_store %arg16[%c0_108, %c2744], %106 {strides = array<i32>} : memref<1x6272xf32, #tpu.memory_space<vmem>>, vector<1x196xf32>,
    %108 = vector.extract_strided_slice %77 {offsets = [15, 0], sizes = [1, 196], strides = [1, 1]} : vector<32x196xf32> to vector<1x196xf32>
    %c0_109 = arith.constant 0 : index
    %c2940 = arith.constant 2940 : index
    %109 = vector.load %arg16[%c0_109, %c2940] : memref<1x6272xf32, #tpu.memory_space<vmem>>, vector<1x196xf32>
    tpu.vector_store %arg16[%c0_109, %c2940], %108 {strides = array<i32>} : memref<1x6272xf32, #tpu.memory_space<vmem>>, vector<1x196xf32>,
    %110 = vector.extract_strided_slice %77 {offsets = [16, 0], sizes = [1, 196], strides = [1, 1]} : vector<32x196xf32> to vector<1x196xf32>
    %c0_110 = arith.constant 0 : index
    %c3136 = arith.constant 3136 : index
    %111 = vector.load %arg16[%c0_110, %c3136] : memref<1x6272xf32, #tpu.memory_space<vmem>>, vector<1x196xf32>
    tpu.vector_store %arg16[%c0_110, %c3136], %110 {strides = array<i32>} : memref<1x6272xf32, #tpu.memory_space<vmem>>, vector<1x196xf32>,
    %112 = vector.extract_strided_slice %77 {offsets = [17, 0], sizes = [1, 196], strides = [1, 1]} : vector<32x196xf32> to vector<1x196xf32>
    %c0_111 = arith.constant 0 : index
    %c3332 = arith.constant 3332 : index
    %113 = vector.load %arg16[%c0_111, %c3332] : memref<1x6272xf32, #tpu.memory_space<vmem>>, vector<1x196xf32>
    tpu.vector_store %arg16[%c0_111, %c3332], %112 {strides = array<i32>} : memref<1x6272xf32, #tpu.memory_space<vmem>>, vector<1x196xf32>,
    %114 = vector.extract_strided_slice %77 {offsets = [18, 0], sizes = [1, 196], strides = [1, 1]} : vector<32x196xf32> to vector<1x196xf32>
    %c0_112 = arith.constant 0 : index
    %c3528 = arith.constant 3528 : index
    %115 = vector.load %arg16[%c0_112, %c3528] : memref<1x6272xf32, #tpu.memory_space<vmem>>, vector<1x196xf32>
    tpu.vector_store %arg16[%c0_112, %c3528], %114 {strides = array<i32>} : memref<1x6272xf32, #tpu.memory_space<vmem>>, vector<1x196xf32>,
    %116 = vector.extract_strided_slice %77 {offsets = [19, 0], sizes = [1, 196], strides = [1, 1]} : vector<32x196xf32> to vector<1x196xf32>
    %c0_113 = arith.constant 0 : index
    %c3724 = arith.constant 3724 : index
    %117 = vector.load %arg16[%c0_113, %c3724] : memref<1x6272xf32, #tpu.memory_space<vmem>>, vector<1x196xf32>
    tpu.vector_store %arg16[%c0_113, %c3724], %116 {strides = array<i32>} : memref<1x6272xf32, #tpu.memory_space<vmem>>, vector<1x196xf32>,
    %118 = vector.extract_strided_slice %77 {offsets = [20, 0], sizes = [1, 196], strides = [1, 1]} : vector<32x196xf32> to vector<1x196xf32>
    %c0_114 = arith.constant 0 : index
    %c3920 = arith.constant 3920 : index
    %119 = vector.load %arg16[%c0_114, %c3920] : memref<1x6272xf32, #tpu.memory_space<vmem>>, vector<1x196xf32>
    tpu.vector_store %arg16[%c0_114, %c3920], %118 {strides = array<i32>} : memref<1x6272xf32, #tpu.memory_space<vmem>>, vector<1x196xf32>,
    %120 = vector.extract_strided_slice %77 {offsets = [21, 0], sizes = [1, 196], strides = [1, 1]} : vector<32x196xf32> to vector<1x196xf32>
    %c0_115 = arith.constant 0 : index
    %c4116 = arith.constant 4116 : index
    %121 = vector.load %arg16[%c0_115, %c4116] : memref<1x6272xf32, #tpu.memory_space<vmem>>, vector<1x196xf32>
    tpu.vector_store %arg16[%c0_115, %c4116], %120 {strides = array<i32>} : memref<1x6272xf32, #tpu.memory_space<vmem>>, vector<1x196xf32>,
    %122 = vector.extract_strided_slice %77 {offsets = [22, 0], sizes = [1, 196], strides = [1, 1]} : vector<32x196xf32> to vector<1x196xf32>
    %c0_116 = arith.constant 0 : index
    %c4312 = arith.constant 4312 : index
    %123 = vector.load %arg16[%c0_116, %c4312] : memref<1x6272xf32, #tpu.memory_space<vmem>>, vector<1x196xf32>
    tpu.vector_store %arg16[%c0_116, %c4312], %122 {strides = array<i32>} : memref<1x6272xf32, #tpu.memory_space<vmem>>, vector<1x196xf32>,
    %124 = vector.extract_strided_slice %77 {offsets = [23, 0], sizes = [1, 196], strides = [1, 1]} : vector<32x196xf32> to vector<1x196xf32>
    %c0_117 = arith.constant 0 : index
    %c4508 = arith.constant 4508 : index
    %125 = vector.load %arg16[%c0_117, %c4508] : memref<1x6272xf32, #tpu.memory_space<vmem>>, vector<1x196xf32>
    tpu.vector_store %arg16[%c0_117, %c4508], %124 {strides = array<i32>} : memref<1x6272xf32, #tpu.memory_space<vmem>>, vector<1x196xf32>,
    %126 = vector.extract_strided_slice %77 {offsets = [24, 0], sizes = [1, 196], strides = [1, 1]} : vector<32x196xf32> to vector<1x196xf32>
    %c0_118 = arith.constant 0 : index
    %c4704 = arith.constant 4704 : index
    %127 = vector.load %arg16[%c0_118, %c4704] : memref<1x6272xf32, #tpu.memory_space<vmem>>, vector<1x196xf32>
    tpu.vector_store %arg16[%c0_118, %c4704], %126 {strides = array<i32>} : memref<1x6272xf32, #tpu.memory_space<vmem>>, vector<1x196xf32>,
    %128 = vector.extract_strided_slice %77 {offsets = [25, 0], sizes = [1, 196], strides = [1, 1]} : vector<32x196xf32> to vector<1x196xf32>
    %c0_119 = arith.constant 0 : index
    %c4900 = arith.constant 4900 : index
    %129 = vector.load %arg16[%c0_119, %c4900] : memref<1x6272xf32, #tpu.memory_space<vmem>>, vector<1x196xf32>
    tpu.vector_store %arg16[%c0_119, %c4900], %128 {strides = array<i32>} : memref<1x6272xf32, #tpu.memory_space<vmem>>, vector<1x196xf32>,
    %130 = vector.extract_strided_slice %77 {offsets = [26, 0], sizes = [1, 196], strides = [1, 1]} : vector<32x196xf32> to vector<1x196xf32>
    %c0_120 = arith.constant 0 : index
    %c5096 = arith.constant 5096 : index
    %131 = vector.load %arg16[%c0_120, %c5096] : memref<1x6272xf32, #tpu.memory_space<vmem>>, vector<1x196xf32>
    tpu.vector_store %arg16[%c0_120, %c5096], %130 {strides = array<i32>} : memref<1x6272xf32, #tpu.memory_space<vmem>>, vector<1x196xf32>,
    %132 = vector.extract_strided_slice %77 {offsets = [27, 0], sizes = [1, 196], strides = [1, 1]} : vector<32x196xf32> to vector<1x196xf32>
    %c0_121 = arith.constant 0 : index
    %c5292 = arith.constant 5292 : index
    %133 = vector.load %arg16[%c0_121, %c5292] : memref<1x6272xf32, #tpu.memory_space<vmem>>, vector<1x196xf32>
    tpu.vector_store %arg16[%c0_121, %c5292], %132 {strides = array<i32>} : memref<1x6272xf32, #tpu.memory_space<vmem>>, vector<1x196xf32>,
    %134 = vector.extract_strided_slice %77 {offsets = [28, 0], sizes = [1, 196], strides = [1, 1]} : vector<32x196xf32> to vector<1x196xf32>
    %c0_122 = arith.constant 0 : index
    %c5488 = arith.constant 5488 : index
    %135 = vector.load %arg16[%c0_122, %c5488] : memref<1x6272xf32, #tpu.memory_space<vmem>>, vector<1x196xf32>
    tpu.vector_store %arg16[%c0_122, %c5488], %134 {strides = array<i32>} : memref<1x6272xf32, #tpu.memory_space<vmem>>, vector<1x196xf32>,
    %136 = vector.extract_strided_slice %77 {offsets = [29, 0], sizes = [1, 196], strides = [1, 1]} : vector<32x196xf32> to vector<1x196xf32>
    %c0_123 = arith.constant 0 : index
    %c5684 = arith.constant 5684 : index
    %137 = vector.load %arg16[%c0_123, %c5684] : memref<1x6272xf32, #tpu.memory_space<vmem>>, vector<1x196xf32>
    tpu.vector_store %arg16[%c0_123, %c5684], %136 {strides = array<i32>} : memref<1x6272xf32, #tpu.memory_space<vmem>>, vector<1x196xf32>,
    %138 = vector.extract_strided_slice %77 {offsets = [30, 0], sizes = [1, 196], strides = [1, 1]} : vector<32x196xf32> to vector<1x196xf32>
    %c0_124 = arith.constant 0 : index
    %c5880 = arith.constant 5880 : index
    %139 = vector.load %arg16[%c0_124, %c5880] : memref<1x6272xf32, #tpu.memory_space<vmem>>, vector<1x196xf32>
    tpu.vector_store %arg16[%c0_124, %c5880], %138 {strides = array<i32>} : memref<1x6272xf32, #tpu.memory_space<vmem>>, vector<1x196xf32>,
    %140 = vector.extract_strided_slice %77 {offsets = [31, 0], sizes = [1, 196], strides = [1, 1]} : vector<32x196xf32> to vector<1x196xf32>
    %c0_125 = arith.constant 0 : index
    %c6076 = arith.constant 6076 : index
    %141 = vector.load %arg16[%c0_125, %c6076] : memref<1x6272xf32, #tpu.memory_space<vmem>>, vector<1x196xf32>
    tpu.vector_store %arg16[%c0_125, %c6076], %140 {strides = array<i32>} : memref<1x6272xf32, #tpu.memory_space<vmem>>, vector<1x196xf32>,
    %c0_126 = arith.constant 0 : index
    %c0_127 = arith.constant 0 : index
    %142 = vector.load %arg16[%c0_126, %c0_127] : memref<1x6272xf32, #tpu.memory_space<vmem>>, vector<1x6272xf32>
    %143 = arith.truncf %142 : vector<1x6272xf32> to vector<1x6272xbf16>
    %c0_128 = arith.constant 0 : index
    %c0_129 = arith.constant 0 : index
    %144 = vector.load %arg7[%c0_128, %c0_129] : memref<6272x128xbf16, #tpu.memory_space<vmem>>, vector<6272x128xbf16>
    %cst_130 = arith.constant dense<0.000000e+00> : vector<1x128xf32>
    %145 = tpu.matmul %143, %144, %cst_130 {dimension_numbers = #tpu.dot_dimension_numbers<[1], [0], [0], [1], [0, 0, 1, 1], [], []>} : vector<1x6272xbf16>, vector<6272x128xbf16>, vector<1x128xf32> -> vector<1x128xf32>
    %c0_131 = arith.constant 0 : index
    %c0_132 = arith.constant 0 : index
    %146 = vector.load %arg8[%c0_131, %c0_132] : memref<1x128xf32, #tpu.memory_space<vmem>>, vector<1x128xf32>
    %147 = arith.addf %145, %146 : vector<1x128xf32>
    %cst_133 = arith.constant 0.000000e+00 : f32
    %148 = vector.broadcast %cst_133 : f32 to vector<1x128xf32>
    %149 = arith.maximumf %147, %148 : vector<1x128xf32>
    %c0_134 = arith.constant 0 : index
    %c0_135 = arith.constant 0 : index
    %150 = vector.load %arg9[%c0_134, %c0_135] : memref<128x10xf32, #tpu.memory_space<vmem>>, vector<128x10xf32>
    %cst_136 = arith.constant dense<0.000000e+00> : vector<1x10xf32>
    %151 = tpu.matmul %149, %150, %cst_136 {dimension_numbers = #tpu.dot_dimension_numbers<[1], [0], [0], [1], [0, 0, 1, 1], [], []>} : vector<1x128xf32>, vector<128x10xf32>, vector<1x10xf32> -> vector<1x10xf32>
    %c0_137 = arith.constant 0 : index
    %c0_138 = arith.constant 0 : index
    %152 = vector.load %arg10[%c0_137, %c0_138] : memref<1x10xf32, #tpu.memory_space<vmem>>, vector<1x10xf32>
    %153 = arith.addf %151, %152 : vector<1x10xf32>
    %c0_139 = arith.constant 0 : index
    %c0_140 = arith.constant 0 : index
    %c0_141 = arith.constant 0 : index
    %154 = vector.load %arg11[%c0_139, %c0_140, %c0_141] : memref<1x1x10xf32, #tpu.memory_space<vmem>>, vector<1x1x10xf32>
    %155 = vector.shape_cast %154 : vector<1x1x10xf32> to vector<1x10xf32>
    %156 = vector.shape_cast %153 : vector<1x10xf32> to vector<1x1x10xf32>
    tpu.vector_store %arg11[%c0_139, %c0_140, %c0_141], %156 {strides = array<i32>} : memref<1x1x10xf32, #tpu.memory_space<vmem>>, vector<1x1x10xf32>,
    return
  }
  func.func @transform_0(%arg0: i32) -> (i32, i32, i32) {
    %c0_i32 = arith.constant 0 : i32
    %c0_i32_0 = arith.constant 0 : i32
    %c0_i32_1 = arith.constant 0 : i32
    return %arg0, %c0_i32, %c0_i32_0 : i32, i32, i32
  }
  func.func @transform_1(%arg0: i32) -> (i32, i32) {
    %c0_i32 = arith.constant 0 : i32
    %c0_i32_0 = arith.constant 0 : i32
    %c0_i32_1 = arith.constant 0 : i32
    return %c0_i32, %c0_i32_0 : i32, i32
  }
  func.func @transform_2(%arg0: i32) -> (i32, i32) {
    %c0_i32 = arith.constant 0 : i32
    %c0_i32_0 = arith.constant 0 : i32
    %c0_i32_1 = arith.constant 0 : i32
    return %c0_i32, %c0_i32_0 : i32, i32
  }
  func.func @transform_3(%arg0: i32) -> (i32, i32) {
    %c0_i32 = arith.constant 0 : i32
    %c0_i32_0 = arith.constant 0 : i32
    %c0_i32_1 = arith.constant 0 : i32
    return %c0_i32, %c0_i32_0 : i32, i32
  }
  func.func @transform_4(%arg0: i32) -> (i32, i32) {
    %c0_i32 = arith.constant 0 : i32
    %c0_i32_0 = arith.constant 0 : i32
    %c0_i32_1 = arith.constant 0 : i32
    return %c0_i32, %c0_i32_0 : i32, i32
  }
  func.func @transform_5(%arg0: i32) -> (i32, i32) {
    %c0_i32 = arith.constant 0 : i32
    %c0_i32_0 = arith.constant 0 : i32
    %c0_i32_1 = arith.constant 0 : i32
    return %c0_i32, %c0_i32_0 : i32, i32
  }
  func.func @transform_6(%arg0: i32) -> (i32, i32) {
    %c0_i32 = arith.constant 0 : i32
    %c0_i32_0 = arith.constant 0 : i32
    %c0_i32_1 = arith.constant 0 : i32
    return %c0_i32, %c0_i32_0 : i32, i32
  }
  func.func @transform_7(%arg0: i32) -> (i32, i32) {
    %c0_i32 = arith.constant 0 : i32
    %c0_i32_0 = arith.constant 0 : i32
    %c0_i32_1 = arith.constant 0 : i32
    return %c0_i32, %c0_i32_0 : i32, i32
  }
  func.func @transform_8(%arg0: i32) -> (i32, i32) {
    %c0_i32 = arith.constant 0 : i32
    %c0_i32_0 = arith.constant 0 : i32
    %c0_i32_1 = arith.constant 0 : i32
    return %c0_i32, %c0_i32_0 : i32, i32
  }
  func.func @transform_9(%arg0: i32) -> (i32, i32) {
    %c0_i32 = arith.constant 0 : i32
    %c0_i32_0 = arith.constant 0 : i32
    %c0_i32_1 = arith.constant 0 : i32
    return %c0_i32, %c0_i32_0 : i32, i32
  }
  func.func @transform_10(%arg0: i32) -> (i32, i32, i32) {
    %c0_i32 = arith.constant 0 : i32
    %c0_i32_0 = arith.constant 0 : i32
    %c0_i32_1 = arith.constant 0 : i32
    return %arg0, %c0_i32, %c0_i32_0 : i32, i32, i32
  }
}

</mosaic_0001>

<llo_original>
// kernel: cnn_forward_pallas.1
$region0: #{cnn_forward_pallas.1}
  #allocation0 [shape = 'u32[]', space=smem, size = 0x4, offset = 0x4, fixed_abs, tag = 'smem constant byte address 0x4 - core index']
  #allocation1 [shape = 'u32[144,128]{1,0:T(1,128)}', space=vmem, size = 0x12000, scoped, tag = 'internal scratch']
  #allocation2 [shape = 'bf16[32,1152]{1,0:T(8,128)(2,1)}', space=vmem, size = 0x12000, scoped, tag = 'scratch operand']
  #allocation3 [shape = 'bf16[32,1152]{1,0:T(8,128)(2,1)}', space=vmem, size = 0x12000, scoped, tag = 'scratch operand']
  #allocation4 [shape = 'f32[27,1024]{1,0:T(8,128)}', space=vmem, size = 0x20000, scoped, tag = 'scratch operand']
  #allocation5 [shape = 'bf16[288,1024]{1,0:T(8,128)(2,1)}', space=vmem, size = 0x90000, scoped, tag = 'scratch operand']
  #allocation6 [shape = 'f32[1,6272]{1,0:T(1,128)}', space=vmem, size = 0x6200, scoped, tag = 'scratch operand']
  %s0 = inlined_call_operand.vmem [shape: f32[2,3,1152], index: 0, kind: input, shape index: {}]
  %s1 = inlined_call_operand.hbm [shape: f32[32,27], index: 1, kind: input, shape index: {}]
  %s2 = inlined_call_operand.vmem [shape: f32[32,1], index: 2, kind: input, shape index: {}]
  %s3 = inlined_call_operand.hbm [shape: bf16[32,288], index: 3, kind: input, shape index: {}]
  %s4 = inlined_call_operand.vmem [shape: f32[32,1], index: 4, kind: input, shape index: {}]
  %s5 = inlined_call_operand.vmem [shape: bf16[1024,196], index: 5, kind: input, shape index: {}]
  %s6 = inlined_call_operand.hbm [shape: bf16[6272,128], index: 6, kind: input, shape index: {}]
  %s7 = inlined_call_operand.hbm [shape: f32[1,128], index: 7, kind: input, shape index: {}]
  %s8 = inlined_call_operand.vmem [shape: f32[128,10], index: 8, kind: input, shape index: {}]
  %s9 = inlined_call_operand.hbm [shape: f32[1,10], index: 9, kind: input, shape index: {}]
  %s10 = inlined_call_operand.hbm [shape: f32[2,1,10], index: 10, kind: output, shape index: {}]
  %s11 = sld [smem:[#allocation0]]
  $region93: #{cnn_forward_pallas.1} parent=0
    _
  %s13 = ssub.s32 1, %s11
  %s14 = scalar_select 0, %s13, %s11
  $region1: #{cnn_forward_pallas.1} parent=0
    #allocation7 [shape = 'u8[16384]{0}', space=vmem, size = 0x4000, scoped, tag = 'input window, operand 1, single buffered']
    #allocation8 [shape = 's32[2]{0}', space=sflag, size = 0x8, scoped, tag = 'scoped memory for cnn_forward_pallas.1']
    #allocation9 [shape = 's32[2]{0}', space=sflag, size = 0x8, scoped, tag = 'scoped memory for cnn_forward_pallas.1']
    #allocation10 [shape = 'u8[24576]{0}', space=vmem, size = 0x6000, scoped, tag = 'input window, operand 3, single buffered']
    #allocation11 [shape = 's32[1]{0}', space=sflag, size = 0x4, scoped, tag = 'scoped memory for cnn_forward_pallas.1']
    #allocation12 [shape = 'u8[1605632]{0}', space=vmem, size = 0x188000, scoped, tag = 'input window, operand 6, single buffered']
    #allocation13 [shape = 'u8[512]{0}', space=vmem, size = 0x400, scoped, tag = 'input window, operand 7, single buffered']
    #allocation14 [shape = 's32[1]{0}', space=sflag, size = 0x4, scoped, tag = 'scoped memory for cnn_forward_pallas.1']
    #allocation15 [shape = 'u8[512]{0}', space=vmem, size = 0x400, scoped, tag = 'input window, operand 9, single buffered']
    #allocation16 [shape = 'u8[1024]{0}', space=vmem, size = 0x400, scoped, tag = 'output window, operand 0']
    %15 = vsyncpa [#allocation8], 0
    %16 = vsyncpa [#allocation11], 0
    %17 = vsyncpa [#allocation14], 0
    %18 = vsyncpa [#allocation9], 0
    %s19 = scalar_lea.sflag [#allocation9], 1
    %20 = vsyncpa %s19, 0
    loop: start=0, step=1, limit=4
    $region2: #{cnn_forward_pallas.1} parent=1 // loop_pre_header
      _
    $region3: #{cnn_forward_pallas.1} parent=1 // loop_header
      %s22 = sphi 0, %s26
      %p23 = scmp.ge.s32.totalorder %s22, 4
      %s32 = sphi 0, %s34
      %s35 = sphi 0, %s32
      %s36 = sphi 0, %s35
      %s52 = sphi 0, %s36
      %s56 = sphi 0, %s56
      %s58 = sphi 0, %s56
      %s59 = sphi 0, %s58
      %s73 = sphi 0, %s59
      %s77 = sphi 0, %s77
      %s79 = sphi 0, %s77
      %s80 = sphi 0, %s79
      %s94 = sphi 0, %s80
      %s98 = sphi 0, %s98
      %s100 = sphi 0, %s98
      %s101 = sphi 0, %s100
      %s115 = sphi 0, %s101
      %s119 = sphi 0, %s119
      %s121 = sphi 0, %s119
      %s122 = sphi 0, %s121
      %s136 = sphi 0, %s122
      %s140 = sphi 0, %s140
      %s142 = sphi 0, %s140
      %s143 = sphi 0, %s142
      %s157 = sphi 0, %s143
      %s161 = sphi 0, %s161
      %s163 = sphi 0, %s161
      %s164 = sphi 0, %s163
      %s178 = sphi 0, %s164
      %s182 = sphi 0, %s182
      %s184 = sphi 0, %s182
      %s185 = sphi 0, %s184
      %s199 = sphi 0, %s185
      %s203 = sphi 0, %s203
      %s205 = sphi 0, %s203
      %s206 = sphi 0, %s205
      %s220 = sphi 0, %s206
      %s224 = sphi 0, %s224
      %s226 = sphi 0, %s224
      %s227 = sphi 0, %s226
      %s241 = sphi 0, %s227
      %s247 = sphi 0, %s249
      %s250 = sphi 0, %s247
      %s251 = sphi 0, %s250
      %s267 = sphi 0, %s251
    $region4: #{cnn_forward_pallas.1} parent=1 // loop_header_branch
      %25 = sbr.rel (%p23) target = $region8
    $region5: #{cnn_forward_pallas.1} parent=1 // loop_body
      %s27 = ssub.s32 %s22, 1
      %s28 = ssub.s32 %s22, 2
      %s29 = sadd.s32 %s22, 1
      %s30 = ssub.s32 %s22, %s29
      %p31 = scmp.eq.s32.totalorder %s30, 0
      %s33 = sadd.s32 %s32, 1
      %s34 = scalar_select %p31, %s32, %s33
      %p37 = pneg %p31
      %p38 = scmp.eq.s32.totalorder %s22, 1
      %p39 = por %p37, %p38
      %p40 = scmp.ne.s32.totalorder %s32, %s35
      %p41 = scmp.eq.s32.totalorder %s22, 0
      %p42 = por %p40, %p41
      %p43 = scmp.ne.s32.totalorder %s32, %s35
      %p44 = scmp.eq.s32.totalorder %s27, 1
      %p45 = por %p43, %p44
      %p46 = scmp.ne.s32.totalorder %s35, %s36
      %p47 = scmp.eq.s32.totalorder %s27, 0
      %p48 = por %p46, %p47
      %p49 = scmp.ne.s32.totalorder %s35, %s36
      %p50 = scmp.eq.s32.totalorder %s28, 1
      %p51 = por %p49, %p50
      %p53 = scmp.ne.s32.totalorder %s36, %s52
      %p54 = scmp.eq.s32.totalorder %s28, 0
      %p55 = por %p53, %p54
      %s57 = sadd.s32 %s56, 1
      %p60 = scmp.eq.s32.totalorder %s22, 1
      %p61 = scmp.ne.s32.totalorder %s56, %s58
      %p62 = scmp.eq.s32.totalorder %s22, 0
      %p63 = por %p61, %p62
      %p64 = scmp.ne.s32.totalorder %s56, %s58
      %p65 = scmp.eq.s32.totalorder %s27, 1
      %p66 = por %p64, %p65
      %p67 = scmp.ne.s32.totalorder %s58, %s59
      %p68 = scmp.eq.s32.totalorder %s27, 0
      %p69 = por %p67, %p68
      %p70 = scmp.ne.s32.totalorder %s58, %s59
      %p71 = scmp.eq.s32.totalorder %s28, 1
      %p72 = por %p70, %p71
      %p74 = scmp.ne.s32.totalorder %s59, %s73
      %p75 = scmp.eq.s32.totalorder %s28, 0
      %p76 = por %p74, %p75
      %s78 = sadd.s32 %s77, 1
      %p81 = scmp.eq.s32.totalorder %s22, 1
      %p82 = scmp.ne.s32.totalorder %s77, %s79
      %p83 = scmp.eq.s32.totalorder %s22, 0
      %p84 = por %p82, %p83
      %p85 = scmp.ne.s32.totalorder %s77, %s79
      %p86 = scmp.eq.s32.totalorder %s27, 1
      %p87 = por %p85, %p86
      %p88 = scmp.ne.s32.totalorder %s79, %s80
      %p89 = scmp.eq.s32.totalorder %s27, 0
      %p90 = por %p88, %p89
      %p91 = scmp.ne.s32.totalorder %s79, %s80
      %p92 = scmp.eq.s32.totalorder %s28, 1
      %p93 = por %p91, %p92
      %p95 = scmp.ne.s32.totalorder %s80, %s94
      %p96 = scmp.eq.s32.totalorder %s28, 0
      %p97 = por %p95, %p96
      %s99 = sadd.s32 %s98, 1
      %p102 = scmp.eq.s32.totalorder %s22, 1
      %p103 = scmp.ne.s32.totalorder %s98, %s100
      %p104 = scmp.eq.s32.totalorder %s22, 0
      %p105 = por %p103, %p104
      %p106 = scmp.ne.s32.totalorder %s98, %s100
      %p107 = scmp.eq.s32.totalorder %s27, 1
      %p108 = por %p106, %p107
      %p109 = scmp.ne.s32.totalorder %s100, %s101
      %p110 = scmp.eq.s32.totalorder %s27, 0
      %p111 = por %p109, %p110
      %p112 = scmp.ne.s32.totalorder %s100, %s101
      %p113 = scmp.eq.s32.totalorder %s28, 1
      %p114 = por %p112, %p113
      %p116 = scmp.ne.s32.totalorder %s101, %s115
      %p117 = scmp.eq.s32.totalorder %s28, 0
      %p118 = por %p116, %p117
      %s120 = sadd.s32 %s119, 1
      %p123 = scmp.eq.s32.totalorder %s22, 1
      %p124 = scmp.ne.s32.totalorder %s119, %s121
      %p125 = scmp.eq.s32.totalorder %s22, 0
      %p126 = por %p124, %p125
      %p127 = scmp.ne.s32.totalorder %s119, %s121
      %p128 = scmp.eq.s32.totalorder %s27, 1
      %p129 = por %p127, %p128
      %p130 = scmp.ne.s32.totalorder %s121, %s122
      %p131 = scmp.eq.s32.totalorder %s27, 0
      %p132 = por %p130, %p131
      %p133 = scmp.ne.s32.totalorder %s121, %s122
      %p134 = scmp.eq.s32.totalorder %s28, 1
      %p135 = por %p133, %p134
      %p137 = scmp.ne.s32.totalorder %s122, %s136
      %p138 = scmp.eq.s32.totalorder %s28, 0
      %p139 = por %p137, %p138
      %s141 = sadd.s32 %s140, 1
      %p144 = scmp.eq.s32.totalorder %s22, 1
      %p145 = scmp.ne.s32.totalorder %s140, %s142
      %p146 = scmp.eq.s32.totalorder %s22, 0
      %p147 = por %p145, %p146
      %p148 = scmp.ne.s32.totalorder %s140, %s142
      %p149 = scmp.eq.s32.totalorder %s27, 1
      %p150 = por %p148, %p149
      %p151 = scmp.ne.s32.totalorder %s142, %s143
      %p152 = scmp.eq.s32.totalorder %s27, 0
      %p153 = por %p151, %p152
      %p154 = scmp.ne.s32.totalorder %s142, %s143
      %p155 = scmp.eq.s32.totalorder %s28, 1
      %p156 = por %p154, %p155
      %p158 = scmp.ne.s32.totalorder %s143, %s157
      %p159 = scmp.eq.s32.totalorder %s28, 0
      %p160 = por %p158, %p159
      %s162 = sadd.s32 %s161, 1
      %p165 = scmp.eq.s32.totalorder %s22, 1
      %p166 = scmp.ne.s32.totalorder %s161, %s163
      %p167 = scmp.eq.s32.totalorder %s22, 0
      %p168 = por %p166, %p167
      %p169 = scmp.ne.s32.totalorder %s161, %s163
      %p170 = scmp.eq.s32.totalorder %s27, 1
      %p171 = por %p169, %p170
      %p172 = scmp.ne.s32.totalorder %s163, %s164
      %p173 = scmp.eq.s32.totalorder %s27, 0
      %p174 = por %p172, %p173
      %p175 = scmp.ne.s32.totalorder %s163, %s164
      %p176 = scmp.eq.s32.totalorder %s28, 1
      %p177 = por %p175, %p176
      %p179 = scmp.ne.s32.totalorder %s164, %s178
      %p180 = scmp.eq.s32.totalorder %s28, 0
      %p181 = por %p179, %p180
      %s183 = sadd.s32 %s182, 1
      %p186 = scmp.eq.s32.totalorder %s22, 1
      %p187 = scmp.ne.s32.totalorder %s182, %s184
      %p188 = scmp.eq.s32.totalorder %s22, 0
      %p189 = por %p187, %p188
      %p190 = scmp.ne.s32.totalorder %s182, %s184
      %p191 = scmp.eq.s32.totalorder %s27, 1
      %p192 = por %p190, %p191
      %p193 = scmp.ne.s32.totalorder %s184, %s185
      %p194 = scmp.eq.s32.totalorder %s27, 0
      %p195 = por %p193, %p194
      %p196 = scmp.ne.s32.totalorder %s184, %s185
      %p197 = scmp.eq.s32.totalorder %s28, 1
      %p198 = por %p196, %p197
      %p200 = scmp.ne.s32.totalorder %s185, %s199
      %p201 = scmp.eq.s32.totalorder %s28, 0
      %p202 = por %p200, %p201
      %s204 = sadd.s32 %s203, 1
      %p207 = scmp.eq.s32.totalorder %s22, 1
      %p208 = scmp.ne.s32.totalorder %s203, %s205
      %p209 = scmp.eq.s32.totalorder %s22, 0
      %p210 = por %p208, %p209
      %p211 = scmp.ne.s32.totalorder %s203, %s205
      %p212 = scmp.eq.s32.totalorder %s27, 1
      %p213 = por %p211, %p212
      %p214 = scmp.ne.s32.totalorder %s205, %s206
      %p215 = scmp.eq.s32.totalorder %s27, 0
      %p216 = por %p214, %p215
      %p217 = scmp.ne.s32.totalorder %s205, %s206
      %p218 = scmp.eq.s32.totalorder %s28, 1
      %p219 = por %p217, %p218
      %p221 = scmp.ne.s32.totalorder %s206, %s220
      %p222 = scmp.eq.s32.totalorder %s28, 0
      %p223 = por %p221, %p222
      %s225 = sadd.s32 %s224, 1
      %p228 = scmp.eq.s32.totalorder %s22, 1
      %p229 = scmp.ne.s32.totalorder %s224, %s226
      %p230 = scmp.eq.s32.totalorder %s22, 0
      %p231 = por %p229, %p230
      %p232 = scmp.ne.s32.totalorder %s224, %s226
      %p233 = scmp.eq.s32.totalorder %s27, 1
      %p234 = por %p232, %p233
      %p235 = scmp.ne.s32.totalorder %s226, %s227
      %p236 = scmp.eq.s32.totalorder %s27, 0
      %p237 = por %p235, %p236
      %p238 = scmp.ne.s32.totalorder %s226, %s227
      %p239 = scmp.eq.s32.totalorder %s28, 1
      %p240 = por %p238, %p239
      %p242 = scmp.ne.s32.totalorder %s227, %s241
      %p243 = scmp.eq.s32.totalorder %s28, 0
      %p244 = por %p242, %p243
      %s245 = ssub.s32 %s22, %s29
      %p246 = scmp.eq.s32.totalorder %s245, 0
      %s248 = sadd.s32 %s247, 1
      %s249 = scalar_select %p246, %s247, %s248
      %p252 = pneg %p246
      %p253 = scmp.eq.s32.totalorder %s22, 1
      %p254 = por %p252, %p253
      %p255 = scmp.ne.s32.totalorder %s247, %s250
      %p256 = scmp.eq.s32.totalorder %s22, 0
      %p257 = por %p255, %p256
      %p258 = scmp.ne.s32.totalorder %s247, %s250
      %p259 = scmp.eq.s32.totalorder %s27, 1
      %p260 = por %p258, %p259
      %p261 = scmp.ne.s32.totalorder %s250, %s251
      %p262 = scmp.eq.s32.totalorder %s27, 0
      %p263 = por %p261, %p262
      %p264 = scmp.ne.s32.totalorder %s250, %s251
      %p265 = scmp.eq.s32.totalorder %s28, 1
      %p266 = por %p264, %p265
      %p268 = scmp.ne.s32.totalorder %s251, %s267
      %p269 = scmp.eq.s32.totalorder %s28, 0
      %p270 = por %p268, %p269
      %p271 = scmp.le.s32.totalorder 1, %s22
      %p272 = scmp.lt.s32.totalorder %s22, 3
      %p273 = pnand %p271, %p272
      %p274 = pneg %p273
      // Predicated region
      $region9: #{cnn_forward_pallas.1} parent=5 // pred_check
        _
      $region10: #{cnn_forward_pallas.1} parent=5 // pred_check_branch
        %276 = sbr.rel (%p273) target = $region12
      $region11: #{cnn_forward_pallas.1} parent=5 // pred_region
        %s277 = ssub.s32 %s22, 1
        // Predicated region
        $region13: #{cnn_forward_pallas.1} parent=11 // pred_check
          %p278 = pneg %p69
        $region14: #{cnn_forward_pallas.1} parent=11 // pred_check_branch
          %280 = sbr.rel (%p278) target = $region16
        $region15: #{cnn_forward_pallas.1} parent=11 // pred_region
          %s282 = ssub.s32 512, 512
          %283 = vsyncadd [#allocation8], %s282
          %s284 = sshll.u32 [#allocation7], 4
          %s285 = int_to_ptr.vmem [resolvable:$true] %s284
          %290 = dma.hbm_to_vmem [thread:$0]  %s1, 512, %s285, [#allocation8], 128, 128, 8
        $region16: #{cnn_forward_pallas.1} parent=11 // pred_fallthru
          _
        // Predicated region
        $region17: #{cnn_forward_pallas.1} parent=11 // pred_check
          %p291 = pneg %p90
        $region18: #{cnn_forward_pallas.1} parent=11 // pred_check_branch
          %293 = sbr.rel (%p291) target = $region20
        $region19: #{cnn_forward_pallas.1} parent=11 // pred_region
          _
        $region20: #{cnn_forward_pallas.1} parent=11 // pred_fallthru
          _
        // Predicated region
        $region21: #{cnn_forward_pallas.1} parent=11 // pred_check
          %p294 = pneg %p111
        $region22: #{cnn_forward_pallas.1} parent=11 // pred_check_branch
          %296 = sbr.rel (%p294) target = $region24
        $region23: #{cnn_forward_pallas.1} parent=11 // pred_region
          %s298 = ssub.s32 768, 768
          %299 = vsyncadd [#allocation11], %s298
          %s300 = sshll.u32 [#allocation10], 4
          %s301 = int_to_ptr.vmem [resolvable:$true] %s300
          %306 = dma.hbm_to_vmem [thread:$0]  %s3, 768, %s301, [#allocation11], 192, 192, 12
        $region24: #{cnn_forward_pallas.1} parent=11 // pred_fallthru
          _
        // Predicated region
        $region25: #{cnn_forward_pallas.1} parent=11 // pred_check
          %p307 = pneg %p132
        $region26: #{cnn_forward_pallas.1} parent=11 // pred_check_branch
          %309 = sbr.rel (%p307) target = $region28
        $region27: #{cnn_forward_pallas.1} parent=11 // pred_region
          _
        $region28: #{cnn_forward_pallas.1} parent=11 // pred_fallthru
          _
        // Predicated region
        $region29: #{cnn_forward_pallas.1} parent=11 // pred_check
          %p310 = pneg %p153
        $region30: #{cnn_forward_pallas.1} parent=11 // pred_check_branch
          %312 = sbr.rel (%p310) target = $region32
        $region31: #{cnn_forward_pallas.1} parent=11 // pred_region
          _
        $region32: #{cnn_forward_pallas.1} parent=11 // pred_fallthru
          _
        // Predicated region
        $region33: #{cnn_forward_pallas.1} parent=11 // pred_check
          %p313 = pneg %p174
        $region34: #{cnn_forward_pallas.1} parent=11 // pred_check_branch
          %315 = sbr.rel (%p313) target = $region36
        $region35: #{cnn_forward_pallas.1} parent=11 // pred_region
          %s317 = ssub.s32 50176, 50176
          %318 = vsyncadd [#allocation11], %s317
          %s319 = sshll.u32 [#allocation12], 4
          %s320 = int_to_ptr.vmem [resolvable:$true] %s319
          %325 = dma.hbm_to_vmem [thread:$0]  %s6, 50176, %s320, [#allocation11], 64, 64, 4
        $region36: #{cnn_forward_pallas.1} parent=11 // pred_fallthru
          _
        // Predicated region
        $region37: #{cnn_forward_pallas.1} parent=11 // pred_check
          %p326 = pneg %p195
        $region38: #{cnn_forward_pallas.1} parent=11 // pred_check_branch
          %328 = sbr.rel (%p326) target = $region40
        $region39: #{cnn_forward_pallas.1} parent=11 // pred_region
          %s330 = ssub.s32 16, 16
          %331 = vsyncadd [#allocation14], %s330
          %s333 = sshll.u32 [#allocation13], 4
          %s334 = int_to_ptr.vmem [resolvable:$true] %s333
          %336 = dma.hbm_to_vmem [thread:$0]  %s7, 16, %s334, [#allocation14]
        $region40: #{cnn_forward_pallas.1} parent=11 // pred_fallthru
          _
        // Predicated region
        $region41: #{cnn_forward_pallas.1} parent=11 // pred_check
          %p337 = pneg %p216
        $region42: #{cnn_forward_pallas.1} parent=11 // pred_check_branch
          %339 = sbr.rel (%p337) target = $region44
        $region43: #{cnn_forward_pallas.1} parent=11 // pred_region
          _
        $region44: #{cnn_forward_pallas.1} parent=11 // pred_fallthru
          _
        // Predicated region
        $region45: #{cnn_forward_pallas.1} parent=11 // pred_check
          %p340 = pneg %p237
        $region46: #{cnn_forward_pallas.1} parent=11 // pred_check_branch
          %342 = sbr.rel (%p340) target = $region48
        $region47: #{cnn_forward_pallas.1} parent=11 // pred_region
          %s344 = ssub.s32 16, 16
          %345 = vsyncadd [#allocation14], %s344
          %s347 = sshll.u32 [#allocation15], 4
          %s348 = int_to_ptr.vmem [resolvable:$true] %s347
          %350 = dma.hbm_to_vmem [thread:$0]  %s9, 16, %s348, [#allocation14]
        $region48: #{cnn_forward_pallas.1} parent=11 // pred_fallthru
          _
      $region12: #{cnn_forward_pallas.1} parent=5 // pred_fallthru
        _
      %p351 = scmp.lt.s32.totalorder %s22, 2
      // Predicated region
      $region49: #{cnn_forward_pallas.1} parent=5 // pred_check
        %p352 = pneg %p351
      $region50: #{cnn_forward_pallas.1} parent=5 // pred_check_branch
        %354 = sbr.rel (%p352) target = $region52
      $region51: #{cnn_forward_pallas.1} parent=5 // pred_region
        // Predicated region
        $region53: #{cnn_forward_pallas.1} parent=51 // pred_check
          %p355 = pneg %p42
        $region54: #{cnn_forward_pallas.1} parent=51 // pred_check_branch
          %357 = sbr.rel (%p355) target = $region56
        $region55: #{cnn_forward_pallas.1} parent=51 // pred_region
          %p358 = scmp.lt.s32.totalorder %s22, 1
          %s359 = scalar_select %p358, %s22, 1
          %s360 = smul.addr %s359, 9
          %s361 = smul.addr %s360, 4
          %s362 = scalar_lea.vmem %s0, %s361
        $region56: #{cnn_forward_pallas.1} parent=51 // pred_fallthru
          _
      $region52: #{cnn_forward_pallas.1} parent=5 // pred_fallthru
        _
      %p363 = scmp.le.s32.totalorder 1, %s22
      %p364 = scmp.lt.s32.totalorder %s22, 3
      %p365 = pnand %p363, %p364
      %p366 = pneg %p365
      // Predicated region
      $region57: #{cnn_forward_pallas.1} parent=5 // pred_check
        _
      $region58: #{cnn_forward_pallas.1} parent=5 // pred_check_branch
        %368 = sbr.rel (%p365) target = $region60
      $region59: #{cnn_forward_pallas.1} parent=5 // pred_region
        %s369 = ssub.s32 %s22, 1
        // Predicated region
        $region61: #{cnn_forward_pallas.1} parent=59 // pred_check
          %p370 = pneg %p69
        $region62: #{cnn_forward_pallas.1} parent=59 // pred_check_branch
          %372 = sbr.rel (%p370) target = $region64
        $region63: #{cnn_forward_pallas.1} parent=59 // pred_region
          %373 = dma.done [#allocation8], 512
        $region64: #{cnn_forward_pallas.1} parent=59 // pred_fallthru
          _
        // Predicated region
        $region65: #{cnn_forward_pallas.1} parent=59 // pred_check
          %p374 = pneg %p111
        $region66: #{cnn_forward_pallas.1} parent=59 // pred_check_branch
          %376 = sbr.rel (%p374) target = $region68
        $region67: #{cnn_forward_pallas.1} parent=59 // pred_region
          %377 = dma.done [#allocation11], 768
        $region68: #{cnn_forward_pallas.1} parent=59 // pred_fallthru
          _
        // Predicated region
        $region69: #{cnn_forward_pallas.1} parent=59 // pred_check
          %p378 = pneg %p174
        $region70: #{cnn_forward_pallas.1} parent=59 // pred_check_branch
          %380 = sbr.rel (%p378) target = $region72
        $region71: #{cnn_forward_pallas.1} parent=59 // pred_region
          %381 = dma.done [#allocation11], 50176
        $region72: #{cnn_forward_pallas.1} parent=59 // pred_fallthru
          _
        // Predicated region
        $region73: #{cnn_forward_pallas.1} parent=59 // pred_check
          %p382 = pneg %p195
        $region74: #{cnn_forward_pallas.1} parent=59 // pred_check_branch
          %384 = sbr.rel (%p382) target = $region76
        $region75: #{cnn_forward_pallas.1} parent=59 // pred_region
          %385 = dma.done [#allocation14], 16
        $region76: #{cnn_forward_pallas.1} parent=59 // pred_fallthru
          _
        // Predicated region
        $region77: #{cnn_forward_pallas.1} parent=59 // pred_check
          %p386 = pneg %p237
        $region78: #{cnn_forward_pallas.1} parent=59 // pred_check_branch
          %388 = sbr.rel (%p386) target = $region80
        $region79: #{cnn_forward_pallas.1} parent=59 // pred_region
          %389 = dma.done [#allocation14], 16
        $region80: #{cnn_forward_pallas.1} parent=59 // pred_fallthru
          _
        %p390 = scmp.lt.s32.totalorder %s27, 1
        %s391 = scalar_select %p390, %s27, 1
        %s392 = smul.addr %s391, 9
        %s393 = smul.addr %s392, 4
        %s394 = scalar_lea.vmem %s0, %s393
        %p395 = pneg %p48
        %p396 = pneg %p45
        %p397 = pneg %p69
        %p398 = pneg %p66
        %p399 = pneg %p90
        %p400 = pneg %p87
        %p401 = pneg %p111
        %p402 = pneg %p108
        %p403 = pneg %p132
        %p404 = pneg %p129
        %p405 = pneg %p153
        %p406 = pneg %p150
        %p407 = pneg %p174
        %p408 = pneg %p171
        %p409 = pneg %p195
        %p410 = pneg %p192
        %p411 = pneg %p216
        %p412 = pneg %p213
        %p413 = pneg %p237
        %p414 = pneg %p234
        %p415 = pneg %p263
        %p416 = pneg %p260
        %s417 = sand.u32 %s250, 1
        %s418 = scalar_lea.sflag [#allocation9], %s417
        %s419 = sand.u32 %s250, 1
        %s420 = scalar_lea.vmem [#allocation16], %s419
        %p421 = scmp.lt.s32.totalorder %s27, 1
        %s422 = scalar_select %p421, %s27, 1
        %s423 = smul.addr %s422, 9
        %s424 = smul.addr %s423, 4
        %s425 = scalar_lea.vmem %s0, %s424
        %427 = vst [vmem:[#allocation2 + $0x20] sm:$0xf] 0
        %428 = vst [vmem:[#allocation2 + $0x44] sm:$0xf] 0
        %429 = vst [vmem:[#allocation2 + $0x68] sm:$0xf] 0
        %430 = vst [vmem:[#allocation2 + $0x8c] sm:$0xf] 0
        %431 = vst [vmem:[#allocation3 + $0x20] sm:$0xf] 0
        %432 = vst [vmem:[#allocation3 + $0x44] sm:$0xf] 0
        %433 = vst [vmem:[#allocation3 + $0x68] sm:$0xf] 0
        %434 = vst [vmem:[#allocation3 + $0x8c] sm:$0xf] 0
        %v435 = vld [vmem:[%s425] sm:$0x77]
        %v436 = vld [vmem:[%s425 + $0x8] sm:$0x77]
        %v437 = vld [vmem:[%s425 + $0x10] sm:$0x77]
        %v438 = vld [vmem:[%s425 + $0x18] sm:$0x77]
        %v443 = vcombine.high %v435, %v435
        %v444 = vcombine.high %v436, %v436
        %v445 = vcombine.high %v437, %v437
        %v446 = vcombine.high %v438, %v438
        %451 = vst [vmem:[#allocation4] sm:$0x7] %v435
        %452 = vst [vmem:[#allocation4 + $0x8] sm:$0x7] %v443
        %453 = vst [vmem:[#allocation4 + $0x10] sm:$0x7] %v436
        %454 = vst [vmem:[#allocation4 + $0x18] sm:$0x7] %v444
        %455 = vst [vmem:[#allocation4 + $0x20] sm:$0x7] %v437
        %456 = vst [vmem:[#allocation4 + $0x28] sm:$0x7] %v445
        %457 = vst [vmem:[#allocation4 + $0x30] sm:$0x7] %v438
        %458 = vst [vmem:[#allocation4 + $0x38] sm:$0x7] %v446
        %v459 = vld [vmem:[%s425] sm:$0x77]
        %v460 = vld [vmem:[%s425 + $0x8] sm:$0x77]
        %v461 = vld [vmem:[%s425 + $0x10] sm:$0x77]
        %v462 = vld [vmem:[%s425 + $0x18] sm:$0x77]
        %v463 = vld [vmem:[%s425 + $0x20] sm:$0x7]
        %v469 = vcombine.high %v459, %v459
        %v470 = vcombine.high %v460, %v460
        %v471 = vcombine.high %v461, %v461
        %v472 = vcombine.high %v462, %v462
        %v473 = vrot.slane %v459, 5
        %v474 = vrot.slane %v469, 5
        %v475 = vrot.slane %v460, 5
        %v476 = vrot.slane %v470, 5
        %v477 = vrot.slane %v461, 5
        %v478 = vrot.slane %v471, 5
        %v479 = vrot.slane %v462, 5
        %v480 = vrot.slane %v472, 5
        %v481 = vrot.slane %v463, 5
        %482 = vrot.lane.b32.xlu0 %v473, 127
        %v483 = vpop.permute.xlu0 %482
        %484 = vrot.lane.b32.xlu0 %v474, 127
        %v485 = vpop.permute.xlu0 %484
        %486 = vrot.lane.b32.xlu0 %v475, 127
        %v487 = vpop.permute.xlu0 %486
        %488 = vrot.lane.b32.xlu0 %v476, 127
        %v489 = vpop.permute.xlu0 %488
        %490 = vrot.lane.b32.xlu0 %v477, 127
        %v491 = vpop.permute.xlu0 %490
        %492 = vrot.lane.b32.xlu0 %v478, 127
        %v493 = vpop.permute.xlu0 %492
        %494 = vrot.lane.b32.xlu0 %v479, 127
        %v495 = vpop.permute.xlu0 %494
        %496 = vrot.lane.b32.xlu0 %v480, 127
        %v497 = vpop.permute.xlu0 %496
        %498 = vrot.lane.b32.xlu0 %v481, 127
        %v499 = vpop.permute.xlu0 %498
        %vm500 = vcmask 1039360
        %v501 = vsel %vm500, %v483, %v485
        %v502 = vsel %vm500, %v485, %v487
        %v503 = vsel %vm500, %v487, %v489
        %v504 = vsel %vm500, %v489, %v491
        %v505 = vsel %vm500, %v491, %v493
        %v506 = vsel %vm500, %v493, %v495
        %v507 = vsel %vm500, %v495, %v497
        %v508 = vsel %vm500, %v497, %v499
        %517 = vst [vmem:[#allocation4] sm:$0x38] %v501
        %518 = vst [vmem:[#allocation4 + $0x8] sm:$0x38] %v502
        %519 = vst [vmem:[#allocation4 + $0x10] sm:$0x38] %v503
        %520 = vst [vmem:[#allocation4 + $0x18] sm:$0x38] %v504
        %521 = vst [vmem:[#allocation4 + $0x20] sm:$0x38] %v505
        %522 = vst [vmem:[#allocation4 + $0x28] sm:$0x38] %v506
        %523 = vst [vmem:[#allocation4 + $0x30] sm:$0x38] %v507
        %524 = vst [vmem:[#allocation4 + $0x38] sm:$0x38] %v508
        %v525 = vld [vmem:[%s425] sm:$0x77]
        %v526 = vld [vmem:[%s425 + $0x8] sm:$0x77]
        %v527 = vld [vmem:[%s425 + $0x10] sm:$0x77]
        %v528 = vld [vmem:[%s425 + $0x18] sm:$0x77]
        %v529 = vld [vmem:[%s425 + $0x20] sm:$0x7]
        %v535 = vcombine.high %v525, %v525
        %v536 = vcombine.high %v526, %v526
        %v537 = vcombine.high %v527, %v527
        %v538 = vcombine.high %v528, %v528
        %v539 = vrot.slane %v525, 2
        %v540 = vrot.slane %v535, 2
        %v541 = vrot.slane %v526, 2
        %v542 = vrot.slane %v536, 2
        %v543 = vrot.slane %v527, 2
        %v544 = vrot.slane %v537, 2
        %v545 = vrot.slane %v528, 2
        %v546 = vrot.slane %v538, 2
        %v547 = vrot.slane %v529, 2
        %548 = vrot.lane.b32.xlu0 %v539, 126
        %v549 = vpop.permute.xlu0 %548
        %550 = vrot.lane.b32.xlu0 %v540, 126
        %v551 = vpop.permute.xlu0 %550
        %552 = vrot.lane.b32.xlu0 %v541, 126
        %v553 = vpop.permute.xlu0 %552
        %554 = vrot.lane.b32.xlu0 %v542, 126
        %v555 = vpop.permute.xlu0 %554
        %556 = vrot.lane.b32.xlu0 %v543, 126
        %v557 = vpop.permute.xlu0 %556
        %558 = vrot.lane.b32.xlu0 %v544, 126
        %v559 = vpop.permute.xlu0 %558
        %560 = vrot.lane.b32.xlu0 %v545, 126
        %v561 = vpop.permute.xlu0 %560
        %562 = vrot.lane.b32.xlu0 %v546, 126
        %v563 = vpop.permute.xlu0 %562
        %564 = vrot.lane.b32.xlu0 %v547, 126
        %v565 = vpop.permute.xlu0 %564
        %vm566 = vcmask 1031168
        %v567 = vsel %vm566, %v549, %v551
        %v568 = vsel %vm566, %v551, %v553
        %v569 = vsel %vm566, %v553, %v555
        %v570 = vsel %vm566, %v555, %v557
        %v571 = vsel %vm566, %v557, %v559
        %v572 = vsel %vm566, %v559, %v561
        %v573 = vsel %vm566, %v561, %v563
        %v574 = vsel %vm566, %v563, %v565
        %583 = vst [vmem:[#allocation4] sm:$0xc0] %v567
        %584 = vst [vmem:[#allocation4 + $0x8] sm:$0xc0] %v568
        %585 = vst [vmem:[#allocation4 + $0x10] sm:$0xc0] %v569
        %586 = vst [vmem:[#allocation4 + $0x18] sm:$0xc0] %v570
        %587 = vst [vmem:[#allocation4 + $0x20] sm:$0xc0] %v571
        %588 = vst [vmem:[#allocation4 + $0x28] sm:$0xc0] %v572
        %589 = vst [vmem:[#allocation4 + $0x30] sm:$0xc0] %v573
        %590 = vst [vmem:[#allocation4 + $0x38] sm:$0xc0] %v574
        %591 = vst [vmem:[#allocation4 + $0x40] sm:$0x1] %v567
        %592 = vst [vmem:[#allocation4 + $0x48] sm:$0x1] %v568
        %593 = vst [vmem:[#allocation4 + $0x50] sm:$0x1] %v569
        %594 = vst [vmem:[#allocation4 + $0x58] sm:$0x1] %v570
        %595 = vst [vmem:[#allocation4 + $0x60] sm:$0x1] %v571
        %596 = vst [vmem:[#allocation4 + $0x68] sm:$0x1] %v572
        %597 = vst [vmem:[#allocation4 + $0x70] sm:$0x1] %v573
        %598 = vst [vmem:[#allocation4 + $0x78] sm:$0x1] %v574
        %v599 = vld [vmem:[%s425] sm:$0x77]
        %v600 = vld [vmem:[%s425 + $0x8] sm:$0x77]
        %v601 = vld [vmem:[%s425 + $0x10] sm:$0x77]
        %v602 = vld [vmem:[%s425 + $0x18] sm:$0x77]
        %v603 = vld [vmem:[%s425 + $0x20] sm:$0x7]
        %v609 = vcombine.high %v599, %v599
        %v610 = vcombine.high %v600, %v600
        %v611 = vcombine.high %v601, %v601
        %v612 = vcombine.high %v602, %v602
        %v613 = vrot.slane %v599, 7
        %v614 = vrot.slane %v609, 7
        %v615 = vrot.slane %v600, 7
        %v616 = vrot.slane %v610, 7
        %v617 = vrot.slane %v601, 7
        %v618 = vrot.slane %v611, 7
        %v619 = vrot.slane %v602, 7
        %v620 = vrot.slane %v612, 7
        %v621 = vrot.slane %v603, 7
        %622 = vrot.lane.b32.xlu0 %v613, 96
        %v623 = vpop.permute.xlu0 %622
        %624 = vrot.lane.b32.xlu0 %v614, 96
        %v625 = vpop.permute.xlu0 %624
        %626 = vrot.lane.b32.xlu0 %v615, 96
        %v627 = vpop.permute.xlu0 %626
        %628 = vrot.lane.b32.xlu0 %v616, 96
        %v629 = vpop.permute.xlu0 %628
        %630 = vrot.lane.b32.xlu0 %v617, 96
        %v631 = vpop.permute.xlu0 %630
        %632 = vrot.lane.b32.xlu0 %v618, 96
        %v633 = vpop.permute.xlu0 %632
        %634 = vrot.lane.b32.xlu0 %v619, 96
        %v635 = vpop.permute.xlu0 %634
        %636 = vrot.lane.b32.xlu0 %v620, 96
        %v637 = vpop.permute.xlu0 %636
        %638 = vrot.lane.b32.xlu0 %v621, 96
        %v639 = vpop.permute.xlu0 %638
        %vm640 = vcmask 785408
        %v641 = vsel %vm640, %v623, %v625
        %v642 = vsel %vm640, %v625, %v627
        %v643 = vsel %vm640, %v627, %v629
        %v644 = vsel %vm640, %v629, %v631
        %v645 = vsel %vm640, %v631, %v633
        %v646 = vsel %vm640, %v633, %v635
        %v647 = vsel %vm640, %v635, %v637
        %v648 = vsel %vm640, %v637, %v639
        %657 = vst [vmem:[#allocation4 + $0x40] sm:$0xe] %v641
        %658 = vst [vmem:[#allocation4 + $0x48] sm:$0xe] %v642
        %659 = vst [vmem:[#allocation4 + $0x50] sm:$0xe] %v643
        %660 = vst [vmem:[#allocation4 + $0x58] sm:$0xe] %v644
        %661 = vst [vmem:[#allocation4 + $0x60] sm:$0xe] %v645
        %662 = vst [vmem:[#allocation4 + $0x68] sm:$0xe] %v646
        %663 = vst [vmem:[#allocation4 + $0x70] sm:$0xe] %v647
        %664 = vst [vmem:[#allocation4 + $0x78] sm:$0xe] %v648
        %v665 = vld [vmem:[%s425] sm:$0x77]
        %v666 = vld [vmem:[%s425 + $0x8] sm:$0x77]
        %v667 = vld [vmem:[%s425 + $0x10] sm:$0x77]
        %v668 = vld [vmem:[%s425 + $0x18] sm:$0x77]
        %v669 = vld [vmem:[%s425 + $0x20] sm:$0x7]
        %v675 = vcombine.low %v665, %v665
        %v676 = vcombine.low %v666, %v666
        %v677 = vcombine.low %v667, %v667
        %v678 = vcombine.low %v668, %v668
        %v679 = vcombine.low %v669, %v669
        %680 = vrot.lane.b32.xlu0 %v675, 95
        %v681 = vpop.permute.xlu0 %680
        %682 = vrot.lane.b32.xlu0 %v665, 95
        %v683 = vpop.permute.xlu0 %682
        %684 = vrot.lane.b32.xlu0 %v676, 95
        %v685 = vpop.permute.xlu0 %684
        %686 = vrot.lane.b32.xlu0 %v666, 95
        %v687 = vpop.permute.xlu0 %686
        %688 = vrot.lane.b32.xlu0 %v677, 95
        %v689 = vpop.permute.xlu0 %688
        %690 = vrot.lane.b32.xlu0 %v667, 95
        %v691 = vpop.permute.xlu0 %690
        %692 = vrot.lane.b32.xlu0 %v678, 95
        %v693 = vpop.permute.xlu0 %692
        %694 = vrot.lane.b32.xlu0 %v668, 95
        %v695 = vpop.permute.xlu0 %694
        %696 = vrot.lane.b32.xlu0 %v679, 95
        %v697 = vpop.permute.xlu0 %696
        %vm698 = vcmask 777216
        %v699 = vsel %vm698, %v681, %v683
        %v700 = vsel %vm698, %v683, %v685
        %v701 = vsel %vm698, %v685, %v687
        %v702 = vsel %vm698, %v687, %v689
        %v703 = vsel %vm698, %v689, %v691
        %v704 = vsel %vm698, %v691, %v693
        %v705 = vsel %vm698, %v693, %v695
        %v706 = vsel %vm698, %v695, %v697
        %715 = vst [vmem:[#allocation4 + $0x40] sm:$0x70] %v699
        %716 = vst [vmem:[#allocation4 + $0x48] sm:$0x70] %v700
        %717 = vst [vmem:[#allocation4 + $0x50] sm:$0x70] %v701
        %718 = vst [vmem:[#allocation4 + $0x58] sm:$0x70] %v702
        %719 = vst [vmem:[#allocation4 + $0x60] sm:$0x70] %v703
        %720 = vst [vmem:[#allocation4 + $0x68] sm:$0x70] %v704
        %721 = vst [vmem:[#allocation4 + $0x70] sm:$0x70] %v705
        %722 = vst [vmem:[#allocation4 + $0x78] sm:$0x70] %v706
        %v723 = vld [vmem:[%s425] sm:$0x77]
        %v724 = vld [vmem:[%s425 + $0x8] sm:$0x77]
        %v725 = vld [vmem:[%s425 + $0x10] sm:$0x77]
        %v726 = vld [vmem:[%s425 + $0x18] sm:$0x77]
        %v727 = vld [vmem:[%s425 + $0x20] sm:$0x7]
        %v733 = vcombine.high %v723, %v723
        %v734 = vcombine.high %v724, %v724
        %v735 = vcombine.high %v725, %v725
        %v736 = vcombine.high %v726, %v726
        %v737 = vrot.slane %v723, 1
        %v738 = vrot.slane %v733, 1
        %v739 = vrot.slane %v724, 1
        %v740 = vrot.slane %v734, 1
        %v741 = vrot.slane %v725, 1
        %v742 = vrot.slane %v735, 1
        %v743 = vrot.slane %v726, 1
        %v744 = vrot.slane %v736, 1
        %v745 = vrot.slane %v727, 1
        %746 = vrot.lane.b32.xlu0 %v737, 94
        %v747 = vpop.permute.xlu0 %746
        %748 = vrot.lane.b32.xlu0 %v738, 94
        %v749 = vpop.permute.xlu0 %748
        %750 = vrot.lane.b32.xlu0 %v739, 94
        %v751 = vpop.permute.xlu0 %750
        %752 = vrot.lane.b32.xlu0 %v740, 94
        %v753 = vpop.permute.xlu0 %752
        %754 = vrot.lane.b32.xlu0 %v741, 94
        %v755 = vpop.permute.xlu0 %754
        %756 = vrot.lane.b32.xlu0 %v742, 94
        %v757 = vpop.permute.xlu0 %756
        %758 = vrot.lane.b32.xlu0 %v743, 94
        %v759 = vpop.permute.xlu0 %758
        %760 = vrot.lane.b32.xlu0 %v744, 94
        %v761 = vpop.permute.xlu0 %760
        %762 = vrot.lane.b32.xlu0 %v745, 94
        %v763 = vpop.permute.xlu0 %762
        %vm764 = vcmask 769024
        %v765 = vsel %vm764, %v747, %v749
        %v766 = vsel %vm764, %v749, %v751
        %v767 = vsel %vm764, %v751, %v753
        %v768 = vsel %vm764, %v753, %v755
        %v769 = vsel %vm764, %v755, %v757
        %v770 = vsel %vm764, %v757, %v759
        %v771 = vsel %vm764, %v759, %v761
        %v772 = vsel %vm764, %v761, %v763
        %781 = vst [vmem:[#allocation4 + $0x40] sm:$0x80] %v765
        %782 = vst [vmem:[#allocation4 + $0x48] sm:$0x80] %v766
        %783 = vst [vmem:[#allocation4 + $0x50] sm:$0x80] %v767
        %784 = vst [vmem:[#allocation4 + $0x58] sm:$0x80] %v768
        %785 = vst [vmem:[#allocation4 + $0x60] sm:$0x80] %v769
        %786 = vst [vmem:[#allocation4 + $0x68] sm:$0x80] %v770
        %787 = vst [vmem:[#allocation4 + $0x70] sm:$0x80] %v771
        %788 = vst [vmem:[#allocation4 + $0x78] sm:$0x80] %v772
        %789 = vst [vmem:[#allocation4 + $0x80] sm:$0x3] %v765
        %790 = vst [vmem:[#allocation4 + $0x88] sm:$0x3] %v766
        %791 = vst [vmem:[#allocation4 + $0x90] sm:$0x3] %v767
        %792 = vst [vmem:[#allocation4 + $0x98] sm:$0x3] %v768
        %793 = vst [vmem:[#allocation4 + $0xa0] sm:$0x3] %v769
        %794 = vst [vmem:[#allocation4 + $0xa8] sm:$0x3] %v770
        %795 = vst [vmem:[#allocation4 + $0xb0] sm:$0x3] %v771
        %796 = vst [vmem:[#allocation4 + $0xb8] sm:$0x3] %v772
        %v797 = vld [vmem:[%s425] sm:$0x77]
        %v798 = vld [vmem:[%s425 + $0x8] sm:$0x77]
        %v799 = vld [vmem:[%s425 + $0x10] sm:$0x77]
        %v800 = vld [vmem:[%s425 + $0x18] sm:$0x77]
        %v801 = vld [vmem:[%s425 + $0x20] sm:$0x7]
        %v807 = vcombine.high %v797, %v797
        %v808 = vcombine.high %v798, %v798
        %v809 = vcombine.high %v799, %v799
        %v810 = vcombine.high %v800, %v800
        %v811 = vrot.slane %v797, 6
        %v812 = vrot.slane %v807, 6
        %v813 = vrot.slane %v798, 6
        %v814 = vrot.slane %v808, 6
        %v815 = vrot.slane %v799, 6
        %v816 = vrot.slane %v809, 6
        %v817 = vrot.slane %v800, 6
        %v818 = vrot.slane %v810, 6
        %v819 = vrot.slane %v801, 6
        %820 = vrot.lane.b32.xlu0 %v811, 64
        %v821 = vpop.permute.xlu0 %820
        %822 = vrot.lane.b32.xlu0 %v812, 64
        %v823 = vpop.permute.xlu0 %822
        %824 = vrot.lane.b32.xlu0 %v813, 64
        %v825 = vpop.permute.xlu0 %824
        %826 = vrot.lane.b32.xlu0 %v814, 64
        %v827 = vpop.permute.xlu0 %826
        %828 = vrot.lane.b32.xlu0 %v815, 64
        %v829 = vpop.permute.xlu0 %828
        %830 = vrot.lane.b32.xlu0 %v816, 64
        %v831 = vpop.permute.xlu0 %830
        %832 = vrot.lane.b32.xlu0 %v817, 64
        %v833 = vpop.permute.xlu0 %832
        %834 = vrot.lane.b32.xlu0 %v818, 64
        %v835 = vpop.permute.xlu0 %834
        %836 = vrot.lane.b32.xlu0 %v819, 64
        %v837 = vpop.permute.xlu0 %836
        %vm838 = vcmask 523264
        %v839 = vsel %vm838, %v821, %v823
        %v840 = vsel %vm838, %v823, %v825
        %v841 = vsel %vm838, %v825, %v827
        %v842 = vsel %vm838, %v827, %v829
        %v843 = vsel %vm838, %v829, %v831
        %v844 = vsel %vm838, %v831, %v833
        %v845 = vsel %vm838, %v833, %v835
        %v846 = vsel %vm838, %v835, %v837
        %855 = vst [vmem:[#allocation4 + $0x80] sm:$0x1c] %v839
        %856 = vst [vmem:[#allocation4 + $0x88] sm:$0x1c] %v840
        %857 = vst [vmem:[#allocation4 + $0x90] sm:$0x1c] %v841
        %858 = vst [vmem:[#allocation4 + $0x98] sm:$0x1c] %v842
        %859 = vst [vmem:[#allocation4 + $0xa0] sm:$0x1c] %v843
        %860 = vst [vmem:[#allocation4 + $0xa8] sm:$0x1c] %v844
        %861 = vst [vmem:[#allocation4 + $0xb0] sm:$0x1c] %v845
        %862 = vst [vmem:[#allocation4 + $0xb8] sm:$0x1c] %v846
        %v863 = vld [vmem:[%s425] sm:$0x77]
        %v864 = vld [vmem:[%s425 + $0x8] sm:$0x77]
        %v865 = vld [vmem:[%s425 + $0x10] sm:$0x77]
        %v866 = vld [vmem:[%s425 + $0x18] sm:$0x77]
        %v867 = vld [vmem:[%s425 + $0x20] sm:$0x7]
        %v873 = vcombine.high %v863, %v863
        %v874 = vcombine.high %v864, %v864
        %v875 = vcombine.high %v865, %v865
        %v876 = vcombine.high %v866, %v866
        %v877 = vrot.slane %v863, 3
        %v878 = vrot.slane %v873, 3
        %v879 = vrot.slane %v864, 3
        %v880 = vrot.slane %v874, 3
        %v881 = vrot.slane %v865, 3
        %v882 = vrot.slane %v875, 3
        %v883 = vrot.slane %v866, 3
        %v884 = vrot.slane %v876, 3
        %v885 = vrot.slane %v867, 3
        %886 = vrot.lane.b32.xlu0 %v877, 63
        %v887 = vpop.permute.xlu0 %886
        %888 = vrot.lane.b32.xlu0 %v878, 63
        %v889 = vpop.permute.xlu0 %888
        %890 = vrot.lane.b32.xlu0 %v879, 63
        %v891 = vpop.permute.xlu0 %890
        %892 = vrot.lane.b32.xlu0 %v880, 63
        %v893 = vpop.permute.xlu0 %892
        %894 = vrot.lane.b32.xlu0 %v881, 63
        %v895 = vpop.permute.xlu0 %894
        %896 = vrot.lane.b32.xlu0 %v882, 63
        %v897 = vpop.permute.xlu0 %896
        %898 = vrot.lane.b32.xlu0 %v883, 63
        %v899 = vpop.permute.xlu0 %898
        %900 = vrot.lane.b32.xlu0 %v884, 63
        %v901 = vpop.permute.xlu0 %900
        %902 = vrot.lane.b32.xlu0 %v885, 63
        %v903 = vpop.permute.xlu0 %902
        %vm904 = vcmask 515072
        %v905 = vsel %vm904, %v887, %v889
        %v906 = vsel %vm904, %v889, %v891
        %v907 = vsel %vm904, %v891, %v893
        %v908 = vsel %vm904, %v893, %v895
        %v909 = vsel %vm904, %v895, %v897
        %v910 = vsel %vm904, %v897, %v899
        %v911 = vsel %vm904, %v899, %v901
        %v912 = vsel %vm904, %v901, %v903
        %921 = vst [vmem:[#allocation4 + $0x80] sm:$0xe0] %v905
        %922 = vst [vmem:[#allocation4 + $0x88] sm:$0xe0] %v906
        %923 = vst [vmem:[#allocation4 + $0x90] sm:$0xe0] %v907
        %924 = vst [vmem:[#allocation4 + $0x98] sm:$0xe0] %v908
        %925 = vst [vmem:[#allocation4 + $0xa0] sm:$0xe0] %v909
        %926 = vst [vmem:[#allocation4 + $0xa8] sm:$0xe0] %v910
        %927 = vst [vmem:[#allocation4 + $0xb0] sm:$0xe0] %v911
        %928 = vst [vmem:[#allocation4 + $0xb8] sm:$0xe0] %v912
        %v929 = vld [vmem:[%s425] sm:$0x77]
        %v930 = vld [vmem:[%s425 + $0x8] sm:$0x77]
        %v931 = vld [vmem:[%s425 + $0x10] sm:$0x77]
        %v932 = vld [vmem:[%s425 + $0x18] sm:$0x77]
        %v933 = vld [vmem:[%s425 + $0x20] sm:$0x7]
        %v939 = vcombine.high %v929, %v929
        %v940 = vcombine.high %v930, %v930
        %v941 = vcombine.high %v931, %v931
        %v942 = vcombine.high %v932, %v932
        %943 = vrot.lane.b32.xlu0 %v929, 62
        %v944 = vpop.permute.xlu0 %943
        %945 = vrot.lane.b32.xlu0 %v939, 62
        %v946 = vpop.permute.xlu0 %945
        %947 = vrot.lane.b32.xlu0 %v930, 62
        %v948 = vpop.permute.xlu0 %947
        %949 = vrot.lane.b32.xlu0 %v940, 62
        %v950 = vpop.permute.xlu0 %949
        %951 = vrot.lane.b32.xlu0 %v931, 62
        %v952 = vpop.permute.xlu0 %951
        %953 = vrot.lane.b32.xlu0 %v941, 62
        %v954 = vpop.permute.xlu0 %953
        %955 = vrot.lane.b32.xlu0 %v932, 62
        %v956 = vpop.permute.xlu0 %955
        %957 = vrot.lane.b32.xlu0 %v942, 62
        %v958 = vpop.permute.xlu0 %957
        %959 = vrot.lane.b32.xlu0 %v933, 62
        %v960 = vpop.permute.xlu0 %959
        %vm961 = vcmask 506880
        %v962 = vsel %vm961, %v944, %v946
        %v963 = vsel %vm961, %v946, %v948
        %v964 = vsel %vm961, %v948, %v950
        %v965 = vsel %vm961, %v950, %v952
        %v966 = vsel %vm961, %v952, %v954
        %v967 = vsel %vm961, %v954, %v956
        %v968 = vsel %vm961, %v956, %v958
        %v969 = vsel %vm961, %v958, %v960
        %978 = vst [vmem:[#allocation4 + $0xc0] sm:$0x7] %v962
        %979 = vst [vmem:[#allocation4 + $0xc8] sm:$0x7] %v963
        %980 = vst [vmem:[#allocation4 + $0xd0] sm:$0x7] %v964
        %981 = vst [vmem:[#allocation4 + $0xd8] sm:$0x7] %v965
        %982 = vst [vmem:[#allocation4 + $0xe0] sm:$0x7] %v966
        %983 = vst [vmem:[#allocation4 + $0xe8] sm:$0x7] %v967
        %984 = vst [vmem:[#allocation4 + $0xf0] sm:$0x7] %v968
        %985 = vst [vmem:[#allocation4 + $0xf8] sm:$0x7] %v969
        %v986 = vld [vmem:[#allocation7] sm:$0xff]
        %v987 = vld [vmem:[#allocation7 + $0x8] sm:$0xff]
        %v988 = vld [vmem:[#allocation7 + $0x10] sm:$0xff]
        %v989 = vld [vmem:[#allocation7 + $0x18] sm:$0xff]
        %v990 = vld [vmem:[#allocation4] sm:$0xff]
        %v991 = vld [vmem:[#allocation4 + $0x8] sm:$0xff]
        %v992 = vld [vmem:[#allocation4 + $0x10] sm:$0xff]
        %v993 = vld [vmem:[#allocation4 + $0x18] sm:$0xff]
        %v994 = vld [vmem:[#allocation4 + $0x20] sm:$0xff]
        %v995 = vld [vmem:[#allocation4 + $0x28] sm:$0xff]
        %v996 = vld [vmem:[#allocation4 + $0x30] sm:$0xff]
        %v997 = vld [vmem:[#allocation4 + $0x38] sm:$0xff]
        %v998 = vld [vmem:[#allocation4 + $0x40] sm:$0xff]
        %v999 = vld [vmem:[#allocation4 + $0x48] sm:$0xff]
        %v1000 = vld [vmem:[#allocation4 + $0x50] sm:$0xff]
        %v1001 = vld [vmem:[#allocation4 + $0x58] sm:$0xff]
        %v1002 = vld [vmem:[#allocation4 + $0x60] sm:$0xff]
        %v1003 = vld [vmem:[#allocation4 + $0x68] sm:$0xff]
        %v1004 = vld [vmem:[#allocation4 + $0x70] sm:$0xff]
        %v1005 = vld [vmem:[#allocation4 + $0x78] sm:$0xff]
        %v1006 = vld [vmem:[#allocation4 + $0x80] sm:$0xff]
        %v1007 = vld [vmem:[#allocation4 + $0x88] sm:$0xff]
        %v1008 = vld [vmem:[#allocation4 + $0x90] sm:$0xff]
        %v1009 = vld [vmem:[#allocation4 + $0x98] sm:$0xff]
        %v1010 = vld [vmem:[#allocation4 + $0xa0] sm:$0xff]
        %v1011 = vld [vmem:[#allocation4 + $0xa8] sm:$0xff]
        %v1012 = vld [vmem:[#allocation4 + $0xb0] sm:$0xff]
        %v1013 = vld [vmem:[#allocation4 + $0xb8] sm:$0xff]
        %v1014 = vld [vmem:[#allocation4 + $0xc0] sm:$0x7]
        %v1015 = vld [vmem:[#allocation4 + $0xc8] sm:$0x7]
        %v1016 = vld [vmem:[#allocation4 + $0xd0] sm:$0x7]
        %v1017 = vld [vmem:[#allocation4 + $0xd8] sm:$0x7]
        %v1018 = vld [vmem:[#allocation4 + $0xe0] sm:$0x7]
        %v1019 = vld [vmem:[#allocation4 + $0xe8] sm:$0x7]
        %v1020 = vld [vmem:[#allocation4 + $0xf0] sm:$0x7]
        %v1021 = vld [vmem:[#allocation4 + $0xf8] sm:$0x7]
        %v1022 = vld [vmem:[%s2] sm:$0xff]
        %v1023 = vld [vmem:[%s2 + $0x8] sm:$0xff]
        %v1024 = vld [vmem:[%s2 + $0x10] sm:$0xff]
        %v1025 = vld [vmem:[%s2 + $0x18] sm:$0xff]
        %1027 = vset.pattern.permute.xlu0 0
        %1028 = vperm.xlu0 %1027, %v1022
        %v1029 = vpop.permute.xlu0 %1028
        %1032 = vset.pattern.permute.xlu0 0
        %1033 = vperm.xlu0 %1032, %v1023
        %v1034 = vpop.permute.xlu0 %1033
        %1037 = vset.pattern.permute.xlu0 0
        %1038 = vperm.xlu0 %1037, %v1024
        %v1039 = vpop.permute.xlu0 %1038
        %1042 = vset.pattern.permute.xlu0 0
        %1043 = vperm.xlu0 %1042, %v1025
        %v1044 = vpop.permute.xlu0 %1043
        %vm1046 = vcmask 220160
        %v1048 = vsel %vm1046, %v986, 0
        %v1051 = vsel %vm1046, %v987, 0
        %v1054 = vsel %vm1046, %v988, 0
        %v1057 = vsel %vm1046, %v989, 0
        %vm1059 = vcmask 1042432
        %v1061 = vsel %vm1059, %v1014, 0
        %v1064 = vsel %vm1059, %v1015, 0
        %v1067 = vsel %vm1059, %v1016, 0
        %v1070 = vsel %vm1059, %v1017, 0
        %v1073 = vsel %vm1059, %v1018, 0
        %v1076 = vsel %vm1059, %v1019, 0
        %v1079 = vsel %vm1059, %v1020, 0
        %v1082 = vsel %vm1059, %v1021, 0
        %1084 = vmatprep.subr.mxu0 0.0
        %1085 = vmatpush1.msra.mxu0 0.0
        %1086 = vmatprep.subr.mxu0 0.0
        %1087 = vmatpush1.msra.mxu0 0.0
        %1088 = vmatprep.subr.mxu0 0.0
        %1089 = vmatpush1.msra.mxu0 0.0
        %1090 = vmatprep.subr.mxu0 0.0
        %1091 = vmatpush1.msra.mxu0 0.0
        %1092 = vmatprep.subr.mxu0 0.0
        %1093 = vmatpush1.msra.mxu0 0.0
        %1094 = vmatprep.subr.mxu0 0.0
        %1095 = vmatpush1.msra.mxu0 0.0
        %1096 = vmatprep.subr.mxu0 0.0
        %1097 = vmatpush1.msra.mxu0 0.0
        %1098 = vmatprep.subr.mxu0 0.0
        %1099 = vmatpush1.msra.mxu0 0.0
        %1100 = vmatprep.subr.mxu0 0.0
        %1101 = vmatpush1.msra.mxu0 0.0
        %1102 = vmatprep.subr.mxu0 0.0
        %1103 = vmatpush1.msra.mxu0 0.0
        %1104 = vmatprep.subr.mxu0 0.0
        %1105 = vmatpush1.msra.mxu0 0.0
        %1106 = vmatprep.subr.mxu0 0.0
        %1107 = vmatpush1.msra.mxu0 0.0
        %1108 = vmatprep.subr.mxu0 %v1064
        %1109 = vmatpush1.msra.mxu0 %v1061
        %1110 = vmatprep.subr.mxu0 %v1007
        %1111 = vmatpush1.msra.mxu0 %v1006
        %1112 = vmatprep.subr.mxu0 %v999
        %1113 = vmatpush1.msra.mxu0 %v998
        %1114 = vmatprep.subr.mxu0 %v991
        %1115 = vmatpush1.msra.mxu0 %v990
        %1116 = vmatprep.subr.mxu0 0.0
        %1117 = vmatpush2.msra.mxu0 0.0
        %1118 = vmatprep.subr.mxu0 0.0
        %1119 = vmatpush2.msra.mxu0 0.0
        %1120 = vmatprep.subr.mxu0 0.0
        %1121 = vmatpush2.msra.mxu0 0.0
        %1122 = vmatprep.subr.mxu0 0.0
        %1123 = vmatpush2.msra.mxu0 0.0
        %1124 = vmatprep.subr.mxu0 0.0
        %1125 = vmatpush2.msra.mxu0 0.0
        %1126 = vmatprep.subr.mxu0 0.0
        %1127 = vmatpush2.msra.mxu0 0.0
        %1128 = vmatprep.subr.mxu0 0.0
        %1129 = vmatpush2.msra.mxu0 0.0
        %1130 = vmatprep.subr.mxu0 0.0
        %1131 = vmatpush2.msra.mxu0 0.0
        %1132 = vmatprep.subr.mxu0 0.0
        %1133 = vmatpush2.msra.mxu0 0.0
        %1134 = vmatprep.subr.mxu0 0.0
        %1135 = vmatpush2.msra.mxu0 0.0
        %1136 = vmatprep.subr.mxu0 0.0
        %1137 = vmatpush2.msra.mxu0 0.0
        %1138 = vmatprep.subr.mxu0 0.0
        %1139 = vmatpush2.msra.mxu0 0.0
        %1140 = vmatprep.subr.mxu0 0.0
        %1141 = vmatpush2.msra.mxu0 0.0
        %1142 = vmatprep.subr.mxu0 0.0
        %1143 = vmatpush2.msra.mxu0 0.0
        %1144 = vmatprep.subr.mxu0 0.0
        %1145 = vmatpush2.msra.mxu0 0.0
        %1146 = vmatprep.subr.mxu0 0.0
        %1147 = vmatpush2.msra.mxu0 0.0
        %1148 = vmatprep.mubr.f32.mxu0 0.0
        %1149 = vmatmul.mubr.f32.gmra.mxu0 %v1048
        %v1150 = vpop.f32.mrf.mxu0
        %v1151 = vadd.f32 %v1029, %v1150
        %v1152 = vpop.f32.mrf.mxu0
        %v1153 = vadd.f32 %v1029, %v1152
        %1154 = vmatprep.mubr.f32.mxu0 0.0
        %1155 = vmatmul.mubr.f32.gmra.mxu0 %v1051
        %v1156 = vpop.f32.mrf.mxu0
        %v1157 = vadd.f32 %v1034, %v1156
        %v1158 = vpop.f32.mrf.mxu0
        %v1159 = vadd.f32 %v1034, %v1158
        %1160 = vmatprep.mubr.f32.mxu0 0.0
        %1161 = vmatmul.mubr.f32.gmra.mxu0 %v1054
        %v1162 = vpop.f32.mrf.mxu0
        %v1163 = vadd.f32 %v1039, %v1162
        %v1164 = vpop.f32.mrf.mxu0
        %v1165 = vadd.f32 %v1039, %v1164
        %1166 = vmatprep.mubr.f32.mxu0 0.0
        %1167 = vmatmul.mubr.f32.gmra.mxu0 %v1057
        %v1168 = vpop.f32.mrf.mxu0
        %v1169 = vadd.f32 %v1044, %v1168
        %v1170 = vpop.f32.mrf.mxu0
        %v1171 = vadd.f32 %v1044, %v1170
        %1172 = vdwg.mxu0
        %1173 = vmatprep.subr.mxu0 0.0
        %1174 = vmatpush1.msra.mxu0 0.0
        %1175 = vmatprep.subr.mxu0 0.0
        %1176 = vmatpush1.msra.mxu0 0.0
        %1177 = vmatprep.subr.mxu0 0.0
        %1178 = vmatpush1.msra.mxu0 0.0
        %1179 = vmatprep.subr.mxu0 0.0
        %1180 = vmatpush1.msra.mxu0 0.0
        %1181 = vmatprep.subr.mxu0 0.0
        %1182 = vmatpush1.msra.mxu0 0.0
        %1183 = vmatprep.subr.mxu0 0.0
        %1184 = vmatpush1.msra.mxu0 0.0
        %1185 = vmatprep.subr.mxu0 0.0
        %1186 = vmatpush1.msra.mxu0 0.0
        %1187 = vmatprep.subr.mxu0 0.0
        %1188 = vmatpush1.msra.mxu0 0.0
        %1189 = vmatprep.subr.mxu0 0.0
        %1190 = vmatpush1.msra.mxu0 0.0
        %1191 = vmatprep.subr.mxu0 0.0
        %1192 = vmatpush1.msra.mxu0 0.0
        %1193 = vmatprep.subr.mxu0 0.0
        %1194 = vmatpush1.msra.mxu0 0.0
        %1195 = vmatprep.subr.mxu0 0.0
        %1196 = vmatpush1.msra.mxu0 0.0
        %1197 = vmatprep.subr.mxu0 %v1070
        %1198 = vmatpush1.msra.mxu0 %v1067
        %1199 = vmatprep.subr.mxu0 %v1009
        %1200 = vmatpush1.msra.mxu0 %v1008
        %1201 = vmatprep.subr.mxu0 %v1001
        %1202 = vmatpush1.msra.mxu0 %v1000
        %1203 = vmatprep.subr.mxu0 %v993
        %1204 = vmatpush1.msra.mxu0 %v992
        %1205 = vmatprep.subr.mxu0 0.0
        %1206 = vmatpush2.msra.mxu0 0.0
        %1207 = vmatprep.subr.mxu0 0.0
        %1208 = vmatpush2.msra.mxu0 0.0
        %1209 = vmatprep.subr.mxu0 0.0
        %1210 = vmatpush2.msra.mxu0 0.0
        %1211 = vmatprep.subr.mxu0 0.0
        %1212 = vmatpush2.msra.mxu0 0.0
        %1213 = vmatprep.subr.mxu0 0.0
        %1214 = vmatpush2.msra.mxu0 0.0
        %1215 = vmatprep.subr.mxu0 0.0
        %1216 = vmatpush2.msra.mxu0 0.0
        %1217 = vmatprep.subr.mxu0 0.0
        %1218 = vmatpush2.msra.mxu0 0.0
        %1219 = vmatprep.subr.mxu0 0.0
        %1220 = vmatpush2.msra.mxu0 0.0
        %1221 = vmatprep.subr.mxu0 0.0
        %1222 = vmatpush2.msra.mxu0 0.0
        %1223 = vmatprep.subr.mxu0 0.0
        %1224 = vmatpush2.msra.mxu0 0.0
        %1225 = vmatprep.subr.mxu0 0.0
        %1226 = vmatpush2.msra.mxu0 0.0
        %1227 = vmatprep.subr.mxu0 0.0
        %1228 = vmatpush2.msra.mxu0 0.0
        %1229 = vmatprep.subr.mxu0 0.0
        %1230 = vmatpush2.msra.mxu0 0.0
        %1231 = vmatprep.subr.mxu0 0.0
        %1232 = vmatpush2.msra.mxu0 0.0
        %1233 = vmatprep.subr.mxu0 0.0
        %1234 = vmatpush2.msra.mxu0 0.0
        %1235 = vmatprep.subr.mxu0 0.0
        %1236 = vmatpush2.msra.mxu0 0.0
        %1237 = vmatprep.mubr.f32.mxu0 0.0
        %1238 = vmatmul.mubr.f32.gmra.mxu0 %v1048
        %v1239 = vpop.f32.mrf.mxu0
        %v1240 = vadd.f32 %v1029, %v1239
        %v1241 = vpop.f32.mrf.mxu0
        %v1242 = vadd.f32 %v1029, %v1241
        %1243 = vmatprep.mubr.f32.mxu0 0.0
        %1244 = vmatmul.mubr.f32.gmra.mxu0 %v1051
        %v1245 = vpop.f32.mrf.mxu0
        %v1246 = vadd.f32 %v1034, %v1245
        %v1247 = vpop.f32.mrf.mxu0
        %v1248 = vadd.f32 %v1034, %v1247
        %1249 = vmatprep.mubr.f32.mxu0 0.0
        %1250 = vmatmul.mubr.f32.gmra.mxu0 %v1054
        %v1251 = vpop.f32.mrf.mxu0
        %v1252 = vadd.f32 %v1039, %v1251
        %v1253 = vpop.f32.mrf.mxu0
        %v1254 = vadd.f32 %v1039, %v1253
        %1255 = vmatprep.mubr.f32.mxu0 0.0
        %1256 = vmatmul.mubr.f32.gmra.mxu0 %v1057
        %v1257 = vpop.f32.mrf.mxu0
        %v1258 = vadd.f32 %v1044, %v1257
        %v1259 = vpop.f32.mrf.mxu0
        %v1260 = vadd.f32 %v1044, %v1259
        %1261 = vdwg.mxu0
        %1262 = vmatprep.subr.mxu0 0.0
        %1263 = vmatpush1.msra.mxu0 0.0
        %1264 = vmatprep.subr.mxu0 0.0
        %1265 = vmatpush1.msra.mxu0 0.0
        %1266 = vmatprep.subr.mxu0 0.0
        %1267 = vmatpush1.msra.mxu0 0.0
        %1268 = vmatprep.subr.mxu0 0.0
        %1269 = vmatpush1.msra.mxu0 0.0
        %1270 = vmatprep.subr.mxu0 0.0
        %1271 = vmatpush1.msra.mxu0 0.0
        %1272 = vmatprep.subr.mxu0 0.0
        %1273 = vmatpush1.msra.mxu0 0.0
        %1274 = vmatprep.subr.mxu0 0.0
        %1275 = vmatpush1.msra.mxu0 0.0
        %1276 = vmatprep.subr.mxu0 0.0
        %1277 = vmatpush1.msra.mxu0 0.0
        %1278 = vmatprep.subr.mxu0 0.0
        %1279 = vmatpush1.msra.mxu0 0.0
        %1280 = vmatprep.subr.mxu0 0.0
        %1281 = vmatpush1.msra.mxu0 0.0
        %1282 = vmatprep.subr.mxu0 0.0
        %1283 = vmatpush1.msra.mxu0 0.0
        %1284 = vmatprep.subr.mxu0 0.0
        %1285 = vmatpush1.msra.mxu0 0.0
        %1286 = vmatprep.subr.mxu0 %v1076
        %1287 = vmatpush1.msra.mxu0 %v1073
        %1288 = vmatprep.subr.mxu0 %v1011
        %1289 = vmatpush1.msra.mxu0 %v1010
        %1290 = vmatprep.subr.mxu0 %v1003
        %1291 = vmatpush1.msra.mxu0 %v1002
        %1292 = vmatprep.subr.mxu0 %v995
        %1293 = vmatpush1.msra.mxu0 %v994
        %1294 = vmatprep.subr.mxu0 0.0
        %1295 = vmatpush2.msra.mxu0 0.0
        %1296 = vmatprep.subr.mxu0 0.0
        %1297 = vmatpush2.msra.mxu0 0.0
        %1298 = vmatprep.subr.mxu0 0.0
        %1299 = vmatpush2.msra.mxu0 0.0
        %1300 = vmatprep.subr.mxu0 0.0
        %1301 = vmatpush2.msra.mxu0 0.0
        %1302 = vmatprep.subr.mxu0 0.0
        %1303 = vmatpush2.msra.mxu0 0.0
        %1304 = vmatprep.subr.mxu0 0.0
        %1305 = vmatpush2.msra.mxu0 0.0
        %1306 = vmatprep.subr.mxu0 0.0
        %1307 = vmatpush2.msra.mxu0 0.0
        %1308 = vmatprep.subr.mxu0 0.0
        %1309 = vmatpush2.msra.mxu0 0.0
        %1310 = vmatprep.subr.mxu0 0.0
        %1311 = vmatpush2.msra.mxu0 0.0
        %1312 = vmatprep.subr.mxu0 0.0
        %1313 = vmatpush2.msra.mxu0 0.0
        %1314 = vmatprep.subr.mxu0 0.0
        %1315 = vmatpush2.msra.mxu0 0.0
        %1316 = vmatprep.subr.mxu0 0.0
        %1317 = vmatpush2.msra.mxu0 0.0
        %1318 = vmatprep.subr.mxu0 0.0
        %1319 = vmatpush2.msra.mxu0 0.0
        %1320 = vmatprep.subr.mxu0 0.0
        %1321 = vmatpush2.msra.mxu0 0.0
        %1322 = vmatprep.subr.mxu0 0.0
        %1323 = vmatpush2.msra.mxu0 0.0
        %1324 = vmatprep.subr.mxu0 0.0
        %1325 = vmatpush2.msra.mxu0 0.0
        %1326 = vmatprep.mubr.f32.mxu0 0.0
        %1327 = vmatmul.mubr.f32.gmra.mxu0 %v1048
        %v1328 = vpop.f32.mrf.mxu0
        %v1329 = vadd.f32 %v1029, %v1328
        %v1330 = vpop.f32.mrf.mxu0
        %v1331 = vadd.f32 %v1029, %v1330
        %1332 = vmatprep.mubr.f32.mxu0 0.0
        %1333 = vmatmul.mubr.f32.gmra.mxu0 %v1051
        %v1334 = vpop.f32.mrf.mxu0
        %v1335 = vadd.f32 %v1034, %v1334
        %v1336 = vpop.f32.mrf.mxu0
        %v1337 = vadd.f32 %v1034, %v1336
        %1338 = vmatprep.mubr.f32.mxu0 0.0
        %1339 = vmatmul.mubr.f32.gmra.mxu0 %v1054
        %v1340 = vpop.f32.mrf.mxu0
        %v1341 = vadd.f32 %v1039, %v1340
        %v1342 = vpop.f32.mrf.mxu0
        %v1343 = vadd.f32 %v1039, %v1342
        %1344 = vmatprep.mubr.f32.mxu0 0.0
        %1345 = vmatmul.mubr.f32.gmra.mxu0 %v1057
        %v1346 = vpop.f32.mrf.mxu0
        %v1347 = vadd.f32 %v1044, %v1346
        %v1348 = vpop.f32.mrf.mxu0
        %v1349 = vadd.f32 %v1044, %v1348
        %1350 = vdwg.mxu0
        %1351 = vmatprep.subr.mxu0 0.0
        %1352 = vmatpush1.msra.mxu0 0.0
        %1353 = vmatprep.subr.mxu0 0.0
        %1354 = vmatpush1.msra.mxu0 0.0
        %1355 = vmatprep.subr.mxu0 0.0
        %1356 = vmatpush1.msra.mxu0 0.0
        %1357 = vmatprep.subr.mxu0 0.0
        %1358 = vmatpush1.msra.mxu0 0.0
        %1359 = vmatprep.subr.mxu0 0.0
        %1360 = vmatpush1.msra.mxu0 0.0
        %1361 = vmatprep.subr.mxu0 0.0
        %1362 = vmatpush1.msra.mxu0 0.0
        %1363 = vmatprep.subr.mxu0 0.0
        %1364 = vmatpush1.msra.mxu0 0.0
        %1365 = vmatprep.subr.mxu0 0.0
        %1366 = vmatpush1.msra.mxu0 0.0
        %1367 = vmatprep.subr.mxu0 0.0
        %1368 = vmatpush1.msra.mxu0 0.0
        %1369 = vmatprep.subr.mxu0 0.0
        %1370 = vmatpush1.msra.mxu0 0.0
        %1371 = vmatprep.subr.mxu0 0.0
        %1372 = vmatpush1.msra.mxu0 0.0
        %1373 = vmatprep.subr.mxu0 0.0
        %1374 = vmatpush1.msra.mxu0 0.0
        %1375 = vmatprep.subr.mxu0 %v1082
        %1376 = vmatpush1.msra.mxu0 %v1079
        %1377 = vmatprep.subr.mxu0 %v1013
        %1378 = vmatpush1.msra.mxu0 %v1012
        %1379 = vmatprep.subr.mxu0 %v1005
        %1380 = vmatpush1.msra.mxu0 %v1004
        %1381 = vmatprep.subr.mxu0 %v997
        %1382 = vmatpush1.msra.mxu0 %v996
        %1383 = vmatprep.subr.mxu0 0.0
        %1384 = vmatpush2.msra.mxu0 0.0
        %1385 = vmatprep.subr.mxu0 0.0
        %1386 = vmatpush2.msra.mxu0 0.0
        %1387 = vmatprep.subr.mxu0 0.0
        %1388 = vmatpush2.msra.mxu0 0.0
        %1389 = vmatprep.subr.mxu0 0.0
        %1390 = vmatpush2.msra.mxu0 0.0
        %1391 = vmatprep.subr.mxu0 0.0
        %1392 = vmatpush2.msra.mxu0 0.0
        %1393 = vmatprep.subr.mxu0 0.0
        %1394 = vmatpush2.msra.mxu0 0.0
        %1395 = vmatprep.subr.mxu0 0.0
        %1396 = vmatpush2.msra.mxu0 0.0
        %1397 = vmatprep.subr.mxu0 0.0
        %1398 = vmatpush2.msra.mxu0 0.0
        %1399 = vmatprep.subr.mxu0 0.0
        %1400 = vmatpush2.msra.mxu0 0.0
        %1401 = vmatprep.subr.mxu0 0.0
        %1402 = vmatpush2.msra.mxu0 0.0
        %1403 = vmatprep.subr.mxu0 0.0
        %1404 = vmatpush2.msra.mxu0 0.0
        %1405 = vmatprep.subr.mxu0 0.0
        %1406 = vmatpush2.msra.mxu0 0.0
        %1407 = vmatprep.subr.mxu0 0.0
        %1408 = vmatpush2.msra.mxu0 0.0
        %1409 = vmatprep.subr.mxu0 0.0
        %1410 = vmatpush2.msra.mxu0 0.0
        %1411 = vmatprep.subr.mxu0 0.0
        %1412 = vmatpush2.msra.mxu0 0.0
        %1413 = vmatprep.subr.mxu0 0.0
        %1414 = vmatpush2.msra.mxu0 0.0
        %1415 = vmatprep.mubr.f32.mxu0 0.0
        %1416 = vmatmul.mubr.f32.gmra.mxu0 %v1048
        %v1417 = vpop.f32.mrf.mxu0
        %v1418 = vadd.f32 %v1029, %v1417
        %v1419 = vpop.f32.mrf.mxu0
        %v1420 = vadd.f32 %v1029, %v1419
        %1421 = vmatprep.mubr.f32.mxu0 0.0
        %1422 = vmatmul.mubr.f32.gmra.mxu0 %v1051
        %v1423 = vpop.f32.mrf.mxu0
        %v1424 = vadd.f32 %v1034, %v1423
        %v1425 = vpop.f32.mrf.mxu0
        %v1426 = vadd.f32 %v1034, %v1425
        %1427 = vmatprep.mubr.f32.mxu0 0.0
        %1428 = vmatmul.mubr.f32.gmra.mxu0 %v1054
        %v1429 = vpop.f32.mrf.mxu0
        %v1430 = vadd.f32 %v1039, %v1429
        %v1431 = vpop.f32.mrf.mxu0
        %v1432 = vadd.f32 %v1039, %v1431
        %1433 = vmatprep.mubr.f32.mxu0 0.0
        %1434 = vmatmul.mubr.f32.gmra.mxu0 %v1057
        %v1435 = vpop.f32.mrf.mxu0
        %v1436 = vadd.f32 %v1044, %v1435
        %v1437 = vpop.f32.mrf.mxu0
        %v1438 = vadd.f32 %v1044, %v1437
        %1439 = vdwg.mxu0
        %v1440 = vmax.f32 %v1151, 0.0
        %v1441 = vmax.f32 %v1153, 0.0
        %v1442 = vmax.f32 %v1240, 0.0
        %v1443 = vmax.f32 %v1242, 0.0
        %v1444 = vmax.f32 %v1329, 0.0
        %v1445 = vmax.f32 %v1331, 0.0
        %v1446 = vmax.f32 %v1418, 0.0
        %v1447 = vmax.f32 %v1420, 0.0
        %v1448 = vmax.f32 %v1157, 0.0
        %v1449 = vmax.f32 %v1159, 0.0
        %v1450 = vmax.f32 %v1246, 0.0
        %v1451 = vmax.f32 %v1248, 0.0
        %v1452 = vmax.f32 %v1335, 0.0
        %v1453 = vmax.f32 %v1337, 0.0
        %v1454 = vmax.f32 %v1424, 0.0
        %v1455 = vmax.f32 %v1426, 0.0
        %v1456 = vmax.f32 %v1163, 0.0
        %v1457 = vmax.f32 %v1165, 0.0
        %v1458 = vmax.f32 %v1252, 0.0
        %v1459 = vmax.f32 %v1254, 0.0
        %v1460 = vmax.f32 %v1341, 0.0
        %v1461 = vmax.f32 %v1343, 0.0
        %v1462 = vmax.f32 %v1430, 0.0
        %v1463 = vmax.f32 %v1432, 0.0
        %v1464 = vmax.f32 %v1169, 0.0
        %v1465 = vmax.f32 %v1171, 0.0
        %v1466 = vmax.f32 %v1258, 0.0
        %v1467 = vmax.f32 %v1260, 0.0
        %v1468 = vmax.f32 %v1347, 0.0
        %v1469 = vmax.f32 %v1349, 0.0
        %v1470 = vmax.f32 %v1436, 0.0
        %v1471 = vmax.f32 %v1438, 0.0
        %v1472 = vpack.c.bf16 %v1448, %v1440
        %v1473 = vpack.c.bf16 %v1449, %v1441
        %v1474 = vpack.c.bf16 %v1450, %v1442
        %v1475 = vpack.c.bf16 %v1451, %v1443
        %v1476 = vpack.c.bf16 %v1452, %v1444
        %v1477 = vpack.c.bf16 %v1453, %v1445
        %v1478 = vpack.c.bf16 %v1454, %v1446
        %v1479 = vpack.c.bf16 %v1455, %v1447
        %v1480 = vpack.c.bf16 %v1464, %v1456
        %v1481 = vpack.c.bf16 %v1465, %v1457
        %v1482 = vpack.c.bf16 %v1466, %v1458
        %v1483 = vpack.c.bf16 %v1467, %v1459
        %v1484 = vpack.c.bf16 %v1468, %v1460
        %v1485 = vpack.c.bf16 %v1469, %v1461
        %v1486 = vpack.c.bf16 %v1470, %v1462
        %v1487 = vpack.c.bf16 %v1471, %v1463
        %v1504 = vunpack.c.l.b16 %v1472
        %v1505 = vunpack.c.l.b16 %v1473
        %v1506 = vunpack.c.l.b16 %v1474
        %v1507 = vunpack.c.l.b16 %v1475
        %v1508 = vunpack.c.l.b16 %v1476
        %v1509 = vunpack.c.l.b16 %v1477
        %v1510 = vunpack.c.l.b16 %v1478
        %v1511 = vunpack.c.l.b16 %v1479
        %v1512 = vunpack.c.h.b16 %v1472
        %v1513 = vunpack.c.h.b16 %v1473
        %v1514 = vunpack.c.h.b16 %v1474
        %v1515 = vunpack.c.h.b16 %v1475
        %v1516 = vunpack.c.h.b16 %v1476
        %v1517 = vunpack.c.h.b16 %v1477
        %v1518 = vunpack.c.h.b16 %v1478
        %v1519 = vunpack.c.h.b16 %v1479
        %v1520 = vunpack.c.l.b16 %v1480
        %v1521 = vunpack.c.l.b16 %v1481
        %v1522 = vunpack.c.l.b16 %v1482
        %v1523 = vunpack.c.l.b16 %v1483
        %v1524 = vunpack.c.l.b16 %v1484
        %v1525 = vunpack.c.l.b16 %v1485
        %v1526 = vunpack.c.l.b16 %v1486
        %v1527 = vunpack.c.l.b16 %v1487
        %v1528 = vunpack.c.h.b16 %v1480
        %v1529 = vunpack.c.h.b16 %v1481
        %v1530 = vunpack.c.h.b16 %v1482
        %v1531 = vunpack.c.h.b16 %v1483
        %v1532 = vunpack.c.h.b16 %v1484
        %v1533 = vunpack.c.h.b16 %v1485
        %v1534 = vunpack.c.h.b16 %v1486
        %v1535 = vunpack.c.h.b16 %v1487
        %v1536 = vpack.c.b16 %v1505, %v1504
        %v1537 = vpack.c.b16 %v1507, %v1506
        %v1538 = vpack.c.b16 %v1509, %v1508
        %v1539 = vpack.c.b16 %v1511, %v1510
        %v1540 = vpack.c.b16 %v1513, %v1512
        %v1541 = vpack.c.b16 %v1515, %v1514
        %v1542 = vpack.c.b16 %v1517, %v1516
        %v1543 = vpack.c.b16 %v1519, %v1518
        %v1544 = vpack.c.b16 %v1521, %v1520
        %v1545 = vpack.c.b16 %v1523, %v1522
        %v1546 = vpack.c.b16 %v1525, %v1524
        %v1547 = vpack.c.b16 %v1527, %v1526
        %v1548 = vpack.c.b16 %v1529, %v1528
        %v1549 = vpack.c.b16 %v1531, %v1530
        %v1550 = vpack.c.b16 %v1533, %v1532
        %v1551 = vpack.c.b16 %v1535, %v1534
        %1568 = vst [vmem:[#allocation2] sm:$0xff] %v1536
        %1569 = vst [vmem:[#allocation2 + $0x8] sm:$0xff] %v1537
        %1570 = vst [vmem:[#allocation2 + $0x10] sm:$0xff] %v1538
        %1571 = vst [vmem:[#allocation2 + $0x18] sm:$0xff] %v1539
        %1572 = vst [vmem:[#allocation2 + $0x24] sm:$0xff] %v1540
        %1573 = vst [vmem:[#allocation2 + $0x2c] sm:$0xff] %v1541
        %1574 = vst [vmem:[#allocation2 + $0x34] sm:$0xff] %v1542
        %1575 = vst [vmem:[#allocation2 + $0x3c] sm:$0xff] %v1543
        %1576 = vst [vmem:[#allocation2 + $0x48] sm:$0xff] %v1544
        %1577 = vst [vmem:[#allocation2 + $0x50] sm:$0xff] %v1545
        %1578 = vst [vmem:[#allocation2 + $0x58] sm:$0xff] %v1546
        %1579 = vst [vmem:[#allocation2 + $0x60] sm:$0xff] %v1547
        %1580 = vst [vmem:[#allocation2 + $0x6c] sm:$0xff] %v1548
        %1581 = vst [vmem:[#allocation2 + $0x74] sm:$0xff] %v1549
        %1582 = vst [vmem:[#allocation2 + $0x7c] sm:$0xff] %v1550
        %1583 = vst [vmem:[#allocation2 + $0x84] sm:$0xff] %v1551
        %v1584 = vld [vmem:[#allocation2] sm:$0xff]
        %v1585 = vld [vmem:[#allocation2 + $0x8] sm:$0xff]
        %v1586 = vld [vmem:[#allocation2 + $0x10] sm:$0xff]
        %v1587 = vld [vmem:[#allocation2 + $0x18] sm:$0xff]
        %v1588 = vld [vmem:[#allocation2 + $0x24] sm:$0xff]
        %v1589 = vld [vmem:[#allocation2 + $0x2c] sm:$0xff]
        %v1590 = vld [vmem:[#allocation2 + $0x34] sm:$0xff]
        %v1591 = vld [vmem:[#allocation2 + $0x3c] sm:$0xff]
        %v1592 = vld [vmem:[#allocation2 + $0x48] sm:$0xff]
        %v1593 = vld [vmem:[#allocation2 + $0x50] sm:$0xff]
        %v1594 = vld [vmem:[#allocation2 + $0x58] sm:$0xff]
        %v1595 = vld [vmem:[#allocation2 + $0x60] sm:$0xff]
        %v1596 = vld [vmem:[#allocation2 + $0x6c] sm:$0xff]
        %v1597 = vld [vmem:[#allocation2 + $0x74] sm:$0xff]
        %v1598 = vld [vmem:[#allocation2 + $0x7c] sm:$0xff]
        %v1599 = vld [vmem:[#allocation2 + $0x84] sm:$0xff]
        %1600 = vst [vmem:[#allocation5] sm:$0xff] %v1584
        %1601 = vst [vmem:[#allocation5 + $0x8] sm:$0xff] %v1585
        %1602 = vst [vmem:[#allocation5 + $0x10] sm:$0xff] %v1586
        %1603 = vst [vmem:[#allocation5 + $0x18] sm:$0xff] %v1587
        %1604 = vst [vmem:[#allocation5 + $0x20] sm:$0xff] %v1588
        %1605 = vst [vmem:[#allocation5 + $0x28] sm:$0xff] %v1589
        %1606 = vst [vmem:[#allocation5 + $0x30] sm:$0xff] %v1590
        %1607 = vst [vmem:[#allocation5 + $0x38] sm:$0xff] %v1591
        %1608 = vst [vmem:[#allocation5 + $0x40] sm:$0xff] %v1592
        %1609 = vst [vmem:[#allocation5 + $0x48] sm:$0xff] %v1593
        %1610 = vst [vmem:[#allocation5 + $0x50] sm:$0xff] %v1594
        %1611 = vst [vmem:[#allocation5 + $0x58] sm:$0xff] %v1595
        %1612 = vst [vmem:[#allocation5 + $0x60] sm:$0xff] %v1596
        %1613 = vst [vmem:[#allocation5 + $0x68] sm:$0xff] %v1597
        %1614 = vst [vmem:[#allocation5 + $0x70] sm:$0xff] %v1598
        %1615 = vst [vmem:[#allocation5 + $0x78] sm:$0xff] %v1599
        %v1616 = vld [vmem:[#allocation2] sm:$0xff]
        %v1617 = vld [vmem:[#allocation2 + $0x8] sm:$0xff]
        %v1618 = vld [vmem:[#allocation2 + $0x10] sm:$0xff]
        %v1619 = vld [vmem:[#allocation2 + $0x18] sm:$0xff]
        %v1620 = vld [vmem:[#allocation2 + $0x20] sm:$0xf]
        %v1621 = vld [vmem:[#allocation2 + $0x24] sm:$0xff]
        %v1622 = vld [vmem:[#allocation2 + $0x2c] sm:$0xff]
        %v1623 = vld [vmem:[#allocation2 + $0x34] sm:$0xff]
        %v1624 = vld [vmem:[#allocation2 + $0x3c] sm:$0xff]
        %v1625 = vld [vmem:[#allocation2 + $0x44] sm:$0xf]
        %v1626 = vld [vmem:[#allocation2 + $0x48] sm:$0xff]
        %v1627 = vld [vmem:[#allocation2 + $0x50] sm:$0xff]
        %v1628 = vld [vmem:[#allocation2 + $0x58] sm:$0xff]
        %v1629 = vld [vmem:[#allocation2 + $0x60] sm:$0xff]
        %v1630 = vld [vmem:[#allocation2 + $0x68] sm:$0xf]
        %v1631 = vld [vmem:[#allocation2 + $0x6c] sm:$0xff]
        %v1632 = vld [vmem:[#allocation2 + $0x74] sm:$0xff]
        %v1633 = vld [vmem:[#allocation2 + $0x7c] sm:$0xff]
        %v1634 = vld [vmem:[#allocation2 + $0x84] sm:$0xff]
        %v1635 = vld [vmem:[#allocation2 + $0x8c] sm:$0xf]
        %1656 = vrot.lane.b32.xlu0 %v1616, 127
        %v1657 = vpop.permute.xlu0 %1656
        %1658 = vrot.lane.b32.xlu0 %v1617, 127
        %v1659 = vpop.permute.xlu0 %1658
        %1660 = vrot.lane.b32.xlu0 %v1618, 127
        %v1661 = vpop.permute.xlu0 %1660
        %1662 = vrot.lane.b32.xlu0 %v1619, 127
        %v1663 = vpop.permute.xlu0 %1662
        %1664 = vrot.lane.b32.xlu0 %v1620, 127
        %v1665 = vpop.permute.xlu0 %1664
        %1666 = vrot.lane.b32.xlu0 %v1621, 127
        %v1667 = vpop.permute.xlu0 %1666
        %1668 = vrot.lane.b32.xlu0 %v1622, 127
        %v1669 = vpop.permute.xlu0 %1668
        %1670 = vrot.lane.b32.xlu0 %v1623, 127
        %v1671 = vpop.permute.xlu0 %1670
        %1672 = vrot.lane.b32.xlu0 %v1624, 127
        %v1673 = vpop.permute.xlu0 %1672
        %1674 = vrot.lane.b32.xlu0 %v1625, 127
        %v1675 = vpop.permute.xlu0 %1674
        %1676 = vrot.lane.b32.xlu0 %v1626, 127
        %v1677 = vpop.permute.xlu0 %1676
        %1678 = vrot.lane.b32.xlu0 %v1627, 127
        %v1679 = vpop.permute.xlu0 %1678
        %1680 = vrot.lane.b32.xlu0 %v1628, 127
        %v1681 = vpop.permute.xlu0 %1680
        %1682 = vrot.lane.b32.xlu0 %v1629, 127
        %v1683 = vpop.permute.xlu0 %1682
        %1684 = vrot.lane.b32.xlu0 %v1630, 127
        %v1685 = vpop.permute.xlu0 %1684
        %1686 = vrot.lane.b32.xlu0 %v1631, 127
        %v1687 = vpop.permute.xlu0 %1686
        %1688 = vrot.lane.b32.xlu0 %v1632, 127
        %v1689 = vpop.permute.xlu0 %1688
        %1690 = vrot.lane.b32.xlu0 %v1633, 127
        %v1691 = vpop.permute.xlu0 %1690
        %1692 = vrot.lane.b32.xlu0 %v1634, 127
        %v1693 = vpop.permute.xlu0 %1692
        %1694 = vrot.lane.b32.xlu0 %v1635, 127
        %v1695 = vpop.permute.xlu0 %1694
        %v1696 = vrot.slane %v1657, 4
        %v1697 = vrot.slane %v1659, 4
        %v1698 = vrot.slane %v1661, 4
        %v1699 = vrot.slane %v1663, 4
        %v1700 = vrot.slane %v1665, 4
        %v1701 = vrot.slane %v1667, 4
        %v1702 = vrot.slane %v1669, 4
        %v1703 = vrot.slane %v1671, 4
        %v1704 = vrot.slane %v1673, 4
        %v1705 = vrot.slane %v1675, 4
        %v1706 = vrot.slane %v1677, 4
        %v1707 = vrot.slane %v1679, 4
        %v1708 = vrot.slane %v1681, 4
        %v1709 = vrot.slane %v1683, 4
        %v1710 = vrot.slane %v1685, 4
        %v1711 = vrot.slane %v1687, 4
        %v1712 = vrot.slane %v1689, 4
        %v1713 = vrot.slane %v1691, 4
        %v1714 = vrot.slane %v1693, 4
        %v1715 = vrot.slane %v1695, 4
        %vm1716 = vcmask 1043456
        %v1717 = vsel %vm1716, %v1696, %v1697
        %vm1718 = vcmask 1039360
        %v1719 = vsel %vm1718, %v1657, %v1717
        %v1720 = vsel %vm1716, %v1697, %v1698
        %v1721 = vsel %vm1718, %v1659, %v1720
        %v1722 = vsel %vm1716, %v1698, %v1699
        %v1723 = vsel %vm1718, %v1661, %v1722
        %v1724 = vsel %vm1716, %v1699, %v1700
        %v1725 = vsel %vm1718, %v1663, %v1724
        %v1726 = vsel %vm1716, %v1701, %v1702
        %v1727 = vsel %vm1718, %v1667, %v1726
        %v1728 = vsel %vm1716, %v1702, %v1703
        %v1729 = vsel %vm1718, %v1669, %v1728
        %v1730 = vsel %vm1716, %v1703, %v1704
        %v1731 = vsel %vm1718, %v1671, %v1730
        %v1732 = vsel %vm1716, %v1704, %v1705
        %v1733 = vsel %vm1718, %v1673, %v1732
        %v1734 = vsel %vm1716, %v1706, %v1707
        %v1735 = vsel %vm1718, %v1677, %v1734
        %v1736 = vsel %vm1716, %v1707, %v1708
        %v1737 = vsel %vm1718, %v1679, %v1736
        %v1738 = vsel %vm1716, %v1708, %v1709
        %v1739 = vsel %vm1718, %v1681, %v1738
        %v1740 = vsel %vm1716, %v1709, %v1710
        %v1741 = vsel %vm1718, %v1683, %v1740
        %v1742 = vsel %vm1716, %v1711, %v1712
        %v1743 = vsel %vm1718, %v1687, %v1742
        %v1744 = vsel %vm1716, %v1712, %v1713
        %v1745 = vsel %vm1718, %v1689, %v1744
        %v1746 = vsel %vm1716, %v1713, %v1714
        %v1747 = vsel %vm1718, %v1691, %v1746
        %v1748 = vsel %vm1716, %v1714, %v1715
        %v1749 = vsel %vm1718, %v1693, %v1748
        %1766 = vst [vmem:[#allocation5 + $0x80] sm:$0xff] %v1719
        %1767 = vst [vmem:[#allocation5 + $0x88] sm:$0xff] %v1721
        %1768 = vst [vmem:[#allocation5 + $0x90] sm:$0xff] %v1723
        %1769 = vst [vmem:[#allocation5 + $0x98] sm:$0xff] %v1725
        %1770 = vst [vmem:[#allocation5 + $0xa0] sm:$0xff] %v1727
        %1771 = vst [vmem:[#allocation5 + $0xa8] sm:$0xff] %v1729
        %1772 = vst [vmem:[#allocation5 + $0xb0] sm:$0xff] %v1731
        %1773 = vst [vmem:[#allocation5 + $0xb8] sm:$0xff] %v1733
        %1774 = vst [vmem:[#allocation5 + $0xc0] sm:$0xff] %v1735
        %1775 = vst [vmem:[#allocation5 + $0xc8] sm:$0xff] %v1737
        %1776 = vst [vmem:[#allocation5 + $0xd0] sm:$0xff] %v1739
        %1777 = vst [vmem:[#allocation5 + $0xd8] sm:$0xff] %v1741
        %1778 = vst [vmem:[#allocation5 + $0xe0] sm:$0xff] %v1743
        %1779 = vst [vmem:[#allocation5 + $0xe8] sm:$0xff] %v1745
        %1780 = vst [vmem:[#allocation5 + $0xf0] sm:$0xff] %v1747
        %1781 = vst [vmem:[#allocation5 + $0xf8] sm:$0xff] %v1749
        %v1782 = vld [vmem:[#allocation2] sm:$0xff]
        %v1783 = vld [vmem:[#allocation2 + $0x8] sm:$0xff]
        %v1784 = vld [vmem:[#allocation2 + $0x10] sm:$0xff]
        %v1785 = vld [vmem:[#allocation2 + $0x18] sm:$0xff]
        %v1786 = vld [vmem:[#allocation2 + $0x20] sm:$0xf]
        %v1787 = vld [vmem:[#allocation2 + $0x24] sm:$0xff]
        %v1788 = vld [vmem:[#allocation2 + $0x2c] sm:$0xff]
        %v1789 = vld [vmem:[#allocation2 + $0x34] sm:$0xff]
        %v1790 = vld [vmem:[#allocation2 + $0x3c] sm:$0xff]
        %v1791 = vld [vmem:[#allocation2 + $0x44] sm:$0xf]
        %v1792 = vld [vmem:[#allocation2 + $0x48] sm:$0xff]
        %v1793 = vld [vmem:[#allocation2 + $0x50] sm:$0xff]
        %v1794 = vld [vmem:[#allocation2 + $0x58] sm:$0xff]
        %v1795 = vld [vmem:[#allocation2 + $0x60] sm:$0xff]
        %v1796 = vld [vmem:[#allocation2 + $0x68] sm:$0xf]
        %v1797 = vld [vmem:[#allocation2 + $0x6c] sm:$0xff]
        %v1798 = vld [vmem:[#allocation2 + $0x74] sm:$0xff]
        %v1799 = vld [vmem:[#allocation2 + $0x7c] sm:$0xff]
        %v1800 = vld [vmem:[#allocation2 + $0x84] sm:$0xff]
        %v1801 = vld [vmem:[#allocation2 + $0x8c] sm:$0xf]
        %1822 = vrot.lane.b32.xlu0 %v1782, 126
        %v1823 = vpop.permute.xlu0 %1822
        %1824 = vrot.lane.b32.xlu0 %v1783, 126
        %v1825 = vpop.permute.xlu0 %1824
        %1826 = vrot.lane.b32.xlu0 %v1784, 126
        %v1827 = vpop.permute.xlu0 %1826
        %1828 = vrot.lane.b32.xlu0 %v1785, 126
        %v1829 = vpop.permute.xlu0 %1828
        %1830 = vrot.lane.b32.xlu0 %v1786, 126
        %v1831 = vpop.permute.xlu0 %1830
        %1832 = vrot.lane.b32.xlu0 %v1787, 126
        %v1833 = vpop.permute.xlu0 %1832
        %1834 = vrot.lane.b32.xlu0 %v1788, 126
        %v1835 = vpop.permute.xlu0 %1834
        %1836 = vrot.lane.b32.xlu0 %v1789, 126
        %v1837 = vpop.permute.xlu0 %1836
        %1838 = vrot.lane.b32.xlu0 %v1790, 126
        %v1839 = vpop.permute.xlu0 %1838
        %1840 = vrot.lane.b32.xlu0 %v1791, 126
        %v1841 = vpop.permute.xlu0 %1840
        %1842 = vrot.lane.b32.xlu0 %v1792, 126
        %v1843 = vpop.permute.xlu0 %1842
        %1844 = vrot.lane.b32.xlu0 %v1793, 126
        %v1845 = vpop.permute.xlu0 %1844
        %1846 = vrot.lane.b32.xlu0 %v1794, 126
        %v1847 = vpop.permute.xlu0 %1846
        %1848 = vrot.lane.b32.xlu0 %v1795, 126
        %v1849 = vpop.permute.xlu0 %1848
        %1850 = vrot.lane.b32.xlu0 %v1796, 126
        %v1851 = vpop.permute.xlu0 %1850
        %1852 = vrot.lane.b32.xlu0 %v1797, 126
        %v1853 = vpop.permute.xlu0 %1852
        %1854 = vrot.lane.b32.xlu0 %v1798, 126
        %v1855 = vpop.permute.xlu0 %1854
        %1856 = vrot.lane.b32.xlu0 %v1799, 126
        %v1857 = vpop.permute.xlu0 %1856
        %1858 = vrot.lane.b32.xlu0 %v1800, 126
        %v1859 = vpop.permute.xlu0 %1858
        %1860 = vrot.lane.b32.xlu0 %v1801, 126
        %v1861 = vpop.permute.xlu0 %1860
        %v1862 = vrot.slane %v1823, 4
        %v1863 = vrot.slane %v1825, 4
        %v1864 = vrot.slane %v1827, 4
        %v1865 = vrot.slane %v1829, 4
        %v1866 = vrot.slane %v1831, 4
        %v1867 = vrot.slane %v1833, 4
        %v1868 = vrot.slane %v1835, 4
        %v1869 = vrot.slane %v1837, 4
        %v1870 = vrot.slane %v1839, 4
        %v1871 = vrot.slane %v1841, 4
        %v1872 = vrot.slane %v1843, 4
        %v1873 = vrot.slane %v1845, 4
        %v1874 = vrot.slane %v1847, 4
        %v1875 = vrot.slane %v1849, 4
        %v1876 = vrot.slane %v1851, 4
        %v1877 = vrot.slane %v1853, 4
        %v1878 = vrot.slane %v1855, 4
        %v1879 = vrot.slane %v1857, 4
        %v1880 = vrot.slane %v1859, 4
        %v1881 = vrot.slane %v1861, 4
        %v1882 = vsel %vm1716, %v1862, %v1863
        %vm1883 = vcmask 1031168
        %v1884 = vsel %vm1883, %v1823, %v1882
        %v1885 = vsel %vm1716, %v1863, %v1864
        %v1886 = vsel %vm1883, %v1825, %v1885
        %v1887 = vsel %vm1716, %v1864, %v1865
        %v1888 = vsel %vm1883, %v1827, %v1887
        %v1889 = vsel %vm1716, %v1865, %v1866
        %v1890 = vsel %vm1883, %v1829, %v1889
        %v1891 = vsel %vm1716, %v1867, %v1868
        %v1892 = vsel %vm1883, %v1833, %v1891
        %v1893 = vsel %vm1716, %v1868, %v1869
        %v1894 = vsel %vm1883, %v1835, %v1893
        %v1895 = vsel %vm1716, %v1869, %v1870
        %v1896 = vsel %vm1883, %v1837, %v1895
        %v1897 = vsel %vm1716, %v1870, %v1871
        %v1898 = vsel %vm1883, %v1839, %v1897
        %v1899 = vsel %vm1716, %v1872, %v1873
        %v1900 = vsel %vm1883, %v1843, %v1899
        %v1901 = vsel %vm1716, %v1873, %v1874
        %v1902 = vsel %vm1883, %v1845, %v1901
        %v1903 = vsel %vm1716, %v1874, %v1875
        %v1904 = vsel %vm1883, %v1847, %v1903
        %v1905 = vsel %vm1716, %v1875, %v1876
        %v1906 = vsel %vm1883, %v1849, %v1905
        %v1907 = vsel %vm1716, %v1877, %v1878
        %v1908 = vsel %vm1883, %v1853, %v1907
        %v1909 = vsel %vm1716, %v1878, %v1879
        %v1910 = vsel %vm1883, %v1855, %v1909
        %v1911 = vsel %vm1716, %v1879, %v1880
        %v1912 = vsel %vm1883, %v1857, %v1911
        %v1913 = vsel %vm1716, %v1880, %v1881
        %v1914 = vsel %vm1883, %v1859, %v1913
        %1931 = vst [vmem:[#allocation5 + $0x100] sm:$0xff] %v1884
        %1932 = vst [vmem:[#allocation5 + $0x108] sm:$0xff] %v1886
        %1933 = vst [vmem:[#allocation5 + $0x110] sm:$0xff] %v1888
        %1934 = vst [vmem:[#allocation5 + $0x118] sm:$0xff] %v1890
        %1935 = vst [vmem:[#allocation5 + $0x120] sm:$0xff] %v1892
        %1936 = vst [vmem:[#allocation5 + $0x128] sm:$0xff] %v1894
        %1937 = vst [vmem:[#allocation5 + $0x130] sm:$0xff] %v1896
        %1938 = vst [vmem:[#allocation5 + $0x138] sm:$0xff] %v1898
        %1939 = vst [vmem:[#allocation5 + $0x140] sm:$0xff] %v1900
        %1940 = vst [vmem:[#allocation5 + $0x148] sm:$0xff] %v1902
        %1941 = vst [vmem:[#allocation5 + $0x150] sm:$0xff] %v1904
        %1942 = vst [vmem:[#allocation5 + $0x158] sm:$0xff] %v1906
        %1943 = vst [vmem:[#allocation5 + $0x160] sm:$0xff] %v1908
        %1944 = vst [vmem:[#allocation5 + $0x168] sm:$0xff] %v1910
        %1945 = vst [vmem:[#allocation5 + $0x170] sm:$0xff] %v1912
        %1946 = vst [vmem:[#allocation5 + $0x178] sm:$0xff] %v1914
        %v1947 = vld [vmem:[#allocation2] sm:$0xff]
        %v1948 = vld [vmem:[#allocation2 + $0x8] sm:$0xff]
        %v1949 = vld [vmem:[#allocation2 + $0x10] sm:$0xff]
        %v1950 = vld [vmem:[#allocation2 + $0x18] sm:$0xff]
        %v1951 = vld [vmem:[#allocation2 + $0x20] sm:$0xf]
        %v1952 = vld [vmem:[#allocation2 + $0x24] sm:$0xff]
        %v1953 = vld [vmem:[#allocation2 + $0x2c] sm:$0xff]
        %v1954 = vld [vmem:[#allocation2 + $0x34] sm:$0xff]
        %v1955 = vld [vmem:[#allocation2 + $0x3c] sm:$0xff]
        %v1956 = vld [vmem:[#allocation2 + $0x44] sm:$0xf]
        %v1957 = vld [vmem:[#allocation2 + $0x48] sm:$0xff]
        %v1958 = vld [vmem:[#allocation2 + $0x50] sm:$0xff]
        %v1959 = vld [vmem:[#allocation2 + $0x58] sm:$0xff]
        %v1960 = vld [vmem:[#allocation2 + $0x60] sm:$0xff]
        %v1961 = vld [vmem:[#allocation2 + $0x68] sm:$0xf]
        %v1962 = vld [vmem:[#allocation2 + $0x6c] sm:$0xff]
        %v1963 = vld [vmem:[#allocation2 + $0x74] sm:$0xff]
        %v1964 = vld [vmem:[#allocation2 + $0x7c] sm:$0xff]
        %v1965 = vld [vmem:[#allocation2 + $0x84] sm:$0xff]
        %v1966 = vld [vmem:[#allocation2 + $0x8c] sm:$0xf]
        %1987 = vrot.lane.b32.xlu0 %v1947, 96
        %v1988 = vpop.permute.xlu0 %1987
        %1989 = vrot.lane.b32.xlu0 %v1948, 96
        %v1990 = vpop.permute.xlu0 %1989
        %1991 = vrot.lane.b32.xlu0 %v1949, 96
        %v1992 = vpop.permute.xlu0 %1991
        %1993 = vrot.lane.b32.xlu0 %v1950, 96
        %v1994 = vpop.permute.xlu0 %1993
        %1995 = vrot.lane.b32.xlu0 %v1951, 96
        %v1996 = vpop.permute.xlu0 %1995
        %1997 = vrot.lane.b32.xlu0 %v1952, 96
        %v1998 = vpop.permute.xlu0 %1997
        %1999 = vrot.lane.b32.xlu0 %v1953, 96
        %v2000 = vpop.permute.xlu0 %1999
        %2001 = vrot.lane.b32.xlu0 %v1954, 96
        %v2002 = vpop.permute.xlu0 %2001
        %2003 = vrot.lane.b32.xlu0 %v1955, 96
        %v2004 = vpop.permute.xlu0 %2003
        %2005 = vrot.lane.b32.xlu0 %v1956, 96
        %v2006 = vpop.permute.xlu0 %2005
        %2007 = vrot.lane.b32.xlu0 %v1957, 96
        %v2008 = vpop.permute.xlu0 %2007
        %2009 = vrot.lane.b32.xlu0 %v1958, 96
        %v2010 = vpop.permute.xlu0 %2009
        %2011 = vrot.lane.b32.xlu0 %v1959, 96
        %v2012 = vpop.permute.xlu0 %2011
        %2013 = vrot.lane.b32.xlu0 %v1960, 96
        %v2014 = vpop.permute.xlu0 %2013
        %2015 = vrot.lane.b32.xlu0 %v1961, 96
        %v2016 = vpop.permute.xlu0 %2015
        %2017 = vrot.lane.b32.xlu0 %v1962, 96
        %v2018 = vpop.permute.xlu0 %2017
        %2019 = vrot.lane.b32.xlu0 %v1963, 96
        %v2020 = vpop.permute.xlu0 %2019
        %2021 = vrot.lane.b32.xlu0 %v1964, 96
        %v2022 = vpop.permute.xlu0 %2021
        %2023 = vrot.lane.b32.xlu0 %v1965, 96
        %v2024 = vpop.permute.xlu0 %2023
        %2025 = vrot.lane.b32.xlu0 %v1966, 96
        %v2026 = vpop.permute.xlu0 %2025
        %v2027 = vrot.slane %v1988, 4
        %v2028 = vrot.slane %v1990, 4
        %v2029 = vrot.slane %v1992, 4
        %v2030 = vrot.slane %v1994, 4
        %v2031 = vrot.slane %v1996, 4
        %v2032 = vrot.slane %v1998, 4
        %v2033 = vrot.slane %v2000, 4
        %v2034 = vrot.slane %v2002, 4
        %v2035 = vrot.slane %v2004, 4
        %v2036 = vrot.slane %v2006, 4
        %v2037 = vrot.slane %v2008, 4
        %v2038 = vrot.slane %v2010, 4
        %v2039 = vrot.slane %v2012, 4
        %v2040 = vrot.slane %v2014, 4
        %v2041 = vrot.slane %v2016, 4
        %v2042 = vrot.slane %v2018, 4
        %v2043 = vrot.slane %v2020, 4
        %v2044 = vrot.slane %v2022, 4
        %v2045 = vrot.slane %v2024, 4
        %v2046 = vrot.slane %v2026, 4
        %v2047 = vsel %vm1716, %v2027, %v2028
        %vm2048 = vcmask 785408
        %v2049 = vsel %vm2048, %v1988, %v2047
        %v2050 = vsel %vm1716, %v2028, %v2029
        %v2051 = vsel %vm2048, %v1990, %v2050
        %v2052 = vsel %vm1716, %v2029, %v2030
        %v2053 = vsel %vm2048, %v1992, %v2052
        %v2054 = vsel %vm1716, %v2030, %v2031
        %v2055 = vsel %vm2048, %v1994, %v2054
        %v2056 = vsel %vm1716, %v2032, %v2033
        %v2057 = vsel %vm2048, %v1998, %v2056
        %v2058 = vsel %vm1716, %v2033, %v2034
        %v2059 = vsel %vm2048, %v2000, %v2058
        %v2060 = vsel %vm1716, %v2034, %v2035
        %v2061 = vsel %vm2048, %v2002, %v2060
        %v2062 = vsel %vm1716, %v2035, %v2036
        %v2063 = vsel %vm2048, %v2004, %v2062
        %v2064 = vsel %vm1716, %v2037, %v2038
        %v2065 = vsel %vm2048, %v2008, %v2064
        %v2066 = vsel %vm1716, %v2038, %v2039
        %v2067 = vsel %vm2048, %v2010, %v2066
        %v2068 = vsel %vm1716, %v2039, %v2040
        %v2069 = vsel %vm2048, %v2012, %v2068
        %v2070 = vsel %vm1716, %v2040, %v2041
        %v2071 = vsel %vm2048, %v2014, %v2070
        %v2072 = vsel %vm1716, %v2042, %v2043
        %v2073 = vsel %vm2048, %v2018, %v2072
        %v2074 = vsel %vm1716, %v2043, %v2044
        %v2075 = vsel %vm2048, %v2020, %v2074
        %v2076 = vsel %vm1716, %v2044, %v2045
        %v2077 = vsel %vm2048, %v2022, %v2076
        %v2078 = vsel %vm1716, %v2045, %v2046
        %v2079 = vsel %vm2048, %v2024, %v2078
        %2096 = vst [vmem:[#allocation5 + $0x180] sm:$0xff] %v2049
        %2097 = vst [vmem:[#allocation5 + $0x188] sm:$0xff] %v2051
        %2098 = vst [vmem:[#allocation5 + $0x190] sm:$0xff] %v2053
        %2099 = vst [vmem:[#allocation5 + $0x198] sm:$0xff] %v2055
        %2100 = vst [vmem:[#allocation5 + $0x1a0] sm:$0xff] %v2057
        %2101 = vst [vmem:[#allocation5 + $0x1a8] sm:$0xff] %v2059
        %2102 = vst [vmem:[#allocation5 + $0x1b0] sm:$0xff] %v2061
        %2103 = vst [vmem:[#allocation5 + $0x1b8] sm:$0xff] %v2063
        %2104 = vst [vmem:[#allocation5 + $0x1c0] sm:$0xff] %v2065
        %2105 = vst [vmem:[#allocation5 + $0x1c8] sm:$0xff] %v2067
        %2106 = vst [vmem:[#allocation5 + $0x1d0] sm:$0xff] %v2069
        %2107 = vst [vmem:[#allocation5 + $0x1d8] sm:$0xff] %v2071
        %2108 = vst [vmem:[#allocation5 + $0x1e0] sm:$0xff] %v2073
        %2109 = vst [vmem:[#allocation5 + $0x1e8] sm:$0xff] %v2075
        %2110 = vst [vmem:[#allocation5 + $0x1f0] sm:$0xff] %v2077
        %2111 = vst [vmem:[#allocation5 + $0x1f8] sm:$0xff] %v2079
        %v2112 = vld [vmem:[#allocation2] sm:$0xff]
        %v2113 = vld [vmem:[#allocation2 + $0x8] sm:$0xff]
        %v2114 = vld [vmem:[#allocation2 + $0x10] sm:$0xff]
        %v2115 = vld [vmem:[#allocation2 + $0x18] sm:$0xff]
        %v2116 = vld [vmem:[#allocation2 + $0x20] sm:$0xf]
        %v2117 = vld [vmem:[#allocation2 + $0x24] sm:$0xff]
        %v2118 = vld [vmem:[#allocation2 + $0x2c] sm:$0xff]
        %v2119 = vld [vmem:[#allocation2 + $0x34] sm:$0xff]
        %v2120 = vld [vmem:[#allocation2 + $0x3c] sm:$0xff]
        %v2121 = vld [vmem:[#allocation2 + $0x44] sm:$0xf]
        %v2122 = vld [vmem:[#allocation2 + $0x48] sm:$0xff]
        %v2123 = vld [vmem:[#allocation2 + $0x50] sm:$0xff]
        %v2124 = vld [vmem:[#allocation2 + $0x58] sm:$0xff]
        %v2125 = vld [vmem:[#allocation2 + $0x60] sm:$0xff]
        %v2126 = vld [vmem:[#allocation2 + $0x68] sm:$0xf]
        %v2127 = vld [vmem:[#allocation2 + $0x6c] sm:$0xff]
        %v2128 = vld [vmem:[#allocation2 + $0x74] sm:$0xff]
        %v2129 = vld [vmem:[#allocation2 + $0x7c] sm:$0xff]
        %v2130 = vld [vmem:[#allocation2 + $0x84] sm:$0xff]
        %v2131 = vld [vmem:[#allocation2 + $0x8c] sm:$0xf]
        %2152 = vrot.lane.b32.xlu0 %v2112, 95
        %v2153 = vpop.permute.xlu0 %2152
        %2154 = vrot.lane.b32.xlu0 %v2113, 95
        %v2155 = vpop.permute.xlu0 %2154
        %2156 = vrot.lane.b32.xlu0 %v2114, 95
        %v2157 = vpop.permute.xlu0 %2156
        %2158 = vrot.lane.b32.xlu0 %v2115, 95
        %v2159 = vpop.permute.xlu0 %2158
        %2160 = vrot.lane.b32.xlu0 %v2116, 95
        %v2161 = vpop.permute.xlu0 %2160
        %2162 = vrot.lane.b32.xlu0 %v2117, 95
        %v2163 = vpop.permute.xlu0 %2162
        %2164 = vrot.lane.b32.xlu0 %v2118, 95
        %v2165 = vpop.permute.xlu0 %2164
        %2166 = vrot.lane.b32.xlu0 %v2119, 95
        %v2167 = vpop.permute.xlu0 %2166
        %2168 = vrot.lane.b32.xlu0 %v2120, 95
        %v2169 = vpop.permute.xlu0 %2168
        %2170 = vrot.lane.b32.xlu0 %v2121, 95
        %v2171 = vpop.permute.xlu0 %2170
        %2172 = vrot.lane.b32.xlu0 %v2122, 95
        %v2173 = vpop.permute.xlu0 %2172
        %2174 = vrot.lane.b32.xlu0 %v2123, 95
        %v2175 = vpop.permute.xlu0 %2174
        %2176 = vrot.lane.b32.xlu0 %v2124, 95
        %v2177 = vpop.permute.xlu0 %2176
        %2178 = vrot.lane.b32.xlu0 %v2125, 95
        %v2179 = vpop.permute.xlu0 %2178
        %2180 = vrot.lane.b32.xlu0 %v2126, 95
        %v2181 = vpop.permute.xlu0 %2180
        %2182 = vrot.lane.b32.xlu0 %v2127, 95
        %v2183 = vpop.permute.xlu0 %2182
        %2184 = vrot.lane.b32.xlu0 %v2128, 95
        %v2185 = vpop.permute.xlu0 %2184
        %2186 = vrot.lane.b32.xlu0 %v2129, 95
        %v2187 = vpop.permute.xlu0 %2186
        %2188 = vrot.lane.b32.xlu0 %v2130, 95
        %v2189 = vpop.permute.xlu0 %2188
        %2190 = vrot.lane.b32.xlu0 %v2131, 95
        %v2191 = vpop.permute.xlu0 %2190
        %v2192 = vrot.slane %v2153, 4
        %v2193 = vrot.slane %v2155, 4
        %v2194 = vrot.slane %v2157, 4
        %v2195 = vrot.slane %v2159, 4
        %v2196 = vrot.slane %v2161, 4
        %v2197 = vrot.slane %v2163, 4
        %v2198 = vrot.slane %v2165, 4
        %v2199 = vrot.slane %v2167, 4
        %v2200 = vrot.slane %v2169, 4
        %v2201 = vrot.slane %v2171, 4
        %v2202 = vrot.slane %v2173, 4
        %v2203 = vrot.slane %v2175, 4
        %v2204 = vrot.slane %v2177, 4
        %v2205 = vrot.slane %v2179, 4
        %v2206 = vrot.slane %v2181, 4
        %v2207 = vrot.slane %v2183, 4
        %v2208 = vrot.slane %v2185, 4
        %v2209 = vrot.slane %v2187, 4
        %v2210 = vrot.slane %v2189, 4
        %v2211 = vrot.slane %v2191, 4
        %v2212 = vsel %vm1716, %v2192, %v2193
        %vm2213 = vcmask 777216
        %v2214 = vsel %vm2213, %v2153, %v2212
        %v2215 = vsel %vm1716, %v2193, %v2194
        %v2216 = vsel %vm2213, %v2155, %v2215
        %v2217 = vsel %vm1716, %v2194, %v2195
        %v2218 = vsel %vm2213, %v2157, %v2217
        %v2219 = vsel %vm1716, %v2195, %v2196
        %v2220 = vsel %vm2213, %v2159, %v2219
        %v2221 = vsel %vm1716, %v2197, %v2198
        %v2222 = vsel %vm2213, %v2163, %v2221
        %v2223 = vsel %vm1716, %v2198, %v2199
        %v2224 = vsel %vm2213, %v2165, %v2223
        %v2225 = vsel %vm1716, %v2199, %v2200
        %v2226 = vsel %vm2213, %v2167, %v2225
        %v2227 = vsel %vm1716, %v2200, %v2201
        %v2228 = vsel %vm2213, %v2169, %v2227
        %v2229 = vsel %vm1716, %v2202, %v2203
        %v2230 = vsel %vm2213, %v2173, %v2229
        %v2231 = vsel %vm1716, %v2203, %v2204
        %v2232 = vsel %vm2213, %v2175, %v2231
        %v2233 = vsel %vm1716, %v2204, %v2205
        %v2234 = vsel %vm2213, %v2177, %v2233
        %v2235 = vsel %vm1716, %v2205, %v2206
        %v2236 = vsel %vm2213, %v2179, %v2235
        %v2237 = vsel %vm1716, %v2207, %v2208
        %v2238 = vsel %vm2213, %v2183, %v2237
        %v2239 = vsel %vm1716, %v2208, %v2209
        %v2240 = vsel %vm2213, %v2185, %v2239
        %v2241 = vsel %vm1716, %v2209, %v2210
        %v2242 = vsel %vm2213, %v2187, %v2241
        %v2243 = vsel %vm1716, %v2210, %v2211
        %v2244 = vsel %vm2213, %v2189, %v2243
        %2261 = vst [vmem:[#allocation5 + $0x200] sm:$0xff] %v2214
        %2262 = vst [vmem:[#allocation5 + $0x208] sm:$0xff] %v2216
        %2263 = vst [vmem:[#allocation5 + $0x210] sm:$0xff] %v2218
        %2264 = vst [vmem:[#allocation5 + $0x218] sm:$0xff] %v2220
        %2265 = vst [vmem:[#allocation5 + $0x220] sm:$0xff] %v2222
        %2266 = vst [vmem:[#allocation5 + $0x228] sm:$0xff] %v2224
        %2267 = vst [vmem:[#allocation5 + $0x230] sm:$0xff] %v2226
        %2268 = vst [vmem:[#allocation5 + $0x238] sm:$0xff] %v2228
        %2269 = vst [vmem:[#allocation5 + $0x240] sm:$0xff] %v2230
        %2270 = vst [vmem:[#allocation5 + $0x248] sm:$0xff] %v2232
        %2271 = vst [vmem:[#allocation5 + $0x250] sm:$0xff] %v2234
        %2272 = vst [vmem:[#allocation5 + $0x258] sm:$0xff] %v2236
        %2273 = vst [vmem:[#allocation5 + $0x260] sm:$0xff] %v2238
        %2274 = vst [vmem:[#allocation5 + $0x268] sm:$0xff] %v2240
        %2275 = vst [vmem:[#allocation5 + $0x270] sm:$0xff] %v2242
        %2276 = vst [vmem:[#allocation5 + $0x278] sm:$0xff] %v2244
        %v2277 = vld [vmem:[#allocation2] sm:$0xff]
        %v2278 = vld [vmem:[#allocation2 + $0x8] sm:$0xff]
        %v2279 = vld [vmem:[#allocation2 + $0x10] sm:$0xff]
        %v2280 = vld [vmem:[#allocation2 + $0x18] sm:$0xff]
        %v2281 = vld [vmem:[#allocation2 + $0x20] sm:$0xf]
        %v2282 = vld [vmem:[#allocation2 + $0x24] sm:$0xff]
        %v2283 = vld [vmem:[#allocation2 + $0x2c] sm:$0xff]
        %v2284 = vld [vmem:[#allocation2 + $0x34] sm:$0xff]
        %v2285 = vld [vmem:[#allocation2 + $0x3c] sm:$0xff]
        %v2286 = vld [vmem:[#allocation2 + $0x44] sm:$0xf]
        %v2287 = vld [vmem:[#allocation2 + $0x48] sm:$0xff]
        %v2288 = vld [vmem:[#allocation2 + $0x50] sm:$0xff]
        %v2289 = vld [vmem:[#allocation2 + $0x58] sm:$0xff]
        %v2290 = vld [vmem:[#allocation2 + $0x60] sm:$0xff]
        %v2291 = vld [vmem:[#allocation2 + $0x68] sm:$0xf]
        %v2292 = vld [vmem:[#allocation2 + $0x6c] sm:$0xff]
        %v2293 = vld [vmem:[#allocation2 + $0x74] sm:$0xff]
        %v2294 = vld [vmem:[#allocation2 + $0x7c] sm:$0xff]
        %v2295 = vld [vmem:[#allocation2 + $0x84] sm:$0xff]
        %v2296 = vld [vmem:[#allocation2 + $0x8c] sm:$0xf]
        %2317 = vrot.lane.b32.xlu0 %v2277, 94
        %v2318 = vpop.permute.xlu0 %2317
        %2319 = vrot.lane.b32.xlu0 %v2278, 94
        %v2320 = vpop.permute.xlu0 %2319
        %2321 = vrot.lane.b32.xlu0 %v2279, 94
        %v2322 = vpop.permute.xlu0 %2321
        %2323 = vrot.lane.b32.xlu0 %v2280, 94
        %v2324 = vpop.permute.xlu0 %2323
        %2325 = vrot.lane.b32.xlu0 %v2281, 94
        %v2326 = vpop.permute.xlu0 %2325
        %2327 = vrot.lane.b32.xlu0 %v2282, 94
        %v2328 = vpop.permute.xlu0 %2327
        %2329 = vrot.lane.b32.xlu0 %v2283, 94
        %v2330 = vpop.permute.xlu0 %2329
        %2331 = vrot.lane.b32.xlu0 %v2284, 94
        %v2332 = vpop.permute.xlu0 %2331
        %2333 = vrot.lane.b32.xlu0 %v2285, 94
        %v2334 = vpop.permute.xlu0 %2333
        %2335 = vrot.lane.b32.xlu0 %v2286, 94
        %v2336 = vpop.permute.xlu0 %2335
        %2337 = vrot.lane.b32.xlu0 %v2287, 94
        %v2338 = vpop.permute.xlu0 %2337
        %2339 = vrot.lane.b32.xlu0 %v2288, 94
        %v2340 = vpop.permute.xlu0 %2339
        %2341 = vrot.lane.b32.xlu0 %v2289, 94
        %v2342 = vpop.permute.xlu0 %2341
        %2343 = vrot.lane.b32.xlu0 %v2290, 94
        %v2344 = vpop.permute.xlu0 %2343
        %2345 = vrot.lane.b32.xlu0 %v2291, 94
        %v2346 = vpop.permute.xlu0 %2345
        %2347 = vrot.lane.b32.xlu0 %v2292, 94
        %v2348 = vpop.permute.xlu0 %2347
        %2349 = vrot.lane.b32.xlu0 %v2293, 94
        %v2350 = vpop.permute.xlu0 %2349
        %2351 = vrot.lane.b32.xlu0 %v2294, 94
        %v2352 = vpop.permute.xlu0 %2351
        %2353 = vrot.lane.b32.xlu0 %v2295, 94
        %v2354 = vpop.permute.xlu0 %2353
        %2355 = vrot.lane.b32.xlu0 %v2296, 94
        %v2356 = vpop.permute.xlu0 %2355
        %v2357 = vrot.slane %v2318, 4
        %v2358 = vrot.slane %v2320, 4
        %v2359 = vrot.slane %v2322, 4
        %v2360 = vrot.slane %v2324, 4
        %v2361 = vrot.slane %v2326, 4
        %v2362 = vrot.slane %v2328, 4
        %v2363 = vrot.slane %v2330, 4
        %v2364 = vrot.slane %v2332, 4
        %v2365 = vrot.slane %v2334, 4
        %v2366 = vrot.slane %v2336, 4
        %v2367 = vrot.slane %v2338, 4
        %v2368 = vrot.slane %v2340, 4
        %v2369 = vrot.slane %v2342, 4
        %v2370 = vrot.slane %v2344, 4
        %v2371 = vrot.slane %v2346, 4
        %v2372 = vrot.slane %v2348, 4
        %v2373 = vrot.slane %v2350, 4
        %v2374 = vrot.slane %v2352, 4
        %v2375 = vrot.slane %v2354, 4
        %v2376 = vrot.slane %v2356, 4
        %v2377 = vsel %vm1716, %v2357, %v2358
        %vm2378 = vcmask 769024
        %v2379 = vsel %vm2378, %v2318, %v2377
        %v2380 = vsel %vm1716, %v2358, %v2359
        %v2381 = vsel %vm2378, %v2320, %v2380
        %v2382 = vsel %vm1716, %v2359, %v2360
        %v2383 = vsel %vm2378, %v2322, %v2382
        %v2384 = vsel %vm1716, %v2360, %v2361
        %v2385 = vsel %vm2378, %v2324, %v2384
        %v2386 = vsel %vm1716, %v2362, %v2363
        %v2387 = vsel %vm2378, %v2328, %v2386
        %v2388 = vsel %vm1716, %v2363, %v2364
        %v2389 = vsel %vm2378, %v2330, %v2388
        %v2390 = vsel %vm1716, %v2364, %v2365
        %v2391 = vsel %vm2378, %v2332, %v2390
        %v2392 = vsel %vm1716, %v2365, %v2366
        %v2393 = vsel %vm2378, %v2334, %v2392
        %v2394 = vsel %vm1716, %v2367, %v2368
        %v2395 = vsel %vm2378, %v2338, %v2394
        %v2396 = vsel %vm1716, %v2368, %v2369
        %v2397 = vsel %vm2378, %v2340, %v2396
        %v2398 = vsel %vm1716, %v2369, %v2370
        %v2399 = vsel %vm2378, %v2342, %v2398
        %v2400 = vsel %vm1716, %v2370, %v2371
        %v2401 = vsel %vm2378, %v2344, %v2400
        %v2402 = vsel %vm1716, %v2372, %v2373
        %v2403 = vsel %vm2378, %v2348, %v2402
        %v2404 = vsel %vm1716, %v2373, %v2374
        %v2405 = vsel %vm2378, %v2350, %v2404
        %v2406 = vsel %vm1716, %v2374, %v2375
        %v2407 = vsel %vm2378, %v2352, %v2406
        %v2408 = vsel %vm1716, %v2375, %v2376
        %v2409 = vsel %vm2378, %v2354, %v2408
        %2426 = vst [vmem:[#allocation5 + $0x280] sm:$0xff] %v2379
        %2427 = vst [vmem:[#allocation5 + $0x288] sm:$0xff] %v2381
        %2428 = vst [vmem:[#allocation5 + $0x290] sm:$0xff] %v2383
        %2429 = vst [vmem:[#allocation5 + $0x298] sm:$0xff] %v2385
        %2430 = vst [vmem:[#allocation5 + $0x2a0] sm:$0xff] %v2387
        %2431 = vst [vmem:[#allocation5 + $0x2a8] sm:$0xff] %v2389
        %2432 = vst [vmem:[#allocation5 + $0x2b0] sm:$0xff] %v2391
        %2433 = vst [vmem:[#allocation5 + $0x2b8] sm:$0xff] %v2393
        %2434 = vst [vmem:[#allocation5 + $0x2c0] sm:$0xff] %v2395
        %2435 = vst [vmem:[#allocation5 + $0x2c8] sm:$0xff] %v2397
        %2436 = vst [vmem:[#allocation5 + $0x2d0] sm:$0xff] %v2399
        %2437 = vst [vmem:[#allocation5 + $0x2d8] sm:$0xff] %v2401
        %2438 = vst [vmem:[#allocation5 + $0x2e0] sm:$0xff] %v2403
        %2439 = vst [vmem:[#allocation5 + $0x2e8] sm:$0xff] %v2405
        %2440 = vst [vmem:[#allocation5 + $0x2f0] sm:$0xff] %v2407
        %2441 = vst [vmem:[#allocation5 + $0x2f8] sm:$0xff] %v2409
        %v2442 = vld [vmem:[#allocation2] sm:$0xff]
        %v2443 = vld [vmem:[#allocation2 + $0x8] sm:$0xff]
        %v2444 = vld [vmem:[#allocation2 + $0x10] sm:$0xff]
        %v2445 = vld [vmem:[#allocation2 + $0x18] sm:$0xff]
        %v2446 = vld [vmem:[#allocation2 + $0x20] sm:$0xf]
        %v2447 = vld [vmem:[#allocation2 + $0x24] sm:$0xff]
        %v2448 = vld [vmem:[#allocation2 + $0x2c] sm:$0xff]
        %v2449 = vld [vmem:[#allocation2 + $0x34] sm:$0xff]
        %v2450 = vld [vmem:[#allocation2 + $0x3c] sm:$0xff]
        %v2451 = vld [vmem:[#allocation2 + $0x44] sm:$0xf]
        %v2452 = vld [vmem:[#allocation2 + $0x48] sm:$0xff]
        %v2453 = vld [vmem:[#allocation2 + $0x50] sm:$0xff]
        %v2454 = vld [vmem:[#allocation2 + $0x58] sm:$0xff]
        %v2455 = vld [vmem:[#allocation2 + $0x60] sm:$0xff]
        %v2456 = vld [vmem:[#allocation2 + $0x68] sm:$0xf]
        %v2457 = vld [vmem:[#allocation2 + $0x6c] sm:$0xff]
        %v2458 = vld [vmem:[#allocation2 + $0x74] sm:$0xff]
        %v2459 = vld [vmem:[#allocation2 + $0x7c] sm:$0xff]
        %v2460 = vld [vmem:[#allocation2 + $0x84] sm:$0xff]
        %v2461 = vld [vmem:[#allocation2 + $0x8c] sm:$0xf]
        %2482 = vrot.lane.b32.xlu0 %v2442, 64
        %v2483 = vpop.permute.xlu0 %2482
        %2484 = vrot.lane.b32.xlu0 %v2443, 64
        %v2485 = vpop.permute.xlu0 %2484
        %2486 = vrot.lane.b32.xlu0 %v2444, 64
        %v2487 = vpop.permute.xlu0 %2486
        %2488 = vrot.lane.b32.xlu0 %v2445, 64
        %v2489 = vpop.permute.xlu0 %2488
        %2490 = vrot.lane.b32.xlu0 %v2446, 64
        %v2491 = vpop.permute.xlu0 %2490
        %2492 = vrot.lane.b32.xlu0 %v2447, 64
        %v2493 = vpop.permute.xlu0 %2492
        %2494 = vrot.lane.b32.xlu0 %v2448, 64
        %v2495 = vpop.permute.xlu0 %2494
        %2496 = vrot.lane.b32.xlu0 %v2449, 64
        %v2497 = vpop.permute.xlu0 %2496
        %2498 = vrot.lane.b32.xlu0 %v2450, 64
        %v2499 = vpop.permute.xlu0 %2498
        %2500 = vrot.lane.b32.xlu0 %v2451, 64
        %v2501 = vpop.permute.xlu0 %2500
        %2502 = vrot.lane.b32.xlu0 %v2452, 64
        %v2503 = vpop.permute.xlu0 %2502
        %2504 = vrot.lane.b32.xlu0 %v2453, 64
        %v2505 = vpop.permute.xlu0 %2504
        %2506 = vrot.lane.b32.xlu0 %v2454, 64
        %v2507 = vpop.permute.xlu0 %2506
        %2508 = vrot.lane.b32.xlu0 %v2455, 64
        %v2509 = vpop.permute.xlu0 %2508
        %2510 = vrot.lane.b32.xlu0 %v2456, 64
        %v2511 = vpop.permute.xlu0 %2510
        %2512 = vrot.lane.b32.xlu0 %v2457, 64
        %v2513 = vpop.permute.xlu0 %2512
        %2514 = vrot.lane.b32.xlu0 %v2458, 64
        %v2515 = vpop.permute.xlu0 %2514
        %2516 = vrot.lane.b32.xlu0 %v2459, 64
        %v2517 = vpop.permute.xlu0 %2516
        %2518 = vrot.lane.b32.xlu0 %v2460, 64
        %v2519 = vpop.permute.xlu0 %2518
        %2520 = vrot.lane.b32.xlu0 %v2461, 64
        %v2521 = vpop.permute.xlu0 %2520
        %v2522 = vrot.slane %v2483, 4
        %v2523 = vrot.slane %v2485, 4
        %v2524 = vrot.slane %v2487, 4
        %v2525 = vrot.slane %v2489, 4
        %v2526 = vrot.slane %v2491, 4
        %v2527 = vrot.slane %v2493, 4
        %v2528 = vrot.slane %v2495, 4
        %v2529 = vrot.slane %v2497, 4
        %v2530 = vrot.slane %v2499, 4
        %v2531 = vrot.slane %v2501, 4
        %v2532 = vrot.slane %v2503, 4
        %v2533 = vrot.slane %v2505, 4
        %v2534 = vrot.slane %v2507, 4
        %v2535 = vrot.slane %v2509, 4
        %v2536 = vrot.slane %v2511, 4
        %v2537 = vrot.slane %v2513, 4
        %v2538 = vrot.slane %v2515, 4
        %v2539 = vrot.slane %v2517, 4
        %v2540 = vrot.slane %v2519, 4
        %v2541 = vrot.slane %v2521, 4
        %v2542 = vsel %vm1716, %v2522, %v2523
        %vm2543 = vcmask 523264
        %v2544 = vsel %vm2543, %v2483, %v2542
        %v2545 = vsel %vm1716, %v2523, %v2524
        %v2546 = vsel %vm2543, %v2485, %v2545
        %v2547 = vsel %vm1716, %v2524, %v2525
        %v2548 = vsel %vm2543, %v2487, %v2547
        %v2549 = vsel %vm1716, %v2525, %v2526
        %v2550 = vsel %vm2543, %v2489, %v2549
        %v2551 = vsel %vm1716, %v2527, %v2528
        %v2552 = vsel %vm2543, %v2493, %v2551
        %v2553 = vsel %vm1716, %v2528, %v2529
        %v2554 = vsel %vm2543, %v2495, %v2553
        %v2555 = vsel %vm1716, %v2529, %v2530
        %v2556 = vsel %vm2543, %v2497, %v2555
        %v2557 = vsel %vm1716, %v2530, %v2531
        %v2558 = vsel %vm2543, %v2499, %v2557
        %v2559 = vsel %vm1716, %v2532, %v2533
        %v2560 = vsel %vm2543, %v2503, %v2559
        %v2561 = vsel %vm1716, %v2533, %v2534
        %v2562 = vsel %vm2543, %v2505, %v2561
        %v2563 = vsel %vm1716, %v2534, %v2535
        %v2564 = vsel %vm2543, %v2507, %v2563
        %v2565 = vsel %vm1716, %v2535, %v2536
        %v2566 = vsel %vm2543, %v2509, %v2565
        %v2567 = vsel %vm1716, %v2537, %v2538
        %v2568 = vsel %vm2543, %v2513, %v2567
        %v2569 = vsel %vm1716, %v2538, %v2539
        %v2570 = vsel %vm2543, %v2515, %v2569
        %v2571 = vsel %vm1716, %v2539, %v2540
        %v2572 = vsel %vm2543, %v2517, %v2571
        %v2573 = vsel %vm1716, %v2540, %v2541
        %v2574 = vsel %vm2543, %v2519, %v2573
        %2591 = vst [vmem:[#allocation5 + $0x300] sm:$0xff] %v2544
        %2592 = vst [vmem:[#allocation5 + $0x308] sm:$0xff] %v2546
        %2593 = vst [vmem:[#allocation5 + $0x310] sm:$0xff] %v2548
        %2594 = vst [vmem:[#allocation5 + $0x318] sm:$0xff] %v2550
        %2595 = vst [vmem:[#allocation5 + $0x320] sm:$0xff] %v2552
        %2596 = vst [vmem:[#allocation5 + $0x328] sm:$0xff] %v2554
        %2597 = vst [vmem:[#allocation5 + $0x330] sm:$0xff] %v2556
        %2598 = vst [vmem:[#allocation5 + $0x338] sm:$0xff] %v2558
        %2599 = vst [vmem:[#allocation5 + $0x340] sm:$0xff] %v2560
        %2600 = vst [vmem:[#allocation5 + $0x348] sm:$0xff] %v2562
        %2601 = vst [vmem:[#allocation5 + $0x350] sm:$0xff] %v2564
        %2602 = vst [vmem:[#allocation5 + $0x358] sm:$0xff] %v2566
        %2603 = vst [vmem:[#allocation5 + $0x360] sm:$0xff] %v2568
        %2604 = vst [vmem:[#allocation5 + $0x368] sm:$0xff] %v2570
        %2605 = vst [vmem:[#allocation5 + $0x370] sm:$0xff] %v2572
        %2606 = vst [vmem:[#allocation5 + $0x378] sm:$0xff] %v2574
        %v2607 = vld [vmem:[#allocation2] sm:$0xff]
        %v2608 = vld [vmem:[#allocation2 + $0x8] sm:$0xff]
        %v2609 = vld [vmem:[#allocation2 + $0x10] sm:$0xff]
        %v2610 = vld [vmem:[#allocation2 + $0x18] sm:$0xff]
        %v2611 = vld [vmem:[#allocation2 + $0x20] sm:$0xf]
        %v2612 = vld [vmem:[#allocation2 + $0x24] sm:$0xff]
        %v2613 = vld [vmem:[#allocation2 + $0x2c] sm:$0xff]
        %v2614 = vld [vmem:[#allocation2 + $0x34] sm:$0xff]
        %v2615 = vld [vmem:[#allocation2 + $0x3c] sm:$0xff]
        %v2616 = vld [vmem:[#allocation2 + $0x44] sm:$0xf]
        %v2617 = vld [vmem:[#allocation2 + $0x48] sm:$0xff]
        %v2618 = vld [vmem:[#allocation2 + $0x50] sm:$0xff]
        %v2619 = vld [vmem:[#allocation2 + $0x58] sm:$0xff]
        %v2620 = vld [vmem:[#allocation2 + $0x60] sm:$0xff]
        %v2621 = vld [vmem:[#allocation2 + $0x68] sm:$0xf]
        %v2622 = vld [vmem:[#allocation2 + $0x6c] sm:$0xff]
        %v2623 = vld [vmem:[#allocation2 + $0x74] sm:$0xff]
        %v2624 = vld [vmem:[#allocation2 + $0x7c] sm:$0xff]
        %v2625 = vld [vmem:[#allocation2 + $0x84] sm:$0xff]
        %v2626 = vld [vmem:[#allocation2 + $0x8c] sm:$0xf]
        %2647 = vrot.lane.b32.xlu0 %v2607, 63
        %v2648 = vpop.permute.xlu0 %2647
        %2649 = vrot.lane.b32.xlu0 %v2608, 63
        %v2650 = vpop.permute.xlu0 %2649
        %2651 = vrot.lane.b32.xlu0 %v2609, 63
        %v2652 = vpop.permute.xlu0 %2651
        %2653 = vrot.lane.b32.xlu0 %v2610, 63
        %v2654 = vpop.permute.xlu0 %2653
        %2655 = vrot.lane.b32.xlu0 %v2611, 63
        %v2656 = vpop.permute.xlu0 %2655
        %2657 = vrot.lane.b32.xlu0 %v2612, 63
        %v2658 = vpop.permute.xlu0 %2657
        %2659 = vrot.lane.b32.xlu0 %v2613, 63
        %v2660 = vpop.permute.xlu0 %2659
        %2661 = vrot.lane.b32.xlu0 %v2614, 63
        %v2662 = vpop.permute.xlu0 %2661
        %2663 = vrot.lane.b32.xlu0 %v2615, 63
        %v2664 = vpop.permute.xlu0 %2663
        %2665 = vrot.lane.b32.xlu0 %v2616, 63
        %v2666 = vpop.permute.xlu0 %2665
        %2667 = vrot.lane.b32.xlu0 %v2617, 63
        %v2668 = vpop.permute.xlu0 %2667
        %2669 = vrot.lane.b32.xlu0 %v2618, 63
        %v2670 = vpop.permute.xlu0 %2669
        %2671 = vrot.lane.b32.xlu0 %v2619, 63
        %v2672 = vpop.permute.xlu0 %2671
        %2673 = vrot.lane.b32.xlu0 %v2620, 63
        %v2674 = vpop.permute.xlu0 %2673
        %2675 = vrot.lane.b32.xlu0 %v2621, 63
        %v2676 = vpop.permute.xlu0 %2675
        %2677 = vrot.lane.b32.xlu0 %v2622, 63
        %v2678 = vpop.permute.xlu0 %2677
        %2679 = vrot.lane.b32.xlu0 %v2623, 63
        %v2680 = vpop.permute.xlu0 %2679
        %2681 = vrot.lane.b32.xlu0 %v2624, 63
        %v2682 = vpop.permute.xlu0 %2681
        %2683 = vrot.lane.b32.xlu0 %v2625, 63
        %v2684 = vpop.permute.xlu0 %2683
        %2685 = vrot.lane.b32.xlu0 %v2626, 63
        %v2686 = vpop.permute.xlu0 %2685
        %v2687 = vrot.slane %v2648, 4
        %v2688 = vrot.slane %v2650, 4
        %v2689 = vrot.slane %v2652, 4
        %v2690 = vrot.slane %v2654, 4
        %v2691 = vrot.slane %v2656, 4
        %v2692 = vrot.slane %v2658, 4
        %v2693 = vrot.slane %v2660, 4
        %v2694 = vrot.slane %v2662, 4
        %v2695 = vrot.slane %v2664, 4
        %v2696 = vrot.slane %v2666, 4
        %v2697 = vrot.slane %v2668, 4
        %v2698 = vrot.slane %v2670, 4
        %v2699 = vrot.slane %v2672, 4
        %v2700 = vrot.slane %v2674, 4
        %v2701 = vrot.slane %v2676, 4
        %v2702 = vrot.slane %v2678, 4
        %v2703 = vrot.slane %v2680, 4
        %v2704 = vrot.slane %v2682, 4
        %v2705 = vrot.slane %v2684, 4
        %v2706 = vrot.slane %v2686, 4
        %v2707 = vsel %vm1716, %v2687, %v2688
        %vm2708 = vcmask 515072
        %v2709 = vsel %vm2708, %v2648, %v2707
        %v2710 = vsel %vm1716, %v2688, %v2689
        %v2711 = vsel %vm2708, %v2650, %v2710
        %v2712 = vsel %vm1716, %v2689, %v2690
        %v2713 = vsel %vm2708, %v2652, %v2712
        %v2714 = vsel %vm1716, %v2690, %v2691
        %v2715 = vsel %vm2708, %v2654, %v2714
        %v2716 = vsel %vm1716, %v2692, %v2693
        %v2717 = vsel %vm2708, %v2658, %v2716
        %v2718 = vsel %vm1716, %v2693, %v2694
        %v2719 = vsel %vm2708, %v2660, %v2718
        %v2720 = vsel %vm1716, %v2694, %v2695
        %v2721 = vsel %vm2708, %v2662, %v2720
        %v2722 = vsel %vm1716, %v2695, %v2696
        %v2723 = vsel %vm2708, %v2664, %v2722
        %v2724 = vsel %vm1716, %v2697, %v2698
        %v2725 = vsel %vm2708, %v2668, %v2724
        %v2726 = vsel %vm1716, %v2698, %v2699
        %v2727 = vsel %vm2708, %v2670, %v2726
        %v2728 = vsel %vm1716, %v2699, %v2700
        %v2729 = vsel %vm2708, %v2672, %v2728
        %v2730 = vsel %vm1716, %v2700, %v2701
        %v2731 = vsel %vm2708, %v2674, %v2730
        %v2732 = vsel %vm1716, %v2702, %v2703
        %v2733 = vsel %vm2708, %v2678, %v2732
        %v2734 = vsel %vm1716, %v2703, %v2704
        %v2735 = vsel %vm2708, %v2680, %v2734
        %v2736 = vsel %vm1716, %v2704, %v2705
        %v2737 = vsel %vm2708, %v2682, %v2736
        %v2738 = vsel %vm1716, %v2705, %v2706
        %v2739 = vsel %vm2708, %v2684, %v2738
        %2756 = vst [vmem:[#allocation5 + $0x380] sm:$0xff] %v2709
        %2757 = vst [vmem:[#allocation5 + $0x388] sm:$0xff] %v2711
        %2758 = vst [vmem:[#allocation5 + $0x390] sm:$0xff] %v2713
        %2759 = vst [vmem:[#allocation5 + $0x398] sm:$0xff] %v2715
        %2760 = vst [vmem:[#allocation5 + $0x3a0] sm:$0xff] %v2717
        %2761 = vst [vmem:[#allocation5 + $0x3a8] sm:$0xff] %v2719
        %2762 = vst [vmem:[#allocation5 + $0x3b0] sm:$0xff] %v2721
        %2763 = vst [vmem:[#allocation5 + $0x3b8] sm:$0xff] %v2723
        %2764 = vst [vmem:[#allocation5 + $0x3c0] sm:$0xff] %v2725
        %2765 = vst [vmem:[#allocation5 + $0x3c8] sm:$0xff] %v2727
        %2766 = vst [vmem:[#allocation5 + $0x3d0] sm:$0xff] %v2729
        %2767 = vst [vmem:[#allocation5 + $0x3d8] sm:$0xff] %v2731
        %2768 = vst [vmem:[#allocation5 + $0x3e0] sm:$0xff] %v2733
        %2769 = vst [vmem:[#allocation5 + $0x3e8] sm:$0xff] %v2735
        %2770 = vst [vmem:[#allocation5 + $0x3f0] sm:$0xff] %v2737
        %2771 = vst [vmem:[#allocation5 + $0x3f8] sm:$0xff] %v2739
        %v2772 = vld [vmem:[#allocation2] sm:$0xff]
        %v2773 = vld [vmem:[#allocation2 + $0x8] sm:$0xff]
        %v2774 = vld [vmem:[#allocation2 + $0x10] sm:$0xff]
        %v2775 = vld [vmem:[#allocation2 + $0x18] sm:$0xff]
        %v2776 = vld [vmem:[#allocation2 + $0x20] sm:$0xf]
        %v2777 = vld [vmem:[#allocation2 + $0x24] sm:$0xff]
        %v2778 = vld [vmem:[#allocation2 + $0x2c] sm:$0xff]
        %v2779 = vld [vmem:[#allocation2 + $0x34] sm:$0xff]
        %v2780 = vld [vmem:[#allocation2 + $0x3c] sm:$0xff]
        %v2781 = vld [vmem:[#allocation2 + $0x44] sm:$0xf]
        %v2782 = vld [vmem:[#allocation2 + $0x48] sm:$0xff]
        %v2783 = vld [vmem:[#allocation2 + $0x50] sm:$0xff]
        %v2784 = vld [vmem:[#allocation2 + $0x58] sm:$0xff]
        %v2785 = vld [vmem:[#allocation2 + $0x60] sm:$0xff]
        %v2786 = vld [vmem:[#allocation2 + $0x68] sm:$0xf]
        %v2787 = vld [vmem:[#allocation2 + $0x6c] sm:$0xff]
        %v2788 = vld [vmem:[#allocation2 + $0x74] sm:$0xff]
        %v2789 = vld [vmem:[#allocation2 + $0x7c] sm:$0xff]
        %v2790 = vld [vmem:[#allocation2 + $0x84] sm:$0xff]
        %v2791 = vld [vmem:[#allocation2 + $0x8c] sm:$0xf]
        %2812 = vrot.lane.b32.xlu0 %v2772, 62
        %v2813 = vpop.permute.xlu0 %2812
        %2814 = vrot.lane.b32.xlu0 %v2773, 62
        %v2815 = vpop.permute.xlu0 %2814
        %2816 = vrot.lane.b32.xlu0 %v2774, 62
        %v2817 = vpop.permute.xlu0 %2816
        %2818 = vrot.lane.b32.xlu0 %v2775, 62
        %v2819 = vpop.permute.xlu0 %2818
        %2820 = vrot.lane.b32.xlu0 %v2776, 62
        %v2821 = vpop.permute.xlu0 %2820
        %2822 = vrot.lane.b32.xlu0 %v2777, 62
        %v2823 = vpop.permute.xlu0 %2822
        %2824 = vrot.lane.b32.xlu0 %v2778, 62
        %v2825 = vpop.permute.xlu0 %2824
        %2826 = vrot.lane.b32.xlu0 %v2779, 62
        %v2827 = vpop.permute.xlu0 %2826
        %2828 = vrot.lane.b32.xlu0 %v2780, 62
        %v2829 = vpop.permute.xlu0 %2828
        %2830 = vrot.lane.b32.xlu0 %v2781, 62
        %v2831 = vpop.permute.xlu0 %2830
        %2832 = vrot.lane.b32.xlu0 %v2782, 62
        %v2833 = vpop.permute.xlu0 %2832
        %2834 = vrot.lane.b32.xlu0 %v2783, 62
        %v2835 = vpop.permute.xlu0 %2834
        %2836 = vrot.lane.b32.xlu0 %v2784, 62
        %v2837 = vpop.permute.xlu0 %2836
        %2838 = vrot.lane.b32.xlu0 %v2785, 62
        %v2839 = vpop.permute.xlu0 %2838
        %2840 = vrot.lane.b32.xlu0 %v2786, 62
        %v2841 = vpop.permute.xlu0 %2840
        %2842 = vrot.lane.b32.xlu0 %v2787, 62
        %v2843 = vpop.permute.xlu0 %2842
        %2844 = vrot.lane.b32.xlu0 %v2788, 62
        %v2845 = vpop.permute.xlu0 %2844
        %2846 = vrot.lane.b32.xlu0 %v2789, 62
        %v2847 = vpop.permute.xlu0 %2846
        %2848 = vrot.lane.b32.xlu0 %v2790, 62
        %v2849 = vpop.permute.xlu0 %2848
        %2850 = vrot.lane.b32.xlu0 %v2791, 62
        %v2851 = vpop.permute.xlu0 %2850
        %v2852 = vrot.slane %v2813, 4
        %v2853 = vrot.slane %v2815, 4
        %v2854 = vrot.slane %v2817, 4
        %v2855 = vrot.slane %v2819, 4
        %v2856 = vrot.slane %v2821, 4
        %v2857 = vrot.slane %v2823, 4
        %v2858 = vrot.slane %v2825, 4
        %v2859 = vrot.slane %v2827, 4
        %v2860 = vrot.slane %v2829, 4
        %v2861 = vrot.slane %v2831, 4
        %v2862 = vrot.slane %v2833, 4
        %v2863 = vrot.slane %v2835, 4
        %v2864 = vrot.slane %v2837, 4
        %v2865 = vrot.slane %v2839, 4
        %v2866 = vrot.slane %v2841, 4
        %v2867 = vrot.slane %v2843, 4
        %v2868 = vrot.slane %v2845, 4
        %v2869 = vrot.slane %v2847, 4
        %v2870 = vrot.slane %v2849, 4
        %v2871 = vrot.slane %v2851, 4
        %v2872 = vsel %vm1716, %v2852, %v2853
        %vm2873 = vcmask 506880
        %v2874 = vsel %vm2873, %v2813, %v2872
        %v2875 = vsel %vm1716, %v2853, %v2854
        %v2876 = vsel %vm2873, %v2815, %v2875
        %v2877 = vsel %vm1716, %v2854, %v2855
        %v2878 = vsel %vm2873, %v2817, %v2877
        %v2879 = vsel %vm1716, %v2855, %v2856
        %v2880 = vsel %vm2873, %v2819, %v2879
        %v2881 = vsel %vm1716, %v2857, %v2858
        %v2882 = vsel %vm2873, %v2823, %v2881
        %v2883 = vsel %vm1716, %v2858, %v2859
        %v2884 = vsel %vm2873, %v2825, %v2883
        %v2885 = vsel %vm1716, %v2859, %v2860
        %v2886 = vsel %vm2873, %v2827, %v2885
        %v2887 = vsel %vm1716, %v2860, %v2861
        %v2888 = vsel %vm2873, %v2829, %v2887
        %v2889 = vsel %vm1716, %v2862, %v2863
        %v2890 = vsel %vm2873, %v2833, %v2889
        %v2891 = vsel %vm1716, %v2863, %v2864
        %v2892 = vsel %vm2873, %v2835, %v2891
        %v2893 = vsel %vm1716, %v2864, %v2865
        %v2894 = vsel %vm2873, %v2837, %v2893
        %v2895 = vsel %vm1716, %v2865, %v2866
        %v2896 = vsel %vm2873, %v2839, %v2895
        %v2897 = vsel %vm1716, %v2867, %v2868
        %v2898 = vsel %vm2873, %v2843, %v2897
        %v2899 = vsel %vm1716, %v2868, %v2869
        %v2900 = vsel %vm2873, %v2845, %v2899
        %v2901 = vsel %vm1716, %v2869, %v2870
        %v2902 = vsel %vm2873, %v2847, %v2901
        %v2903 = vsel %vm1716, %v2870, %v2871
        %v2904 = vsel %vm2873, %v2849, %v2903
        %2921 = vst [vmem:[#allocation5 + $0x400] sm:$0xff] %v2874
        %2922 = vst [vmem:[#allocation5 + $0x408] sm:$0xff] %v2876
        %2923 = vst [vmem:[#allocation5 + $0x410] sm:$0xff] %v2878
        %2924 = vst [vmem:[#allocation5 + $0x418] sm:$0xff] %v2880
        %2925 = vst [vmem:[#allocation5 + $0x420] sm:$0xff] %v2882
        %2926 = vst [vmem:[#allocation5 + $0x428] sm:$0xff] %v2884
        %2927 = vst [vmem:[#allocation5 + $0x430] sm:$0xff] %v2886
        %2928 = vst [vmem:[#allocation5 + $0x438] sm:$0xff] %v2888
        %2929 = vst [vmem:[#allocation5 + $0x440] sm:$0xff] %v2890
        %2930 = vst [vmem:[#allocation5 + $0x448] sm:$0xff] %v2892
        %2931 = vst [vmem:[#allocation5 + $0x450] sm:$0xff] %v2894
        %2932 = vst [vmem:[#allocation5 + $0x458] sm:$0xff] %v2896
        %2933 = vst [vmem:[#allocation5 + $0x460] sm:$0xff] %v2898
        %2934 = vst [vmem:[#allocation5 + $0x468] sm:$0xff] %v2900
        %2935 = vst [vmem:[#allocation5 + $0x470] sm:$0xff] %v2902
        %2936 = vst [vmem:[#allocation5 + $0x478] sm:$0xff] %v2904
        %v2937 = vld [vmem:[#allocation10] sm:$0xff]
        %v2938 = vld [vmem:[#allocation10 + $0x8] sm:$0xf]
        %v2939 = vld [vmem:[#allocation10 + $0xc] sm:$0xff]
        %v2940 = vld [vmem:[#allocation10 + $0x14] sm:$0xf]
        %v2941 = vld [vmem:[#allocation10 + $0x18] sm:$0xff]
        %v2942 = vld [vmem:[#allocation10 + $0x20] sm:$0xf]
        %v2943 = vld [vmem:[#allocation10 + $0x24] sm:$0xff]
        %v2944 = vld [vmem:[#allocation10 + $0x2c] sm:$0xf]
        %v2945 = vld [vmem:[#allocation5] sm:$0xff]
        %v2946 = vld [vmem:[#allocation5 + $0x8] sm:$0xff]
        %v2947 = vld [vmem:[#allocation5 + $0x10] sm:$0xff]
        %v2948 = vld [vmem:[#allocation5 + $0x18] sm:$0xff]
        %v2949 = vld [vmem:[#allocation5 + $0x20] sm:$0xff]
        %v2950 = vld [vmem:[#allocation5 + $0x28] sm:$0xff]
        %v2951 = vld [vmem:[#allocation5 + $0x30] sm:$0xff]
        %v2952 = vld [vmem:[#allocation5 + $0x38] sm:$0xff]
        %v2953 = vld [vmem:[#allocation5 + $0x40] sm:$0xff]
        %v2954 = vld [vmem:[#allocation5 + $0x48] sm:$0xff]
        %v2955 = vld [vmem:[#allocation5 + $0x50] sm:$0xff]
        %v2956 = vld [vmem:[#allocation5 + $0x58] sm:$0xff]
        %v2957 = vld [vmem:[#allocation5 + $0x60] sm:$0xff]
        %v2958 = vld [vmem:[#allocation5 + $0x68] sm:$0xff]
        %v2959 = vld [vmem:[#allocation5 + $0x70] sm:$0xff]
        %v2960 = vld [vmem:[#allocation5 + $0x78] sm:$0xff]
        %v2961 = vld [vmem:[#allocation5 + $0x80] sm:$0xff]
        %v2962 = vld [vmem:[#allocation5 + $0x88] sm:$0xff]
        %v2963 = vld [vmem:[#allocation5 + $0x90] sm:$0xff]
        %v2964 = vld [vmem:[#allocation5 + $0x98] sm:$0xff]
        %v2965 = vld [vmem:[#allocation5 + $0xa0] sm:$0xff]
        %v2966 = vld [vmem:[#allocation5 + $0xa8] sm:$0xff]
        %v2967 = vld [vmem:[#allocation5 + $0xb0] sm:$0xff]
        %v2968 = vld [vmem:[#allocation5 + $0xb8] sm:$0xff]
        %v2969 = vld [vmem:[#allocation5 + $0xc0] sm:$0xff]
        %v2970 = vld [vmem:[#allocation5 + $0xc8] sm:$0xff]
        %v2971 = vld [vmem:[#allocation5 + $0xd0] sm:$0xff]
        %v2972 = vld [vmem:[#allocation5 + $0xd8] sm:$0xff]
        %v2973 = vld [vmem:[#allocation5 + $0xe0] sm:$0xff]
        %v2974 = vld [vmem:[#allocation5 + $0xe8] sm:$0xff]
        %v2975 = vld [vmem:[#allocation5 + $0xf0] sm:$0xff]
        %v2976 = vld [vmem:[#allocation5 + $0xf8] sm:$0xff]
        %v2977 = vld [vmem:[#allocation5 + $0x100] sm:$0xff]
        %v2978 = vld [vmem:[#allocation5 + $0x108] sm:$0xff]
        %v2979 = vld [vmem:[#allocation5 + $0x110] sm:$0xff]
        %v2980 = vld [vmem:[#allocation5 + $0x118] sm:$0xff]
        %v2981 = vld [vmem:[#allocation5 + $0x120] sm:$0xff]
        %v2982 = vld [vmem:[#allocation5 + $0x128] sm:$0xff]
        %v2983 = vld [vmem:[#allocation5 + $0x130] sm:$0xff]
        %v2984 = vld [vmem:[#allocation5 + $0x138] sm:$0xff]
        %v2985 = vld [vmem:[#allocation5 + $0x140] sm:$0xff]
        %v2986 = vld [vmem:[#allocation5 + $0x148] sm:$0xff]
        %v2987 = vld [vmem:[#allocation5 + $0x150] sm:$0xff]
        %v2988 = vld [vmem:[#allocation5 + $0x158] sm:$0xff]
        %v2989 = vld [vmem:[#allocation5 + $0x160] sm:$0xff]
        %v2990 = vld [vmem:[#allocation5 + $0x168] sm:$0xff]
        %v2991 = vld [vmem:[#allocation5 + $0x170] sm:$0xff]
        %v2992 = vld [vmem:[#allocation5 + $0x178] sm:$0xff]
        %v2993 = vld [vmem:[#allocation5 + $0x180] sm:$0xff]
        %v2994 = vld [vmem:[#allocation5 + $0x188] sm:$0xff]
        %v2995 = vld [vmem:[#allocation5 + $0x190] sm:$0xff]
        %v2996 = vld [vmem:[#allocation5 + $0x198] sm:$0xff]
        %v2997 = vld [vmem:[#allocation5 + $0x1a0] sm:$0xff]
        %v2998 = vld [vmem:[#allocation5 + $0x1a8] sm:$0xff]
        %v2999 = vld [vmem:[#allocation5 + $0x1b0] sm:$0xff]
        %v3000 = vld [vmem:[#allocation5 + $0x1b8] sm:$0xff]
        %v3001 = vld [vmem:[#allocation5 + $0x1c0] sm:$0xff]
        %v3002 = vld [vmem:[#allocation5 + $0x1c8] sm:$0xff]
        %v3003 = vld [vmem:[#allocation5 + $0x1d0] sm:$0xff]
        %v3004 = vld [vmem:[#allocation5 + $0x1d8] sm:$0xff]
        %v3005 = vld [vmem:[#allocation5 + $0x1e0] sm:$0xff]
        %v3006 = vld [vmem:[#allocation5 + $0x1e8] sm:$0xff]
        %v3007 = vld [vmem:[#allocation5 + $0x1f0] sm:$0xff]
        %v3008 = vld [vmem:[#allocation5 + $0x1f8] sm:$0xff]
        %v3009 = vld [vmem:[#allocation5 + $0x200] sm:$0xff]
        %v3010 = vld [vmem:[#allocation5 + $0x208] sm:$0xff]
        %v3011 = vld [vmem:[#allocation5 + $0x210] sm:$0xff]
        %v3012 = vld [vmem:[#allocation5 + $0x218] sm:$0xff]
        %v3013 = vld [vmem:[#allocation5 + $0x220] sm:$0xff]
        %v3014 = vld [vmem:[#allocation5 + $0x228] sm:$0xff]
        %v3015 = vld [vmem:[#allocation5 + $0x230] sm:$0xff]
        %v3016 = vld [vmem:[#allocation5 + $0x238] sm:$0xff]
        %v3017 = vld [vmem:[#allocation5 + $0x240] sm:$0xff]
        %v3018 = vld [vmem:[#allocation5 + $0x248] sm:$0xff]
        %v3019 = vld [vmem:[#allocation5 + $0x250] sm:$0xff]
        %v3020 = vld [vmem:[#allocation5 + $0x258] sm:$0xff]
        %v3021 = vld [vmem:[#allocation5 + $0x260] sm:$0xff]
        %v3022 = vld [vmem:[#allocation5 + $0x268] sm:$0xff]
        %v3023 = vld [vmem:[#allocation5 + $0x270] sm:$0xff]
        %v3024 = vld [vmem:[#allocation5 + $0x278] sm:$0xff]
        %v3025 = vld [vmem:[#allocation5 + $0x280] sm:$0xff]
        %v3026 = vld [vmem:[#allocation5 + $0x288] sm:$0xff]
        %v3027 = vld [vmem:[#allocation5 + $0x290] sm:$0xff]
        %v3028 = vld [vmem:[#allocation5 + $0x298] sm:$0xff]
        %v3029 = vld [vmem:[#allocation5 + $0x2a0] sm:$0xff]
        %v3030 = vld [vmem:[#allocation5 + $0x2a8] sm:$0xff]
        %v3031 = vld [vmem:[#allocation5 + $0x2b0] sm:$0xff]
        %v3032 = vld [vmem:[#allocation5 + $0x2b8] sm:$0xff]
        %v3033 = vld [vmem:[#allocation5 + $0x2c0] sm:$0xff]
        %v3034 = vld [vmem:[#allocation5 + $0x2c8] sm:$0xff]
        %v3035 = vld [vmem:[#allocation5 + $0x2d0] sm:$0xff]
        %v3036 = vld [vmem:[#allocation5 + $0x2d8] sm:$0xff]
        %v3037 = vld [vmem:[#allocation5 + $0x2e0] sm:$0xff]
        %v3038 = vld [vmem:[#allocation5 + $0x2e8] sm:$0xff]
        %v3039 = vld [vmem:[#allocation5 + $0x2f0] sm:$0xff]
        %v3040 = vld [vmem:[#allocation5 + $0x2f8] sm:$0xff]
        %v3041 = vld [vmem:[#allocation5 + $0x300] sm:$0xff]
        %v3042 = vld [vmem:[#allocation5 + $0x308] sm:$0xff]
        %v3043 = vld [vmem:[#allocation5 + $0x310] sm:$0xff]
        %v3044 = vld [vmem:[#allocation5 + $0x318] sm:$0xff]
        %v3045 = vld [vmem:[#allocation5 + $0x320] sm:$0xff]
        %v3046 = vld [vmem:[#allocation5 + $0x328] sm:$0xff]
        %v3047 = vld [vmem:[#allocation5 + $0x330] sm:$0xff]
        %v3048 = vld [vmem:[#allocation5 + $0x338] sm:$0xff]
        %v3049 = vld [vmem:[#allocation5 + $0x340] sm:$0xff]
        %v3050 = vld [vmem:[#allocation5 + $0x348] sm:$0xff]
        %v3051 = vld [vmem:[#allocation5 + $0x350] sm:$0xff]
        %v3052 = vld [vmem:[#allocation5 + $0x358] sm:$0xff]
        %v3053 = vld [vmem:[#allocation5 + $0x360] sm:$0xff]
        %v3054 = vld [vmem:[#allocation5 + $0x368] sm:$0xff]
        %v3055 = vld [vmem:[#allocation5 + $0x370] sm:$0xff]
        %v3056 = vld [vmem:[#allocation5 + $0x378] sm:$0xff]
        %v3057 = vld [vmem:[#allocation5 + $0x380] sm:$0xff]
        %v3058 = vld [vmem:[#allocation5 + $0x388] sm:$0xff]
        %v3059 = vld [vmem:[#allocation5 + $0x390] sm:$0xff]
        %v3060 = vld [vmem:[#allocation5 + $0x398] sm:$0xff]
        %v3061 = vld [vmem:[#allocation5 + $0x3a0] sm:$0xff]
        %v3062 = vld [vmem:[#allocation5 + $0x3a8] sm:$0xff]
        %v3063 = vld [vmem:[#allocation5 + $0x3b0] sm:$0xff]
        %v3064 = vld [vmem:[#allocation5 + $0x3b8] sm:$0xff]
        %v3065 = vld [vmem:[#allocation5 + $0x3c0] sm:$0xff]
        %v3066 = vld [vmem:[#allocation5 + $0x3c8] sm:$0xff]
        %v3067 = vld [vmem:[#allocation5 + $0x3d0] sm:$0xff]
        %v3068 = vld [vmem:[#allocation5 + $0x3d8] sm:$0xff]
        %v3069 = vld [vmem:[#allocation5 + $0x3e0] sm:$0xff]
        %v3070 = vld [vmem:[#allocation5 + $0x3e8] sm:$0xff]
        %v3071 = vld [vmem:[#allocation5 + $0x3f0] sm:$0xff]
        %v3072 = vld [vmem:[#allocation5 + $0x3f8] sm:$0xff]
        %v3073 = vld [vmem:[#allocation5 + $0x400] sm:$0xff]
        %v3074 = vld [vmem:[#allocation5 + $0x408] sm:$0xff]
        %v3075 = vld [vmem:[#allocation5 + $0x410] sm:$0xff]
        %v3076 = vld [vmem:[#allocation5 + $0x418] sm:$0xff]
        %v3077 = vld [vmem:[#allocation5 + $0x420] sm:$0xff]
        %v3078 = vld [vmem:[#allocation5 + $0x428] sm:$0xff]
        %v3079 = vld [vmem:[#allocation5 + $0x430] sm:$0xff]
        %v3080 = vld [vmem:[#allocation5 + $0x438] sm:$0xff]
        %v3081 = vld [vmem:[#allocation5 + $0x440] sm:$0xff]
        %v3082 = vld [vmem:[#allocation5 + $0x448] sm:$0xff]
        %v3083 = vld [vmem:[#allocation5 + $0x450] sm:$0xff]
        %v3084 = vld [vmem:[#allocation5 + $0x458] sm:$0xff]
        %v3085 = vld [vmem:[#allocation5 + $0x460] sm:$0xff]
        %v3086 = vld [vmem:[#allocation5 + $0x468] sm:$0xff]
        %v3087 = vld [vmem:[#allocation5 + $0x470] sm:$0xff]
        %v3088 = vld [vmem:[#allocation5 + $0x478] sm:$0xff]
        %v3089 = vld [vmem:[%s4] sm:$0xff]
        %v3090 = vld [vmem:[%s4 + $0x8] sm:$0xff]
        %v3091 = vld [vmem:[%s4 + $0x10] sm:$0xff]
        %v3092 = vld [vmem:[%s4 + $0x18] sm:$0xff]
        %3094 = vset.pattern.permute.xlu0 0
        %3095 = vperm.xlu0 %3094, %v3089
        %v3096 = vpop.permute.xlu0 %3095
        %3099 = vset.pattern.permute.xlu0 0
        %3100 = vperm.xlu0 %3099, %v3090
        %v3101 = vpop.permute.xlu0 %3100
        %3104 = vset.pattern.permute.xlu0 0
        %3105 = vperm.xlu0 %3104, %v3091
        %v3106 = vpop.permute.xlu0 %3105
        %3109 = vset.pattern.permute.xlu0 0
        %3110 = vperm.xlu0 %3109, %v3092
        %v3111 = vpop.permute.xlu0 %3110
        %v3121 = vunpack.c.l.b16 %v2937
        %v3122 = vunpack.c.h.b16 %v2937
        %v3123 = vunpack.c.l.b16 %v2938
        %v3124 = vunpack.c.l.b16 %v2939
        %v3125 = vunpack.c.h.b16 %v2939
        %v3126 = vunpack.c.l.b16 %v2940
        %v3127 = vunpack.c.l.b16 %v2941
        %v3128 = vunpack.c.h.b16 %v2941
        %v3129 = vunpack.c.l.b16 %v2942
        %v3130 = vunpack.c.l.b16 %v2943
        %v3131 = vunpack.c.h.b16 %v2943
        %v3132 = vunpack.c.l.b16 %v2944
        %v3133 = vpack.c.b16 %v3124, %v3121
        %v3134 = vpack.c.b16 %v3125, %v3122
        %v3135 = vpack.c.b16 %v3126, %v3123
        %v3136 = vpack.c.b16 %v3130, %v3127
        %v3137 = vpack.c.b16 %v3131, %v3128
        %v3138 = vpack.c.b16 %v3132, %v3129
        %v3287 = vunpack.c.l.b16 %v2945
        %v3288 = vunpack.c.h.b16 %v2945
        %v3289 = vunpack.c.l.b16 %v2946
        %v3290 = vunpack.c.h.b16 %v2946
        %v3291 = vunpack.c.l.b16 %v2947
        %v3292 = vunpack.c.h.b16 %v2947
        %v3293 = vunpack.c.l.b16 %v2948
        %v3294 = vunpack.c.h.b16 %v2948
        %v3295 = vunpack.c.l.b16 %v2949
        %v3296 = vunpack.c.h.b16 %v2949
        %v3297 = vunpack.c.l.b16 %v2950
        %v3298 = vunpack.c.h.b16 %v2950
        %v3299 = vunpack.c.l.b16 %v2951
        %v3300 = vunpack.c.h.b16 %v2951
        %v3301 = vunpack.c.l.b16 %v2952
        %v3302 = vunpack.c.h.b16 %v2952
        %v3303 = vunpack.c.l.b16 %v2953
        %v3304 = vunpack.c.h.b16 %v2953
        %v3305 = vunpack.c.l.b16 %v2954
        %v3306 = vunpack.c.h.b16 %v2954
        %v3307 = vunpack.c.l.b16 %v2955
        %v3308 = vunpack.c.h.b16 %v2955
        %v3309 = vunpack.c.l.b16 %v2956
        %v3310 = vunpack.c.h.b16 %v2956
        %v3311 = vunpack.c.l.b16 %v2957
        %v3312 = vunpack.c.h.b16 %v2957
        %v3313 = vunpack.c.l.b16 %v2958
        %v3314 = vunpack.c.h.b16 %v2958
        %v3315 = vunpack.c.l.b16 %v2959
        %v3316 = vunpack.c.h.b16 %v2959
        %v3317 = vunpack.c.l.b16 %v2960
        %v3318 = vunpack.c.h.b16 %v2960
        %v3319 = vunpack.c.l.b16 %v2961
        %v3320 = vunpack.c.h.b16 %v2961
        %v3321 = vunpack.c.l.b16 %v2962
        %v3322 = vunpack.c.h.b16 %v2962
        %v3323 = vunpack.c.l.b16 %v2963
        %v3324 = vunpack.c.h.b16 %v2963
        %v3325 = vunpack.c.l.b16 %v2964
        %v3326 = vunpack.c.h.b16 %v2964
        %v3327 = vunpack.c.l.b16 %v2965
        %v3328 = vunpack.c.h.b16 %v2965
        %v3329 = vunpack.c.l.b16 %v2966
        %v3330 = vunpack.c.h.b16 %v2966
        %v3331 = vunpack.c.l.b16 %v2967
        %v3332 = vunpack.c.h.b16 %v2967
        %v3333 = vunpack.c.l.b16 %v2968
        %v3334 = vunpack.c.h.b16 %v2968
        %v3335 = vunpack.c.l.b16 %v2969
        %v3336 = vunpack.c.h.b16 %v2969
        %v3337 = vunpack.c.l.b16 %v2970
        %v3338 = vunpack.c.h.b16 %v2970
        %v3339 = vunpack.c.l.b16 %v2971
        %v3340 = vunpack.c.h.b16 %v2971
        %v3341 = vunpack.c.l.b16 %v2972
        %v3342 = vunpack.c.h.b16 %v2972
        %v3343 = vunpack.c.l.b16 %v2973
        %v3344 = vunpack.c.h.b16 %v2973
        %v3345 = vunpack.c.l.b16 %v2974
        %v3346 = vunpack.c.h.b16 %v2974
        %v3347 = vunpack.c.l.b16 %v2975
        %v3348 = vunpack.c.h.b16 %v2975
        %v3349 = vunpack.c.l.b16 %v2976
        %v3350 = vunpack.c.h.b16 %v2976
        %v3351 = vunpack.c.l.b16 %v2977
        %v3352 = vunpack.c.h.b16 %v2977
        %v3353 = vunpack.c.l.b16 %v2978
        %v3354 = vunpack.c.h.b16 %v2978
        %v3355 = vunpack.c.l.b16 %v2979
        %v3356 = vunpack.c.h.b16 %v2979
        %v3357 = vunpack.c.l.b16 %v2980
        %v3358 = vunpack.c.h.b16 %v2980
        %v3359 = vunpack.c.l.b16 %v2981
        %v3360 = vunpack.c.h.b16 %v2981
        %v3361 = vunpack.c.l.b16 %v2982
        %v3362 = vunpack.c.h.b16 %v2982
        %v3363 = vunpack.c.l.b16 %v2983
        %v3364 = vunpack.c.h.b16 %v2983
        %v3365 = vunpack.c.l.b16 %v2984
        %v3366 = vunpack.c.h.b16 %v2984
        %v3367 = vunpack.c.l.b16 %v2985
        %v3368 = vunpack.c.h.b16 %v2985
        %v3369 = vunpack.c.l.b16 %v2986
        %v3370 = vunpack.c.h.b16 %v2986
        %v3371 = vunpack.c.l.b16 %v2987
        %v3372 = vunpack.c.h.b16 %v2987
        %v3373 = vunpack.c.l.b16 %v2988
        %v3374 = vunpack.c.h.b16 %v2988
        %v3375 = vunpack.c.l.b16 %v2989
        %v3376 = vunpack.c.h.b16 %v2989
        %v3377 = vunpack.c.l.b16 %v2990
        %v3378 = vunpack.c.h.b16 %v2990
        %v3379 = vunpack.c.l.b16 %v2991
        %v3380 = vunpack.c.h.b16 %v2991
        %v3381 = vunpack.c.l.b16 %v2992
        %v3382 = vunpack.c.h.b16 %v2992
        %v3383 = vunpack.c.l.b16 %v2993
        %v3384 = vunpack.c.h.b16 %v2993
        %v3385 = vunpack.c.l.b16 %v2994
        %v3386 = vunpack.c.h.b16 %v2994
        %v3387 = vunpack.c.l.b16 %v2995
        %v3388 = vunpack.c.h.b16 %v2995
        %v3389 = vunpack.c.l.b16 %v2996
        %v3390 = vunpack.c.h.b16 %v2996
        %v3391 = vunpack.c.l.b16 %v2997
        %v3392 = vunpack.c.h.b16 %v2997
        %v3393 = vunpack.c.l.b16 %v2998
        %v3394 = vunpack.c.h.b16 %v2998
        %v3395 = vunpack.c.l.b16 %v2999
        %v3396 = vunpack.c.h.b16 %v2999
        %v3397 = vunpack.c.l.b16 %v3000
        %v3398 = vunpack.c.h.b16 %v3000
        %v3399 = vunpack.c.l.b16 %v3001
        %v3400 = vunpack.c.h.b16 %v3001
        %v3401 = vunpack.c.l.b16 %v3002
        %v3402 = vunpack.c.h.b16 %v3002
        %v3403 = vunpack.c.l.b16 %v3003
        %v3404 = vunpack.c.h.b16 %v3003
        %v3405 = vunpack.c.l.b16 %v3004
        %v3406 = vunpack.c.h.b16 %v3004
        %v3407 = vunpack.c.l.b16 %v3005
        %v3408 = vunpack.c.h.b16 %v3005
        %v3409 = vunpack.c.l.b16 %v3006
        %v3410 = vunpack.c.h.b16 %v3006
        %v3411 = vunpack.c.l.b16 %v3007
        %v3412 = vunpack.c.h.b16 %v3007
        %v3413 = vunpack.c.l.b16 %v3008
        %v3414 = vunpack.c.h.b16 %v3008
        %v3415 = vunpack.c.l.b16 %v3009
        %v3416 = vunpack.c.h.b16 %v3009
        %v3417 = vunpack.c.l.b16 %v3010
        %v3418 = vunpack.c.h.b16 %v3010
        %v3419 = vunpack.c.l.b16 %v3011
        %v3420 = vunpack.c.h.b16 %v3011
        %v3421 = vunpack.c.l.b16 %v3012
        %v3422 = vunpack.c.h.b16 %v3012
        %v3423 = vunpack.c.l.b16 %v3013
        %v3424 = vunpack.c.h.b16 %v3013
        %v3425 = vunpack.c.l.b16 %v3014
        %v3426 = vunpack.c.h.b16 %v3014
        %v3427 = vunpack.c.l.b16 %v3015
        %v3428 = vunpack.c.h.b16 %v3015
        %v3429 = vunpack.c.l.b16 %v3016
        %v3430 = vunpack.c.h.b16 %v3016
        %v3431 = vunpack.c.l.b16 %v3017
        %v3432 = vunpack.c.h.b16 %v3017
        %v3433 = vunpack.c.l.b16 %v3018
        %v3434 = vunpack.c.h.b16 %v3018
        %v3435 = vunpack.c.l.b16 %v3019
        %v3436 = vunpack.c.h.b16 %v3019
        %v3437 = vunpack.c.l.b16 %v3020
        %v3438 = vunpack.c.h.b16 %v3020
        %v3439 = vunpack.c.l.b16 %v3021
        %v3440 = vunpack.c.h.b16 %v3021
        %v3441 = vunpack.c.l.b16 %v3022
        %v3442 = vunpack.c.h.b16 %v3022
        %v3443 = vunpack.c.l.b16 %v3023
        %v3444 = vunpack.c.h.b16 %v3023
        %v3445 = vunpack.c.l.b16 %v3024
        %v3446 = vunpack.c.h.b16 %v3024
        %v3447 = vunpack.c.l.b16 %v3025
        %v3448 = vunpack.c.h.b16 %v3025
        %v3449 = vunpack.c.l.b16 %v3026
        %v3450 = vunpack.c.h.b16 %v3026
        %v3451 = vunpack.c.l.b16 %v3027
        %v3452 = vunpack.c.h.b16 %v3027
        %v3453 = vunpack.c.l.b16 %v3028
        %v3454 = vunpack.c.h.b16 %v3028
        %v3455 = vunpack.c.l.b16 %v3029
        %v3456 = vunpack.c.h.b16 %v3029
        %v3457 = vunpack.c.l.b16 %v3030
        %v3458 = vunpack.c.h.b16 %v3030
        %v3459 = vunpack.c.l.b16 %v3031
        %v3460 = vunpack.c.h.b16 %v3031
        %v3461 = vunpack.c.l.b16 %v3032
        %v3462 = vunpack.c.h.b16 %v3032
        %v3463 = vunpack.c.l.b16 %v3033
        %v3464 = vunpack.c.h.b16 %v3033
        %v3465 = vunpack.c.l.b16 %v3034
        %v3466 = vunpack.c.h.b16 %v3034
        %v3467 = vunpack.c.l.b16 %v3035
        %v3468 = vunpack.c.h.b16 %v3035
        %v3469 = vunpack.c.l.b16 %v3036
        %v3470 = vunpack.c.h.b16 %v3036
        %v3471 = vunpack.c.l.b16 %v3037
        %v3472 = vunpack.c.h.b16 %v3037
        %v3473 = vunpack.c.l.b16 %v3038
        %v3474 = vunpack.c.h.b16 %v3038
        %v3475 = vunpack.c.l.b16 %v3039
        %v3476 = vunpack.c.h.b16 %v3039
        %v3477 = vunpack.c.l.b16 %v3040
        %v3478 = vunpack.c.h.b16 %v3040
        %v3479 = vunpack.c.l.b16 %v3041
        %v3480 = vunpack.c.h.b16 %v3041
        %v3481 = vunpack.c.l.b16 %v3042
        %v3482 = vunpack.c.h.b16 %v3042
        %v3483 = vunpack.c.l.b16 %v3043
        %v3484 = vunpack.c.h.b16 %v3043
        %v3485 = vunpack.c.l.b16 %v3044
        %v3486 = vunpack.c.h.b16 %v3044
        %v3487 = vunpack.c.l.b16 %v3045
        %v3488 = vunpack.c.h.b16 %v3045
        %v3489 = vunpack.c.l.b16 %v3046
        %v3490 = vunpack.c.h.b16 %v3046
        %v3491 = vunpack.c.l.b16 %v3047
        %v3492 = vunpack.c.h.b16 %v3047
        %v3493 = vunpack.c.l.b16 %v3048
        %v3494 = vunpack.c.h.b16 %v3048
        %v3495 = vunpack.c.l.b16 %v3049
        %v3496 = vunpack.c.h.b16 %v3049
        %v3497 = vunpack.c.l.b16 %v3050
        %v3498 = vunpack.c.h.b16 %v3050
        %v3499 = vunpack.c.l.b16 %v3051
        %v3500 = vunpack.c.h.b16 %v3051
        %v3501 = vunpack.c.l.b16 %v3052
        %v3502 = vunpack.c.h.b16 %v3052
        %v3503 = vunpack.c.l.b16 %v3053
        %v3504 = vunpack.c.h.b16 %v3053
        %v3505 = vunpack.c.l.b16 %v3054
        %v3506 = vunpack.c.h.b16 %v3054
        %v3507 = vunpack.c.l.b16 %v3055
        %v3508 = vunpack.c.h.b16 %v3055
        %v3509 = vunpack.c.l.b16 %v3056
        %v3510 = vunpack.c.h.b16 %v3056
        %v3511 = vunpack.c.l.b16 %v3057
        %v3512 = vunpack.c.h.b16 %v3057
        %v3513 = vunpack.c.l.b16 %v3058
        %v3514 = vunpack.c.h.b16 %v3058
        %v3515 = vunpack.c.l.b16 %v3059
        %v3516 = vunpack.c.h.b16 %v3059
        %v3517 = vunpack.c.l.b16 %v3060
        %v3518 = vunpack.c.h.b16 %v3060
        %v3519 = vunpack.c.l.b16 %v3061
        %v3520 = vunpack.c.h.b16 %v3061
        %v3521 = vunpack.c.l.b16 %v3062
        %v3522 = vunpack.c.h.b16 %v3062
        %v3523 = vunpack.c.l.b16 %v3063
        %v3524 = vunpack.c.h.b16 %v3063
        %v3525 = vunpack.c.l.b16 %v3064
        %v3526 = vunpack.c.h.b16 %v3064
        %v3527 = vunpack.c.l.b16 %v3065
        %v3528 = vunpack.c.h.b16 %v3065
        %v3529 = vunpack.c.l.b16 %v3066
        %v3530 = vunpack.c.h.b16 %v3066
        %v3531 = vunpack.c.l.b16 %v3067
        %v3532 = vunpack.c.h.b16 %v3067
        %v3533 = vunpack.c.l.b16 %v3068
        %v3534 = vunpack.c.h.b16 %v3068
        %v3535 = vunpack.c.l.b16 %v3069
        %v3536 = vunpack.c.h.b16 %v3069
        %v3537 = vunpack.c.l.b16 %v3070
        %v3538 = vunpack.c.h.b16 %v3070
        %v3539 = vunpack.c.l.b16 %v3071
        %v3540 = vunpack.c.h.b16 %v3071
        %v3541 = vunpack.c.l.b16 %v3072
        %v3542 = vunpack.c.h.b16 %v3072
        %v3543 = vunpack.c.l.b16 %v3073
        %v3544 = vunpack.c.h.b16 %v3073
        %v3545 = vunpack.c.l.b16 %v3074
        %v3546 = vunpack.c.h.b16 %v3074
        %v3547 = vunpack.c.l.b16 %v3075
        %v3548 = vunpack.c.h.b16 %v3075
        %v3549 = vunpack.c.l.b16 %v3076
        %v3550 = vunpack.c.h.b16 %v3076
        %v3551 = vunpack.c.l.b16 %v3077
        %v3552 = vunpack.c.h.b16 %v3077
        %v3553 = vunpack.c.l.b16 %v3078
        %v3554 = vunpack.c.h.b16 %v3078
        %v3555 = vunpack.c.l.b16 %v3079
        %v3556 = vunpack.c.h.b16 %v3079
        %v3557 = vunpack.c.l.b16 %v3080
        %v3558 = vunpack.c.h.b16 %v3080
        %v3559 = vunpack.c.l.b16 %v3081
        %v3560 = vunpack.c.h.b16 %v3081
        %v3561 = vunpack.c.l.b16 %v3082
        %v3562 = vunpack.c.h.b16 %v3082
        %v3563 = vunpack.c.l.b16 %v3083
        %v3564 = vunpack.c.h.b16 %v3083
        %v3565 = vunpack.c.l.b16 %v3084
        %v3566 = vunpack.c.h.b16 %v3084
        %v3567 = vunpack.c.l.b16 %v3085
        %v3568 = vunpack.c.h.b16 %v3085
        %v3569 = vunpack.c.l.b16 %v3086
        %v3570 = vunpack.c.h.b16 %v3086
        %v3571 = vunpack.c.l.b16 %v3087
        %v3572 = vunpack.c.h.b16 %v3087
        %v3573 = vunpack.c.l.b16 %v3088
        %v3574 = vunpack.c.h.b16 %v3088
        %v3575 = vpack.c.b16 %v3295, %v3287
        %v3576 = vpack.c.b16 %v3296, %v3288
        %v3577 = vpack.c.b16 %v3297, %v3289
        %v3578 = vpack.c.b16 %v3298, %v3290
        %v3579 = vpack.c.b16 %v3299, %v3291
        %v3580 = vpack.c.b16 %v3300, %v3292
        %v3581 = vpack.c.b16 %v3301, %v3293
        %v3582 = vpack.c.b16 %v3302, %v3294
        %v3583 = vpack.c.b16 %v3311, %v3303
        %v3584 = vpack.c.b16 %v3312, %v3304
        %v3585 = vpack.c.b16 %v3313, %v3305
        %v3586 = vpack.c.b16 %v3314, %v3306
        %v3587 = vpack.c.b16 %v3315, %v3307
        %v3588 = vpack.c.b16 %v3316, %v3308
        %v3589 = vpack.c.b16 %v3317, %v3309
        %v3590 = vpack.c.b16 %v3318, %v3310
        %v3591 = vpack.c.b16 %v3327, %v3319
        %v3592 = vpack.c.b16 %v3328, %v3320
        %v3593 = vpack.c.b16 %v3329, %v3321
        %v3594 = vpack.c.b16 %v3330, %v3322
        %v3595 = vpack.c.b16 %v3331, %v3323
        %v3596 = vpack.c.b16 %v3332, %v3324
        %v3597 = vpack.c.b16 %v3333, %v3325
        %v3598 = vpack.c.b16 %v3334, %v3326
        %v3599 = vpack.c.b16 %v3343, %v3335
        %v3600 = vpack.c.b16 %v3344, %v3336
        %v3601 = vpack.c.b16 %v3345, %v3337
        %v3602 = vpack.c.b16 %v3346, %v3338
        %v3603 = vpack.c.b16 %v3347, %v3339
        %v3604 = vpack.c.b16 %v3348, %v3340
        %v3605 = vpack.c.b16 %v3349, %v3341
        %v3606 = vpack.c.b16 %v3350, %v3342
        %v3607 = vpack.c.b16 %v3359, %v3351
        %v3608 = vpack.c.b16 %v3360, %v3352
        %v3609 = vpack.c.b16 %v3361, %v3353
        %v3610 = vpack.c.b16 %v3362, %v3354
        %v3611 = vpack.c.b16 %v3363, %v3355
        %v3612 = vpack.c.b16 %v3364, %v3356
        %v3613 = vpack.c.b16 %v3365, %v3357
        %v3614 = vpack.c.b16 %v3366, %v3358
        %v3615 = vpack.c.b16 %v3375, %v3367
        %v3616 = vpack.c.b16 %v3376, %v3368
        %v3617 = vpack.c.b16 %v3377, %v3369
        %v3618 = vpack.c.b16 %v3378, %v3370
        %v3619 = vpack.c.b16 %v3379, %v3371
        %v3620 = vpack.c.b16 %v3380, %v3372
        %v3621 = vpack.c.b16 %v3381, %v3373
        %v3622 = vpack.c.b16 %v3382, %v3374
        %v3623 = vpack.c.b16 %v3391, %v3383
        %v3624 = vpack.c.b16 %v3392, %v3384
        %v3625 = vpack.c.b16 %v3393, %v3385
        %v3626 = vpack.c.b16 %v3394, %v3386
        %v3627 = vpack.c.b16 %v3395, %v3387
        %v3628 = vpack.c.b16 %v3396, %v3388
        %v3629 = vpack.c.b16 %v3397, %v3389
        %v3630 = vpack.c.b16 %v3398, %v3390
        %v3631 = vpack.c.b16 %v3407, %v3399
        %v3632 = vpack.c.b16 %v3408, %v3400
        %v3633 = vpack.c.b16 %v3409, %v3401
        %v3634 = vpack.c.b16 %v3410, %v3402
        %v3635 = vpack.c.b16 %v3411, %v3403
        %v3636 = vpack.c.b16 %v3412, %v3404
        %v3637 = vpack.c.b16 %v3413, %v3405
        %v3638 = vpack.c.b16 %v3414, %v3406
        %v3639 = vpack.c.b16 %v3423, %v3415
        %v3640 = vpack.c.b16 %v3424, %v3416
        %v3641 = vpack.c.b16 %v3425, %v3417
        %v3642 = vpack.c.b16 %v3426, %v3418
        %v3643 = vpack.c.b16 %v3427, %v3419
        %v3644 = vpack.c.b16 %v3428, %v3420
        %v3645 = vpack.c.b16 %v3429, %v3421
        %v3646 = vpack.c.b16 %v3430, %v3422
        %v3647 = vpack.c.b16 %v3439, %v3431
        %v3648 = vpack.c.b16 %v3440, %v3432
        %v3649 = vpack.c.b16 %v3441, %v3433
        %v3650 = vpack.c.b16 %v3442, %v3434
        %v3651 = vpack.c.b16 %v3443, %v3435
        %v3652 = vpack.c.b16 %v3444, %v3436
        %v3653 = vpack.c.b16 %v3445, %v3437
        %v3654 = vpack.c.b16 %v3446, %v3438
        %v3655 = vpack.c.b16 %v3455, %v3447
        %v3656 = vpack.c.b16 %v3456, %v3448
        %v3657 = vpack.c.b16 %v3457, %v3449
        %v3658 = vpack.c.b16 %v3458, %v3450
        %v3659 = vpack.c.b16 %v3459, %v3451
        %v3660 = vpack.c.b16 %v3460, %v3452
        %v3661 = vpack.c.b16 %v3461, %v3453
        %v3662 = vpack.c.b16 %v3462, %v3454
        %v3663 = vpack.c.b16 %v3471, %v3463
        %v3664 = vpack.c.b16 %v3472, %v3464
        %v3665 = vpack.c.b16 %v3473, %v3465
        %v3666 = vpack.c.b16 %v3474, %v3466
        %v3667 = vpack.c.b16 %v3475, %v3467
        %v3668 = vpack.c.b16 %v3476, %v3468
        %v3669 = vpack.c.b16 %v3477, %v3469
        %v3670 = vpack.c.b16 %v3478, %v3470
        %v3671 = vpack.c.b16 %v3487, %v3479
        %v3672 = vpack.c.b16 %v3488, %v3480
        %v3673 = vpack.c.b16 %v3489, %v3481
        %v3674 = vpack.c.b16 %v3490, %v3482
        %v3675 = vpack.c.b16 %v3491, %v3483
        %v3676 = vpack.c.b16 %v3492, %v3484
        %v3677 = vpack.c.b16 %v3493, %v3485
        %v3678 = vpack.c.b16 %v3494, %v3486
        %v3679 = vpack.c.b16 %v3503, %v3495
        %v3680 = vpack.c.b16 %v3504, %v3496
        %v3681 = vpack.c.b16 %v3505, %v3497
        %v3682 = vpack.c.b16 %v3506, %v3498
        %v3683 = vpack.c.b16 %v3507, %v3499
        %v3684 = vpack.c.b16 %v3508, %v3500
        %v3685 = vpack.c.b16 %v3509, %v3501
        %v3686 = vpack.c.b16 %v3510, %v3502
        %v3687 = vpack.c.b16 %v3519, %v3511
        %v3688 = vpack.c.b16 %v3520, %v3512
        %v3689 = vpack.c.b16 %v3521, %v3513
        %v3690 = vpack.c.b16 %v3522, %v3514
        %v3691 = vpack.c.b16 %v3523, %v3515
        %v3692 = vpack.c.b16 %v3524, %v3516
        %v3693 = vpack.c.b16 %v3525, %v3517
        %v3694 = vpack.c.b16 %v3526, %v3518
        %v3695 = vpack.c.b16 %v3535, %v3527
        %v3696 = vpack.c.b16 %v3536, %v3528
        %v3697 = vpack.c.b16 %v3537, %v3529
        %v3698 = vpack.c.b16 %v3538, %v3530
        %v3699 = vpack.c.b16 %v3539, %v3531
        %v3700 = vpack.c.b16 %v3540, %v3532
        %v3701 = vpack.c.b16 %v3541, %v3533
        %v3702 = vpack.c.b16 %v3542, %v3534
        %v3703 = vpack.c.b16 %v3551, %v3543
        %v3704 = vpack.c.b16 %v3552, %v3544
        %v3705 = vpack.c.b16 %v3553, %v3545
        %v3706 = vpack.c.b16 %v3554, %v3546
        %v3707 = vpack.c.b16 %v3555, %v3547
        %v3708 = vpack.c.b16 %v3556, %v3548
        %v3709 = vpack.c.b16 %v3557, %v3549
        %v3710 = vpack.c.b16 %v3558, %v3550
        %v3711 = vpack.c.b16 %v3567, %v3559
        %v3712 = vpack.c.b16 %v3568, %v3560
        %v3713 = vpack.c.b16 %v3569, %v3561
        %v3714 = vpack.c.b16 %v3570, %v3562
        %v3715 = vpack.c.b16 %v3571, %v3563
        %v3716 = vpack.c.b16 %v3572, %v3564
        %v3717 = vpack.c.b16 %v3573, %v3565
        %v3718 = vpack.c.b16 %v3574, %v3566
        %vm3863 = vcmask 261120
        %v3865 = vsel %vm3863, %v3135, 0
        %v3868 = vsel %vm3863, %v3138, 0
        %3870 = vmatprep.subr.bf16.mxu0 %v3632
        %3871 = vmatpush1.bf16.msra.mxu0 %v3631
        %3872 = vmatprep.subr.bf16.mxu0 %v3624
        %3873 = vmatpush1.bf16.msra.mxu0 %v3623
        %3874 = vmatprep.subr.bf16.mxu0 %v3616
        %3875 = vmatpush1.bf16.msra.mxu0 %v3615
        %3876 = vmatprep.subr.bf16.mxu0 %v3608
        %3877 = vmatpush1.bf16.msra.mxu0 %v3607
        %3878 = vmatprep.subr.bf16.mxu0 %v3600
        %3879 = vmatpush1.bf16.msra.mxu0 %v3599
        %3880 = vmatprep.subr.bf16.mxu0 %v3592
        %3881 = vmatpush1.bf16.msra.mxu0 %v3591
        %3882 = vmatprep.subr.bf16.mxu0 %v3584
        %3883 = vmatpush1.bf16.msra.mxu0 %v3583
        %3884 = vmatprep.subr.bf16.mxu0 %v3576
        %3885 = vmatpush1.bf16.msra.mxu0 %v3575
        %3886 = vmatprep.subr.bf16.mxu0 %v3696
        %3887 = vmatpush2.bf16.msra.mxu0 %v3695
        %3888 = vmatprep.subr.bf16.mxu0 %v3688
        %3889 = vmatpush2.bf16.msra.mxu0 %v3687
        %3890 = vmatprep.subr.bf16.mxu0 %v3680
        %3891 = vmatpush2.bf16.msra.mxu0 %v3679
        %3892 = vmatprep.subr.bf16.mxu0 %v3672
        %3893 = vmatpush2.bf16.msra.mxu0 %v3671
        %3894 = vmatprep.subr.bf16.mxu0 %v3664
        %3895 = vmatpush2.bf16.msra.mxu0 %v3663
        %3896 = vmatprep.subr.bf16.mxu0 %v3656
        %3897 = vmatpush2.bf16.msra.mxu0 %v3655
        %3898 = vmatprep.subr.bf16.mxu0 %v3648
        %3899 = vmatpush2.bf16.msra.mxu0 %v3647
        %3900 = vmatprep.subr.bf16.mxu0 %v3640
        %3901 = vmatpush2.bf16.msra.mxu0 %v3639
        %3902 = vmatprep.mubr.bf16.mxu0 %v3134
        %3903 = vmatmul.mubr.bf16.gmra.mxu0 %v3133
        %v3904 = vpop.f32.mrf.mxu0
        %v3905 = vadd.f32 %v3096, %v3904
        %v3906 = vpop.f32.mrf.mxu0
        %v3907 = vadd.f32 %v3096, %v3906
        %v3908 = vpop.f32.mrf.mxu0
        %v3909 = vadd.f32 %v3101, %v3908
        %v3910 = vpop.f32.mrf.mxu0
        %v3911 = vadd.f32 %v3101, %v3910
        %3912 = vmatprep.mubr.bf16.mxu0 %v3137
        %3913 = vmatmul.mubr.bf16.gmra.mxu0 %v3136
        %v3914 = vpop.f32.mrf.mxu0
        %v3915 = vadd.f32 %v3106, %v3914
        %v3916 = vpop.f32.mrf.mxu0
        %v3917 = vadd.f32 %v3106, %v3916
        %v3918 = vpop.f32.mrf.mxu0
        %v3919 = vadd.f32 %v3111, %v3918
        %v3920 = vpop.f32.mrf.mxu0
        %v3921 = vadd.f32 %v3111, %v3920
        %3922 = vdwg.mxu0
        %3923 = vmatprep.subr.bf16.mxu0 0
        %3924 = vmatpush1.bf16.msra.mxu0 0
        %3925 = vmatprep.subr.bf16.mxu0 0
        %3926 = vmatpush1.bf16.msra.mxu0 0
        %3927 = vmatprep.subr.bf16.mxu0 0
        %3928 = vmatpush1.bf16.msra.mxu0 0
        %3929 = vmatprep.subr.bf16.mxu0 0
        %3930 = vmatpush1.bf16.msra.mxu0 0
        %3931 = vmatprep.subr.bf16.mxu0 0
        %3932 = vmatpush1.bf16.msra.mxu0 0
        %3933 = vmatprep.subr.bf16.mxu0 0
        %3934 = vmatpush1.bf16.msra.mxu0 0
        %3935 = vmatprep.subr.bf16.mxu0 %v3712
        %3936 = vmatpush1.bf16.msra.mxu0 %v3711
        %3937 = vmatprep.subr.bf16.mxu0 %v3704
        %3938 = vmatpush1.bf16.msra.mxu0 %v3703
        %3939 = vmatprep.subr.bf16.mxu0 0
        %3940 = vmatpush2.bf16.msra.mxu0 0
        %3941 = vmatprep.subr.bf16.mxu0 0
        %3942 = vmatpush2.bf16.msra.mxu0 0
        %3943 = vmatprep.subr.bf16.mxu0 0
        %3944 = vmatpush2.bf16.msra.mxu0 0
        %3945 = vmatprep.subr.bf16.mxu0 0
        %3946 = vmatpush2.bf16.msra.mxu0 0
        %3947 = vmatprep.subr.bf16.mxu0 0
        %3948 = vmatpush2.bf16.msra.mxu0 0
        %3949 = vmatprep.subr.bf16.mxu0 0
        %3950 = vmatpush2.bf16.msra.mxu0 0
        %3951 = vmatprep.subr.bf16.mxu0 0
        %3952 = vmatpush2.bf16.msra.mxu0 0
        %3953 = vmatprep.subr.bf16.mxu0 0
        %3954 = vmatpush2.bf16.msra.mxu0 0
        %3955 = vmatprep.mubr.bf16.mxu0 0
        %3956 = vmatmul.mubr.bf16.gmra.mxu0 %v3865
        %v3957 = vpop.f32.mrf.mxu0
        %v3958 = vadd.f32 %v3905, %v3957
        %v3959 = vpop.f32.mrf.mxu0
        %v3960 = vadd.f32 %v3907, %v3959
        %v3961 = vpop.f32.mrf.mxu0
        %v3962 = vadd.f32 %v3909, %v3961
        %v3963 = vpop.f32.mrf.mxu0
        %v3964 = vadd.f32 %v3911, %v3963
        %3965 = vmatprep.mubr.bf16.mxu0 0
        %3966 = vmatmul.mubr.bf16.gmra.mxu0 %v3868
        %v3967 = vpop.f32.mrf.mxu0
        %v3968 = vadd.f32 %v3915, %v3967
        %v3969 = vpop.f32.mrf.mxu0
        %v3970 = vadd.f32 %v3917, %v3969
        %v3971 = vpop.f32.mrf.mxu0
        %v3972 = vadd.f32 %v3919, %v3971
        %v3973 = vpop.f32.mrf.mxu0
        %v3974 = vadd.f32 %v3921, %v3973
        %3975 = vdwg.mxu0
        %3976 = vmatprep.subr.bf16.mxu0 %v3634
        %3977 = vmatpush1.bf16.msra.mxu0 %v3633
        %3978 = vmatprep.subr.bf16.mxu0 %v3626
        %3979 = vmatpush1.bf16.msra.mxu0 %v3625
        %3980 = vmatprep.subr.bf16.mxu0 %v3618
        %3981 = vmatpush1.bf16.msra.mxu0 %v3617
        %3982 = vmatprep.subr.bf16.mxu0 %v3610
        %3983 = vmatpush1.bf16.msra.mxu0 %v3609
        %3984 = vmatprep.subr.bf16.mxu0 %v3602
        %3985 = vmatpush1.bf16.msra.mxu0 %v3601
        %3986 = vmatprep.subr.bf16.mxu0 %v3594
        %3987 = vmatpush1.bf16.msra.mxu0 %v3593
        %3988 = vmatprep.subr.bf16.mxu0 %v3586
        %3989 = vmatpush1.bf16.msra.mxu0 %v3585
        %3990 = vmatprep.subr.bf16.mxu0 %v3578
        %3991 = vmatpush1.bf16.msra.mxu0 %v3577
        %3992 = vmatprep.subr.bf16.mxu0 %v3698
        %3993 = vmatpush2.bf16.msra.mxu0 %v3697
        %3994 = vmatprep.subr.bf16.mxu0 %v3690
        %3995 = vmatpush2.bf16.msra.mxu0 %v3689
        %3996 = vmatprep.subr.bf16.mxu0 %v3682
        %3997 = vmatpush2.bf16.msra.mxu0 %v3681
        %3998 = vmatprep.subr.bf16.mxu0 %v3674
        %3999 = vmatpush2.bf16.msra.mxu0 %v3673
        %4000 = vmatprep.subr.bf16.mxu0 %v3666
        %4001 = vmatpush2.bf16.msra.mxu0 %v3665
        %4002 = vmatprep.subr.bf16.mxu0 %v3658
        %4003 = vmatpush2.bf16.msra.mxu0 %v3657
        %4004 = vmatprep.subr.bf16.mxu0 %v3650
        %4005 = vmatpush2.bf16.msra.mxu0 %v3649
        %4006 = vmatprep.subr.bf16.mxu0 %v3642
        %4007 = vmatpush2.bf16.msra.mxu0 %v3641
        %4008 = vmatprep.mubr.bf16.mxu0 %v3134
        %4009 = vmatmul.mubr.bf16.gmra.mxu0 %v3133
        %v4010 = vpop.f32.mrf.mxu0
        %v4011 = vadd.f32 %v3096, %v4010
        %v4012 = vpop.f32.mrf.mxu0
        %v4013 = vadd.f32 %v3096, %v4012
        %v4014 = vpop.f32.mrf.mxu0
        %v4015 = vadd.f32 %v3101, %v4014
        %v4016 = vpop.f32.mrf.mxu0
        %v4017 = vadd.f32 %v3101, %v4016
        %4018 = vmatprep.mubr.bf16.mxu0 %v3137
        %4019 = vmatmul.mubr.bf16.gmra.mxu0 %v3136
        %v4020 = vpop.f32.mrf.mxu0
        %v4021 = vadd.f32 %v3106, %v4020
        %v4022 = vpop.f32.mrf.mxu0
        %v4023 = vadd.f32 %v3106, %v4022
        %v4024 = vpop.f32.mrf.mxu0
        %v4025 = vadd.f32 %v3111, %v4024
        %v4026 = vpop.f32.mrf.mxu0
        %v4027 = vadd.f32 %v3111, %v4026
        %4028 = vdwg.mxu0
        %4029 = vmatprep.subr.bf16.mxu0 0
        %4030 = vmatpush1.bf16.msra.mxu0 0
        %4031 = vmatprep.subr.bf16.mxu0 0
        %4032 = vmatpush1.bf16.msra.mxu0 0
        %4033 = vmatprep.subr.bf16.mxu0 0
        %4034 = vmatpush1.bf16.msra.mxu0 0
        %4035 = vmatprep.subr.bf16.mxu0 0
        %4036 = vmatpush1.bf16.msra.mxu0 0
        %4037 = vmatprep.subr.bf16.mxu0 0
        %4038 = vmatpush1.bf16.msra.mxu0 0
        %4039 = vmatprep.subr.bf16.mxu0 0
        %4040 = vmatpush1.bf16.msra.mxu0 0
        %4041 = vmatprep.subr.bf16.mxu0 %v3714
        %4042 = vmatpush1.bf16.msra.mxu0 %v3713
        %4043 = vmatprep.subr.bf16.mxu0 %v3706
        %4044 = vmatpush1.bf16.msra.mxu0 %v3705
        %4045 = vmatprep.subr.bf16.mxu0 0
        %4046 = vmatpush2.bf16.msra.mxu0 0
        %4047 = vmatprep.subr.bf16.mxu0 0
        %4048 = vmatpush2.bf16.msra.mxu0 0
        %4049 = vmatprep.subr.bf16.mxu0 0
        %4050 = vmatpush2.bf16.msra.mxu0 0
        %4051 = vmatprep.subr.bf16.mxu0 0
        %4052 = vmatpush2.bf16.msra.mxu0 0
        %4053 = vmatprep.subr.bf16.mxu0 0
        %4054 = vmatpush2.bf16.msra.mxu0 0
        %4055 = vmatprep.subr.bf16.mxu0 0
        %4056 = vmatpush2.bf16.msra.mxu0 0
        %4057 = vmatprep.subr.bf16.mxu0 0
        %4058 = vmatpush2.bf16.msra.mxu0 0
        %4059 = vmatprep.subr.bf16.mxu0 0
        %4060 = vmatpush2.bf16.msra.mxu0 0
        %4061 = vmatprep.mubr.bf16.mxu0 0
        %4062 = vmatmul.mubr.bf16.gmra.mxu0 %v3865
        %v4063 = vpop.f32.mrf.mxu0
        %v4064 = vadd.f32 %v4011, %v4063
        %v4065 = vpop.f32.mrf.mxu0
        %v4066 = vadd.f32 %v4013, %v4065
        %v4067 = vpop.f32.mrf.mxu0
        %v4068 = vadd.f32 %v4015, %v4067
        %v4069 = vpop.f32.mrf.mxu0
        %v4070 = vadd.f32 %v4017, %v4069
        %4071 = vmatprep.mubr.bf16.mxu0 0
        %4072 = vmatmul.mubr.bf16.gmra.mxu0 %v3868
        %v4073 = vpop.f32.mrf.mxu0
        %v4074 = vadd.f32 %v4021, %v4073
        %v4075 = vpop.f32.mrf.mxu0
        %v4076 = vadd.f32 %v4023, %v4075
        %v4077 = vpop.f32.mrf.mxu0
        %v4078 = vadd.f32 %v4025, %v4077
        %v4079 = vpop.f32.mrf.mxu0
        %v4080 = vadd.f32 %v4027, %v4079
        %4081 = vdwg.mxu0
        %4082 = vmatprep.subr.bf16.mxu0 %v3636
        %4083 = vmatpush1.bf16.msra.mxu0 %v3635
        %4084 = vmatprep.subr.bf16.mxu0 %v3628
        %4085 = vmatpush1.bf16.msra.mxu0 %v3627
        %4086 = vmatprep.subr.bf16.mxu0 %v3620
        %4087 = vmatpush1.bf16.msra.mxu0 %v3619
        %4088 = vmatprep.subr.bf16.mxu0 %v3612
        %4089 = vmatpush1.bf16.msra.mxu0 %v3611
        %4090 = vmatprep.subr.bf16.mxu0 %v3604
        %4091 = vmatpush1.bf16.msra.mxu0 %v3603
        %4092 = vmatprep.subr.bf16.mxu0 %v3596
        %4093 = vmatpush1.bf16.msra.mxu0 %v3595
        %4094 = vmatprep.subr.bf16.mxu0 %v3588
        %4095 = vmatpush1.bf16.msra.mxu0 %v3587
        %4096 = vmatprep.subr.bf16.mxu0 %v3580
        %4097 = vmatpush1.bf16.msra.mxu0 %v3579
        %4098 = vmatprep.subr.bf16.mxu0 %v3700
        %4099 = vmatpush2.bf16.msra.mxu0 %v3699
        %4100 = vmatprep.subr.bf16.mxu0 %v3692
        %4101 = vmatpush2.bf16.msra.mxu0 %v3691
        %4102 = vmatprep.subr.bf16.mxu0 %v3684
        %4103 = vmatpush2.bf16.msra.mxu0 %v3683
        %4104 = vmatprep.subr.bf16.mxu0 %v3676
        %4105 = vmatpush2.bf16.msra.mxu0 %v3675
        %4106 = vmatprep.subr.bf16.mxu0 %v3668
        %4107 = vmatpush2.bf16.msra.mxu0 %v3667
        %4108 = vmatprep.subr.bf16.mxu0 %v3660
        %4109 = vmatpush2.bf16.msra.mxu0 %v3659
        %4110 = vmatprep.subr.bf16.mxu0 %v3652
        %4111 = vmatpush2.bf16.msra.mxu0 %v3651
        %4112 = vmatprep.subr.bf16.mxu0 %v3644
        %4113 = vmatpush2.bf16.msra.mxu0 %v3643
        %4114 = vmatprep.mubr.bf16.mxu0 %v3134
        %4115 = vmatmul.mubr.bf16.gmra.mxu0 %v3133
        %v4116 = vpop.f32.mrf.mxu0
        %v4117 = vadd.f32 %v3096, %v4116
        %v4118 = vpop.f32.mrf.mxu0
        %v4119 = vadd.f32 %v3096, %v4118
        %v4120 = vpop.f32.mrf.mxu0
        %v4121 = vadd.f32 %v3101, %v4120
        %v4122 = vpop.f32.mrf.mxu0
        %v4123 = vadd.f32 %v3101, %v4122
        %4124 = vmatprep.mubr.bf16.mxu0 %v3137
        %4125 = vmatmul.mubr.bf16.gmra.mxu0 %v3136
        %v4126 = vpop.f32.mrf.mxu0
        %v4127 = vadd.f32 %v3106, %v4126
        %v4128 = vpop.f32.mrf.mxu0
        %v4129 = vadd.f32 %v3106, %v4128
        %v4130 = vpop.f32.mrf.mxu0
        %v4131 = vadd.f32 %v3111, %v4130
        %v4132 = vpop.f32.mrf.mxu0
        %v4133 = vadd.f32 %v3111, %v4132
        %4134 = vdwg.mxu0
        %4135 = vmatprep.subr.bf16.mxu0 0
        %4136 = vmatpush1.bf16.msra.mxu0 0
        %4137 = vmatprep.subr.bf16.mxu0 0
        %4138 = vmatpush1.bf16.msra.mxu0 0
        %4139 = vmatprep.subr.bf16.mxu0 0
        %4140 = vmatpush1.bf16.msra.mxu0 0
        %4141 = vmatprep.subr.bf16.mxu0 0
        %4142 = vmatpush1.bf16.msra.mxu0 0
        %4143 = vmatprep.subr.bf16.mxu0 0
        %4144 = vmatpush1.bf16.msra.mxu0 0
        %4145 = vmatprep.subr.bf16.mxu0 0
        %4146 = vmatpush1.bf16.msra.mxu0 0
        %4147 = vmatprep.subr.bf16.mxu0 %v3716
        %4148 = vmatpush1.bf16.msra.mxu0 %v3715
        %4149 = vmatprep.subr.bf16.mxu0 %v3708
        %4150 = vmatpush1.bf16.msra.mxu0 %v3707
        %4151 = vmatprep.subr.bf16.mxu0 0
        %4152 = vmatpush2.bf16.msra.mxu0 0
        %4153 = vmatprep.subr.bf16.mxu0 0
        %4154 = vmatpush2.bf16.msra.mxu0 0
        %4155 = vmatprep.subr.bf16.mxu0 0
        %4156 = vmatpush2.bf16.msra.mxu0 0
        %4157 = vmatprep.subr.bf16.mxu0 0
        %4158 = vmatpush2.bf16.msra.mxu0 0
        %4159 = vmatprep.subr.bf16.mxu0 0
        %4160 = vmatpush2.bf16.msra.mxu0 0
        %4161 = vmatprep.subr.bf16.mxu0 0
        %4162 = vmatpush2.bf16.msra.mxu0 0
        %4163 = vmatprep.subr.bf16.mxu0 0
        %4164 = vmatpush2.bf16.msra.mxu0 0
        %4165 = vmatprep.subr.bf16.mxu0 0
        %4166 = vmatpush2.bf16.msra.mxu0 0
        %4167 = vmatprep.mubr.bf16.mxu0 0
        %4168 = vmatmul.mubr.bf16.gmra.mxu0 %v3865
        %v4169 = vpop.f32.mrf.mxu0
        %v4170 = vadd.f32 %v4117, %v4169
        %v4171 = vpop.f32.mrf.mxu0
        %v4172 = vadd.f32 %v4119, %v4171
        %v4173 = vpop.f32.mrf.mxu0
        %v4174 = vadd.f32 %v4121, %v4173
        %v4175 = vpop.f32.mrf.mxu0
        %v4176 = vadd.f32 %v4123, %v4175
        %4177 = vmatprep.mubr.bf16.mxu0 0
        %4178 = vmatmul.mubr.bf16.gmra.mxu0 %v3868
        %v4179 = vpop.f32.mrf.mxu0
        %v4180 = vadd.f32 %v4127, %v4179
        %v4181 = vpop.f32.mrf.mxu0
        %v4182 = vadd.f32 %v4129, %v4181
        %v4183 = vpop.f32.mrf.mxu0
        %v4184 = vadd.f32 %v4131, %v4183
        %v4185 = vpop.f32.mrf.mxu0
        %v4186 = vadd.f32 %v4133, %v4185
        %4187 = vdwg.mxu0
        %4188 = vmatprep.subr.bf16.mxu0 %v3638
        %4189 = vmatpush1.bf16.msra.mxu0 %v3637
        %4190 = vmatprep.subr.bf16.mxu0 %v3630
        %4191 = vmatpush1.bf16.msra.mxu0 %v3629
        %4192 = vmatprep.subr.bf16.mxu0 %v3622
        %4193 = vmatpush1.bf16.msra.mxu0 %v3621
        %4194 = vmatprep.subr.bf16.mxu0 %v3614
        %4195 = vmatpush1.bf16.msra.mxu0 %v3613
        %4196 = vmatprep.subr.bf16.mxu0 %v3606
        %4197 = vmatpush1.bf16.msra.mxu0 %v3605
        %4198 = vmatprep.subr.bf16.mxu0 %v3598
        %4199 = vmatpush1.bf16.msra.mxu0 %v3597
        %4200 = vmatprep.subr.bf16.mxu0 %v3590
        %4201 = vmatpush1.bf16.msra.mxu0 %v3589
        %4202 = vmatprep.subr.bf16.mxu0 %v3582
        %4203 = vmatpush1.bf16.msra.mxu0 %v3581
        %4204 = vmatprep.subr.bf16.mxu0 %v3702
        %4205 = vmatpush2.bf16.msra.mxu0 %v3701
        %4206 = vmatprep.subr.bf16.mxu0 %v3694
        %4207 = vmatpush2.bf16.msra.mxu0 %v3693
        %4208 = vmatprep.subr.bf16.mxu0 %v3686
        %4209 = vmatpush2.bf16.msra.mxu0 %v3685
        %4210 = vmatprep.subr.bf16.mxu0 %v3678
        %4211 = vmatpush2.bf16.msra.mxu0 %v3677
        %4212 = vmatprep.subr.bf16.mxu0 %v3670
        %4213 = vmatpush2.bf16.msra.mxu0 %v3669
        %4214 = vmatprep.subr.bf16.mxu0 %v3662
        %4215 = vmatpush2.bf16.msra.mxu0 %v3661
        %4216 = vmatprep.subr.bf16.mxu0 %v3654
        %4217 = vmatpush2.bf16.msra.mxu0 %v3653
        %4218 = vmatprep.subr.bf16.mxu0 %v3646
        %4219 = vmatpush2.bf16.msra.mxu0 %v3645
        %4220 = vmatprep.mubr.bf16.mxu0 %v3134
        %4221 = vmatmul.mubr.bf16.gmra.mxu0 %v3133
        %v4222 = vpop.f32.mrf.mxu0
        %v4223 = vadd.f32 %v3096, %v4222
        %v4224 = vpop.f32.mrf.mxu0
        %v4225 = vadd.f32 %v3096, %v4224
        %v4226 = vpop.f32.mrf.mxu0
        %v4227 = vadd.f32 %v3101, %v4226
        %v4228 = vpop.f32.mrf.mxu0
        %v4229 = vadd.f32 %v3101, %v4228
        %4230 = vmatprep.mubr.bf16.mxu0 %v3137
        %4231 = vmatmul.mubr.bf16.gmra.mxu0 %v3136
        %v4232 = vpop.f32.mrf.mxu0
        %v4233 = vadd.f32 %v3106, %v4232
        %v4234 = vpop.f32.mrf.mxu0
        %v4235 = vadd.f32 %v3106, %v4234
        %v4236 = vpop.f32.mrf.mxu0
        %v4237 = vadd.f32 %v3111, %v4236
        %v4238 = vpop.f32.mrf.mxu0
        %v4239 = vadd.f32 %v3111, %v4238
        %4240 = vdwg.mxu0
        %4241 = vmatprep.subr.bf16.mxu0 0
        %4242 = vmatpush1.bf16.msra.mxu0 0
        %4243 = vmatprep.subr.bf16.mxu0 0
        %4244 = vmatpush1.bf16.msra.mxu0 0
        %4245 = vmatprep.subr.bf16.mxu0 0
        %4246 = vmatpush1.bf16.msra.mxu0 0
        %4247 = vmatprep.subr.bf16.mxu0 0
        %4248 = vmatpush1.bf16.msra.mxu0 0
        %4249 = vmatprep.subr.bf16.mxu0 0
        %4250 = vmatpush1.bf16.msra.mxu0 0
        %4251 = vmatprep.subr.bf16.mxu0 0
        %4252 = vmatpush1.bf16.msra.mxu0 0
        %4253 = vmatprep.subr.bf16.mxu0 %v3718
        %4254 = vmatpush1.bf16.msra.mxu0 %v3717
        %4255 = vmatprep.subr.bf16.mxu0 %v3710
        %4256 = vmatpush1.bf16.msra.mxu0 %v3709
        %4257 = vmatprep.subr.bf16.mxu0 0
        %4258 = vmatpush2.bf16.msra.mxu0 0
        %4259 = vmatprep.subr.bf16.mxu0 0
        %4260 = vmatpush2.bf16.msra.mxu0 0
        %4261 = vmatprep.subr.bf16.mxu0 0
        %4262 = vmatpush2.bf16.msra.mxu0 0
        %4263 = vmatprep.subr.bf16.mxu0 0
        %4264 = vmatpush2.bf16.msra.mxu0 0
        %4265 = vmatprep.subr.bf16.mxu0 0
        %4266 = vmatpush2.bf16.msra.mxu0 0
        %4267 = vmatprep.subr.bf16.mxu0 0
        %4268 = vmatpush2.bf16.msra.mxu0 0
        %4269 = vmatprep.subr.bf16.mxu0 0
        %4270 = vmatpush2.bf16.msra.mxu0 0
        %4271 = vmatprep.subr.bf16.mxu0 0
        %4272 = vmatpush2.bf16.msra.mxu0 0
        %4273 = vmatprep.mubr.bf16.mxu0 0
        %4274 = vmatmul.mubr.bf16.gmra.mxu0 %v3865
        %v4275 = vpop.f32.mrf.mxu0
        %v4276 = vadd.f32 %v4223, %v4275
        %v4277 = vpop.f32.mrf.mxu0
        %v4278 = vadd.f32 %v4225, %v4277
        %v4279 = vpop.f32.mrf.mxu0
        %v4280 = vadd.f32 %v4227, %v4279
        %v4281 = vpop.f32.mrf.mxu0
        %v4282 = vadd.f32 %v4229, %v4281
        %4283 = vmatprep.mubr.bf16.mxu0 0
        %4284 = vmatmul.mubr.bf16.gmra.mxu0 %v3868
        %v4285 = vpop.f32.mrf.mxu0
        %v4286 = vadd.f32 %v4233, %v4285
        %v4287 = vpop.f32.mrf.mxu0
        %v4288 = vadd.f32 %v4235, %v4287
        %v4289 = vpop.f32.mrf.mxu0
        %v4290 = vadd.f32 %v4237, %v4289
        %v4291 = vpop.f32.mrf.mxu0
        %v4292 = vadd.f32 %v4239, %v4291
        %4293 = vdwg.mxu0
        %v4294 = vmax.f32 %v3958, 0.0
        %v4295 = vmax.f32 %v3960, 0.0
        %v4296 = vmax.f32 %v4064, 0.0
        %v4297 = vmax.f32 %v4066, 0.0
        %v4298 = vmax.f32 %v4170, 0.0
        %v4299 = vmax.f32 %v4172, 0.0
        %v4300 = vmax.f32 %v4276, 0.0
        %v4301 = vmax.f32 %v4278, 0.0
        %v4302 = vmax.f32 %v3962, 0.0
        %v4303 = vmax.f32 %v3964, 0.0
        %v4304 = vmax.f32 %v4068, 0.0
        %v4305 = vmax.f32 %v4070, 0.0
        %v4306 = vmax.f32 %v4174, 0.0
        %v4307 = vmax.f32 %v4176, 0.0
        %v4308 = vmax.f32 %v4280, 0.0
        %v4309 = vmax.f32 %v4282, 0.0
        %v4310 = vmax.f32 %v3968, 0.0
        %v4311 = vmax.f32 %v3970, 0.0
        %v4312 = vmax.f32 %v4074, 0.0
        %v4313 = vmax.f32 %v4076, 0.0
        %v4314 = vmax.f32 %v4180, 0.0
        %v4315 = vmax.f32 %v4182, 0.0
        %v4316 = vmax.f32 %v4286, 0.0
        %v4317 = vmax.f32 %v4288, 0.0
        %v4318 = vmax.f32 %v3972, 0.0
        %v4319 = vmax.f32 %v3974, 0.0
        %v4320 = vmax.f32 %v4078, 0.0
        %v4321 = vmax.f32 %v4080, 0.0
        %v4322 = vmax.f32 %v4184, 0.0
        %v4323 = vmax.f32 %v4186, 0.0
        %v4324 = vmax.f32 %v4290, 0.0
        %v4325 = vmax.f32 %v4292, 0.0
        %v4326 = vpack.c.bf16 %v4302, %v4294
        %v4327 = vpack.c.bf16 %v4303, %v4295
        %v4328 = vpack.c.bf16 %v4304, %v4296
        %v4329 = vpack.c.bf16 %v4305, %v4297
        %v4330 = vpack.c.bf16 %v4306, %v4298
        %v4331 = vpack.c.bf16 %v4307, %v4299
        %v4332 = vpack.c.bf16 %v4308, %v4300
        %v4333 = vpack.c.bf16 %v4309, %v4301
        %v4334 = vpack.c.bf16 %v4318, %v4310
        %v4335 = vpack.c.bf16 %v4319, %v4311
        %v4336 = vpack.c.bf16 %v4320, %v4312
        %v4337 = vpack.c.bf16 %v4321, %v4313
        %v4338 = vpack.c.bf16 %v4322, %v4314
        %v4339 = vpack.c.bf16 %v4323, %v4315
        %v4340 = vpack.c.bf16 %v4324, %v4316
        %v4341 = vpack.c.bf16 %v4325, %v4317
        %v4358 = vunpack.c.l.b16 %v4326
        %v4359 = vunpack.c.l.b16 %v4327
        %v4360 = vunpack.c.l.b16 %v4328
        %v4361 = vunpack.c.l.b16 %v4329
        %v4362 = vunpack.c.l.b16 %v4330
        %v4363 = vunpack.c.l.b16 %v4331
        %v4364 = vunpack.c.l.b16 %v4332
        %v4365 = vunpack.c.l.b16 %v4333
        %v4366 = vunpack.c.h.b16 %v4326
        %v4367 = vunpack.c.h.b16 %v4327
        %v4368 = vunpack.c.h.b16 %v4328
        %v4369 = vunpack.c.h.b16 %v4329
        %v4370 = vunpack.c.h.b16 %v4330
        %v4371 = vunpack.c.h.b16 %v4331
        %v4372 = vunpack.c.h.b16 %v4332
        %v4373 = vunpack.c.h.b16 %v4333
        %v4374 = vunpack.c.l.b16 %v4334
        %v4375 = vunpack.c.l.b16 %v4335
        %v4376 = vunpack.c.l.b16 %v4336
        %v4377 = vunpack.c.l.b16 %v4337
        %v4378 = vunpack.c.l.b16 %v4338
        %v4379 = vunpack.c.l.b16 %v4339
        %v4380 = vunpack.c.l.b16 %v4340
        %v4381 = vunpack.c.l.b16 %v4341
        %v4382 = vunpack.c.h.b16 %v4334
        %v4383 = vunpack.c.h.b16 %v4335
        %v4384 = vunpack.c.h.b16 %v4336
        %v4385 = vunpack.c.h.b16 %v4337
        %v4386 = vunpack.c.h.b16 %v4338
        %v4387 = vunpack.c.h.b16 %v4339
        %v4388 = vunpack.c.h.b16 %v4340
        %v4389 = vunpack.c.h.b16 %v4341
        %v4390 = vpack.c.b16 %v4359, %v4358
        %v4391 = vpack.c.b16 %v4361, %v4360
        %v4392 = vpack.c.b16 %v4363, %v4362
        %v4393 = vpack.c.b16 %v4365, %v4364
        %v4394 = vpack.c.b16 %v4367, %v4366
        %v4395 = vpack.c.b16 %v4369, %v4368
        %v4396 = vpack.c.b16 %v4371, %v4370
        %v4397 = vpack.c.b16 %v4373, %v4372
        %v4398 = vpack.c.b16 %v4375, %v4374
        %v4399 = vpack.c.b16 %v4377, %v4376
        %v4400 = vpack.c.b16 %v4379, %v4378
        %v4401 = vpack.c.b16 %v4381, %v4380
        %v4402 = vpack.c.b16 %v4383, %v4382
        %v4403 = vpack.c.b16 %v4385, %v4384
        %v4404 = vpack.c.b16 %v4387, %v4386
        %v4405 = vpack.c.b16 %v4389, %v4388
        %4422 = vst [vmem:[#allocation3] sm:$0xff] %v4390
        %4423 = vst [vmem:[#allocation3 + $0x8] sm:$0xff] %v4391
        %4424 = vst [vmem:[#allocation3 + $0x10] sm:$0xff] %v4392
        %4425 = vst [vmem:[#allocation3 + $0x18] sm:$0xff] %v4393
        %4426 = vst [vmem:[#allocation3 + $0x24] sm:$0xff] %v4394
        %4427 = vst [vmem:[#allocation3 + $0x2c] sm:$0xff] %v4395
        %4428 = vst [vmem:[#allocation3 + $0x34] sm:$0xff] %v4396
        %4429 = vst [vmem:[#allocation3 + $0x3c] sm:$0xff] %v4397
        %4430 = vst [vmem:[#allocation3 + $0x48] sm:$0xff] %v4398
        %4431 = vst [vmem:[#allocation3 + $0x50] sm:$0xff] %v4399
        %4432 = vst [vmem:[#allocation3 + $0x58] sm:$0xff] %v4400
        %4433 = vst [vmem:[#allocation3 + $0x60] sm:$0xff] %v4401
        %4434 = vst [vmem:[#allocation3 + $0x6c] sm:$0xff] %v4402
        %4435 = vst [vmem:[#allocation3 + $0x74] sm:$0xff] %v4403
        %4436 = vst [vmem:[#allocation3 + $0x7c] sm:$0xff] %v4404
        %4437 = vst [vmem:[#allocation3 + $0x84] sm:$0xff] %v4405
        %v4438 = vld [vmem:[#allocation3] sm:$0xff]
        %v4439 = vld [vmem:[#allocation3 + $0x8] sm:$0xff]
        %v4440 = vld [vmem:[#allocation3 + $0x10] sm:$0xff]
        %v4441 = vld [vmem:[#allocation3 + $0x18] sm:$0xff]
        %v4442 = vld [vmem:[#allocation3 + $0x24] sm:$0xff]
        %v4443 = vld [vmem:[#allocation3 + $0x2c] sm:$0xff]
        %v4444 = vld [vmem:[#allocation3 + $0x34] sm:$0xff]
        %v4445 = vld [vmem:[#allocation3 + $0x3c] sm:$0xff]
        %v4446 = vld [vmem:[#allocation3 + $0x48] sm:$0xff]
        %v4447 = vld [vmem:[#allocation3 + $0x50] sm:$0xff]
        %v4448 = vld [vmem:[#allocation3 + $0x58] sm:$0xff]
        %v4449 = vld [vmem:[#allocation3 + $0x60] sm:$0xff]
        %v4450 = vld [vmem:[#allocation3 + $0x6c] sm:$0xff]
        %v4451 = vld [vmem:[#allocation3 + $0x74] sm:$0xff]
        %v4452 = vld [vmem:[#allocation3 + $0x7c] sm:$0xff]
        %v4453 = vld [vmem:[#allocation3 + $0x84] sm:$0xff]
        %v4454 = vld [vmem:[#allocation3] sm:$0xff]
        %v4455 = vld [vmem:[#allocation3 + $0x8] sm:$0xff]
        %v4456 = vld [vmem:[#allocation3 + $0x10] sm:$0xff]
        %v4457 = vld [vmem:[#allocation3 + $0x18] sm:$0xff]
        %v4458 = vld [vmem:[#allocation3 + $0x20] sm:$0xf]
        %v4459 = vld [vmem:[#allocation3 + $0x24] sm:$0xff]
        %v4460 = vld [vmem:[#allocation3 + $0x2c] sm:$0xff]
        %v4461 = vld [vmem:[#allocation3 + $0x34] sm:$0xff]
        %v4462 = vld [vmem:[#allocation3 + $0x3c] sm:$0xff]
        %v4463 = vld [vmem:[#allocation3 + $0x44] sm:$0xf]
        %v4464 = vld [vmem:[#allocation3 + $0x48] sm:$0xff]
        %v4465 = vld [vmem:[#allocation3 + $0x50] sm:$0xff]
        %v4466 = vld [vmem:[#allocation3 + $0x58] sm:$0xff]
        %v4467 = vld [vmem:[#allocation3 + $0x60] sm:$0xff]
        %v4468 = vld [vmem:[#allocation3 + $0x68] sm:$0xf]
        %v4469 = vld [vmem:[#allocation3 + $0x6c] sm:$0xff]
        %v4470 = vld [vmem:[#allocation3 + $0x74] sm:$0xff]
        %v4471 = vld [vmem:[#allocation3 + $0x7c] sm:$0xff]
        %v4472 = vld [vmem:[#allocation3 + $0x84] sm:$0xff]
        %v4473 = vld [vmem:[#allocation3 + $0x8c] sm:$0xf]
        %4494 = vrot.lane.b32.xlu0 %v4454, 127
        %v4495 = vpop.permute.xlu0 %4494
        %4496 = vrot.lane.b32.xlu0 %v4455, 127
        %v4497 = vpop.permute.xlu0 %4496
        %4498 = vrot.lane.b32.xlu0 %v4456, 127
        %v4499 = vpop.permute.xlu0 %4498
        %4500 = vrot.lane.b32.xlu0 %v4457, 127
        %v4501 = vpop.permute.xlu0 %4500
        %4502 = vrot.lane.b32.xlu0 %v4458, 127
        %v4503 = vpop.permute.xlu0 %4502
        %4504 = vrot.lane.b32.xlu0 %v4459, 127
        %v4505 = vpop.permute.xlu0 %4504
        %4506 = vrot.lane.b32.xlu0 %v4460, 127
        %v4507 = vpop.permute.xlu0 %4506
        %4508 = vrot.lane.b32.xlu0 %v4461, 127
        %v4509 = vpop.permute.xlu0 %4508
        %4510 = vrot.lane.b32.xlu0 %v4462, 127
        %v4511 = vpop.permute.xlu0 %4510
        %4512 = vrot.lane.b32.xlu0 %v4463, 127
        %v4513 = vpop.permute.xlu0 %4512
        %4514 = vrot.lane.b32.xlu0 %v4464, 127
        %v4515 = vpop.permute.xlu0 %4514
        %4516 = vrot.lane.b32.xlu0 %v4465, 127
        %v4517 = vpop.permute.xlu0 %4516
        %4518 = vrot.lane.b32.xlu0 %v4466, 127
        %v4519 = vpop.permute.xlu0 %4518
        %4520 = vrot.lane.b32.xlu0 %v4467, 127
        %v4521 = vpop.permute.xlu0 %4520
        %4522 = vrot.lane.b32.xlu0 %v4468, 127
        %v4523 = vpop.permute.xlu0 %4522
        %4524 = vrot.lane.b32.xlu0 %v4469, 127
        %v4525 = vpop.permute.xlu0 %4524
        %4526 = vrot.lane.b32.xlu0 %v4470, 127
        %v4527 = vpop.permute.xlu0 %4526
        %4528 = vrot.lane.b32.xlu0 %v4471, 127
        %v4529 = vpop.permute.xlu0 %4528
        %4530 = vrot.lane.b32.xlu0 %v4472, 127
        %v4531 = vpop.permute.xlu0 %4530
        %4532 = vrot.lane.b32.xlu0 %v4473, 127
        %v4533 = vpop.permute.xlu0 %4532
        %v4534 = vrot.slane %v4495, 4
        %v4535 = vrot.slane %v4497, 4
        %v4536 = vrot.slane %v4499, 4
        %v4537 = vrot.slane %v4501, 4
        %v4538 = vrot.slane %v4503, 4
        %v4539 = vrot.slane %v4505, 4
        %v4540 = vrot.slane %v4507, 4
        %v4541 = vrot.slane %v4509, 4
        %v4542 = vrot.slane %v4511, 4
        %v4543 = vrot.slane %v4513, 4
        %v4544 = vrot.slane %v4515, 4
        %v4545 = vrot.slane %v4517, 4
        %v4546 = vrot.slane %v4519, 4
        %v4547 = vrot.slane %v4521, 4
        %v4548 = vrot.slane %v4523, 4
        %v4549 = vrot.slane %v4525, 4
        %v4550 = vrot.slane %v4527, 4
        %v4551 = vrot.slane %v4529, 4
        %v4552 = vrot.slane %v4531, 4
        %v4553 = vrot.slane %v4533, 4
        %v4554 = vsel %vm1716, %v4534, %v4535
        %v4555 = vsel %vm1718, %v4495, %v4554
        %v4556 = vsel %vm1716, %v4535, %v4536
        %v4557 = vsel %vm1718, %v4497, %v4556
        %v4558 = vsel %vm1716, %v4536, %v4537
        %v4559 = vsel %vm1718, %v4499, %v4558
        %v4560 = vsel %vm1716, %v4537, %v4538
        %v4561 = vsel %vm1718, %v4501, %v4560
        %v4562 = vsel %vm1716, %v4539, %v4540
        %v4563 = vsel %vm1718, %v4505, %v4562
        %v4564 = vsel %vm1716, %v4540, %v4541
        %v4565 = vsel %vm1718, %v4507, %v4564
        %v4566 = vsel %vm1716, %v4541, %v4542
        %v4567 = vsel %vm1718, %v4509, %v4566
        %v4568 = vsel %vm1716, %v4542, %v4543
        %v4569 = vsel %vm1718, %v4511, %v4568
        %v4570 = vsel %vm1716, %v4544, %v4545
        %v4571 = vsel %vm1718, %v4515, %v4570
        %v4572 = vsel %vm1716, %v4545, %v4546
        %v4573 = vsel %vm1718, %v4517, %v4572
        %v4574 = vsel %vm1716, %v4546, %v4547
        %v4575 = vsel %vm1718, %v4519, %v4574
        %v4576 = vsel %vm1716, %v4547, %v4548
        %v4577 = vsel %vm1718, %v4521, %v4576
        %v4578 = vsel %vm1716, %v4549, %v4550
        %v4579 = vsel %vm1718, %v4525, %v4578
        %v4580 = vsel %vm1716, %v4550, %v4551
        %v4581 = vsel %vm1718, %v4527, %v4580
        %v4582 = vsel %vm1716, %v4551, %v4552
        %v4583 = vsel %vm1718, %v4529, %v4582
        %v4584 = vsel %vm1716, %v4552, %v4553
        %v4585 = vsel %vm1718, %v4531, %v4584
        %v4602 = vmax.bf16 %v4438, %v4555
        %v4603 = vmax.bf16 %v4439, %v4557
        %v4604 = vmax.bf16 %v4440, %v4559
        %v4605 = vmax.bf16 %v4441, %v4561
        %v4606 = vmax.bf16 %v4442, %v4563
        %v4607 = vmax.bf16 %v4443, %v4565
        %v4608 = vmax.bf16 %v4444, %v4567
        %v4609 = vmax.bf16 %v4445, %v4569
        %v4610 = vmax.bf16 %v4446, %v4571
        %v4611 = vmax.bf16 %v4447, %v4573
        %v4612 = vmax.bf16 %v4448, %v4575
        %v4613 = vmax.bf16 %v4449, %v4577
        %v4614 = vmax.bf16 %v4450, %v4579
        %v4615 = vmax.bf16 %v4451, %v4581
        %v4616 = vmax.bf16 %v4452, %v4583
        %v4617 = vmax.bf16 %v4453, %v4585
        %v4622 = vmax.bf16 %v4454, %v4555
        %v4623 = vmax.bf16 %v4455, %v4557
        %v4624 = vmax.bf16 %v4456, %v4559
        %v4625 = vmax.bf16 %v4457, %v4561
        %v4626 = vmax.bf16 %v4458, %v4503
        %v4627 = vmax.bf16 %v4459, %v4563
        %v4628 = vmax.bf16 %v4460, %v4565
        %v4629 = vmax.bf16 %v4461, %v4567
        %v4630 = vmax.bf16 %v4462, %v4569
        %v4631 = vmax.bf16 %v4463, %v4513
        %v4632 = vmax.bf16 %v4464, %v4571
        %v4633 = vmax.bf16 %v4465, %v4573
        %v4634 = vmax.bf16 %v4466, %v4575
        %v4635 = vmax.bf16 %v4467, %v4577
        %v4636 = vmax.bf16 %v4468, %v4523
        %v4637 = vmax.bf16 %v4469, %v4579
        %v4638 = vmax.bf16 %v4470, %v4581
        %v4639 = vmax.bf16 %v4471, %v4583
        %v4640 = vmax.bf16 %v4472, %v4585
        %v4641 = vmax.bf16 %v4473, %v4533
        %4662 = vrot.lane.b32.xlu0 %v4622, 96
        %v4663 = vpop.permute.xlu0 %4662
        %4664 = vrot.lane.b32.xlu0 %v4623, 96
        %v4665 = vpop.permute.xlu0 %4664
        %4666 = vrot.lane.b32.xlu0 %v4624, 96
        %v4667 = vpop.permute.xlu0 %4666
        %4668 = vrot.lane.b32.xlu0 %v4625, 96
        %v4669 = vpop.permute.xlu0 %4668
        %4670 = vrot.lane.b32.xlu0 %v4626, 96
        %v4671 = vpop.permute.xlu0 %4670
        %4672 = vrot.lane.b32.xlu0 %v4627, 96
        %v4673 = vpop.permute.xlu0 %4672
        %4674 = vrot.lane.b32.xlu0 %v4628, 96
        %v4675 = vpop.permute.xlu0 %4674
        %4676 = vrot.lane.b32.xlu0 %v4629, 96
        %v4677 = vpop.permute.xlu0 %4676
        %4678 = vrot.lane.b32.xlu0 %v4630, 96
        %v4679 = vpop.permute.xlu0 %4678
        %4680 = vrot.lane.b32.xlu0 %v4631, 96
        %v4681 = vpop.permute.xlu0 %4680
        %4682 = vrot.lane.b32.xlu0 %v4632, 96
        %v4683 = vpop.permute.xlu0 %4682
        %4684 = vrot.lane.b32.xlu0 %v4633, 96
        %v4685 = vpop.permute.xlu0 %4684
        %4686 = vrot.lane.b32.xlu0 %v4634, 96
        %v4687 = vpop.permute.xlu0 %4686
        %4688 = vrot.lane.b32.xlu0 %v4635, 96
        %v4689 = vpop.permute.xlu0 %4688
        %4690 = vrot.lane.b32.xlu0 %v4636, 96
        %v4691 = vpop.permute.xlu0 %4690
        %4692 = vrot.lane.b32.xlu0 %v4637, 96
        %v4693 = vpop.permute.xlu0 %4692
        %4694 = vrot.lane.b32.xlu0 %v4638, 96
        %v4695 = vpop.permute.xlu0 %4694
        %4696 = vrot.lane.b32.xlu0 %v4639, 96
        %v4697 = vpop.permute.xlu0 %4696
        %4698 = vrot.lane.b32.xlu0 %v4640, 96
        %v4699 = vpop.permute.xlu0 %4698
        %4700 = vrot.lane.b32.xlu0 %v4641, 96
        %v4701 = vpop.permute.xlu0 %4700
        %v4702 = vrot.slane %v4663, 4
        %v4703 = vrot.slane %v4665, 4
        %v4704 = vrot.slane %v4667, 4
        %v4705 = vrot.slane %v4669, 4
        %v4706 = vrot.slane %v4671, 4
        %v4707 = vrot.slane %v4673, 4
        %v4708 = vrot.slane %v4675, 4
        %v4709 = vrot.slane %v4677, 4
        %v4710 = vrot.slane %v4679, 4
        %v4711 = vrot.slane %v4681, 4
        %v4712 = vrot.slane %v4683, 4
        %v4713 = vrot.slane %v4685, 4
        %v4714 = vrot.slane %v4687, 4
        %v4715 = vrot.slane %v4689, 4
        %v4716 = vrot.slane %v4691, 4
        %v4717 = vrot.slane %v4693, 4
        %v4718 = vrot.slane %v4695, 4
        %v4719 = vrot.slane %v4697, 4
        %v4720 = vrot.slane %v4699, 4
        %v4721 = vrot.slane %v4701, 4
        %v4722 = vsel %vm1716, %v4702, %v4703
        %v4723 = vsel %vm2048, %v4663, %v4722
        %v4724 = vsel %vm1716, %v4703, %v4704
        %v4725 = vsel %vm2048, %v4665, %v4724
        %v4726 = vsel %vm1716, %v4704, %v4705
        %v4727 = vsel %vm2048, %v4667, %v4726
        %v4728 = vsel %vm1716, %v4705, %v4706
        %v4729 = vsel %vm2048, %v4669, %v4728
        %v4730 = vsel %vm1716, %v4707, %v4708
        %v4731 = vsel %vm2048, %v4673, %v4730
        %v4732 = vsel %vm1716, %v4708, %v4709
        %v4733 = vsel %vm2048, %v4675, %v4732
        %v4734 = vsel %vm1716, %v4709, %v4710
        %v4735 = vsel %vm2048, %v4677, %v4734
        %v4736 = vsel %vm1716, %v4710, %v4711
        %v4737 = vsel %vm2048, %v4679, %v4736
        %v4738 = vsel %vm1716, %v4712, %v4713
        %v4739 = vsel %vm2048, %v4683, %v4738
        %v4740 = vsel %vm1716, %v4713, %v4714
        %v4741 = vsel %vm2048, %v4685, %v4740
        %v4742 = vsel %vm1716, %v4714, %v4715
        %v4743 = vsel %vm2048, %v4687, %v4742
        %v4744 = vsel %vm1716, %v4715, %v4716
        %v4745 = vsel %vm2048, %v4689, %v4744
        %v4746 = vsel %vm1716, %v4717, %v4718
        %v4747 = vsel %vm2048, %v4693, %v4746
        %v4748 = vsel %vm1716, %v4718, %v4719
        %v4749 = vsel %vm2048, %v4695, %v4748
        %v4750 = vsel %vm1716, %v4719, %v4720
        %v4751 = vsel %vm2048, %v4697, %v4750
        %v4752 = vsel %vm1716, %v4720, %v4721
        %v4753 = vsel %vm2048, %v4699, %v4752
        %v4770 = vmax.bf16 %v4602, %v4723
        %v4771 = vmax.bf16 %v4603, %v4725
        %v4772 = vmax.bf16 %v4604, %v4727
        %v4773 = vmax.bf16 %v4605, %v4729
        %v4774 = vmax.bf16 %v4606, %v4731
        %v4775 = vmax.bf16 %v4607, %v4733
        %v4776 = vmax.bf16 %v4608, %v4735
        %v4777 = vmax.bf16 %v4609, %v4737
        %v4778 = vmax.bf16 %v4610, %v4739
        %v4779 = vmax.bf16 %v4611, %v4741
        %v4780 = vmax.bf16 %v4612, %v4743
        %v4781 = vmax.bf16 %v4613, %v4745
        %v4782 = vmax.bf16 %v4614, %v4747
        %v4783 = vmax.bf16 %v4615, %v4749
        %v4784 = vmax.bf16 %v4616, %v4751
        %v4785 = vmax.bf16 %v4617, %v4753
        %v4786 = vld [vmem:[%s5] sm:$0xff]
        %v4787 = vld [vmem:[%s5 + $0x8] sm:$0xff]
        %v4788 = vld [vmem:[%s5 + $0x10] sm:$0xff]
        %v4789 = vld [vmem:[%s5 + $0x18] sm:$0xff]
        %v4790 = vld [vmem:[%s5 + $0x20] sm:$0xff]
        %v4791 = vld [vmem:[%s5 + $0x28] sm:$0xff]
        %v4792 = vld [vmem:[%s5 + $0x30] sm:$0xff]
        %v4793 = vld [vmem:[%s5 + $0x38] sm:$0xff]
        %v4794 = vld [vmem:[%s5 + $0x40] sm:$0xff]
        %v4795 = vld [vmem:[%s5 + $0x48] sm:$0xff]
        %v4796 = vld [vmem:[%s5 + $0x50] sm:$0xff]
        %v4797 = vld [vmem:[%s5 + $0x58] sm:$0xff]
        %v4798 = vld [vmem:[%s5 + $0x60] sm:$0xff]
        %v4799 = vld [vmem:[%s5 + $0x68] sm:$0xff]
        %v4800 = vld [vmem:[%s5 + $0x70] sm:$0xff]
        %v4801 = vld [vmem:[%s5 + $0x78] sm:$0xff]
        %v4802 = vld [vmem:[%s5 + $0x80] sm:$0xff]
        %v4803 = vld [vmem:[%s5 + $0x88] sm:$0xff]
        %v4804 = vld [vmem:[%s5 + $0x90] sm:$0xff]
        %v4805 = vld [vmem:[%s5 + $0x98] sm:$0xff]
        %v4806 = vld [vmem:[%s5 + $0xa0] sm:$0xff]
        %v4807 = vld [vmem:[%s5 + $0xa8] sm:$0xff]
        %v4808 = vld [vmem:[%s5 + $0xb0] sm:$0xff]
        %v4809 = vld [vmem:[%s5 + $0xb8] sm:$0xff]
        %v4810 = vld [vmem:[%s5 + $0xc0] sm:$0xff]
        %v4811 = vld [vmem:[%s5 + $0xc8] sm:$0xff]
        %v4812 = vld [vmem:[%s5 + $0xd0] sm:$0xff]
        %v4813 = vld [vmem:[%s5 + $0xd8] sm:$0xff]
        %v4814 = vld [vmem:[%s5 + $0xe0] sm:$0xff]
        %v4815 = vld [vmem:[%s5 + $0xe8] sm:$0xff]
        %v4816 = vld [vmem:[%s5 + $0xf0] sm:$0xff]
        %v4817 = vld [vmem:[%s5 + $0xf8] sm:$0xff]
        %v4818 = vld [vmem:[%s5 + $0x100] sm:$0xff]
        %v4819 = vld [vmem:[%s5 + $0x108] sm:$0xff]
        %v4820 = vld [vmem:[%s5 + $0x110] sm:$0xff]
        %v4821 = vld [vmem:[%s5 + $0x118] sm:$0xff]
        %v4822 = vld [vmem:[%s5 + $0x120] sm:$0xff]
        %v4823 = vld [vmem:[%s5 + $0x128] sm:$0xff]
        %v4824 = vld [vmem:[%s5 + $0x130] sm:$0xff]
        %v4825 = vld [vmem:[%s5 + $0x138] sm:$0xff]
        %v4826 = vld [vmem:[%s5 + $0x140] sm:$0xff]
        %v4827 = vld [vmem:[%s5 + $0x148] sm:$0xff]
        %v4828 = vld [vmem:[%s5 + $0x150] sm:$0xff]
        %v4829 = vld [vmem:[%s5 + $0x158] sm:$0xff]
        %v4830 = vld [vmem:[%s5 + $0x160] sm:$0xff]
        %v4831 = vld [vmem:[%s5 + $0x168] sm:$0xff]
        %v4832 = vld [vmem:[%s5 + $0x170] sm:$0xff]
        %v4833 = vld [vmem:[%s5 + $0x178] sm:$0xff]
        %v4834 = vld [vmem:[%s5 + $0x180] sm:$0xff]
        %v4835 = vld [vmem:[%s5 + $0x188] sm:$0xff]
        %v4836 = vld [vmem:[%s5 + $0x190] sm:$0xff]
        %v4837 = vld [vmem:[%s5 + $0x198] sm:$0xff]
        %v4838 = vld [vmem:[%s5 + $0x1a0] sm:$0xff]
        %v4839 = vld [vmem:[%s5 + $0x1a8] sm:$0xff]
        %v4840 = vld [vmem:[%s5 + $0x1b0] sm:$0xff]
        %v4841 = vld [vmem:[%s5 + $0x1b8] sm:$0xff]
        %v4842 = vld [vmem:[%s5 + $0x1c0] sm:$0xff]
        %v4843 = vld [vmem:[%s5 + $0x1c8] sm:$0xff]
        %v4844 = vld [vmem:[%s5 + $0x1d0] sm:$0xff]
        %v4845 = vld [vmem:[%s5 + $0x1d8] sm:$0xff]
        %v4846 = vld [vmem:[%s5 + $0x1e0] sm:$0xff]
        %v4847 = vld [vmem:[%s5 + $0x1e8] sm:$0xff]
        %v4848 = vld [vmem:[%s5 + $0x1f0] sm:$0xff]
        %v4849 = vld [vmem:[%s5 + $0x1f8] sm:$0xff]
        %v4850 = vld [vmem:[%s5 + $0x200] sm:$0xff]
        %v4851 = vld [vmem:[%s5 + $0x208] sm:$0xff]
        %v4852 = vld [vmem:[%s5 + $0x210] sm:$0xff]
        %v4853 = vld [vmem:[%s5 + $0x218] sm:$0xff]
        %v4854 = vld [vmem:[%s5 + $0x220] sm:$0xff]
        %v4855 = vld [vmem:[%s5 + $0x228] sm:$0xff]
        %v4856 = vld [vmem:[%s5 + $0x230] sm:$0xff]
        %v4857 = vld [vmem:[%s5 + $0x238] sm:$0xff]
        %v4858 = vld [vmem:[%s5 + $0x240] sm:$0xff]
        %v4859 = vld [vmem:[%s5 + $0x248] sm:$0xff]
        %v4860 = vld [vmem:[%s5 + $0x250] sm:$0xff]
        %v4861 = vld [vmem:[%s5 + $0x258] sm:$0xff]
        %v4862 = vld [vmem:[%s5 + $0x260] sm:$0xff]
        %v4863 = vld [vmem:[%s5 + $0x268] sm:$0xff]
        %v4864 = vld [vmem:[%s5 + $0x270] sm:$0xff]
        %v4865 = vld [vmem:[%s5 + $0x278] sm:$0xff]
        %v4866 = vld [vmem:[%s5 + $0x280] sm:$0xff]
        %v4867 = vld [vmem:[%s5 + $0x288] sm:$0xff]
        %v4868 = vld [vmem:[%s5 + $0x290] sm:$0xff]
        %v4869 = vld [vmem:[%s5 + $0x298] sm:$0xff]
        %v4870 = vld [vmem:[%s5 + $0x2a0] sm:$0xff]
        %v4871 = vld [vmem:[%s5 + $0x2a8] sm:$0xff]
        %v4872 = vld [vmem:[%s5 + $0x2b0] sm:$0xff]
        %v4873 = vld [vmem:[%s5 + $0x2b8] sm:$0xff]
        %v4874 = vld [vmem:[%s5 + $0x2c0] sm:$0xff]
        %v4875 = vld [vmem:[%s5 + $0x2c8] sm:$0xff]
        %v4876 = vld [vmem:[%s5 + $0x2d0] sm:$0xff]
        %v4877 = vld [vmem:[%s5 + $0x2d8] sm:$0xff]
        %v4878 = vld [vmem:[%s5 + $0x2e0] sm:$0xff]
        %v4879 = vld [vmem:[%s5 + $0x2e8] sm:$0xff]
        %v4880 = vld [vmem:[%s5 + $0x2f0] sm:$0xff]
        %v4881 = vld [vmem:[%s5 + $0x2f8] sm:$0xff]
        %v4882 = vld [vmem:[%s5 + $0x300] sm:$0xff]
        %v4883 = vld [vmem:[%s5 + $0x308] sm:$0xff]
        %v4884 = vld [vmem:[%s5 + $0x310] sm:$0xff]
        %v4885 = vld [vmem:[%s5 + $0x318] sm:$0xff]
        %v4886 = vld [vmem:[%s5 + $0x320] sm:$0xff]
        %v4887 = vld [vmem:[%s5 + $0x328] sm:$0xff]
        %v4888 = vld [vmem:[%s5 + $0x330] sm:$0xff]
        %v4889 = vld [vmem:[%s5 + $0x338] sm:$0xff]
        %v4890 = vld [vmem:[%s5 + $0x340] sm:$0xff]
        %v4891 = vld [vmem:[%s5 + $0x348] sm:$0xff]
        %v4892 = vld [vmem:[%s5 + $0x350] sm:$0xff]
        %v4893 = vld [vmem:[%s5 + $0x358] sm:$0xff]
        %v4894 = vld [vmem:[%s5 + $0x360] sm:$0xff]
        %v4895 = vld [vmem:[%s5 + $0x368] sm:$0xff]
        %v4896 = vld [vmem:[%s5 + $0x370] sm:$0xff]
        %v4897 = vld [vmem:[%s5 + $0x378] sm:$0xff]
        %v4898 = vld [vmem:[%s5 + $0x380] sm:$0xff]
        %v4899 = vld [vmem:[%s5 + $0x388] sm:$0xff]
        %v4900 = vld [vmem:[%s5 + $0x390] sm:$0xff]
        %v4901 = vld [vmem:[%s5 + $0x398] sm:$0xff]
        %v4902 = vld [vmem:[%s5 + $0x3a0] sm:$0xff]
        %v4903 = vld [vmem:[%s5 + $0x3a8] sm:$0xff]
        %v4904 = vld [vmem:[%s5 + $0x3b0] sm:$0xff]
        %v4905 = vld [vmem:[%s5 + $0x3b8] sm:$0xff]
        %v4906 = vld [vmem:[%s5 + $0x3c0] sm:$0xff]
        %v4907 = vld [vmem:[%s5 + $0x3c8] sm:$0xff]
        %v4908 = vld [vmem:[%s5 + $0x3d0] sm:$0xff]
        %v4909 = vld [vmem:[%s5 + $0x3d8] sm:$0xff]
        %v4910 = vld [vmem:[%s5 + $0x3e0] sm:$0xff]
        %v4911 = vld [vmem:[%s5 + $0x3e8] sm:$0xff]
        %v4912 = vld [vmem:[%s5 + $0x3f0] sm:$0xff]
        %v4913 = vld [vmem:[%s5 + $0x3f8] sm:$0xff]
        %v4930 = vunpack.c.l.b16 %v4770
        %v4931 = vunpack.c.h.b16 %v4770
        %v4932 = vunpack.c.l.b16 %v4771
        %v4933 = vunpack.c.h.b16 %v4771
        %v4934 = vunpack.c.l.b16 %v4772
        %v4935 = vunpack.c.h.b16 %v4772
        %v4936 = vunpack.c.l.b16 %v4773
        %v4937 = vunpack.c.h.b16 %v4773
        %v4938 = vunpack.c.l.b16 %v4774
        %v4939 = vunpack.c.h.b16 %v4774
        %v4940 = vunpack.c.l.b16 %v4775
        %v4941 = vunpack.c.h.b16 %v4775
        %v4942 = vunpack.c.l.b16 %v4776
        %v4943 = vunpack.c.h.b16 %v4776
        %v4944 = vunpack.c.l.b16 %v4777
        %v4945 = vunpack.c.h.b16 %v4777
        %v4946 = vunpack.c.l.b16 %v4778
        %v4947 = vunpack.c.h.b16 %v4778
        %v4948 = vunpack.c.l.b16 %v4779
        %v4949 = vunpack.c.h.b16 %v4779
        %v4950 = vunpack.c.l.b16 %v4780
        %v4951 = vunpack.c.h.b16 %v4780
        %v4952 = vunpack.c.l.b16 %v4781
        %v4953 = vunpack.c.h.b16 %v4781
        %v4954 = vunpack.c.l.b16 %v4782
        %v4955 = vunpack.c.h.b16 %v4782
        %v4956 = vunpack.c.l.b16 %v4783
        %v4957 = vunpack.c.h.b16 %v4783
        %v4958 = vunpack.c.l.b16 %v4784
        %v4959 = vunpack.c.h.b16 %v4784
        %v4960 = vunpack.c.l.b16 %v4785
        %v4961 = vunpack.c.h.b16 %v4785
        %v4962 = vpack.c.b16 %v4938, %v4930
        %v4963 = vpack.c.b16 %v4939, %v4931
        %v4964 = vpack.c.b16 %v4940, %v4932
        %v4965 = vpack.c.b16 %v4941, %v4933
        %v4966 = vpack.c.b16 %v4942, %v4934
        %v4967 = vpack.c.b16 %v4943, %v4935
        %v4968 = vpack.c.b16 %v4944, %v4936
        %v4969 = vpack.c.b16 %v4945, %v4937
        %v4970 = vpack.c.b16 %v4954, %v4946
        %v4971 = vpack.c.b16 %v4955, %v4947
        %v4972 = vpack.c.b16 %v4956, %v4948
        %v4973 = vpack.c.b16 %v4957, %v4949
        %v4974 = vpack.c.b16 %v4958, %v4950
        %v4975 = vpack.c.b16 %v4959, %v4951
        %v4976 = vpack.c.b16 %v4960, %v4952
        %v4977 = vpack.c.b16 %v4961, %v4953
        %v5122 = vunpack.c.l.b16 %v4786
        %v5123 = vunpack.c.h.b16 %v4786
        %v5124 = vunpack.c.l.b16 %v4787
        %v5125 = vunpack.c.h.b16 %v4787
        %v5126 = vunpack.c.l.b16 %v4788
        %v5127 = vunpack.c.h.b16 %v4788
        %v5128 = vunpack.c.l.b16 %v4789
        %v5129 = vunpack.c.h.b16 %v4789
        %v5130 = vunpack.c.l.b16 %v4790
        %v5131 = vunpack.c.h.b16 %v4790
        %v5132 = vunpack.c.l.b16 %v4791
        %v5133 = vunpack.c.h.b16 %v4791
        %v5134 = vunpack.c.l.b16 %v4792
        %v5135 = vunpack.c.h.b16 %v4792
        %v5136 = vunpack.c.l.b16 %v4793
        %v5137 = vunpack.c.h.b16 %v4793
        %v5138 = vunpack.c.l.b16 %v4794
        %v5139 = vunpack.c.h.b16 %v4794
        %v5140 = vunpack.c.l.b16 %v4795
        %v5141 = vunpack.c.h.b16 %v4795
        %v5142 = vunpack.c.l.b16 %v4796
        %v5143 = vunpack.c.h.b16 %v4796
        %v5144 = vunpack.c.l.b16 %v4797
        %v5145 = vunpack.c.h.b16 %v4797
        %v5146 = vunpack.c.l.b16 %v4798
        %v5147 = vunpack.c.h.b16 %v4798
        %v5148 = vunpack.c.l.b16 %v4799
        %v5149 = vunpack.c.h.b16 %v4799
        %v5150 = vunpack.c.l.b16 %v4800
        %v5151 = vunpack.c.h.b16 %v4800
        %v5152 = vunpack.c.l.b16 %v4801
        %v5153 = vunpack.c.h.b16 %v4801
        %v5154 = vunpack.c.l.b16 %v4802
        %v5155 = vunpack.c.h.b16 %v4802
        %v5156 = vunpack.c.l.b16 %v4803
        %v5157 = vunpack.c.h.b16 %v4803
        %v5158 = vunpack.c.l.b16 %v4804
        %v5159 = vunpack.c.h.b16 %v4804
        %v5160 = vunpack.c.l.b16 %v4805
        %v5161 = vunpack.c.h.b16 %v4805
        %v5162 = vunpack.c.l.b16 %v4806
        %v5163 = vunpack.c.h.b16 %v4806
        %v5164 = vunpack.c.l.b16 %v4807
        %v5165 = vunpack.c.h.b16 %v4807
        %v5166 = vunpack.c.l.b16 %v4808
        %v5167 = vunpack.c.h.b16 %v4808
        %v5168 = vunpack.c.l.b16 %v4809
        %v5169 = vunpack.c.h.b16 %v4809
        %v5170 = vunpack.c.l.b16 %v4810
        %v5171 = vunpack.c.h.b16 %v4810
        %v5172 = vunpack.c.l.b16 %v4811
        %v5173 = vunpack.c.h.b16 %v4811
        %v5174 = vunpack.c.l.b16 %v4812
        %v5175 = vunpack.c.h.b16 %v4812
        %v5176 = vunpack.c.l.b16 %v4813
        %v5177 = vunpack.c.h.b16 %v4813
        %v5178 = vunpack.c.l.b16 %v4814
        %v5179 = vunpack.c.h.b16 %v4814
        %v5180 = vunpack.c.l.b16 %v4815
        %v5181 = vunpack.c.h.b16 %v4815
        %v5182 = vunpack.c.l.b16 %v4816
        %v5183 = vunpack.c.h.b16 %v4816
        %v5184 = vunpack.c.l.b16 %v4817
        %v5185 = vunpack.c.h.b16 %v4817
        %v5186 = vunpack.c.l.b16 %v4818
        %v5187 = vunpack.c.h.b16 %v4818
        %v5188 = vunpack.c.l.b16 %v4819
        %v5189 = vunpack.c.h.b16 %v4819
        %v5190 = vunpack.c.l.b16 %v4820
        %v5191 = vunpack.c.h.b16 %v4820
        %v5192 = vunpack.c.l.b16 %v4821
        %v5193 = vunpack.c.h.b16 %v4821
        %v5194 = vunpack.c.l.b16 %v4822
        %v5195 = vunpack.c.h.b16 %v4822
        %v5196 = vunpack.c.l.b16 %v4823
        %v5197 = vunpack.c.h.b16 %v4823
        %v5198 = vunpack.c.l.b16 %v4824
        %v5199 = vunpack.c.h.b16 %v4824
        %v5200 = vunpack.c.l.b16 %v4825
        %v5201 = vunpack.c.h.b16 %v4825
        %v5202 = vunpack.c.l.b16 %v4826
        %v5203 = vunpack.c.h.b16 %v4826
        %v5204 = vunpack.c.l.b16 %v4827
        %v5205 = vunpack.c.h.b16 %v4827
        %v5206 = vunpack.c.l.b16 %v4828
        %v5207 = vunpack.c.h.b16 %v4828
        %v5208 = vunpack.c.l.b16 %v4829
        %v5209 = vunpack.c.h.b16 %v4829
        %v5210 = vunpack.c.l.b16 %v4830
        %v5211 = vunpack.c.h.b16 %v4830
        %v5212 = vunpack.c.l.b16 %v4831
        %v5213 = vunpack.c.h.b16 %v4831
        %v5214 = vunpack.c.l.b16 %v4832
        %v5215 = vunpack.c.h.b16 %v4832
        %v5216 = vunpack.c.l.b16 %v4833
        %v5217 = vunpack.c.h.b16 %v4833
        %v5218 = vunpack.c.l.b16 %v4834
        %v5219 = vunpack.c.h.b16 %v4834
        %v5220 = vunpack.c.l.b16 %v4835
        %v5221 = vunpack.c.h.b16 %v4835
        %v5222 = vunpack.c.l.b16 %v4836
        %v5223 = vunpack.c.h.b16 %v4836
        %v5224 = vunpack.c.l.b16 %v4837
        %v5225 = vunpack.c.h.b16 %v4837
        %v5226 = vunpack.c.l.b16 %v4838
        %v5227 = vunpack.c.h.b16 %v4838
        %v5228 = vunpack.c.l.b16 %v4839
        %v5229 = vunpack.c.h.b16 %v4839
        %v5230 = vunpack.c.l.b16 %v4840
        %v5231 = vunpack.c.h.b16 %v4840
        %v5232 = vunpack.c.l.b16 %v4841
        %v5233 = vunpack.c.h.b16 %v4841
        %v5234 = vunpack.c.l.b16 %v4842
        %v5235 = vunpack.c.h.b16 %v4842
        %v5236 = vunpack.c.l.b16 %v4843
        %v5237 = vunpack.c.h.b16 %v4843
        %v5238 = vunpack.c.l.b16 %v4844
        %v5239 = vunpack.c.h.b16 %v4844
        %v5240 = vunpack.c.l.b16 %v4845
        %v5241 = vunpack.c.h.b16 %v4845
        %v5242 = vunpack.c.l.b16 %v4846
        %v5243 = vunpack.c.h.b16 %v4846
        %v5244 = vunpack.c.l.b16 %v4847
        %v5245 = vunpack.c.h.b16 %v4847
        %v5246 = vunpack.c.l.b16 %v4848
        %v5247 = vunpack.c.h.b16 %v4848
        %v5248 = vunpack.c.l.b16 %v4849
        %v5249 = vunpack.c.h.b16 %v4849
        %v5250 = vunpack.c.l.b16 %v4850
        %v5251 = vunpack.c.h.b16 %v4850
        %v5252 = vunpack.c.l.b16 %v4851
        %v5253 = vunpack.c.h.b16 %v4851
        %v5254 = vunpack.c.l.b16 %v4852
        %v5255 = vunpack.c.h.b16 %v4852
        %v5256 = vunpack.c.l.b16 %v4853
        %v5257 = vunpack.c.h.b16 %v4853
        %v5258 = vunpack.c.l.b16 %v4854
        %v5259 = vunpack.c.h.b16 %v4854
        %v5260 = vunpack.c.l.b16 %v4855
        %v5261 = vunpack.c.h.b16 %v4855
        %v5262 = vunpack.c.l.b16 %v4856
        %v5263 = vunpack.c.h.b16 %v4856
        %v5264 = vunpack.c.l.b16 %v4857
        %v5265 = vunpack.c.h.b16 %v4857
        %v5266 = vunpack.c.l.b16 %v4858
        %v5267 = vunpack.c.h.b16 %v4858
        %v5268 = vunpack.c.l.b16 %v4859
        %v5269 = vunpack.c.h.b16 %v4859
        %v5270 = vunpack.c.l.b16 %v4860
        %v5271 = vunpack.c.h.b16 %v4860
        %v5272 = vunpack.c.l.b16 %v4861
        %v5273 = vunpack.c.h.b16 %v4861
        %v5274 = vunpack.c.l.b16 %v4862
        %v5275 = vunpack.c.h.b16 %v4862
        %v5276 = vunpack.c.l.b16 %v4863
        %v5277 = vunpack.c.h.b16 %v4863
        %v5278 = vunpack.c.l.b16 %v4864
        %v5279 = vunpack.c.h.b16 %v4864
        %v5280 = vunpack.c.l.b16 %v4865
        %v5281 = vunpack.c.h.b16 %v4865
        %v5282 = vunpack.c.l.b16 %v4866
        %v5283 = vunpack.c.h.b16 %v4866
        %v5284 = vunpack.c.l.b16 %v4867
        %v5285 = vunpack.c.h.b16 %v4867
        %v5286 = vunpack.c.l.b16 %v4868
        %v5287 = vunpack.c.h.b16 %v4868
        %v5288 = vunpack.c.l.b16 %v4869
        %v5289 = vunpack.c.h.b16 %v4869
        %v5290 = vunpack.c.l.b16 %v4870
        %v5291 = vunpack.c.h.b16 %v4870
        %v5292 = vunpack.c.l.b16 %v4871
        %v5293 = vunpack.c.h.b16 %v4871
        %v5294 = vunpack.c.l.b16 %v4872
        %v5295 = vunpack.c.h.b16 %v4872
        %v5296 = vunpack.c.l.b16 %v4873
        %v5297 = vunpack.c.h.b16 %v4873
        %v5298 = vunpack.c.l.b16 %v4874
        %v5299 = vunpack.c.h.b16 %v4874
        %v5300 = vunpack.c.l.b16 %v4875
        %v5301 = vunpack.c.h.b16 %v4875
        %v5302 = vunpack.c.l.b16 %v4876
        %v5303 = vunpack.c.h.b16 %v4876
        %v5304 = vunpack.c.l.b16 %v4877
        %v5305 = vunpack.c.h.b16 %v4877
        %v5306 = vunpack.c.l.b16 %v4878
        %v5307 = vunpack.c.h.b16 %v4878
        %v5308 = vunpack.c.l.b16 %v4879
        %v5309 = vunpack.c.h.b16 %v4879
        %v5310 = vunpack.c.l.b16 %v4880
        %v5311 = vunpack.c.h.b16 %v4880
        %v5312 = vunpack.c.l.b16 %v4881
        %v5313 = vunpack.c.h.b16 %v4881
        %v5314 = vunpack.c.l.b16 %v4882
        %v5315 = vunpack.c.h.b16 %v4882
        %v5316 = vunpack.c.l.b16 %v4883
        %v5317 = vunpack.c.h.b16 %v4883
        %v5318 = vunpack.c.l.b16 %v4884
        %v5319 = vunpack.c.h.b16 %v4884
        %v5320 = vunpack.c.l.b16 %v4885
        %v5321 = vunpack.c.h.b16 %v4885
        %v5322 = vunpack.c.l.b16 %v4886
        %v5323 = vunpack.c.h.b16 %v4886
        %v5324 = vunpack.c.l.b16 %v4887
        %v5325 = vunpack.c.h.b16 %v4887
        %v5326 = vunpack.c.l.b16 %v4888
        %v5327 = vunpack.c.h.b16 %v4888
        %v5328 = vunpack.c.l.b16 %v4889
        %v5329 = vunpack.c.h.b16 %v4889
        %v5330 = vunpack.c.l.b16 %v4890
        %v5331 = vunpack.c.h.b16 %v4890
        %v5332 = vunpack.c.l.b16 %v4891
        %v5333 = vunpack.c.h.b16 %v4891
        %v5334 = vunpack.c.l.b16 %v4892
        %v5335 = vunpack.c.h.b16 %v4892
        %v5336 = vunpack.c.l.b16 %v4893
        %v5337 = vunpack.c.h.b16 %v4893
        %v5338 = vunpack.c.l.b16 %v4894
        %v5339 = vunpack.c.h.b16 %v4894
        %v5340 = vunpack.c.l.b16 %v4895
        %v5341 = vunpack.c.h.b16 %v4895
        %v5342 = vunpack.c.l.b16 %v4896
        %v5343 = vunpack.c.h.b16 %v4896
        %v5344 = vunpack.c.l.b16 %v4897
        %v5345 = vunpack.c.h.b16 %v4897
        %v5346 = vunpack.c.l.b16 %v4898
        %v5347 = vunpack.c.h.b16 %v4898
        %v5348 = vunpack.c.l.b16 %v4899
        %v5349 = vunpack.c.h.b16 %v4899
        %v5350 = vunpack.c.l.b16 %v4900
        %v5351 = vunpack.c.h.b16 %v4900
        %v5352 = vunpack.c.l.b16 %v4901
        %v5353 = vunpack.c.h.b16 %v4901
        %v5354 = vunpack.c.l.b16 %v4902
        %v5355 = vunpack.c.h.b16 %v4902
        %v5356 = vunpack.c.l.b16 %v4903
        %v5357 = vunpack.c.h.b16 %v4903
        %v5358 = vunpack.c.l.b16 %v4904
        %v5359 = vunpack.c.h.b16 %v4904
        %v5360 = vunpack.c.l.b16 %v4905
        %v5361 = vunpack.c.h.b16 %v4905
        %v5362 = vunpack.c.l.b16 %v4906
        %v5363 = vunpack.c.h.b16 %v4906
        %v5364 = vunpack.c.l.b16 %v4907
        %v5365 = vunpack.c.h.b16 %v4907
        %v5366 = vunpack.c.l.b16 %v4908
        %v5367 = vunpack.c.h.b16 %v4908
        %v5368 = vunpack.c.l.b16 %v4909
        %v5369 = vunpack.c.h.b16 %v4909
        %v5370 = vunpack.c.l.b16 %v4910
        %v5371 = vunpack.c.h.b16 %v4910
        %v5372 = vunpack.c.l.b16 %v4911
        %v5373 = vunpack.c.h.b16 %v4911
        %v5374 = vunpack.c.l.b16 %v4912
        %v5375 = vunpack.c.h.b16 %v4912
        %v5376 = vunpack.c.l.b16 %v4913
        %v5377 = vunpack.c.h.b16 %v4913
        %v5378 = vpack.c.b16 %v5124, %v5122
        %v5379 = vpack.c.b16 %v5125, %v5123
        %v5380 = vpack.c.b16 %v5128, %v5126
        %v5381 = vpack.c.b16 %v5129, %v5127
        %v5382 = vpack.c.b16 %v5132, %v5130
        %v5383 = vpack.c.b16 %v5133, %v5131
        %v5384 = vpack.c.b16 %v5136, %v5134
        %v5385 = vpack.c.b16 %v5137, %v5135
        %v5386 = vpack.c.b16 %v5140, %v5138
        %v5387 = vpack.c.b16 %v5141, %v5139
        %v5388 = vpack.c.b16 %v5144, %v5142
        %v5389 = vpack.c.b16 %v5145, %v5143
        %v5390 = vpack.c.b16 %v5148, %v5146
        %v5391 = vpack.c.b16 %v5149, %v5147
        %v5392 = vpack.c.b16 %v5152, %v5150
        %v5393 = vpack.c.b16 %v5153, %v5151
        %v5394 = vpack.c.b16 %v5156, %v5154
        %v5395 = vpack.c.b16 %v5157, %v5155
        %v5396 = vpack.c.b16 %v5160, %v5158
        %v5397 = vpack.c.b16 %v5161, %v5159
        %v5398 = vpack.c.b16 %v5164, %v5162
        %v5399 = vpack.c.b16 %v5165, %v5163
        %v5400 = vpack.c.b16 %v5168, %v5166
        %v5401 = vpack.c.b16 %v5169, %v5167
        %v5402 = vpack.c.b16 %v5172, %v5170
        %v5403 = vpack.c.b16 %v5173, %v5171
        %v5404 = vpack.c.b16 %v5176, %v5174
        %v5405 = vpack.c.b16 %v5177, %v5175
        %v5406 = vpack.c.b16 %v5180, %v5178
        %v5407 = vpack.c.b16 %v5181, %v5179
        %v5408 = vpack.c.b16 %v5184, %v5182
        %v5409 = vpack.c.b16 %v5185, %v5183
        %v5410 = vpack.c.b16 %v5188, %v5186
        %v5411 = vpack.c.b16 %v5189, %v5187
        %v5412 = vpack.c.b16 %v5192, %v5190
        %v5413 = vpack.c.b16 %v5193, %v5191
        %v5414 = vpack.c.b16 %v5196, %v5194
        %v5415 = vpack.c.b16 %v5197, %v5195
        %v5416 = vpack.c.b16 %v5200, %v5198
        %v5417 = vpack.c.b16 %v5201, %v5199
        %v5418 = vpack.c.b16 %v5204, %v5202
        %v5419 = vpack.c.b16 %v5205, %v5203
        %v5420 = vpack.c.b16 %v5208, %v5206
        %v5421 = vpack.c.b16 %v5209, %v5207
        %v5422 = vpack.c.b16 %v5212, %v5210
        %v5423 = vpack.c.b16 %v5213, %v5211
        %v5424 = vpack.c.b16 %v5216, %v5214
        %v5425 = vpack.c.b16 %v5217, %v5215
        %v5426 = vpack.c.b16 %v5220, %v5218
        %v5427 = vpack.c.b16 %v5221, %v5219
        %v5428 = vpack.c.b16 %v5224, %v5222
        %v5429 = vpack.c.b16 %v5225, %v5223
        %v5430 = vpack.c.b16 %v5228, %v5226
        %v5431 = vpack.c.b16 %v5229, %v5227
        %v5432 = vpack.c.b16 %v5232, %v5230
        %v5433 = vpack.c.b16 %v5233, %v5231
        %v5434 = vpack.c.b16 %v5236, %v5234
        %v5435 = vpack.c.b16 %v5237, %v5235
        %v5436 = vpack.c.b16 %v5240, %v5238
        %v5437 = vpack.c.b16 %v5241, %v5239
        %v5438 = vpack.c.b16 %v5244, %v5242
        %v5439 = vpack.c.b16 %v5245, %v5243
        %v5440 = vpack.c.b16 %v5248, %v5246
        %v5441 = vpack.c.b16 %v5249, %v5247
        %v5442 = vpack.c.b16 %v5252, %v5250
        %v5443 = vpack.c.b16 %v5253, %v5251
        %v5444 = vpack.c.b16 %v5256, %v5254
        %v5445 = vpack.c.b16 %v5257, %v5255
        %v5446 = vpack.c.b16 %v5260, %v5258
        %v5447 = vpack.c.b16 %v5261, %v5259
        %v5448 = vpack.c.b16 %v5264, %v5262
        %v5449 = vpack.c.b16 %v5265, %v5263
        %v5450 = vpack.c.b16 %v5268, %v5266
        %v5451 = vpack.c.b16 %v5269, %v5267
        %v5452 = vpack.c.b16 %v5272, %v5270
        %v5453 = vpack.c.b16 %v5273, %v5271
        %v5454 = vpack.c.b16 %v5276, %v5274
        %v5455 = vpack.c.b16 %v5277, %v5275
        %v5456 = vpack.c.b16 %v5280, %v5278
        %v5457 = vpack.c.b16 %v5281, %v5279
        %v5458 = vpack.c.b16 %v5284, %v5282
        %v5459 = vpack.c.b16 %v5285, %v5283
        %v5460 = vpack.c.b16 %v5288, %v5286
        %v5461 = vpack.c.b16 %v5289, %v5287
        %v5462 = vpack.c.b16 %v5292, %v5290
        %v5463 = vpack.c.b16 %v5293, %v5291
        %v5464 = vpack.c.b16 %v5296, %v5294
        %v5465 = vpack.c.b16 %v5297, %v5295
        %v5466 = vpack.c.b16 %v5300, %v5298
        %v5467 = vpack.c.b16 %v5301, %v5299
        %v5468 = vpack.c.b16 %v5304, %v5302
        %v5469 = vpack.c.b16 %v5305, %v5303
        %v5470 = vpack.c.b16 %v5308, %v5306
        %v5471 = vpack.c.b16 %v5309, %v5307
        %v5472 = vpack.c.b16 %v5312, %v5310
        %v5473 = vpack.c.b16 %v5313, %v5311
        %v5474 = vpack.c.b16 %v5316, %v5314
        %v5475 = vpack.c.b16 %v5317, %v5315
        %v5476 = vpack.c.b16 %v5320, %v5318
        %v5477 = vpack.c.b16 %v5321, %v5319
        %v5478 = vpack.c.b16 %v5324, %v5322
        %v5479 = vpack.c.b16 %v5325, %v5323
        %v5480 = vpack.c.b16 %v5328, %v5326
        %v5481 = vpack.c.b16 %v5329, %v5327
        %v5482 = vpack.c.b16 %v5332, %v5330
        %v5483 = vpack.c.b16 %v5333, %v5331
        %v5484 = vpack.c.b16 %v5336, %v5334
        %v5485 = vpack.c.b16 %v5337, %v5335
        %v5486 = vpack.c.b16 %v5340, %v5338
        %v5487 = vpack.c.b16 %v5341, %v5339
        %v5488 = vpack.c.b16 %v5344, %v5342
        %v5489 = vpack.c.b16 %v5345, %v5343
        %v5490 = vpack.c.b16 %v5348, %v5346
        %v5491 = vpack.c.b16 %v5349, %v5347
        %v5492 = vpack.c.b16 %v5352, %v5350
        %v5493 = vpack.c.b16 %v5353, %v5351
        %v5494 = vpack.c.b16 %v5356, %v5354
        %v5495 = vpack.c.b16 %v5357, %v5355
        %v5496 = vpack.c.b16 %v5360, %v5358
        %v5497 = vpack.c.b16 %v5361, %v5359
        %v5498 = vpack.c.b16 %v5364, %v5362
        %v5499 = vpack.c.b16 %v5365, %v5363
        %v5500 = vpack.c.b16 %v5368, %v5366
        %v5501 = vpack.c.b16 %v5369, %v5367
        %v5502 = vpack.c.b16 %v5372, %v5370
        %v5503 = vpack.c.b16 %v5373, %v5371
        %v5504 = vpack.c.b16 %v5376, %v5374
        %v5505 = vpack.c.b16 %v5377, %v5375
        %5634 = vmatprep.subr.bf16.mxu0 %v5393
        %5635 = vmatpush1.bf16.msra.mxu0 %v5392
        %5636 = vmatprep.subr.bf16.mxu0 %v5391
        %5637 = vmatpush1.bf16.msra.mxu0 %v5390
        %5638 = vmatprep.subr.bf16.mxu0 %v5389
        %5639 = vmatpush1.bf16.msra.mxu0 %v5388
        %5640 = vmatprep.subr.bf16.mxu0 %v5387
        %5641 = vmatpush1.bf16.msra.mxu0 %v5386
        %5642 = vmatprep.subr.bf16.mxu0 %v5385
        %5643 = vmatpush1.bf16.msra.mxu0 %v5384
        %5644 = vmatprep.subr.bf16.mxu0 %v5383
        %5645 = vmatpush1.bf16.msra.mxu0 %v5382
        %5646 = vmatprep.subr.bf16.mxu0 %v5381
        %5647 = vmatpush1.bf16.msra.mxu0 %v5380
        %5648 = vmatprep.subr.bf16.mxu0 %v5379
        %5649 = vmatpush1.bf16.msra.mxu0 %v5378
        %5650 = vmatprep.subr.bf16.mxu0 %v5409
        %5651 = vmatpush2.bf16.msra.mxu0 %v5408
        %5652 = vmatprep.subr.bf16.mxu0 %v5407
        %5653 = vmatpush2.bf16.msra.mxu0 %v5406
        %5654 = vmatprep.subr.bf16.mxu0 %v5405
        %5655 = vmatpush2.bf16.msra.mxu0 %v5404
        %5656 = vmatprep.subr.bf16.mxu0 %v5403
        %5657 = vmatpush2.bf16.msra.mxu0 %v5402
        %5658 = vmatprep.subr.bf16.mxu0 %v5401
        %5659 = vmatpush2.bf16.msra.mxu0 %v5400
        %5660 = vmatprep.subr.bf16.mxu0 %v5399
        %5661 = vmatpush2.bf16.msra.mxu0 %v5398
        %5662 = vmatprep.subr.bf16.mxu0 %v5397
        %5663 = vmatpush2.bf16.msra.mxu0 %v5396
        %5664 = vmatprep.subr.bf16.mxu0 %v5395
        %5665 = vmatpush2.bf16.msra.mxu0 %v5394
        %5666 = vmatprep.mubr.bf16.mxu0 %v4963
        %5667 = vmatmul.mubr.bf16.gmra.mxu0 %v4962
        %v5668 = vpop.f32.mrf.mxu0
        %v5669 = vadd.f32 0.0, %v5668
        %v5670 = vpop.f32.mrf.mxu0
        %v5671 = vadd.f32 0.0, %v5670
        %v5672 = vpop.f32.mrf.mxu0
        %v5673 = vadd.f32 0.0, %v5672
        %v5674 = vpop.f32.mrf.mxu0
        %v5675 = vadd.f32 0.0, %v5674
        %5676 = vmatprep.mubr.bf16.mxu0 %v4971
        %5677 = vmatmul.mubr.bf16.gmra.mxu0 %v4970
        %v5678 = vpop.f32.mrf.mxu0
        %v5679 = vadd.f32 0.0, %v5678
        %v5680 = vpop.f32.mrf.mxu0
        %v5681 = vadd.f32 0.0, %v5680
        %v5682 = vpop.f32.mrf.mxu0
        %v5683 = vadd.f32 0.0, %v5682
        %v5684 = vpop.f32.mrf.mxu0
        %v5685 = vadd.f32 0.0, %v5684
        %5686 = vdwg.mxu0
        %5687 = vmatprep.subr.bf16.mxu0 %v5425
        %5688 = vmatpush1.bf16.msra.mxu0 %v5424
        %5689 = vmatprep.subr.bf16.mxu0 %v5423
        %5690 = vmatpush1.bf16.msra.mxu0 %v5422
        %5691 = vmatprep.subr.bf16.mxu0 %v5421
        %5692 = vmatpush1.bf16.msra.mxu0 %v5420
        %5693 = vmatprep.subr.bf16.mxu0 %v5419
        %5694 = vmatpush1.bf16.msra.mxu0 %v5418
        %5695 = vmatprep.subr.bf16.mxu0 %v5417
        %5696 = vmatpush1.bf16.msra.mxu0 %v5416
        %5697 = vmatprep.subr.bf16.mxu0 %v5415
        %5698 = vmatpush1.bf16.msra.mxu0 %v5414
        %5699 = vmatprep.subr.bf16.mxu0 %v5413
        %5700 = vmatpush1.bf16.msra.mxu0 %v5412
        %5701 = vmatprep.subr.bf16.mxu0 %v5411
        %5702 = vmatpush1.bf16.msra.mxu0 %v5410
        %5703 = vmatprep.subr.bf16.mxu0 %v5441
        %5704 = vmatpush2.bf16.msra.mxu0 %v5440
        %5705 = vmatprep.subr.bf16.mxu0 %v5439
        %5706 = vmatpush2.bf16.msra.mxu0 %v5438
        %5707 = vmatprep.subr.bf16.mxu0 %v5437
        %5708 = vmatpush2.bf16.msra.mxu0 %v5436
        %5709 = vmatprep.subr.bf16.mxu0 %v5435
        %5710 = vmatpush2.bf16.msra.mxu0 %v5434
        %5711 = vmatprep.subr.bf16.mxu0 %v5433
        %5712 = vmatpush2.bf16.msra.mxu0 %v5432
        %5713 = vmatprep.subr.bf16.mxu0 %v5431
        %5714 = vmatpush2.bf16.msra.mxu0 %v5430
        %5715 = vmatprep.subr.bf16.mxu0 %v5429
        %5716 = vmatpush2.bf16.msra.mxu0 %v5428
        %5717 = vmatprep.subr.bf16.mxu0 %v5427
        %5718 = vmatpush2.bf16.msra.mxu0 %v5426
        %5719 = vmatprep.mubr.bf16.mxu0 %v4965
        %5720 = vmatmul.mubr.bf16.gmra.mxu0 %v4964
        %v5721 = vpop.f32.mrf.mxu0
        %v5722 = vadd.f32 %v5669, %v5721
        %v5723 = vpop.f32.mrf.mxu0
        %v5724 = vadd.f32 %v5671, %v5723
        %v5725 = vpop.f32.mrf.mxu0
        %v5726 = vadd.f32 %v5673, %v5725
        %v5727 = vpop.f32.mrf.mxu0
        %v5728 = vadd.f32 %v5675, %v5727
        %5729 = vmatprep.mubr.bf16.mxu0 %v4973
        %5730 = vmatmul.mubr.bf16.gmra.mxu0 %v4972
        %v5731 = vpop.f32.mrf.mxu0
        %v5732 = vadd.f32 %v5679, %v5731
        %v5733 = vpop.f32.mrf.mxu0
        %v5734 = vadd.f32 %v5681, %v5733
        %v5735 = vpop.f32.mrf.mxu0
        %v5736 = vadd.f32 %v5683, %v5735
        %v5737 = vpop.f32.mrf.mxu0
        %v5738 = vadd.f32 %v5685, %v5737
        %5739 = vdwg.mxu0
        %5740 = vmatprep.subr.bf16.mxu0 %v5457
        %5741 = vmatpush1.bf16.msra.mxu0 %v5456
        %5742 = vmatprep.subr.bf16.mxu0 %v5455
        %5743 = vmatpush1.bf16.msra.mxu0 %v5454
        %5744 = vmatprep.subr.bf16.mxu0 %v5453
        %5745 = vmatpush1.bf16.msra.mxu0 %v5452
        %5746 = vmatprep.subr.bf16.mxu0 %v5451
        %5747 = vmatpush1.bf16.msra.mxu0 %v5450
        %5748 = vmatprep.subr.bf16.mxu0 %v5449
        %5749 = vmatpush1.bf16.msra.mxu0 %v5448
        %5750 = vmatprep.subr.bf16.mxu0 %v5447
        %5751 = vmatpush1.bf16.msra.mxu0 %v5446
        %5752 = vmatprep.subr.bf16.mxu0 %v5445
        %5753 = vmatpush1.bf16.msra.mxu0 %v5444
        %5754 = vmatprep.subr.bf16.mxu0 %v5443
        %5755 = vmatpush1.bf16.msra.mxu0 %v5442
        %5756 = vmatprep.subr.bf16.mxu0 %v5473
        %5757 = vmatpush2.bf16.msra.mxu0 %v5472
        %5758 = vmatprep.subr.bf16.mxu0 %v5471
        %5759 = vmatpush2.bf16.msra.mxu0 %v5470
        %5760 = vmatprep.subr.bf16.mxu0 %v5469
        %5761 = vmatpush2.bf16.msra.mxu0 %v5468
        %5762 = vmatprep.subr.bf16.mxu0 %v5467
        %5763 = vmatpush2.bf16.msra.mxu0 %v5466
        %5764 = vmatprep.subr.bf16.mxu0 %v5465
        %5765 = vmatpush2.bf16.msra.mxu0 %v5464
        %5766 = vmatprep.subr.bf16.mxu0 %v5463
        %5767 = vmatpush2.bf16.msra.mxu0 %v5462
        %5768 = vmatprep.subr.bf16.mxu0 %v5461
        %5769 = vmatpush2.bf16.msra.mxu0 %v5460
        %5770 = vmatprep.subr.bf16.mxu0 %v5459
        %5771 = vmatpush2.bf16.msra.mxu0 %v5458
        %5772 = vmatprep.mubr.bf16.mxu0 %v4967
        %5773 = vmatmul.mubr.bf16.gmra.mxu0 %v4966
        %v5774 = vpop.f32.mrf.mxu0
        %v5775 = vadd.f32 %v5722, %v5774
        %v5776 = vpop.f32.mrf.mxu0
        %v5777 = vadd.f32 %v5724, %v5776
        %v5778 = vpop.f32.mrf.mxu0
        %v5779 = vadd.f32 %v5726, %v5778
        %v5780 = vpop.f32.mrf.mxu0
        %v5781 = vadd.f32 %v5728, %v5780
        %5782 = vmatprep.mubr.bf16.mxu0 %v4975
        %5783 = vmatmul.mubr.bf16.gmra.mxu0 %v4974
        %v5784 = vpop.f32.mrf.mxu0
        %v5785 = vadd.f32 %v5732, %v5784
        %v5786 = vpop.f32.mrf.mxu0
        %v5787 = vadd.f32 %v5734, %v5786
        %v5788 = vpop.f32.mrf.mxu0
        %v5789 = vadd.f32 %v5736, %v5788
        %v5790 = vpop.f32.mrf.mxu0
        %v5791 = vadd.f32 %v5738, %v5790
        %5792 = vdwg.mxu0
        %5793 = vmatprep.subr.bf16.mxu0 %v5489
        %5794 = vmatpush1.bf16.msra.mxu0 %v5488
        %5795 = vmatprep.subr.bf16.mxu0 %v5487
        %5796 = vmatpush1.bf16.msra.mxu0 %v5486
        %5797 = vmatprep.subr.bf16.mxu0 %v5485
        %5798 = vmatpush1.bf16.msra.mxu0 %v5484
        %5799 = vmatprep.subr.bf16.mxu0 %v5483
        %5800 = vmatpush1.bf16.msra.mxu0 %v5482
        %5801 = vmatprep.subr.bf16.mxu0 %v5481
        %5802 = vmatpush1.bf16.msra.mxu0 %v5480
        %5803 = vmatprep.subr.bf16.mxu0 %v5479
        %5804 = vmatpush1.bf16.msra.mxu0 %v5478
        %5805 = vmatprep.subr.bf16.mxu0 %v5477
        %5806 = vmatpush1.bf16.msra.mxu0 %v5476
        %5807 = vmatprep.subr.bf16.mxu0 %v5475
        %5808 = vmatpush1.bf16.msra.mxu0 %v5474
        %5809 = vmatprep.subr.bf16.mxu0 %v5505
        %5810 = vmatpush2.bf16.msra.mxu0 %v5504
        %5811 = vmatprep.subr.bf16.mxu0 %v5503
        %5812 = vmatpush2.bf16.msra.mxu0 %v5502
        %5813 = vmatprep.subr.bf16.mxu0 %v5501
        %5814 = vmatpush2.bf16.msra.mxu0 %v5500
        %5815 = vmatprep.subr.bf16.mxu0 %v5499
        %5816 = vmatpush2.bf16.msra.mxu0 %v5498
        %5817 = vmatprep.subr.bf16.mxu0 %v5497
        %5818 = vmatpush2.bf16.msra.mxu0 %v5496
        %5819 = vmatprep.subr.bf16.mxu0 %v5495
        %5820 = vmatpush2.bf16.msra.mxu0 %v5494
        %5821 = vmatprep.subr.bf16.mxu0 %v5493
        %5822 = vmatpush2.bf16.msra.mxu0 %v5492
        %5823 = vmatprep.subr.bf16.mxu0 %v5491
        %5824 = vmatpush2.bf16.msra.mxu0 %v5490
        %5825 = vmatprep.mubr.bf16.mxu0 %v4969
        %5826 = vmatmul.mubr.bf16.gmra.mxu0 %v4968
        %v5827 = vpop.f32.mrf.mxu0
        %v5828 = vadd.f32 %v5775, %v5827
        %v5829 = vpop.f32.mrf.mxu0
        %v5830 = vadd.f32 %v5777, %v5829
        %v5831 = vpop.f32.mrf.mxu0
        %v5832 = vadd.f32 %v5779, %v5831
        %v5833 = vpop.f32.mrf.mxu0
        %v5834 = vadd.f32 %v5781, %v5833
        %5835 = vmatprep.mubr.bf16.mxu0 %v4977
        %5836 = vmatmul.mubr.bf16.gmra.mxu0 %v4976
        %v5837 = vpop.f32.mrf.mxu0
        %v5838 = vadd.f32 %v5785, %v5837
        %v5839 = vpop.f32.mrf.mxu0
        %v5840 = vadd.f32 %v5787, %v5839
        %v5841 = vpop.f32.mrf.mxu0
        %v5842 = vadd.f32 %v5789, %v5841
        %v5843 = vpop.f32.mrf.mxu0
        %v5844 = vadd.f32 %v5791, %v5843
        %5845 = vdwg.mxu0
        %v5848 = vcombine.low %v5828, %v5830
        %v5850 = vunpack.c.l.s4 1966171168
        %v5851 = vunpack.c.0.s8 %v5850
        %v5852 = vlaneseq
        %v5853 = vshrl.u32 %v5852, 7
        %v5854 = vsub.s32 %v5851, %v5853
        %v5855 = vrot.slane %v5848, %v5854
        %v5857 = vunpack.c.l.s4 1966171168
        %v5858 = vunpack.c.0.s8 %v5857
        %v5859 = vlaneseq
        %v5860 = vshrl.u32 %v5859, 7
        %v5861 = vsub.s32 %v5858, %v5860
        %v5862 = vrot.slane %v5855, %v5861
        %v5864 = vlaneseq
        %vm5865 = vcmp.ge.s32.totalorder %v5864, 0
        %vm5866 = vcmp.lt.s32.totalorder %v5864, 196
        %vm5867 = vmand %vm5865, %vm5866
        %5868 = vst.msk [vmem:[#allocation6] sm:$0x3] %vm5867, %v5862
        %v5869 = vcombine.high %v5855, %v5855
        %v5871 = vunpack.c.l.s4 1966171168
        %v5872 = vunpack.c.0.s8 %v5871
        %v5873 = vlaneseq
        %v5874 = vshrl.u32 %v5873, 7
        %v5875 = vsub.s32 %v5872, %v5874
        %v5876 = vrot.slane %v5869, %v5875
        %5877 = vrot.lane.b32.xlu0 %v5876, 68
        %v5878 = vpop.permute.xlu0 %5877
        %v5879 = vrot.slane %v5878, 7
        %vm5880 = vcmask 556032
        %v5881 = vsel %vm5880, %v5879, %v5878
        %vm5883 = vcmp.ge.s32.totalorder %v5864, 68
        %vm5884 = vcmp.lt.s32.totalorder %v5864, 264
        %vm5885 = vmand %vm5883, %vm5884
        %5886 = vst.msk [vmem:[#allocation6 + $0x1] sm:$0x7] %vm5885, %v5881
        %v5887 = vcombine.high %v5862, %v5862
        %5888 = vrot.lane.b32.xlu0 %v5887, 8
        %v5889 = vpop.permute.xlu0 %5888
        %v5890 = vrot.slane %v5889, 7
        %vm5891 = vcmask 64512
        %v5892 = vsel %vm5891, %v5890, %v5889
        %vm5894 = vcmp.ge.s32.totalorder %v5864, 8
        %vm5895 = vcmp.lt.s32.totalorder %v5864, 204
        %vm5896 = vmand %vm5894, %vm5895
        %5897 = vst.msk [vmem:[#allocation6 + $0x3] sm:$0x3] %vm5896, %v5892
        %v5898 = vcombine.high %v5876, %v5876
        %5899 = vrot.lane.b32.xlu0 %v5898, 76
        %v5900 = vpop.permute.xlu0 %5899
        %v5901 = vrot.slane %v5900, 7
        %vm5902 = vcmask 621568
        %v5903 = vsel %vm5902, %v5901, %v5900
        %vm5905 = vcmp.ge.s32.totalorder %v5864, 76
        %vm5906 = vcmp.lt.s32.totalorder %v5864, 272
        %vm5907 = vmand %vm5905, %vm5906
        %5908 = vst.msk [vmem:[#allocation6 + $0x4] sm:$0x7] %vm5907, %v5903
        %v5909 = vcombine.high %v5828, %v5830
        %v5911 = vunpack.c.l.s4 1966171168
        %v5912 = vunpack.c.0.s8 %v5911
        %v5913 = vlaneseq
        %v5914 = vshrl.u32 %v5913, 7
        %v5915 = vsub.s32 %v5912, %v5914
        %v5916 = vrot.slane %v5909, %v5915
        %v5918 = vunpack.c.l.s4 1966171168
        %v5919 = vunpack.c.0.s8 %v5918
        %v5920 = vlaneseq
        %v5921 = vshrl.u32 %v5920, 7
        %v5922 = vsub.s32 %v5919, %v5921
        %v5923 = vrot.slane %v5916, %v5922
        %5924 = vrot.lane.b32.xlu0 %v5923, 16
        %v5925 = vpop.permute.xlu0 %5924
        %v5926 = vrot.slane %v5925, 7
        %vm5927 = vcmask 130048
        %v5928 = vsel %vm5927, %v5926, %v5925
        %vm5930 = vcmp.ge.s32.totalorder %v5864, 16
        %vm5931 = vcmp.lt.s32.totalorder %v5864, 212
        %vm5932 = vmand %vm5930, %vm5931
        %5933 = vst.msk [vmem:[#allocation6 + $0x6] sm:$0x3] %vm5932, %v5928
        %v5934 = vcombine.high %v5916, %v5916
        %v5936 = vunpack.c.l.s4 1966171168
        %v5937 = vunpack.c.0.s8 %v5936
        %v5938 = vlaneseq
        %v5939 = vshrl.u32 %v5938, 7
        %v5940 = vsub.s32 %v5937, %v5939
        %v5941 = vrot.slane %v5934, %v5940
        %5942 = vrot.lane.b32.xlu0 %v5941, 84
        %v5943 = vpop.permute.xlu0 %5942
        %v5944 = vrot.slane %v5943, 7
        %vm5945 = vcmask 687104
        %v5946 = vsel %vm5945, %v5944, %v5943
        %vm5948 = vcmp.ge.s32.totalorder %v5864, 84
        %vm5949 = vcmp.lt.s32.totalorder %v5864, 280
        %vm5950 = vmand %vm5948, %vm5949
        %5951 = vst.msk [vmem:[#allocation6 + $0x7] sm:$0x7] %vm5950, %v5946
        %v5952 = vcombine.high %v5923, %v5923
        %5953 = vrot.lane.b32.xlu0 %v5952, 24
        %v5954 = vpop.permute.xlu0 %5953
        %v5955 = vrot.slane %v5954, 7
        %vm5956 = vcmask 195584
        %v5957 = vsel %vm5956, %v5955, %v5954
        %vm5959 = vcmp.ge.s32.totalorder %v5864, 24
        %vm5960 = vcmp.lt.s32.totalorder %v5864, 220
        %vm5961 = vmand %vm5959, %vm5960
        %5962 = vst.msk [vmem:[#allocation6 + $0x9] sm:$0x3] %vm5961, %v5957
        %v5963 = vcombine.high %v5941, %v5941
        %5964 = vrot.lane.b32.xlu0 %v5963, 92
        %v5965 = vpop.permute.xlu0 %5964
        %v5966 = vrot.slane %v5965, 7
        %vm5967 = vcmask 752640
        %v5968 = vsel %vm5967, %v5966, %v5965
        %vm5970 = vcmp.ge.s32.totalorder %v5864, 92
        %vm5971 = vcmp.lt.s32.totalorder %v5864, 288
        %vm5972 = vmand %vm5970, %vm5971
        %5973 = vst.msk [vmem:[#allocation6 + $0xa] sm:$0x7] %vm5972, %v5968
        %v5976 = vcombine.low %v5832, %v5834
        %v5978 = vunpack.c.l.s4 1966171168
        %v5979 = vunpack.c.0.s8 %v5978
        %v5980 = vlaneseq
        %v5981 = vshrl.u32 %v5980, 7
        %v5982 = vsub.s32 %v5979, %v5981
        %v5983 = vrot.slane %v5976, %v5982
        %v5985 = vunpack.c.l.s4 1966171168
        %v5986 = vunpack.c.0.s8 %v5985
        %v5987 = vlaneseq
        %v5988 = vshrl.u32 %v5987, 7
        %v5989 = vsub.s32 %v5986, %v5988
        %v5990 = vrot.slane %v5983, %v5989
        %5991 = vrot.lane.b32.xlu0 %v5990, 32
        %v5992 = vpop.permute.xlu0 %5991
        %v5993 = vrot.slane %v5992, 7
        %v5994 = vsel %vm3863, %v5993, %v5992
        %vm5996 = vcmp.ge.s32.totalorder %v5864, 32
        %vm5997 = vcmp.lt.s32.totalorder %v5864, 228
        %vm5998 = vmand %vm5996, %vm5997
        %5999 = vst.msk [vmem:[#allocation6 + $0xc] sm:$0x3] %vm5998, %v5994
        %v6000 = vcombine.high %v5983, %v5983
        %v6002 = vunpack.c.l.s4 1966171168
        %v6003 = vunpack.c.0.s8 %v6002
        %v6004 = vlaneseq
        %v6005 = vshrl.u32 %v6004, 7
        %v6006 = vsub.s32 %v6003, %v6005
        %v6007 = vrot.slane %v6000, %v6006
        %6008 = vrot.lane.b32.xlu0 %v6007, 100
        %v6009 = vpop.permute.xlu0 %6008
        %v6010 = vrot.slane %v6009, 7
        %vm6011 = vcmask 818176
        %v6012 = vsel %vm6011, %v6010, %v6009
        %vm6014 = vcmp.ge.s32.totalorder %v5864, 100
        %vm6015 = vcmp.lt.s32.totalorder %v5864, 296
        %vm6016 = vmand %vm6014, %vm6015
        %6017 = vst.msk [vmem:[#allocation6 + $0xd] sm:$0x7] %vm6016, %v6012
        %v6018 = vcombine.high %v5990, %v5990
        %6019 = vrot.lane.b32.xlu0 %v6018, 40
        %v6020 = vpop.permute.xlu0 %6019
        %v6021 = vrot.slane %v6020, 7
        %vm6022 = vcmask 326656
        %v6023 = vsel %vm6022, %v6021, %v6020
        %vm6025 = vcmp.ge.s32.totalorder %v5864, 40
        %vm6026 = vcmp.lt.s32.totalorder %v5864, 236
        %vm6027 = vmand %vm6025, %vm6026
        %6028 = vst.msk [vmem:[#allocation6 + $0xf] sm:$0x3] %vm6027, %v6023
        %v6029 = vcombine.high %v6007, %v6007
        %6030 = vrot.lane.b32.xlu0 %v6029, 108
        %v6031 = vpop.permute.xlu0 %6030
        %v6032 = vrot.slane %v6031, 7
        %vm6033 = vcmask 883712
        %v6034 = vsel %vm6033, %v6032, %v6031
        %vm6036 = vcmp.ge.s32.totalorder %v5864, 108
        %vm6037 = vcmp.lt.s32.totalorder %v5864, 304
        %vm6038 = vmand %vm6036, %vm6037
        %6039 = vst.msk [vmem:[#allocation6 + $0x10] sm:$0x7] %vm6038, %v6034
        %v6040 = vcombine.high %v5832, %v5834
        %v6042 = vunpack.c.l.s4 1966171168
        %v6043 = vunpack.c.0.s8 %v6042
        %v6044 = vlaneseq
        %v6045 = vshrl.u32 %v6044, 7
        %v6046 = vsub.s32 %v6043, %v6045
        %v6047 = vrot.slane %v6040, %v6046
        %v6049 = vunpack.c.l.s4 1966171168
        %v6050 = vunpack.c.0.s8 %v6049
        %v6051 = vlaneseq
        %v6052 = vshrl.u32 %v6051, 7
        %v6053 = vsub.s32 %v6050, %v6052
        %v6054 = vrot.slane %v6047, %v6053
        %6055 = vrot.lane.b32.xlu0 %v6054, 48
        %v6056 = vpop.permute.xlu0 %6055
        %v6057 = vrot.slane %v6056, 7
        %vm6058 = vcmask 392192
        %v6059 = vsel %vm6058, %v6057, %v6056
        %vm6061 = vcmp.ge.s32.totalorder %v5864, 48
        %vm6062 = vcmp.lt.s32.totalorder %v5864, 244
        %vm6063 = vmand %vm6061, %vm6062
        %6064 = vst.msk [vmem:[#allocation6 + $0x12] sm:$0x3] %vm6063, %v6059
        %v6065 = vcombine.high %v6047, %v6047
        %v6067 = vunpack.c.l.s4 1966171168
        %v6068 = vunpack.c.0.s8 %v6067
        %v6069 = vlaneseq
        %v6070 = vshrl.u32 %v6069, 7
        %v6071 = vsub.s32 %v6068, %v6070
        %v6072 = vrot.slane %v6065, %v6071
        %6073 = vrot.lane.b32.xlu0 %v6072, 116
        %v6074 = vpop.permute.xlu0 %6073
        %v6075 = vrot.slane %v6074, 7
        %vm6076 = vcmask 949248
        %v6077 = vsel %vm6076, %v6075, %v6074
        %vm6079 = vcmp.ge.s32.totalorder %v5864, 116
        %vm6080 = vcmp.lt.s32.totalorder %v5864, 312
        %vm6081 = vmand %vm6079, %vm6080
        %6082 = vst.msk [vmem:[#allocation6 + $0x13] sm:$0x7] %vm6081, %v6077
        %v6083 = vcombine.high %v6054, %v6054
        %6084 = vrot.lane.b32.xlu0 %v6083, 56
        %v6085 = vpop.permute.xlu0 %6084
        %v6086 = vrot.slane %v6085, 7
        %vm6087 = vcmask 457728
        %v6088 = vsel %vm6087, %v6086, %v6085
        %vm6090 = vcmp.ge.s32.totalorder %v5864, 56
        %vm6091 = vcmp.lt.s32.totalorder %v5864, 252
        %vm6092 = vmand %vm6090, %vm6091
        %6093 = vst.msk [vmem:[#allocation6 + $0x15] sm:$0x3] %vm6092, %v6088
        %v6094 = vcombine.high %v6072, %v6072
        %6095 = vrot.lane.b32.xlu0 %v6094, 124
        %v6096 = vpop.permute.xlu0 %6095
        %v6097 = vrot.slane %v6096, 7
        %vm6098 = vcmask 1014784
        %v6099 = vsel %vm6098, %v6097, %v6096
        %vm6101 = vcmp.ge.s32.totalorder %v5864, 124
        %vm6102 = vcmp.lt.s32.totalorder %v5864, 320
        %vm6103 = vmand %vm6101, %vm6102
        %6104 = vst.msk [vmem:[#allocation6 + $0x16] sm:$0x7] %vm6103, %v6099
        %v6107 = vcombine.low %v5838, %v5840
        %v6109 = vunpack.c.l.s4 1966171168
        %v6110 = vunpack.c.0.s8 %v6109
        %v6111 = vlaneseq
        %v6112 = vshrl.u32 %v6111, 7
        %v6113 = vsub.s32 %v6110, %v6112
        %v6114 = vrot.slane %v6107, %v6113
        %v6116 = vunpack.c.l.s4 1966171168
        %v6117 = vunpack.c.0.s8 %v6116
        %v6118 = vlaneseq
        %v6119 = vshrl.u32 %v6118, 7
        %v6120 = vsub.s32 %v6117, %v6119
        %v6121 = vrot.slane %v6114, %v6120
        %6122 = vrot.lane.b32.xlu0 %v6121, 64
        %v6123 = vpop.permute.xlu0 %6122
        %v6124 = vrot.slane %v6123, 7
        %v6125 = vsel %vm838, %v6124, %v6123
        %vm6127 = vcmp.ge.s32.totalorder %v5864, 64
        %vm6128 = vcmp.lt.s32.totalorder %v5864, 260
        %vm6129 = vmand %vm6127, %vm6128
        %6130 = vst.msk [vmem:[#allocation6 + $0x18] sm:$0x7] %vm6129, %v6125
        %v6131 = vcombine.high %v6114, %v6114
        %v6133 = vunpack.c.l.s4 1966171168
        %v6134 = vunpack.c.0.s8 %v6133
        %v6135 = vlaneseq
        %v6136 = vshrl.u32 %v6135, 7
        %v6137 = vsub.s32 %v6134, %v6136
        %v6138 = vrot.slane %v6131, %v6137
        %6139 = vrot.lane.b32.xlu0 %v6138, 4
        %v6140 = vpop.permute.xlu0 %6139
        %v6141 = vrot.slane %v6140, 7
        %vm6142 = vcmask 31744
        %v6143 = vsel %vm6142, %v6141, %v6140
        %vm6145 = vcmp.ge.s32.totalorder %v5864, 4
        %vm6146 = vcmp.lt.s32.totalorder %v5864, 200
        %vm6147 = vmand %vm6145, %vm6146
        %6148 = vst.msk [vmem:[#allocation6 + $0x1a] sm:$0x3] %vm6147, %v6143
        %v6149 = vcombine.high %v6121, %v6121
        %6150 = vrot.lane.b32.xlu0 %v6149, 72
        %v6151 = vpop.permute.xlu0 %6150
        %v6152 = vrot.slane %v6151, 7
        %vm6153 = vcmask 588800
        %v6154 = vsel %vm6153, %v6152, %v6151
        %vm6156 = vcmp.ge.s32.totalorder %v5864, 72
        %vm6157 = vcmp.lt.s32.totalorder %v5864, 268
        %vm6158 = vmand %vm6156, %vm6157
        %6159 = vst.msk [vmem:[#allocation6 + $0x1b] sm:$0x7] %vm6158, %v6154
        %v6160 = vcombine.high %v6138, %v6138
        %6161 = vrot.lane.b32.xlu0 %v6160, 12
        %v6162 = vpop.permute.xlu0 %6161
        %v6163 = vrot.slane %v6162, 7
        %vm6164 = vcmask 97280
        %v6165 = vsel %vm6164, %v6163, %v6162
        %vm6167 = vcmp.ge.s32.totalorder %v5864, 12
        %vm6168 = vcmp.lt.s32.totalorder %v5864, 208
        %vm6169 = vmand %vm6167, %vm6168
        %6170 = vst.msk [vmem:[#allocation6 + $0x1d] sm:$0x3] %vm6169, %v6165
        %v6171 = vcombine.high %v5838, %v5840
        %v6173 = vunpack.c.l.s4 1966171168
        %v6174 = vunpack.c.0.s8 %v6173
        %v6175 = vlaneseq
        %v6176 = vshrl.u32 %v6175, 7
        %v6177 = vsub.s32 %v6174, %v6176
        %v6178 = vrot.slane %v6171, %v6177
        %v6180 = vunpack.c.l.s4 1966171168
        %v6181 = vunpack.c.0.s8 %v6180
        %v6182 = vlaneseq
        %v6183 = vshrl.u32 %v6182, 7
        %v6184 = vsub.s32 %v6181, %v6183
        %v6185 = vrot.slane %v6178, %v6184
        %6186 = vrot.lane.b32.xlu0 %v6185, 80
        %v6187 = vpop.permute.xlu0 %6186
        %v6188 = vrot.slane %v6187, 7
        %vm6189 = vcmask 654336
        %v6190 = vsel %vm6189, %v6188, %v6187
        %vm6192 = vcmp.ge.s32.totalorder %v5864, 80
        %vm6193 = vcmp.lt.s32.totalorder %v5864, 276
        %vm6194 = vmand %vm6192, %vm6193
        %6195 = vst.msk [vmem:[#allocation6 + $0x1e] sm:$0x7] %vm6194, %v6190
        %v6196 = vcombine.high %v6178, %v6178
        %v6198 = vunpack.c.l.s4 1966171168
        %v6199 = vunpack.c.0.s8 %v6198
        %v6200 = vlaneseq
        %v6201 = vshrl.u32 %v6200, 7
        %v6202 = vsub.s32 %v6199, %v6201
        %v6203 = vrot.slane %v6196, %v6202
        %6204 = vrot.lane.b32.xlu0 %v6203, 20
        %v6205 = vpop.permute.xlu0 %6204
        %v6206 = vrot.slane %v6205, 7
        %vm6207 = vcmask 162816
        %v6208 = vsel %vm6207, %v6206, %v6205
        %vm6210 = vcmp.ge.s32.totalorder %v5864, 20
        %vm6211 = vcmp.lt.s32.totalorder %v5864, 216
        %vm6212 = vmand %vm6210, %vm6211
        %6213 = vst.msk [vmem:[#allocation6 + $0x20] sm:$0x3] %vm6212, %v6208
        %v6214 = vcombine.high %v6185, %v6185
        %6215 = vrot.lane.b32.xlu0 %v6214, 88
        %v6216 = vpop.permute.xlu0 %6215
        %v6217 = vrot.slane %v6216, 7
        %vm6218 = vcmask 719872
        %v6219 = vsel %vm6218, %v6217, %v6216
        %vm6221 = vcmp.ge.s32.totalorder %v5864, 88
        %vm6222 = vcmp.lt.s32.totalorder %v5864, 284
        %vm6223 = vmand %vm6221, %vm6222
        %6224 = vst.msk [vmem:[#allocation6 + $0x21] sm:$0x7] %vm6223, %v6219
        %v6225 = vcombine.high %v6203, %v6203
        %6226 = vrot.lane.b32.xlu0 %v6225, 28
        %v6227 = vpop.permute.xlu0 %6226
        %v6228 = vrot.slane %v6227, 7
        %vm6229 = vcmask 228352
        %v6230 = vsel %vm6229, %v6228, %v6227
        %vm6232 = vcmp.ge.s32.totalorder %v5864, 28
        %vm6233 = vcmp.lt.s32.totalorder %v5864, 224
        %vm6234 = vmand %vm6232, %vm6233
        %6235 = vst.msk [vmem:[#allocation6 + $0x23] sm:$0x3] %vm6234, %v6230
        %v6238 = vcombine.low %v5842, %v5844
        %v6240 = vunpack.c.l.s4 1966171168
        %v6241 = vunpack.c.0.s8 %v6240
        %v6242 = vlaneseq
        %v6243 = vshrl.u32 %v6242, 7
        %v6244 = vsub.s32 %v6241, %v6243
        %v6245 = vrot.slane %v6238, %v6244
        %v6247 = vunpack.c.l.s4 1966171168
        %v6248 = vunpack.c.0.s8 %v6247
        %v6249 = vlaneseq
        %v6250 = vshrl.u32 %v6249, 7
        %v6251 = vsub.s32 %v6248, %v6250
        %v6252 = vrot.slane %v6245, %v6251
        %6253 = vrot.lane.b32.xlu0 %v6252, 96
        %v6254 = vpop.permute.xlu0 %6253
        %v6255 = vrot.slane %v6254, 7
        %v6256 = vsel %vm640, %v6255, %v6254
        %vm6258 = vcmp.ge.s32.totalorder %v5864, 96
        %vm6259 = vcmp.lt.s32.totalorder %v5864, 292
        %vm6260 = vmand %vm6258, %vm6259
        %6261 = vst.msk [vmem:[#allocation6 + $0x24] sm:$0x7] %vm6260, %v6256
        %v6262 = vcombine.high %v6245, %v6245
        %v6264 = vunpack.c.l.s4 1966171168
        %v6265 = vunpack.c.0.s8 %v6264
        %v6266 = vlaneseq
        %v6267 = vshrl.u32 %v6266, 7
        %v6268 = vsub.s32 %v6265, %v6267
        %v6269 = vrot.slane %v6262, %v6268
        %6270 = vrot.lane.b32.xlu0 %v6269, 36
        %v6271 = vpop.permute.xlu0 %6270
        %v6272 = vrot.slane %v6271, 7
        %vm6273 = vcmask 293888
        %v6274 = vsel %vm6273, %v6272, %v6271
        %vm6276 = vcmp.ge.s32.totalorder %v5864, 36
        %vm6277 = vcmp.lt.s32.totalorder %v5864, 232
        %vm6278 = vmand %vm6276, %vm6277
        %6279 = vst.msk [vmem:[#allocation6 + $0x26] sm:$0x3] %vm6278, %v6274
        %v6280 = vcombine.high %v6252, %v6252
        %6281 = vrot.lane.b32.xlu0 %v6280, 104
        %v6282 = vpop.permute.xlu0 %6281
        %v6283 = vrot.slane %v6282, 7
        %vm6284 = vcmask 850944
        %v6285 = vsel %vm6284, %v6283, %v6282
        %vm6287 = vcmp.ge.s32.totalorder %v5864, 104
        %vm6288 = vcmp.lt.s32.totalorder %v5864, 300
        %vm6289 = vmand %vm6287, %vm6288
        %6290 = vst.msk [vmem:[#allocation6 + $0x27] sm:$0x7] %vm6289, %v6285
        %v6291 = vcombine.high %v6269, %v6269
        %6292 = vrot.lane.b32.xlu0 %v6291, 44
        %v6293 = vpop.permute.xlu0 %6292
        %v6294 = vrot.slane %v6293, 7
        %vm6295 = vcmask 359424
        %v6296 = vsel %vm6295, %v6294, %v6293
        %vm6298 = vcmp.ge.s32.totalorder %v5864, 44
        %vm6299 = vcmp.lt.s32.totalorder %v5864, 240
        %vm6300 = vmand %vm6298, %vm6299
        %6301 = vst.msk [vmem:[#allocation6 + $0x29] sm:$0x3] %vm6300, %v6296
        %v6302 = vcombine.high %v5842, %v5844
        %v6304 = vunpack.c.l.s4 1966171168
        %v6305 = vunpack.c.0.s8 %v6304
        %v6306 = vlaneseq
        %v6307 = vshrl.u32 %v6306, 7
        %v6308 = vsub.s32 %v6305, %v6307
        %v6309 = vrot.slane %v6302, %v6308
        %v6311 = vunpack.c.l.s4 1966171168
        %v6312 = vunpack.c.0.s8 %v6311
        %v6313 = vlaneseq
        %v6314 = vshrl.u32 %v6313, 7
        %v6315 = vsub.s32 %v6312, %v6314
        %v6316 = vrot.slane %v6309, %v6315
        %6317 = vrot.lane.b32.xlu0 %v6316, 112
        %v6318 = vpop.permute.xlu0 %6317
        %v6319 = vrot.slane %v6318, 7
        %vm6320 = vcmask 916480
        %v6321 = vsel %vm6320, %v6319, %v6318
        %vm6323 = vcmp.ge.s32.totalorder %v5864, 112
        %vm6324 = vcmp.lt.s32.totalorder %v5864, 308
        %vm6325 = vmand %vm6323, %vm6324
        %6326 = vst.msk [vmem:[#allocation6 + $0x2a] sm:$0x7] %vm6325, %v6321
        %v6327 = vcombine.high %v6309, %v6309
        %v6329 = vunpack.c.l.s4 1966171168
        %v6330 = vunpack.c.0.s8 %v6329
        %v6331 = vlaneseq
        %v6332 = vshrl.u32 %v6331, 7
        %v6333 = vsub.s32 %v6330, %v6332
        %v6334 = vrot.slane %v6327, %v6333
        %6335 = vrot.lane.b32.xlu0 %v6334, 52
        %v6336 = vpop.permute.xlu0 %6335
        %v6337 = vrot.slane %v6336, 7
        %vm6338 = vcmask 424960
        %v6339 = vsel %vm6338, %v6337, %v6336
        %vm6341 = vcmp.ge.s32.totalorder %v5864, 52
        %vm6342 = vcmp.lt.s32.totalorder %v5864, 248
        %vm6343 = vmand %vm6341, %vm6342
        %6344 = vst.msk [vmem:[#allocation6 + $0x2c] sm:$0x3] %vm6343, %v6339
        %v6345 = vcombine.high %v6316, %v6316
        %6346 = vrot.lane.b32.xlu0 %v6345, 120
        %v6347 = vpop.permute.xlu0 %6346
        %v6348 = vrot.slane %v6347, 7
        %vm6349 = vcmask 982016
        %v6350 = vsel %vm6349, %v6348, %v6347
        %vm6352 = vcmp.ge.s32.totalorder %v5864, 120
        %vm6353 = vcmp.lt.s32.totalorder %v5864, 316
        %vm6354 = vmand %vm6352, %vm6353
        %6355 = vst.msk [vmem:[#allocation6 + $0x2d] sm:$0x7] %vm6354, %v6350
        %v6356 = vcombine.high %v6334, %v6334
        %6357 = vrot.lane.b32.xlu0 %v6356, 60
        %v6358 = vpop.permute.xlu0 %6357
        %v6359 = vrot.slane %v6358, 7
        %vm6360 = vcmask 490496
        %v6361 = vsel %vm6360, %v6359, %v6358
        %vm6363 = vcmp.ge.s32.totalorder %v5864, 60
        %vm6364 = vcmp.lt.s32.totalorder %v5864, 256
        %vm6365 = vmand %vm6363, %vm6364
        %6366 = vst.msk [vmem:[#allocation6 + $0x2f] sm:$0x3] %vm6365, %v6361
        %v6367 = vld [vmem:[#allocation6] sm:$0xff]
        %v6368 = vld [vmem:[#allocation6 + $0x8] sm:$0xff]
        %v6369 = vld [vmem:[#allocation6 + $0x10] sm:$0xff]
        %v6370 = vld [vmem:[#allocation6 + $0x18] sm:$0xff]
        %v6371 = vld [vmem:[#allocation6 + $0x20] sm:$0xff]
        %v6372 = vld [vmem:[#allocation6 + $0x28] sm:$0xff]
        %v6373 = vld [vmem:[#allocation6 + $0x30] sm:$0x1]
        %v6381 = vlaneseq
        %v6382 = vshrl.u32 %v6381, 7
        %v6383 = vsub.s32 0, %v6382
        %v6384 = vrot.slane %v6367, %v6383
        %v6385 = vlaneseq
        %v6386 = vshrl.u32 %v6385, 7
        %v6387 = vsub.s32 1, %v6386
        %v6388 = vrot.slane %v6367, %v6387
        %v6389 = vlaneseq
        %v6390 = vshrl.u32 %v6389, 7
        %v6391 = vsub.s32 2, %v6390
        %v6392 = vrot.slane %v6367, %v6391
        %v6393 = vlaneseq
        %v6394 = vshrl.u32 %v6393, 7
        %v6395 = vsub.s32 3, %v6394
        %v6396 = vrot.slane %v6367, %v6395
        %v6397 = vlaneseq
        %v6398 = vshrl.u32 %v6397, 7
        %v6399 = vsub.s32 4, %v6398
        %v6400 = vrot.slane %v6367, %v6399
        %v6401 = vlaneseq
        %v6402 = vshrl.u32 %v6401, 7
        %v6403 = vsub.s32 5, %v6402
        %v6404 = vrot.slane %v6367, %v6403
        %v6405 = vlaneseq
        %v6406 = vshrl.u32 %v6405, 7
        %v6407 = vsub.s32 6, %v6406
        %v6408 = vrot.slane %v6367, %v6407
        %v6409 = vlaneseq
        %v6410 = vshrl.u32 %v6409, 7
        %v6411 = vsub.s32 7, %v6410
        %v6412 = vrot.slane %v6367, %v6411
        %v6413 = vlaneseq
        %v6414 = vshrl.u32 %v6413, 7
        %v6415 = vsub.s32 0, %v6414
        %v6416 = vrot.slane %v6368, %v6415
        %v6417 = vlaneseq
        %v6418 = vshrl.u32 %v6417, 7
        %v6419 = vsub.s32 1, %v6418
        %v6420 = vrot.slane %v6368, %v6419
        %v6421 = vlaneseq
        %v6422 = vshrl.u32 %v6421, 7
        %v6423 = vsub.s32 2, %v6422
        %v6424 = vrot.slane %v6368, %v6423
        %v6425 = vlaneseq
        %v6426 = vshrl.u32 %v6425, 7
        %v6427 = vsub.s32 3, %v6426
        %v6428 = vrot.slane %v6368, %v6427
        %v6429 = vlaneseq
        %v6430 = vshrl.u32 %v6429, 7
        %v6431 = vsub.s32 4, %v6430
        %v6432 = vrot.slane %v6368, %v6431
        %v6433 = vlaneseq
        %v6434 = vshrl.u32 %v6433, 7
        %v6435 = vsub.s32 5, %v6434
        %v6436 = vrot.slane %v6368, %v6435
        %v6437 = vlaneseq
        %v6438 = vshrl.u32 %v6437, 7
        %v6439 = vsub.s32 6, %v6438
        %v6440 = vrot.slane %v6368, %v6439
        %v6441 = vlaneseq
        %v6442 = vshrl.u32 %v6441, 7
        %v6443 = vsub.s32 7, %v6442
        %v6444 = vrot.slane %v6368, %v6443
        %v6445 = vlaneseq
        %v6446 = vshrl.u32 %v6445, 7
        %v6447 = vsub.s32 0, %v6446
        %v6448 = vrot.slane %v6369, %v6447
        %v6449 = vlaneseq
        %v6450 = vshrl.u32 %v6449, 7
        %v6451 = vsub.s32 1, %v6450
        %v6452 = vrot.slane %v6369, %v6451
        %v6453 = vlaneseq
        %v6454 = vshrl.u32 %v6453, 7
        %v6455 = vsub.s32 2, %v6454
        %v6456 = vrot.slane %v6369, %v6455
        %v6457 = vlaneseq
        %v6458 = vshrl.u32 %v6457, 7
        %v6459 = vsub.s32 3, %v6458
        %v6460 = vrot.slane %v6369, %v6459
        %v6461 = vlaneseq
        %v6462 = vshrl.u32 %v6461, 7
        %v6463 = vsub.s32 4, %v6462
        %v6464 = vrot.slane %v6369, %v6463
        %v6465 = vlaneseq
        %v6466 = vshrl.u32 %v6465, 7
        %v6467 = vsub.s32 5, %v6466
        %v6468 = vrot.slane %v6369, %v6467
        %v6469 = vlaneseq
        %v6470 = vshrl.u32 %v6469, 7
        %v6471 = vsub.s32 6, %v6470
        %v6472 = vrot.slane %v6369, %v6471
        %v6473 = vlaneseq
        %v6474 = vshrl.u32 %v6473, 7
        %v6475 = vsub.s32 7, %v6474
        %v6476 = vrot.slane %v6369, %v6475
        %v6477 = vlaneseq
        %v6478 = vshrl.u32 %v6477, 7
        %v6479 = vsub.s32 0, %v6478
        %v6480 = vrot.slane %v6370, %v6479
        %v6481 = vlaneseq
        %v6482 = vshrl.u32 %v6481, 7
        %v6483 = vsub.s32 1, %v6482
        %v6484 = vrot.slane %v6370, %v6483
        %v6485 = vlaneseq
        %v6486 = vshrl.u32 %v6485, 7
        %v6487 = vsub.s32 2, %v6486
        %v6488 = vrot.slane %v6370, %v6487
        %v6489 = vlaneseq
        %v6490 = vshrl.u32 %v6489, 7
        %v6491 = vsub.s32 3, %v6490
        %v6492 = vrot.slane %v6370, %v6491
        %v6493 = vlaneseq
        %v6494 = vshrl.u32 %v6493, 7
        %v6495 = vsub.s32 4, %v6494
        %v6496 = vrot.slane %v6370, %v6495
        %v6497 = vlaneseq
        %v6498 = vshrl.u32 %v6497, 7
        %v6499 = vsub.s32 5, %v6498
        %v6500 = vrot.slane %v6370, %v6499
        %v6501 = vlaneseq
        %v6502 = vshrl.u32 %v6501, 7
        %v6503 = vsub.s32 6, %v6502
        %v6504 = vrot.slane %v6370, %v6503
        %v6505 = vlaneseq
        %v6506 = vshrl.u32 %v6505, 7
        %v6507 = vsub.s32 7, %v6506
        %v6508 = vrot.slane %v6370, %v6507
        %v6509 = vlaneseq
        %v6510 = vshrl.u32 %v6509, 7
        %v6511 = vsub.s32 0, %v6510
        %v6512 = vrot.slane %v6371, %v6511
        %v6513 = vlaneseq
        %v6514 = vshrl.u32 %v6513, 7
        %v6515 = vsub.s32 1, %v6514
        %v6516 = vrot.slane %v6371, %v6515
        %v6517 = vlaneseq
        %v6518 = vshrl.u32 %v6517, 7
        %v6519 = vsub.s32 2, %v6518
        %v6520 = vrot.slane %v6371, %v6519
        %v6521 = vlaneseq
        %v6522 = vshrl.u32 %v6521, 7
        %v6523 = vsub.s32 3, %v6522
        %v6524 = vrot.slane %v6371, %v6523
        %v6525 = vlaneseq
        %v6526 = vshrl.u32 %v6525, 7
        %v6527 = vsub.s32 4, %v6526
        %v6528 = vrot.slane %v6371, %v6527
        %v6529 = vlaneseq
        %v6530 = vshrl.u32 %v6529, 7
        %v6531 = vsub.s32 5, %v6530
        %v6532 = vrot.slane %v6371, %v6531
        %v6533 = vlaneseq
        %v6534 = vshrl.u32 %v6533, 7
        %v6535 = vsub.s32 6, %v6534
        %v6536 = vrot.slane %v6371, %v6535
        %v6537 = vlaneseq
        %v6538 = vshrl.u32 %v6537, 7
        %v6539 = vsub.s32 7, %v6538
        %v6540 = vrot.slane %v6371, %v6539
        %v6541 = vlaneseq
        %v6542 = vshrl.u32 %v6541, 7
        %v6543 = vsub.s32 0, %v6542
        %v6544 = vrot.slane %v6372, %v6543
        %v6545 = vlaneseq
        %v6546 = vshrl.u32 %v6545, 7
        %v6547 = vsub.s32 1, %v6546
        %v6548 = vrot.slane %v6372, %v6547
        %v6549 = vlaneseq
        %v6550 = vshrl.u32 %v6549, 7
        %v6551 = vsub.s32 2, %v6550
        %v6552 = vrot.slane %v6372, %v6551
        %v6553 = vlaneseq
        %v6554 = vshrl.u32 %v6553, 7
        %v6555 = vsub.s32 3, %v6554
        %v6556 = vrot.slane %v6372, %v6555
        %v6557 = vlaneseq
        %v6558 = vshrl.u32 %v6557, 7
        %v6559 = vsub.s32 4, %v6558
        %v6560 = vrot.slane %v6372, %v6559
        %v6561 = vlaneseq
        %v6562 = vshrl.u32 %v6561, 7
        %v6563 = vsub.s32 5, %v6562
        %v6564 = vrot.slane %v6372, %v6563
        %v6565 = vlaneseq
        %v6566 = vshrl.u32 %v6565, 7
        %v6567 = vsub.s32 6, %v6566
        %v6568 = vrot.slane %v6372, %v6567
        %v6569 = vlaneseq
        %v6570 = vshrl.u32 %v6569, 7
        %v6571 = vsub.s32 7, %v6570
        %v6572 = vrot.slane %v6372, %v6571
        %v6573 = vlaneseq
        %v6574 = vshrl.u32 %v6573, 7
        %v6575 = vsub.s32 0, %v6574
        %v6576 = vrot.slane %v6373, %v6575
        %v6626 = vpack.c.bf16 %v6384, %v6384
        %v6627 = vpack.c.bf16 %v6388, %v6388
        %v6628 = vpack.c.bf16 %v6392, %v6392
        %v6629 = vpack.c.bf16 %v6396, %v6396
        %v6630 = vpack.c.bf16 %v6400, %v6400
        %v6631 = vpack.c.bf16 %v6404, %v6404
        %v6632 = vpack.c.bf16 %v6408, %v6408
        %v6633 = vpack.c.bf16 %v6412, %v6412
        %v6634 = vpack.c.bf16 %v6416, %v6416
        %v6635 = vpack.c.bf16 %v6420, %v6420
        %v6636 = vpack.c.bf16 %v6424, %v6424
        %v6637 = vpack.c.bf16 %v6428, %v6428
        %v6638 = vpack.c.bf16 %v6432, %v6432
        %v6639 = vpack.c.bf16 %v6436, %v6436
        %v6640 = vpack.c.bf16 %v6440, %v6440
        %v6641 = vpack.c.bf16 %v6444, %v6444
        %v6642 = vpack.c.bf16 %v6448, %v6448
        %v6643 = vpack.c.bf16 %v6452, %v6452
        %v6644 = vpack.c.bf16 %v6456, %v6456
        %v6645 = vpack.c.bf16 %v6460, %v6460
        %v6646 = vpack.c.bf16 %v6464, %v6464
        %v6647 = vpack.c.bf16 %v6468, %v6468
        %v6648 = vpack.c.bf16 %v6472, %v6472
        %v6649 = vpack.c.bf16 %v6476, %v6476
        %v6650 = vpack.c.bf16 %v6480, %v6480
        %v6651 = vpack.c.bf16 %v6484, %v6484
        %v6652 = vpack.c.bf16 %v6488, %v6488
        %v6653 = vpack.c.bf16 %v6492, %v6492
        %v6654 = vpack.c.bf16 %v6496, %v6496
        %v6655 = vpack.c.bf16 %v6500, %v6500
        %v6656 = vpack.c.bf16 %v6504, %v6504
        %v6657 = vpack.c.bf16 %v6508, %v6508
        %v6658 = vpack.c.bf16 %v6512, %v6512
        %v6659 = vpack.c.bf16 %v6516, %v6516
        %v6660 = vpack.c.bf16 %v6520, %v6520
        %v6661 = vpack.c.bf16 %v6524, %v6524
        %v6662 = vpack.c.bf16 %v6528, %v6528
        %v6663 = vpack.c.bf16 %v6532, %v6532
        %v6664 = vpack.c.bf16 %v6536, %v6536
        %v6665 = vpack.c.bf16 %v6540, %v6540
        %v6666 = vpack.c.bf16 %v6544, %v6544
        %v6667 = vpack.c.bf16 %v6548, %v6548
        %v6668 = vpack.c.bf16 %v6552, %v6552
        %v6669 = vpack.c.bf16 %v6556, %v6556
        %v6670 = vpack.c.bf16 %v6560, %v6560
        %v6671 = vpack.c.bf16 %v6564, %v6564
        %v6672 = vpack.c.bf16 %v6568, %v6568
        %v6673 = vpack.c.bf16 %v6572, %v6572
        %v6674 = vpack.c.bf16 %v6576, %v6576
        %v6675 = vld [vmem:[#allocation12] sm:$0xf]
        %v6676 = vld [vmem:[#allocation12 + $0x4] sm:$0xf]
        %v6677 = vld [vmem:[#allocation12 + $0x8] sm:$0xf]
        %v6678 = vld [vmem:[#allocation12 + $0xc] sm:$0xf]
        %v6679 = vld [vmem:[#allocation12 + $0x10] sm:$0xf]
        %v6680 = vld [vmem:[#allocation12 + $0x14] sm:$0xf]
        %v6681 = vld [vmem:[#allocation12 + $0x18] sm:$0xf]
        %v6682 = vld [vmem:[#allocation12 + $0x1c] sm:$0xf]
        %v6683 = vld [vmem:[#allocation12 + $0x20] sm:$0xf]
        %v6684 = vld [vmem:[#allocation12 + $0x24] sm:$0xf]
        %v6685 = vld [vmem:[#allocation12 + $0x28] sm:$0xf]
        %v6686 = vld [vmem:[#allocation12 + $0x2c] sm:$0xf]
        %v6687 = vld [vmem:[#allocation12 + $0x30] sm:$0xf]
        %v6688 = vld [vmem:[#allocation12 + $0x34] sm:$0xf]
        %v6689 = vld [vmem:[#allocation12 + $0x38] sm:$0xf]
        %v6690 = vld [vmem:[#allocation12 + $0x3c] sm:$0xf]
        %v6691 = vld [vmem:[#allocation12 + $0x40] sm:$0xf]
        %v6692 = vld [vmem:[#allocation12 + $0x44] sm:$0xf]
        %v6693 = vld [vmem:[#allocation12 + $0x48] sm:$0xf]
        %v6694 = vld [vmem:[#allocation12 + $0x4c] sm:$0xf]
        %v6695 = vld [vmem:[#allocation12 + $0x50] sm:$0xf]
        %v6696 = vld [vmem:[#allocation12 + $0x54] sm:$0xf]
        %v6697 = vld [vmem:[#allocation12 + $0x58] sm:$0xf]
        %v6698 = vld [vmem:[#allocation12 + $0x5c] sm:$0xf]
        %v6699 = vld [vmem:[#allocation12 + $0x60] sm:$0xf]
        %v6700 = vld [vmem:[#allocation12 + $0x64] sm:$0xf]
        %v6701 = vld [vmem:[#allocation12 + $0x68] sm:$0xf]
        %v6702 = vld [vmem:[#allocation12 + $0x6c] sm:$0xf]
        %v6703 = vld [vmem:[#allocation12 + $0x70] sm:$0xf]
        %v6704 = vld [vmem:[#allocation12 + $0x74] sm:$0xf]
        %v6705 = vld [vmem:[#allocation12 + $0x78] sm:$0xf]
        %v6706 = vld [vmem:[#allocation12 + $0x7c] sm:$0xf]
        %v6707 = vld [vmem:[#allocation12 + $0x80] sm:$0xf]
        %v6708 = vld [vmem:[#allocation12 + $0x84] sm:$0xf]
        %v6709 = vld [vmem:[#allocation12 + $0x88] sm:$0xf]
        %v6710 = vld [vmem:[#allocation12 + $0x8c] sm:$0xf]
        %v6711 = vld [vmem:[#allocation12 + $0x90] sm:$0xf]
        %v6712 = vld [vmem:[#allocation12 + $0x94] sm:$0xf]
        %v6713 = vld [vmem:[#allocation12 + $0x98] sm:$0xf]
        %v6714 = vld [vmem:[#allocation12 + $0x9c] sm:$0xf]
        %v6715 = vld [vmem:[#allocation12 + $0xa0] sm:$0xf]
        %v6716 = vld [vmem:[#allocation12 + $0xa4] sm:$0xf]
        %v6717 = vld [vmem:[#allocation12 + $0xa8] sm:$0xf]
        %v6718 = vld [vmem:[#allocation12 + $0xac] sm:$0xf]
        %v6719 = vld [vmem:[#allocation12 + $0xb0] sm:$0xf]
        %v6720 = vld [vmem:[#allocation12 + $0xb4] sm:$0xf]
        %v6721 = vld [vmem:[#allocation12 + $0xb8] sm:$0xf]
        %v6722 = vld [vmem:[#allocation12 + $0xbc] sm:$0xf]
        %v6723 = vld [vmem:[#allocation12 + $0xc0] sm:$0xf]
        %v6724 = vld [vmem:[#allocation12 + $0xc4] sm:$0xf]
        %v6725 = vld [vmem:[#allocation12 + $0xc8] sm:$0xf]
        %v6726 = vld [vmem:[#allocation12 + $0xcc] sm:$0xf]
        %v6727 = vld [vmem:[#allocation12 + $0xd0] sm:$0xf]
        %v6728 = vld [vmem:[#allocation12 + $0xd4] sm:$0xf]
        %v6729 = vld [vmem:[#allocation12 + $0xd8] sm:$0xf]
        %v6730 = vld [vmem:[#allocation12 + $0xdc] sm:$0xf]
        %v6731 = vld [vmem:[#allocation12 + $0xe0] sm:$0xf]
        %v6732 = vld [vmem:[#allocation12 + $0xe4] sm:$0xf]
        %v6733 = vld [vmem:[#allocation12 + $0xe8] sm:$0xf]
        %v6734 = vld [vmem:[#allocation12 + $0xec] sm:$0xf]
        %v6735 = vld [vmem:[#allocation12 + $0xf0] sm:$0xf]
        %v6736 = vld [vmem:[#allocation12 + $0xf4] sm:$0xf]
        %v6737 = vld [vmem:[#allocation12 + $0xf8] sm:$0xf]
        %v6738 = vld [vmem:[#allocation12 + $0xfc] sm:$0xf]
        %v6739 = vld [vmem:[#allocation12 + $0x100] sm:$0xf]
        %v6740 = vld [vmem:[#allocation12 + $0x104] sm:$0xf]
        %v6741 = vld [vmem:[#allocation12 + $0x108] sm:$0xf]
        %v6742 = vld [vmem:[#allocation12 + $0x10c] sm:$0xf]
        %v6743 = vld [vmem:[#allocation12 + $0x110] sm:$0xf]
        %v6744 = vld [vmem:[#allocation12 + $0x114] sm:$0xf]
        %v6745 = vld [vmem:[#allocation12 + $0x118] sm:$0xf]
        %v6746 = vld [vmem:[#allocation12 + $0x11c] sm:$0xf]
        %v6747 = vld [vmem:[#allocation12 + $0x120] sm:$0xf]
        %v6748 = vld [vmem:[#allocation12 + $0x124] sm:$0xf]
        %v6749 = vld [vmem:[#allocation12 + $0x128] sm:$0xf]
        %v6750 = vld [vmem:[#allocation12 + $0x12c] sm:$0xf]
        %v6751 = vld [vmem:[#allocation12 + $0x130] sm:$0xf]
        %v6752 = vld [vmem:[#allocation12 + $0x134] sm:$0xf]
        %v6753 = vld [vmem:[#allocation12 + $0x138] sm:$0xf]
        %v6754 = vld [vmem:[#allocation12 + $0x13c] sm:$0xf]
        %v6755 = vld [vmem:[#allocation12 + $0x140] sm:$0xf]
        %v6756 = vld [vmem:[#allocation12 + $0x144] sm:$0xf]
        %v6757 = vld [vmem:[#allocation12 + $0x148] sm:$0xf]
        %v6758 = vld [vmem:[#allocation12 + $0x14c] sm:$0xf]
        %v6759 = vld [vmem:[#allocation12 + $0x150] sm:$0xf]
        %v6760 = vld [vmem:[#allocation12 + $0x154] sm:$0xf]
        %v6761 = vld [vmem:[#allocation12 + $0x158] sm:$0xf]
        %v6762 = vld [vmem:[#allocation12 + $0x15c] sm:$0xf]
        %v6763 = vld [vmem:[#allocation12 + $0x160] sm:$0xf]
        %v6764 = vld [vmem:[#allocation12 + $0x164] sm:$0xf]
        %v6765 = vld [vmem:[#allocation12 + $0x168] sm:$0xf]
        %v6766 = vld [vmem:[#allocation12 + $0x16c] sm:$0xf]
        %v6767 = vld [vmem:[#allocation12 + $0x170] sm:$0xf]
        %v6768 = vld [vmem:[#allocation12 + $0x174] sm:$0xf]
        %v6769 = vld [vmem:[#allocation12 + $0x178] sm:$0xf]
        %v6770 = vld [vmem:[#allocation12 + $0x17c] sm:$0xf]
        %v6771 = vld [vmem:[#allocation12 + $0x180] sm:$0xf]
        %v6772 = vld [vmem:[#allocation12 + $0x184] sm:$0xf]
        %v6773 = vld [vmem:[#allocation12 + $0x188] sm:$0xf]
        %v6774 = vld [vmem:[#allocation12 + $0x18c] sm:$0xf]
        %v6775 = vld [vmem:[#allocation12 + $0x190] sm:$0xf]
        %v6776 = vld [vmem:[#allocation12 + $0x194] sm:$0xf]
        %v6777 = vld [vmem:[#allocation12 + $0x198] sm:$0xf]
        %v6778 = vld [vmem:[#allocation12 + $0x19c] sm:$0xf]
        %v6779 = vld [vmem:[#allocation12 + $0x1a0] sm:$0xf]
        %v6780 = vld [vmem:[#allocation12 + $0x1a4] sm:$0xf]
        %v6781 = vld [vmem:[#allocation12 + $0x1a8] sm:$0xf]
        %v6782 = vld [vmem:[#allocation12 + $0x1ac] sm:$0xf]
        %v6783 = vld [vmem:[#allocation12 + $0x1b0] sm:$0xf]
        %v6784 = vld [vmem:[#allocation12 + $0x1b4] sm:$0xf]
        %v6785 = vld [vmem:[#allocation12 + $0x1b8] sm:$0xf]
        %v6786 = vld [vmem:[#allocation12 + $0x1bc] sm:$0xf]
        %v6787 = vld [vmem:[#allocation12 + $0x1c0] sm:$0xf]
        %v6788 = vld [vmem:[#allocation12 + $0x1c4] sm:$0xf]
        %v6789 = vld [vmem:[#allocation12 + $0x1c8] sm:$0xf]
        %v6790 = vld [vmem:[#allocation12 + $0x1cc] sm:$0xf]
        %v6791 = vld [vmem:[#allocation12 + $0x1d0] sm:$0xf]
        %v6792 = vld [vmem:[#allocation12 + $0x1d4] sm:$0xf]
        %v6793 = vld [vmem:[#allocation12 + $0x1d8] sm:$0xf]
        %v6794 = vld [vmem:[#allocation12 + $0x1dc] sm:$0xf]
        %v6795 = vld [vmem:[#allocation12 + $0x1e0] sm:$0xf]
        %v6796 = vld [vmem:[#allocation12 + $0x1e4] sm:$0xf]
        %v6797 = vld [vmem:[#allocation12 + $0x1e8] sm:$0xf]
        %v6798 = vld [vmem:[#allocation12 + $0x1ec] sm:$0xf]
        %v6799 = vld [vmem:[#allocation12 + $0x1f0] sm:$0xf]
        %v6800 = vld [vmem:[#allocation12 + $0x1f4] sm:$0xf]
        %v6801 = vld [vmem:[#allocation12 + $0x1f8] sm:$0xf]
        %v6802 = vld [vmem:[#allocation12 + $0x1fc] sm:$0xf]
        %v6803 = vld [vmem:[#allocation12 + $0x200] sm:$0xf]
        %v6804 = vld [vmem:[#allocation12 + $0x204] sm:$0xf]
        %v6805 = vld [vmem:[#allocation12 + $0x208] sm:$0xf]
        %v6806 = vld [vmem:[#allocation12 + $0x20c] sm:$0xf]
        %v6807 = vld [vmem:[#allocation12 + $0x210] sm:$0xf]
        %v6808 = vld [vmem:[#allocation12 + $0x214] sm:$0xf]
        %v6809 = vld [vmem:[#allocation12 + $0x218] sm:$0xf]
        %v6810 = vld [vmem:[#allocation12 + $0x21c] sm:$0xf]
        %v6811 = vld [vmem:[#allocation12 + $0x220] sm:$0xf]
        %v6812 = vld [vmem:[#allocation12 + $0x224] sm:$0xf]
        %v6813 = vld [vmem:[#allocation12 + $0x228] sm:$0xf]
        %v6814 = vld [vmem:[#allocation12 + $0x22c] sm:$0xf]
        %v6815 = vld [vmem:[#allocation12 + $0x230] sm:$0xf]
        %v6816 = vld [vmem:[#allocation12 + $0x234] sm:$0xf]
        %v6817 = vld [vmem:[#allocation12 + $0x238] sm:$0xf]
        %v6818 = vld [vmem:[#allocation12 + $0x23c] sm:$0xf]
        %v6819 = vld [vmem:[#allocation12 + $0x240] sm:$0xf]
        %v6820 = vld [vmem:[#allocation12 + $0x244] sm:$0xf]
        %v6821 = vld [vmem:[#allocation12 + $0x248] sm:$0xf]
        %v6822 = vld [vmem:[#allocation12 + $0x24c] sm:$0xf]
        %v6823 = vld [vmem:[#allocation12 + $0x250] sm:$0xf]
        %v6824 = vld [vmem:[#allocation12 + $0x254] sm:$0xf]
        %v6825 = vld [vmem:[#allocation12 + $0x258] sm:$0xf]
        %v6826 = vld [vmem:[#allocation12 + $0x25c] sm:$0xf]
        %v6827 = vld [vmem:[#allocation12 + $0x260] sm:$0xf]
        %v6828 = vld [vmem:[#allocation12 + $0x264] sm:$0xf]
        %v6829 = vld [vmem:[#allocation12 + $0x268] sm:$0xf]
        %v6830 = vld [vmem:[#allocation12 + $0x26c] sm:$0xf]
        %v6831 = vld [vmem:[#allocation12 + $0x270] sm:$0xf]
        %v6832 = vld [vmem:[#allocation12 + $0x274] sm:$0xf]
        %v6833 = vld [vmem:[#allocation12 + $0x278] sm:$0xf]
        %v6834 = vld [vmem:[#allocation12 + $0x27c] sm:$0xf]
        %v6835 = vld [vmem:[#allocation12 + $0x280] sm:$0xf]
        %v6836 = vld [vmem:[#allocation12 + $0x284] sm:$0xf]
        %v6837 = vld [vmem:[#allocation12 + $0x288] sm:$0xf]
        %v6838 = vld [vmem:[#allocation12 + $0x28c] sm:$0xf]
        %v6839 = vld [vmem:[#allocation12 + $0x290] sm:$0xf]
        %v6840 = vld [vmem:[#allocation12 + $0x294] sm:$0xf]
        %v6841 = vld [vmem:[#allocation12 + $0x298] sm:$0xf]
        %v6842 = vld [vmem:[#allocation12 + $0x29c] sm:$0xf]
        %v6843 = vld [vmem:[#allocation12 + $0x2a0] sm:$0xf]
        %v6844 = vld [vmem:[#allocation12 + $0x2a4] sm:$0xf]
        %v6845 = vld [vmem:[#allocation12 + $0x2a8] sm:$0xf]
        %v6846 = vld [vmem:[#allocation12 + $0x2ac] sm:$0xf]
        %v6847 = vld [vmem:[#allocation12 + $0x2b0] sm:$0xf]
        %v6848 = vld [vmem:[#allocation12 + $0x2b4] sm:$0xf]
        %v6849 = vld [vmem:[#allocation12 + $0x2b8] sm:$0xf]
        %v6850 = vld [vmem:[#allocation12 + $0x2bc] sm:$0xf]
        %v6851 = vld [vmem:[#allocation12 + $0x2c0] sm:$0xf]
        %v6852 = vld [vmem:[#allocation12 + $0x2c4] sm:$0xf]
        %v6853 = vld [vmem:[#allocation12 + $0x2c8] sm:$0xf]
        %v6854 = vld [vmem:[#allocation12 + $0x2cc] sm:$0xf]
        %v6855 = vld [vmem:[#allocation12 + $0x2d0] sm:$0xf]
        %v6856 = vld [vmem:[#allocation12 + $0x2d4] sm:$0xf]
        %v6857 = vld [vmem:[#allocation12 + $0x2d8] sm:$0xf]
        %v6858 = vld [vmem:[#allocation12 + $0x2dc] sm:$0xf]
        %v6859 = vld [vmem:[#allocation12 + $0x2e0] sm:$0xf]
        %v6860 = vld [vmem:[#allocation12 + $0x2e4] sm:$0xf]
        %v6861 = vld [vmem:[#allocation12 + $0x2e8] sm:$0xf]
        %v6862 = vld [vmem:[#allocation12 + $0x2ec] sm:$0xf]
        %v6863 = vld [vmem:[#allocation12 + $0x2f0] sm:$0xf]
        %v6864 = vld [vmem:[#allocation12 + $0x2f4] sm:$0xf]
        %v6865 = vld [vmem:[#allocation12 + $0x2f8] sm:$0xf]
        %v6866 = vld [vmem:[#allocation12 + $0x2fc] sm:$0xf]
        %v6867 = vld [vmem:[#allocation12 + $0x300] sm:$0xf]
        %v6868 = vld [vmem:[#allocation12 + $0x304] sm:$0xf]
        %v6869 = vld [vmem:[#allocation12 + $0x308] sm:$0xf]
        %v6870 = vld [vmem:[#allocation12 + $0x30c] sm:$0xf]
        %v6871 = vld [vmem:[#allocation12 + $0x310] sm:$0xf]
        %v6872 = vld [vmem:[#allocation12 + $0x314] sm:$0xf]
        %v6873 = vld [vmem:[#allocation12 + $0x318] sm:$0xf]
        %v6874 = vld [vmem:[#allocation12 + $0x31c] sm:$0xf]
        %v6875 = vld [vmem:[#allocation12 + $0x320] sm:$0xf]
        %v6876 = vld [vmem:[#allocation12 + $0x324] sm:$0xf]
        %v6877 = vld [vmem:[#allocation12 + $0x328] sm:$0xf]
        %v6878 = vld [vmem:[#allocation12 + $0x32c] sm:$0xf]
        %v6879 = vld [vmem:[#allocation12 + $0x330] sm:$0xf]
        %v6880 = vld [vmem:[#allocation12 + $0x334] sm:$0xf]
        %v6881 = vld [vmem:[#allocation12 + $0x338] sm:$0xf]
        %v6882 = vld [vmem:[#allocation12 + $0x33c] sm:$0xf]
        %v6883 = vld [vmem:[#allocation12 + $0x340] sm:$0xf]
        %v6884 = vld [vmem:[#allocation12 + $0x344] sm:$0xf]
        %v6885 = vld [vmem:[#allocation12 + $0x348] sm:$0xf]
        %v6886 = vld [vmem:[#allocation12 + $0x34c] sm:$0xf]
        %v6887 = vld [vmem:[#allocation12 + $0x350] sm:$0xf]
        %v6888 = vld [vmem:[#allocation12 + $0x354] sm:$0xf]
        %v6889 = vld [vmem:[#allocation12 + $0x358] sm:$0xf]
        %v6890 = vld [vmem:[#allocation12 + $0x35c] sm:$0xf]
        %v6891 = vld [vmem:[#allocation12 + $0x360] sm:$0xf]
        %v6892 = vld [vmem:[#allocation12 + $0x364] sm:$0xf]
        %v6893 = vld [vmem:[#allocation12 + $0x368] sm:$0xf]
        %v6894 = vld [vmem:[#allocation12 + $0x36c] sm:$0xf]
        %v6895 = vld [vmem:[#allocation12 + $0x370] sm:$0xf]
        %v6896 = vld [vmem:[#allocation12 + $0x374] sm:$0xf]
        %v6897 = vld [vmem:[#allocation12 + $0x378] sm:$0xf]
        %v6898 = vld [vmem:[#allocation12 + $0x37c] sm:$0xf]
        %v6899 = vld [vmem:[#allocation12 + $0x380] sm:$0xf]
        %v6900 = vld [vmem:[#allocation12 + $0x384] sm:$0xf]
        %v6901 = vld [vmem:[#allocation12 + $0x388] sm:$0xf]
        %v6902 = vld [vmem:[#allocation12 + $0x38c] sm:$0xf]
        %v6903 = vld [vmem:[#allocation12 + $0x390] sm:$0xf]
        %v6904 = vld [vmem:[#allocation12 + $0x394] sm:$0xf]
        %v6905 = vld [vmem:[#allocation12 + $0x398] sm:$0xf]
        %v6906 = vld [vmem:[#allocation12 + $0x39c] sm:$0xf]
        %v6907 = vld [vmem:[#allocation12 + $0x3a0] sm:$0xf]
        %v6908 = vld [vmem:[#allocation12 + $0x3a4] sm:$0xf]
        %v6909 = vld [vmem:[#allocation12 + $0x3a8] sm:$0xf]
        %v6910 = vld [vmem:[#allocation12 + $0x3ac] sm:$0xf]
        %v6911 = vld [vmem:[#allocation12 + $0x3b0] sm:$0xf]
        %v6912 = vld [vmem:[#allocation12 + $0x3b4] sm:$0xf]
        %v6913 = vld [vmem:[#allocation12 + $0x3b8] sm:$0xf]
        %v6914 = vld [vmem:[#allocation12 + $0x3bc] sm:$0xf]
        %v6915 = vld [vmem:[#allocation12 + $0x3c0] sm:$0xf]
        %v6916 = vld [vmem:[#allocation12 + $0x3c4] sm:$0xf]
        %v6917 = vld [vmem:[#allocation12 + $0x3c8] sm:$0xf]
        %v6918 = vld [vmem:[#allocation12 + $0x3cc] sm:$0xf]
        %v6919 = vld [vmem:[#allocation12 + $0x3d0] sm:$0xf]
        %v6920 = vld [vmem:[#allocation12 + $0x3d4] sm:$0xf]
        %v6921 = vld [vmem:[#allocation12 + $0x3d8] sm:$0xf]
        %v6922 = vld [vmem:[#allocation12 + $0x3dc] sm:$0xf]
        %v6923 = vld [vmem:[#allocation12 + $0x3e0] sm:$0xf]
        %v6924 = vld [vmem:[#allocation12 + $0x3e4] sm:$0xf]
        %v6925 = vld [vmem:[#allocation12 + $0x3e8] sm:$0xf]
        %v6926 = vld [vmem:[#allocation12 + $0x3ec] sm:$0xf]
        %v6927 = vld [vmem:[#allocation12 + $0x3f0] sm:$0xf]
        %v6928 = vld [vmem:[#allocation12 + $0x3f4] sm:$0xf]
        %v6929 = vld [vmem:[#allocation12 + $0x3f8] sm:$0xf]
        %v6930 = vld [vmem:[#allocation12 + $0x3fc] sm:$0xf]
        %v6931 = vld [vmem:[#allocation12 + $0x400] sm:$0xf]
        %v6932 = vld [vmem:[#allocation12 + $0x404] sm:$0xf]
        %v6933 = vld [vmem:[#allocation12 + $0x408] sm:$0xf]
        %v6934 = vld [vmem:[#allocation12 + $0x40c] sm:$0xf]
        %v6935 = vld [vmem:[#allocation12 + $0x410] sm:$0xf]
        %v6936 = vld [vmem:[#allocation12 + $0x414] sm:$0xf]
        %v6937 = vld [vmem:[#allocation12 + $0x418] sm:$0xf]
        %v6938 = vld [vmem:[#allocation12 + $0x41c] sm:$0xf]
        %v6939 = vld [vmem:[#allocation12 + $0x420] sm:$0xf]
        %v6940 = vld [vmem:[#allocation12 + $0x424] sm:$0xf]
        %v6941 = vld [vmem:[#allocation12 + $0x428] sm:$0xf]
        %v6942 = vld [vmem:[#allocation12 + $0x42c] sm:$0xf]
        %v6943 = vld [vmem:[#allocation12 + $0x430] sm:$0xf]
        %v6944 = vld [vmem:[#allocation12 + $0x434] sm:$0xf]
        %v6945 = vld [vmem:[#allocation12 + $0x438] sm:$0xf]
        %v6946 = vld [vmem:[#allocation12 + $0x43c] sm:$0xf]
        %v6947 = vld [vmem:[#allocation12 + $0x440] sm:$0xf]
        %v6948 = vld [vmem:[#allocation12 + $0x444] sm:$0xf]
        %v6949 = vld [vmem:[#allocation12 + $0x448] sm:$0xf]
        %v6950 = vld [vmem:[#allocation12 + $0x44c] sm:$0xf]
        %v6951 = vld [vmem:[#allocation12 + $0x450] sm:$0xf]
        %v6952 = vld [vmem:[#allocation12 + $0x454] sm:$0xf]
        %v6953 = vld [vmem:[#allocation12 + $0x458] sm:$0xf]
        %v6954 = vld [vmem:[#allocation12 + $0x45c] sm:$0xf]
        %v6955 = vld [vmem:[#allocation12 + $0x460] sm:$0xf]
        %v6956 = vld [vmem:[#allocation12 + $0x464] sm:$0xf]
        %v6957 = vld [vmem:[#allocation12 + $0x468] sm:$0xf]
        %v6958 = vld [vmem:[#allocation12 + $0x46c] sm:$0xf]
        %v6959 = vld [vmem:[#allocation12 + $0x470] sm:$0xf]
        %v6960 = vld [vmem:[#allocation12 + $0x474] sm:$0xf]
        %v6961 = vld [vmem:[#allocation12 + $0x478] sm:$0xf]
        %v6962 = vld [vmem:[#allocation12 + $0x47c] sm:$0xf]
        %v6963 = vld [vmem:[#allocation12 + $0x480] sm:$0xf]
        %v6964 = vld [vmem:[#allocation12 + $0x484] sm:$0xf]
        %v6965 = vld [vmem:[#allocation12 + $0x488] sm:$0xf]
        %v6966 = vld [vmem:[#allocation12 + $0x48c] sm:$0xf]
        %v6967 = vld [vmem:[#allocation12 + $0x490] sm:$0xf]
        %v6968 = vld [vmem:[#allocation12 + $0x494] sm:$0xf]
        %v6969 = vld [vmem:[#allocation12 + $0x498] sm:$0xf]
        %v6970 = vld [vmem:[#allocation12 + $0x49c] sm:$0xf]
        %v6971 = vld [vmem:[#allocation12 + $0x4a0] sm:$0xf]
        %v6972 = vld [vmem:[#allocation12 + $0x4a4] sm:$0xf]
        %v6973 = vld [vmem:[#allocation12 + $0x4a8] sm:$0xf]
        %v6974 = vld [vmem:[#allocation12 + $0x4ac] sm:$0xf]
        %v6975 = vld [vmem:[#allocation12 + $0x4b0] sm:$0xf]
        %v6976 = vld [vmem:[#allocation12 + $0x4b4] sm:$0xf]
        %v6977 = vld [vmem:[#allocation12 + $0x4b8] sm:$0xf]
        %v6978 = vld [vmem:[#allocation12 + $0x4bc] sm:$0xf]
        %v6979 = vld [vmem:[#allocation12 + $0x4c0] sm:$0xf]
        %v6980 = vld [vmem:[#allocation12 + $0x4c4] sm:$0xf]
        %v6981 = vld [vmem:[#allocation12 + $0x4c8] sm:$0xf]
        %v6982 = vld [vmem:[#allocation12 + $0x4cc] sm:$0xf]
        %v6983 = vld [vmem:[#allocation12 + $0x4d0] sm:$0xf]
        %v6984 = vld [vmem:[#allocation12 + $0x4d4] sm:$0xf]
        %v6985 = vld [vmem:[#allocation12 + $0x4d8] sm:$0xf]
        %v6986 = vld [vmem:[#allocation12 + $0x4dc] sm:$0xf]
        %v6987 = vld [vmem:[#allocation12 + $0x4e0] sm:$0xf]
        %v6988 = vld [vmem:[#allocation12 + $0x4e4] sm:$0xf]
        %v6989 = vld [vmem:[#allocation12 + $0x4e8] sm:$0xf]
        %v6990 = vld [vmem:[#allocation12 + $0x4ec] sm:$0xf]
        %v6991 = vld [vmem:[#allocation12 + $0x4f0] sm:$0xf]
        %v6992 = vld [vmem:[#allocation12 + $0x4f4] sm:$0xf]
        %v6993 = vld [vmem:[#allocation12 + $0x4f8] sm:$0xf]
        %v6994 = vld [vmem:[#allocation12 + $0x4fc] sm:$0xf]
        %v6995 = vld [vmem:[#allocation12 + $0x500] sm:$0xf]
        %v6996 = vld [vmem:[#allocation12 + $0x504] sm:$0xf]
        %v6997 = vld [vmem:[#allocation12 + $0x508] sm:$0xf]
        %v6998 = vld [vmem:[#allocation12 + $0x50c] sm:$0xf]
        %v6999 = vld [vmem:[#allocation12 + $0x510] sm:$0xf]
        %v7000 = vld [vmem:[#allocation12 + $0x514] sm:$0xf]
        %v7001 = vld [vmem:[#allocation12 + $0x518] sm:$0xf]
        %v7002 = vld [vmem:[#allocation12 + $0x51c] sm:$0xf]
        %v7003 = vld [vmem:[#allocation12 + $0x520] sm:$0xf]
        %v7004 = vld [vmem:[#allocation12 + $0x524] sm:$0xf]
        %v7005 = vld [vmem:[#allocation12 + $0x528] sm:$0xf]
        %v7006 = vld [vmem:[#allocation12 + $0x52c] sm:$0xf]
        %v7007 = vld [vmem:[#allocation12 + $0x530] sm:$0xf]
        %v7008 = vld [vmem:[#allocation12 + $0x534] sm:$0xf]
        %v7009 = vld [vmem:[#allocation12 + $0x538] sm:$0xf]
        %v7010 = vld [vmem:[#allocation12 + $0x53c] sm:$0xf]
        %v7011 = vld [vmem:[#allocation12 + $0x540] sm:$0xf]
        %v7012 = vld [vmem:[#allocation12 + $0x544] sm:$0xf]
        %v7013 = vld [vmem:[#allocation12 + $0x548] sm:$0xf]
        %v7014 = vld [vmem:[#allocation12 + $0x54c] sm:$0xf]
        %v7015 = vld [vmem:[#allocation12 + $0x550] sm:$0xf]
        %v7016 = vld [vmem:[#allocation12 + $0x554] sm:$0xf]
        %v7017 = vld [vmem:[#allocation12 + $0x558] sm:$0xf]
        %v7018 = vld [vmem:[#allocation12 + $0x55c] sm:$0xf]
        %v7019 = vld [vmem:[#allocation12 + $0x560] sm:$0xf]
        %v7020 = vld [vmem:[#allocation12 + $0x564] sm:$0xf]
        %v7021 = vld [vmem:[#allocation12 + $0x568] sm:$0xf]
        %v7022 = vld [vmem:[#allocation12 + $0x56c] sm:$0xf]
        %v7023 = vld [vmem:[#allocation12 + $0x570] sm:$0xf]
        %v7024 = vld [vmem:[#allocation12 + $0x574] sm:$0xf]
        %v7025 = vld [vmem:[#allocation12 + $0x578] sm:$0xf]
        %v7026 = vld [vmem:[#allocation12 + $0x57c] sm:$0xf]
        %v7027 = vld [vmem:[#allocation12 + $0x580] sm:$0xf]
        %v7028 = vld [vmem:[#allocation12 + $0x584] sm:$0xf]
        %v7029 = vld [vmem:[#allocation12 + $0x588] sm:$0xf]
        %v7030 = vld [vmem:[#allocation12 + $0x58c] sm:$0xf]
        %v7031 = vld [vmem:[#allocation12 + $0x590] sm:$0xf]
        %v7032 = vld [vmem:[#allocation12 + $0x594] sm:$0xf]
        %v7033 = vld [vmem:[#allocation12 + $0x598] sm:$0xf]
        %v7034 = vld [vmem:[#allocation12 + $0x59c] sm:$0xf]
        %v7035 = vld [vmem:[#allocation12 + $0x5a0] sm:$0xf]
        %v7036 = vld [vmem:[#allocation12 + $0x5a4] sm:$0xf]
        %v7037 = vld [vmem:[#allocation12 + $0x5a8] sm:$0xf]
        %v7038 = vld [vmem:[#allocation12 + $0x5ac] sm:$0xf]
        %v7039 = vld [vmem:[#allocation12 + $0x5b0] sm:$0xf]
        %v7040 = vld [vmem:[#allocation12 + $0x5b4] sm:$0xf]
        %v7041 = vld [vmem:[#allocation12 + $0x5b8] sm:$0xf]
        %v7042 = vld [vmem:[#allocation12 + $0x5bc] sm:$0xf]
        %v7043 = vld [vmem:[#allocation12 + $0x5c0] sm:$0xf]
        %v7044 = vld [vmem:[#allocation12 + $0x5c4] sm:$0xf]
        %v7045 = vld [vmem:[#allocation12 + $0x5c8] sm:$0xf]
        %v7046 = vld [vmem:[#allocation12 + $0x5cc] sm:$0xf]
        %v7047 = vld [vmem:[#allocation12 + $0x5d0] sm:$0xf]
        %v7048 = vld [vmem:[#allocation12 + $0x5d4] sm:$0xf]
        %v7049 = vld [vmem:[#allocation12 + $0x5d8] sm:$0xf]
        %v7050 = vld [vmem:[#allocation12 + $0x5dc] sm:$0xf]
        %v7051 = vld [vmem:[#allocation12 + $0x5e0] sm:$0xf]
        %v7052 = vld [vmem:[#allocation12 + $0x5e4] sm:$0xf]
        %v7053 = vld [vmem:[#allocation12 + $0x5e8] sm:$0xf]
        %v7054 = vld [vmem:[#allocation12 + $0x5ec] sm:$0xf]
        %v7055 = vld [vmem:[#allocation12 + $0x5f0] sm:$0xf]
        %v7056 = vld [vmem:[#allocation12 + $0x5f4] sm:$0xf]
        %v7057 = vld [vmem:[#allocation12 + $0x5f8] sm:$0xf]
        %v7058 = vld [vmem:[#allocation12 + $0x5fc] sm:$0xf]
        %v7059 = vld [vmem:[#allocation12 + $0x600] sm:$0xf]
        %v7060 = vld [vmem:[#allocation12 + $0x604] sm:$0xf]
        %v7061 = vld [vmem:[#allocation12 + $0x608] sm:$0xf]
        %v7062 = vld [vmem:[#allocation12 + $0x60c] sm:$0xf]
        %v7063 = vld [vmem:[#allocation12 + $0x610] sm:$0xf]
        %v7064 = vld [vmem:[#allocation12 + $0x614] sm:$0xf]
        %v7065 = vld [vmem:[#allocation12 + $0x618] sm:$0xf]
        %v7066 = vld [vmem:[#allocation12 + $0x61c] sm:$0xf]
        %v7067 = vld [vmem:[#allocation12 + $0x620] sm:$0xf]
        %v7068 = vld [vmem:[#allocation12 + $0x624] sm:$0xf]
        %v7069 = vld [vmem:[#allocation12 + $0x628] sm:$0xf]
        %v7070 = vld [vmem:[#allocation12 + $0x62c] sm:$0xf]
        %v7071 = vld [vmem:[#allocation12 + $0x630] sm:$0xf]
        %v7072 = vld [vmem:[#allocation12 + $0x634] sm:$0xf]
        %v7073 = vld [vmem:[#allocation12 + $0x638] sm:$0xf]
        %v7074 = vld [vmem:[#allocation12 + $0x63c] sm:$0xf]
        %v7075 = vld [vmem:[#allocation12 + $0x640] sm:$0xf]
        %v7076 = vld [vmem:[#allocation12 + $0x644] sm:$0xf]
        %v7077 = vld [vmem:[#allocation12 + $0x648] sm:$0xf]
        %v7078 = vld [vmem:[#allocation12 + $0x64c] sm:$0xf]
        %v7079 = vld [vmem:[#allocation12 + $0x650] sm:$0xf]
        %v7080 = vld [vmem:[#allocation12 + $0x654] sm:$0xf]
        %v7081 = vld [vmem:[#allocation12 + $0x658] sm:$0xf]
        %v7082 = vld [vmem:[#allocation12 + $0x65c] sm:$0xf]
        %v7083 = vld [vmem:[#allocation12 + $0x660] sm:$0xf]
        %v7084 = vld [vmem:[#allocation12 + $0x664] sm:$0xf]
        %v7085 = vld [vmem:[#allocation12 + $0x668] sm:$0xf]
        %v7086 = vld [vmem:[#allocation12 + $0x66c] sm:$0xf]
        %v7087 = vld [vmem:[#allocation12 + $0x670] sm:$0xf]
        %v7088 = vld [vmem:[#allocation12 + $0x674] sm:$0xf]
        %v7089 = vld [vmem:[#allocation12 + $0x678] sm:$0xf]
        %v7090 = vld [vmem:[#allocation12 + $0x67c] sm:$0xf]
        %v7091 = vld [vmem:[#allocation12 + $0x680] sm:$0xf]
        %v7092 = vld [vmem:[#allocation12 + $0x684] sm:$0xf]
        %v7093 = vld [vmem:[#allocation12 + $0x688] sm:$0xf]
        %v7094 = vld [vmem:[#allocation12 + $0x68c] sm:$0xf]
        %v7095 = vld [vmem:[#allocation12 + $0x690] sm:$0xf]
        %v7096 = vld [vmem:[#allocation12 + $0x694] sm:$0xf]
        %v7097 = vld [vmem:[#allocation12 + $0x698] sm:$0xf]
        %v7098 = vld [vmem:[#allocation12 + $0x69c] sm:$0xf]
        %v7099 = vld [vmem:[#allocation12 + $0x6a0] sm:$0xf]
        %v7100 = vld [vmem:[#allocation12 + $0x6a4] sm:$0xf]
        %v7101 = vld [vmem:[#allocation12 + $0x6a8] sm:$0xf]
        %v7102 = vld [vmem:[#allocation12 + $0x6ac] sm:$0xf]
        %v7103 = vld [vmem:[#allocation12 + $0x6b0] sm:$0xf]
        %v7104 = vld [vmem:[#allocation12 + $0x6b4] sm:$0xf]
        %v7105 = vld [vmem:[#allocation12 + $0x6b8] sm:$0xf]
        %v7106 = vld [vmem:[#allocation12 + $0x6bc] sm:$0xf]
        %v7107 = vld [vmem:[#allocation12 + $0x6c0] sm:$0xf]
        %v7108 = vld [vmem:[#allocation12 + $0x6c4] sm:$0xf]
        %v7109 = vld [vmem:[#allocation12 + $0x6c8] sm:$0xf]
        %v7110 = vld [vmem:[#allocation12 + $0x6cc] sm:$0xf]
        %v7111 = vld [vmem:[#allocation12 + $0x6d0] sm:$0xf]
        %v7112 = vld [vmem:[#allocation12 + $0x6d4] sm:$0xf]
        %v7113 = vld [vmem:[#allocation12 + $0x6d8] sm:$0xf]
        %v7114 = vld [vmem:[#allocation12 + $0x6dc] sm:$0xf]
        %v7115 = vld [vmem:[#allocation12 + $0x6e0] sm:$0xf]
        %v7116 = vld [vmem:[#allocation12 + $0x6e4] sm:$0xf]
        %v7117 = vld [vmem:[#allocation12 + $0x6e8] sm:$0xf]
        %v7118 = vld [vmem:[#allocation12 + $0x6ec] sm:$0xf]
        %v7119 = vld [vmem:[#allocation12 + $0x6f0] sm:$0xf]
        %v7120 = vld [vmem:[#allocation12 + $0x6f4] sm:$0xf]
        %v7121 = vld [vmem:[#allocation12 + $0x6f8] sm:$0xf]
        %v7122 = vld [vmem:[#allocation12 + $0x6fc] sm:$0xf]
        %v7123 = vld [vmem:[#allocation12 + $0x700] sm:$0xf]
        %v7124 = vld [vmem:[#allocation12 + $0x704] sm:$0xf]
        %v7125 = vld [vmem:[#allocation12 + $0x708] sm:$0xf]
        %v7126 = vld [vmem:[#allocation12 + $0x70c] sm:$0xf]
        %v7127 = vld [vmem:[#allocation12 + $0x710] sm:$0xf]
        %v7128 = vld [vmem:[#allocation12 + $0x714] sm:$0xf]
        %v7129 = vld [vmem:[#allocation12 + $0x718] sm:$0xf]
        %v7130 = vld [vmem:[#allocation12 + $0x71c] sm:$0xf]
        %v7131 = vld [vmem:[#allocation12 + $0x720] sm:$0xf]
        %v7132 = vld [vmem:[#allocation12 + $0x724] sm:$0xf]
        %v7133 = vld [vmem:[#allocation12 + $0x728] sm:$0xf]
        %v7134 = vld [vmem:[#allocation12 + $0x72c] sm:$0xf]
        %v7135 = vld [vmem:[#allocation12 + $0x730] sm:$0xf]
        %v7136 = vld [vmem:[#allocation12 + $0x734] sm:$0xf]
        %v7137 = vld [vmem:[#allocation12 + $0x738] sm:$0xf]
        %v7138 = vld [vmem:[#allocation12 + $0x73c] sm:$0xf]
        %v7139 = vld [vmem:[#allocation12 + $0x740] sm:$0xf]
        %v7140 = vld [vmem:[#allocation12 + $0x744] sm:$0xf]
        %v7141 = vld [vmem:[#allocation12 + $0x748] sm:$0xf]
        %v7142 = vld [vmem:[#allocation12 + $0x74c] sm:$0xf]
        %v7143 = vld [vmem:[#allocation12 + $0x750] sm:$0xf]
        %v7144 = vld [vmem:[#allocation12 + $0x754] sm:$0xf]
        %v7145 = vld [vmem:[#allocation12 + $0x758] sm:$0xf]
        %v7146 = vld [vmem:[#allocation12 + $0x75c] sm:$0xf]
        %v7147 = vld [vmem:[#allocation12 + $0x760] sm:$0xf]
        %v7148 = vld [vmem:[#allocation12 + $0x764] sm:$0xf]
        %v7149 = vld [vmem:[#allocation12 + $0x768] sm:$0xf]
        %v7150 = vld [vmem:[#allocation12 + $0x76c] sm:$0xf]
        %v7151 = vld [vmem:[#allocation12 + $0x770] sm:$0xf]
        %v7152 = vld [vmem:[#allocation12 + $0x774] sm:$0xf]
        %v7153 = vld [vmem:[#allocation12 + $0x778] sm:$0xf]
        %v7154 = vld [vmem:[#allocation12 + $0x77c] sm:$0xf]
        %v7155 = vld [vmem:[#allocation12 + $0x780] sm:$0xf]
        %v7156 = vld [vmem:[#allocation12 + $0x784] sm:$0xf]
        %v7157 = vld [vmem:[#allocation12 + $0x788] sm:$0xf]
        %v7158 = vld [vmem:[#allocation12 + $0x78c] sm:$0xf]
        %v7159 = vld [vmem:[#allocation12 + $0x790] sm:$0xf]
        %v7160 = vld [vmem:[#allocation12 + $0x794] sm:$0xf]
        %v7161 = vld [vmem:[#allocation12 + $0x798] sm:$0xf]
        %v7162 = vld [vmem:[#allocation12 + $0x79c] sm:$0xf]
        %v7163 = vld [vmem:[#allocation12 + $0x7a0] sm:$0xf]
        %v7164 = vld [vmem:[#allocation12 + $0x7a4] sm:$0xf]
        %v7165 = vld [vmem:[#allocation12 + $0x7a8] sm:$0xf]
        %v7166 = vld [vmem:[#allocation12 + $0x7ac] sm:$0xf]
        %v7167 = vld [vmem:[#allocation12 + $0x7b0] sm:$0xf]
        %v7168 = vld [vmem:[#allocation12 + $0x7b4] sm:$0xf]
        %v7169 = vld [vmem:[#allocation12 + $0x7b8] sm:$0xf]
        %v7170 = vld [vmem:[#allocation12 + $0x7bc] sm:$0xf]
        %v7171 = vld [vmem:[#allocation12 + $0x7c0] sm:$0xf]
        %v7172 = vld [vmem:[#allocation12 + $0x7c4] sm:$0xf]
        %v7173 = vld [vmem:[#allocation12 + $0x7c8] sm:$0xf]
        %v7174 = vld [vmem:[#allocation12 + $0x7cc] sm:$0xf]
        %v7175 = vld [vmem:[#allocation12 + $0x7d0] sm:$0xf]
        %v7176 = vld [vmem:[#allocation12 + $0x7d4] sm:$0xf]
        %v7177 = vld [vmem:[#allocation12 + $0x7d8] sm:$0xf]
        %v7178 = vld [vmem:[#allocation12 + $0x7dc] sm:$0xf]
        %v7179 = vld [vmem:[#allocation12 + $0x7e0] sm:$0xf]
        %v7180 = vld [vmem:[#allocation12 + $0x7e4] sm:$0xf]
        %v7181 = vld [vmem:[#allocation12 + $0x7e8] sm:$0xf]
        %v7182 = vld [vmem:[#allocation12 + $0x7ec] sm:$0xf]
        %v7183 = vld [vmem:[#allocation12 + $0x7f0] sm:$0xf]
        %v7184 = vld [vmem:[#allocation12 + $0x7f4] sm:$0xf]
        %v7185 = vld [vmem:[#allocation12 + $0x7f8] sm:$0xf]
        %v7186 = vld [vmem:[#allocation12 + $0x7fc] sm:$0xf]
        %v7187 = vld [vmem:[#allocation12 + $0x800] sm:$0xf]
        %v7188 = vld [vmem:[#allocation12 + $0x804] sm:$0xf]
        %v7189 = vld [vmem:[#allocation12 + $0x808] sm:$0xf]
        %v7190 = vld [vmem:[#allocation12 + $0x80c] sm:$0xf]
        %v7191 = vld [vmem:[#allocation12 + $0x810] sm:$0xf]
        %v7192 = vld [vmem:[#allocation12 + $0x814] sm:$0xf]
        %v7193 = vld [vmem:[#allocation12 + $0x818] sm:$0xf]
        %v7194 = vld [vmem:[#allocation12 + $0x81c] sm:$0xf]
        %v7195 = vld [vmem:[#allocation12 + $0x820] sm:$0xf]
        %v7196 = vld [vmem:[#allocation12 + $0x824] sm:$0xf]
        %v7197 = vld [vmem:[#allocation12 + $0x828] sm:$0xf]
        %v7198 = vld [vmem:[#allocation12 + $0x82c] sm:$0xf]
        %v7199 = vld [vmem:[#allocation12 + $0x830] sm:$0xf]
        %v7200 = vld [vmem:[#allocation12 + $0x834] sm:$0xf]
        %v7201 = vld [vmem:[#allocation12 + $0x838] sm:$0xf]
        %v7202 = vld [vmem:[#allocation12 + $0x83c] sm:$0xf]
        %v7203 = vld [vmem:[#allocation12 + $0x840] sm:$0xf]
        %v7204 = vld [vmem:[#allocation12 + $0x844] sm:$0xf]
        %v7205 = vld [vmem:[#allocation12 + $0x848] sm:$0xf]
        %v7206 = vld [vmem:[#allocation12 + $0x84c] sm:$0xf]
        %v7207 = vld [vmem:[#allocation12 + $0x850] sm:$0xf]
        %v7208 = vld [vmem:[#allocation12 + $0x854] sm:$0xf]
        %v7209 = vld [vmem:[#allocation12 + $0x858] sm:$0xf]
        %v7210 = vld [vmem:[#allocation12 + $0x85c] sm:$0xf]
        %v7211 = vld [vmem:[#allocation12 + $0x860] sm:$0xf]
        %v7212 = vld [vmem:[#allocation12 + $0x864] sm:$0xf]
        %v7213 = vld [vmem:[#allocation12 + $0x868] sm:$0xf]
        %v7214 = vld [vmem:[#allocation12 + $0x86c] sm:$0xf]
        %v7215 = vld [vmem:[#allocation12 + $0x870] sm:$0xf]
        %v7216 = vld [vmem:[#allocation12 + $0x874] sm:$0xf]
        %v7217 = vld [vmem:[#allocation12 + $0x878] sm:$0xf]
        %v7218 = vld [vmem:[#allocation12 + $0x87c] sm:$0xf]
        %v7219 = vld [vmem:[#allocation12 + $0x880] sm:$0xf]
        %v7220 = vld [vmem:[#allocation12 + $0x884] sm:$0xf]
        %v7221 = vld [vmem:[#allocation12 + $0x888] sm:$0xf]
        %v7222 = vld [vmem:[#allocation12 + $0x88c] sm:$0xf]
        %v7223 = vld [vmem:[#allocation12 + $0x890] sm:$0xf]
        %v7224 = vld [vmem:[#allocation12 + $0x894] sm:$0xf]
        %v7225 = vld [vmem:[#allocation12 + $0x898] sm:$0xf]
        %v7226 = vld [vmem:[#allocation12 + $0x89c] sm:$0xf]
        %v7227 = vld [vmem:[#allocation12 + $0x8a0] sm:$0xf]
        %v7228 = vld [vmem:[#allocation12 + $0x8a4] sm:$0xf]
        %v7229 = vld [vmem:[#allocation12 + $0x8a8] sm:$0xf]
        %v7230 = vld [vmem:[#allocation12 + $0x8ac] sm:$0xf]
        %v7231 = vld [vmem:[#allocation12 + $0x8b0] sm:$0xf]
        %v7232 = vld [vmem:[#allocation12 + $0x8b4] sm:$0xf]
        %v7233 = vld [vmem:[#allocation12 + $0x8b8] sm:$0xf]
        %v7234 = vld [vmem:[#allocation12 + $0x8bc] sm:$0xf]
        %v7235 = vld [vmem:[#allocation12 + $0x8c0] sm:$0xf]
        %v7236 = vld [vmem:[#allocation12 + $0x8c4] sm:$0xf]
        %v7237 = vld [vmem:[#allocation12 + $0x8c8] sm:$0xf]
        %v7238 = vld [vmem:[#allocation12 + $0x8cc] sm:$0xf]
        %v7239 = vld [vmem:[#allocation12 + $0x8d0] sm:$0xf]
        %v7240 = vld [vmem:[#allocation12 + $0x8d4] sm:$0xf]
        %v7241 = vld [vmem:[#allocation12 + $0x8d8] sm:$0xf]
        %v7242 = vld [vmem:[#allocation12 + $0x8dc] sm:$0xf]
        %v7243 = vld [vmem:[#allocation12 + $0x8e0] sm:$0xf]
        %v7244 = vld [vmem:[#allocation12 + $0x8e4] sm:$0xf]
        %v7245 = vld [vmem:[#allocation12 + $0x8e8] sm:$0xf]
        %v7246 = vld [vmem:[#allocation12 + $0x8ec] sm:$0xf]
        %v7247 = vld [vmem:[#allocation12 + $0x8f0] sm:$0xf]
        %v7248 = vld [vmem:[#allocation12 + $0x8f4] sm:$0xf]
        %v7249 = vld [vmem:[#allocation12 + $0x8f8] sm:$0xf]
        %v7250 = vld [vmem:[#allocation12 + $0x8fc] sm:$0xf]
        %v7251 = vld [vmem:[#allocation12 + $0x900] sm:$0xf]
        %v7252 = vld [vmem:[#allocation12 + $0x904] sm:$0xf]
        %v7253 = vld [vmem:[#allocation12 + $0x908] sm:$0xf]
        %v7254 = vld [vmem:[#allocation12 + $0x90c] sm:$0xf]
        %v7255 = vld [vmem:[#allocation12 + $0x910] sm:$0xf]
        %v7256 = vld [vmem:[#allocation12 + $0x914] sm:$0xf]
        %v7257 = vld [vmem:[#allocation12 + $0x918] sm:$0xf]
        %v7258 = vld [vmem:[#allocation12 + $0x91c] sm:$0xf]
        %v7259 = vld [vmem:[#allocation12 + $0x920] sm:$0xf]
        %v7260 = vld [vmem:[#allocation12 + $0x924] sm:$0xf]
        %v7261 = vld [vmem:[#allocation12 + $0x928] sm:$0xf]
        %v7262 = vld [vmem:[#allocation12 + $0x92c] sm:$0xf]
        %v7263 = vld [vmem:[#allocation12 + $0x930] sm:$0xf]
        %v7264 = vld [vmem:[#allocation12 + $0x934] sm:$0xf]
        %v7265 = vld [vmem:[#allocation12 + $0x938] sm:$0xf]
        %v7266 = vld [vmem:[#allocation12 + $0x93c] sm:$0xf]
        %v7267 = vld [vmem:[#allocation12 + $0x940] sm:$0xf]
        %v7268 = vld [vmem:[#allocation12 + $0x944] sm:$0xf]
        %v7269 = vld [vmem:[#allocation12 + $0x948] sm:$0xf]
        %v7270 = vld [vmem:[#allocation12 + $0x94c] sm:$0xf]
        %v7271 = vld [vmem:[#allocation12 + $0x950] sm:$0xf]
        %v7272 = vld [vmem:[#allocation12 + $0x954] sm:$0xf]
        %v7273 = vld [vmem:[#allocation12 + $0x958] sm:$0xf]
        %v7274 = vld [vmem:[#allocation12 + $0x95c] sm:$0xf]
        %v7275 = vld [vmem:[#allocation12 + $0x960] sm:$0xf]
        %v7276 = vld [vmem:[#allocation12 + $0x964] sm:$0xf]
        %v7277 = vld [vmem:[#allocation12 + $0x968] sm:$0xf]
        %v7278 = vld [vmem:[#allocation12 + $0x96c] sm:$0xf]
        %v7279 = vld [vmem:[#allocation12 + $0x970] sm:$0xf]
        %v7280 = vld [vmem:[#allocation12 + $0x974] sm:$0xf]
        %v7281 = vld [vmem:[#allocation12 + $0x978] sm:$0xf]
        %v7282 = vld [vmem:[#allocation12 + $0x97c] sm:$0xf]
        %v7283 = vld [vmem:[#allocation12 + $0x980] sm:$0xf]
        %v7284 = vld [vmem:[#allocation12 + $0x984] sm:$0xf]
        %v7285 = vld [vmem:[#allocation12 + $0x988] sm:$0xf]
        %v7286 = vld [vmem:[#allocation12 + $0x98c] sm:$0xf]
        %v7287 = vld [vmem:[#allocation12 + $0x990] sm:$0xf]
        %v7288 = vld [vmem:[#allocation12 + $0x994] sm:$0xf]
        %v7289 = vld [vmem:[#allocation12 + $0x998] sm:$0xf]
        %v7290 = vld [vmem:[#allocation12 + $0x99c] sm:$0xf]
        %v7291 = vld [vmem:[#allocation12 + $0x9a0] sm:$0xf]
        %v7292 = vld [vmem:[#allocation12 + $0x9a4] sm:$0xf]
        %v7293 = vld [vmem:[#allocation12 + $0x9a8] sm:$0xf]
        %v7294 = vld [vmem:[#allocation12 + $0x9ac] sm:$0xf]
        %v7295 = vld [vmem:[#allocation12 + $0x9b0] sm:$0xf]
        %v7296 = vld [vmem:[#allocation12 + $0x9b4] sm:$0xf]
        %v7297 = vld [vmem:[#allocation12 + $0x9b8] sm:$0xf]
        %v7298 = vld [vmem:[#allocation12 + $0x9bc] sm:$0xf]
        %v7299 = vld [vmem:[#allocation12 + $0x9c0] sm:$0xf]
        %v7300 = vld [vmem:[#allocation12 + $0x9c4] sm:$0xf]
        %v7301 = vld [vmem:[#allocation12 + $0x9c8] sm:$0xf]
        %v7302 = vld [vmem:[#allocation12 + $0x9cc] sm:$0xf]
        %v7303 = vld [vmem:[#allocation12 + $0x9d0] sm:$0xf]
        %v7304 = vld [vmem:[#allocation12 + $0x9d4] sm:$0xf]
        %v7305 = vld [vmem:[#allocation12 + $0x9d8] sm:$0xf]
        %v7306 = vld [vmem:[#allocation12 + $0x9dc] sm:$0xf]
        %v7307 = vld [vmem:[#allocation12 + $0x9e0] sm:$0xf]
        %v7308 = vld [vmem:[#allocation12 + $0x9e4] sm:$0xf]
        %v7309 = vld [vmem:[#allocation12 + $0x9e8] sm:$0xf]
        %v7310 = vld [vmem:[#allocation12 + $0x9ec] sm:$0xf]
        %v7311 = vld [vmem:[#allocation12 + $0x9f0] sm:$0xf]
        %v7312 = vld [vmem:[#allocation12 + $0x9f4] sm:$0xf]
        %v7313 = vld [vmem:[#allocation12 + $0x9f8] sm:$0xf]
        %v7314 = vld [vmem:[#allocation12 + $0x9fc] sm:$0xf]
        %v7315 = vld [vmem:[#allocation12 + $0xa00] sm:$0xf]
        %v7316 = vld [vmem:[#allocation12 + $0xa04] sm:$0xf]
        %v7317 = vld [vmem:[#allocation12 + $0xa08] sm:$0xf]
        %v7318 = vld [vmem:[#allocation12 + $0xa0c] sm:$0xf]
        %v7319 = vld [vmem:[#allocation12 + $0xa10] sm:$0xf]
        %v7320 = vld [vmem:[#allocation12 + $0xa14] sm:$0xf]
        %v7321 = vld [vmem:[#allocation12 + $0xa18] sm:$0xf]
        %v7322 = vld [vmem:[#allocation12 + $0xa1c] sm:$0xf]
        %v7323 = vld [vmem:[#allocation12 + $0xa20] sm:$0xf]
        %v7324 = vld [vmem:[#allocation12 + $0xa24] sm:$0xf]
        %v7325 = vld [vmem:[#allocation12 + $0xa28] sm:$0xf]
        %v7326 = vld [vmem:[#allocation12 + $0xa2c] sm:$0xf]
        %v7327 = vld [vmem:[#allocation12 + $0xa30] sm:$0xf]
        %v7328 = vld [vmem:[#allocation12 + $0xa34] sm:$0xf]
        %v7329 = vld [vmem:[#allocation12 + $0xa38] sm:$0xf]
        %v7330 = vld [vmem:[#allocation12 + $0xa3c] sm:$0xf]
        %v7331 = vld [vmem:[#allocation12 + $0xa40] sm:$0xf]
        %v7332 = vld [vmem:[#allocation12 + $0xa44] sm:$0xf]
        %v7333 = vld [vmem:[#allocation12 + $0xa48] sm:$0xf]
        %v7334 = vld [vmem:[#allocation12 + $0xa4c] sm:$0xf]
        %v7335 = vld [vmem:[#allocation12 + $0xa50] sm:$0xf]
        %v7336 = vld [vmem:[#allocation12 + $0xa54] sm:$0xf]
        %v7337 = vld [vmem:[#allocation12 + $0xa58] sm:$0xf]
        %v7338 = vld [vmem:[#allocation12 + $0xa5c] sm:$0xf]
        %v7339 = vld [vmem:[#allocation12 + $0xa60] sm:$0xf]
        %v7340 = vld [vmem:[#allocation12 + $0xa64] sm:$0xf]
        %v7341 = vld [vmem:[#allocation12 + $0xa68] sm:$0xf]
        %v7342 = vld [vmem:[#allocation12 + $0xa6c] sm:$0xf]
        %v7343 = vld [vmem:[#allocation12 + $0xa70] sm:$0xf]
        %v7344 = vld [vmem:[#allocation12 + $0xa74] sm:$0xf]
        %v7345 = vld [vmem:[#allocation12 + $0xa78] sm:$0xf]
        %v7346 = vld [vmem:[#allocation12 + $0xa7c] sm:$0xf]
        %v7347 = vld [vmem:[#allocation12 + $0xa80] sm:$0xf]
        %v7348 = vld [vmem:[#allocation12 + $0xa84] sm:$0xf]
        %v7349 = vld [vmem:[#allocation12 + $0xa88] sm:$0xf]
        %v7350 = vld [vmem:[#allocation12 + $0xa8c] sm:$0xf]
        %v7351 = vld [vmem:[#allocation12 + $0xa90] sm:$0xf]
        %v7352 = vld [vmem:[#allocation12 + $0xa94] sm:$0xf]
        %v7353 = vld [vmem:[#allocation12 + $0xa98] sm:$0xf]
        %v7354 = vld [vmem:[#allocation12 + $0xa9c] sm:$0xf]
        %v7355 = vld [vmem:[#allocation12 + $0xaa0] sm:$0xf]
        %v7356 = vld [vmem:[#allocation12 + $0xaa4] sm:$0xf]
        %v7357 = vld [vmem:[#allocation12 + $0xaa8] sm:$0xf]
        %v7358 = vld [vmem:[#allocation12 + $0xaac] sm:$0xf]
        %v7359 = vld [vmem:[#allocation12 + $0xab0] sm:$0xf]
        %v7360 = vld [vmem:[#allocation12 + $0xab4] sm:$0xf]
        %v7361 = vld [vmem:[#allocation12 + $0xab8] sm:$0xf]
        %v7362 = vld [vmem:[#allocation12 + $0xabc] sm:$0xf]
        %v7363 = vld [vmem:[#allocation12 + $0xac0] sm:$0xf]
        %v7364 = vld [vmem:[#allocation12 + $0xac4] sm:$0xf]
        %v7365 = vld [vmem:[#allocation12 + $0xac8] sm:$0xf]
        %v7366 = vld [vmem:[#allocation12 + $0xacc] sm:$0xf]
        %v7367 = vld [vmem:[#allocation12 + $0xad0] sm:$0xf]
        %v7368 = vld [vmem:[#allocation12 + $0xad4] sm:$0xf]
        %v7369 = vld [vmem:[#allocation12 + $0xad8] sm:$0xf]
        %v7370 = vld [vmem:[#allocation12 + $0xadc] sm:$0xf]
        %v7371 = vld [vmem:[#allocation12 + $0xae0] sm:$0xf]
        %v7372 = vld [vmem:[#allocation12 + $0xae4] sm:$0xf]
        %v7373 = vld [vmem:[#allocation12 + $0xae8] sm:$0xf]
        %v7374 = vld [vmem:[#allocation12 + $0xaec] sm:$0xf]
        %v7375 = vld [vmem:[#allocation12 + $0xaf0] sm:$0xf]
        %v7376 = vld [vmem:[#allocation12 + $0xaf4] sm:$0xf]
        %v7377 = vld [vmem:[#allocation12 + $0xaf8] sm:$0xf]
        %v7378 = vld [vmem:[#allocation12 + $0xafc] sm:$0xf]
        %v7379 = vld [vmem:[#allocation12 + $0xb00] sm:$0xf]
        %v7380 = vld [vmem:[#allocation12 + $0xb04] sm:$0xf]
        %v7381 = vld [vmem:[#allocation12 + $0xb08] sm:$0xf]
        %v7382 = vld [vmem:[#allocation12 + $0xb0c] sm:$0xf]
        %v7383 = vld [vmem:[#allocation12 + $0xb10] sm:$0xf]
        %v7384 = vld [vmem:[#allocation12 + $0xb14] sm:$0xf]
        %v7385 = vld [vmem:[#allocation12 + $0xb18] sm:$0xf]
        %v7386 = vld [vmem:[#allocation12 + $0xb1c] sm:$0xf]
        %v7387 = vld [vmem:[#allocation12 + $0xb20] sm:$0xf]
        %v7388 = vld [vmem:[#allocation12 + $0xb24] sm:$0xf]
        %v7389 = vld [vmem:[#allocation12 + $0xb28] sm:$0xf]
        %v7390 = vld [vmem:[#allocation12 + $0xb2c] sm:$0xf]
        %v7391 = vld [vmem:[#allocation12 + $0xb30] sm:$0xf]
        %v7392 = vld [vmem:[#allocation12 + $0xb34] sm:$0xf]
        %v7393 = vld [vmem:[#allocation12 + $0xb38] sm:$0xf]
        %v7394 = vld [vmem:[#allocation12 + $0xb3c] sm:$0xf]
        %v7395 = vld [vmem:[#allocation12 + $0xb40] sm:$0xf]
        %v7396 = vld [vmem:[#allocation12 + $0xb44] sm:$0xf]
        %v7397 = vld [vmem:[#allocation12 + $0xb48] sm:$0xf]
        %v7398 = vld [vmem:[#allocation12 + $0xb4c] sm:$0xf]
        %v7399 = vld [vmem:[#allocation12 + $0xb50] sm:$0xf]
        %v7400 = vld [vmem:[#allocation12 + $0xb54] sm:$0xf]
        %v7401 = vld [vmem:[#allocation12 + $0xb58] sm:$0xf]
        %v7402 = vld [vmem:[#allocation12 + $0xb5c] sm:$0xf]
        %v7403 = vld [vmem:[#allocation12 + $0xb60] sm:$0xf]
        %v7404 = vld [vmem:[#allocation12 + $0xb64] sm:$0xf]
        %v7405 = vld [vmem:[#allocation12 + $0xb68] sm:$0xf]
        %v7406 = vld [vmem:[#allocation12 + $0xb6c] sm:$0xf]
        %v7407 = vld [vmem:[#allocation12 + $0xb70] sm:$0xf]
        %v7408 = vld [vmem:[#allocation12 + $0xb74] sm:$0xf]
        %v7409 = vld [vmem:[#allocation12 + $0xb78] sm:$0xf]
        %v7410 = vld [vmem:[#allocation12 + $0xb7c] sm:$0xf]
        %v7411 = vld [vmem:[#allocation12 + $0xb80] sm:$0xf]
        %v7412 = vld [vmem:[#allocation12 + $0xb84] sm:$0xf]
        %v7413 = vld [vmem:[#allocation12 + $0xb88] sm:$0xf]
        %v7414 = vld [vmem:[#allocation12 + $0xb8c] sm:$0xf]
        %v7415 = vld [vmem:[#allocation12 + $0xb90] sm:$0xf]
        %v7416 = vld [vmem:[#allocation12 + $0xb94] sm:$0xf]
        %v7417 = vld [vmem:[#allocation12 + $0xb98] sm:$0xf]
        %v7418 = vld [vmem:[#allocation12 + $0xb9c] sm:$0xf]
        %v7419 = vld [vmem:[#allocation12 + $0xba0] sm:$0xf]
        %v7420 = vld [vmem:[#allocation12 + $0xba4] sm:$0xf]
        %v7421 = vld [vmem:[#allocation12 + $0xba8] sm:$0xf]
        %v7422 = vld [vmem:[#allocation12 + $0xbac] sm:$0xf]
        %v7423 = vld [vmem:[#allocation12 + $0xbb0] sm:$0xf]
        %v7424 = vld [vmem:[#allocation12 + $0xbb4] sm:$0xf]
        %v7425 = vld [vmem:[#allocation12 + $0xbb8] sm:$0xf]
        %v7426 = vld [vmem:[#allocation12 + $0xbbc] sm:$0xf]
        %v7427 = vld [vmem:[#allocation12 + $0xbc0] sm:$0xf]
        %v7428 = vld [vmem:[#allocation12 + $0xbc4] sm:$0xf]
        %v7429 = vld [vmem:[#allocation12 + $0xbc8] sm:$0xf]
        %v7430 = vld [vmem:[#allocation12 + $0xbcc] sm:$0xf]
        %v7431 = vld [vmem:[#allocation12 + $0xbd0] sm:$0xf]
        %v7432 = vld [vmem:[#allocation12 + $0xbd4] sm:$0xf]
        %v7433 = vld [vmem:[#allocation12 + $0xbd8] sm:$0xf]
        %v7434 = vld [vmem:[#allocation12 + $0xbdc] sm:$0xf]
        %v7435 = vld [vmem:[#allocation12 + $0xbe0] sm:$0xf]
        %v7436 = vld [vmem:[#allocation12 + $0xbe4] sm:$0xf]
        %v7437 = vld [vmem:[#allocation12 + $0xbe8] sm:$0xf]
        %v7438 = vld [vmem:[#allocation12 + $0xbec] sm:$0xf]
        %v7439 = vld [vmem:[#allocation12 + $0xbf0] sm:$0xf]
        %v7440 = vld [vmem:[#allocation12 + $0xbf4] sm:$0xf]
        %v7441 = vld [vmem:[#allocation12 + $0xbf8] sm:$0xf]
        %v7442 = vld [vmem:[#allocation12 + $0xbfc] sm:$0xf]
        %v7443 = vld [vmem:[#allocation12 + $0xc00] sm:$0xf]
        %v7444 = vld [vmem:[#allocation12 + $0xc04] sm:$0xf]
        %v7445 = vld [vmem:[#allocation12 + $0xc08] sm:$0xf]
        %v7446 = vld [vmem:[#allocation12 + $0xc0c] sm:$0xf]
        %v7447 = vld [vmem:[#allocation12 + $0xc10] sm:$0xf]
        %v7448 = vld [vmem:[#allocation12 + $0xc14] sm:$0xf]
        %v7449 = vld [vmem:[#allocation12 + $0xc18] sm:$0xf]
        %v7450 = vld [vmem:[#allocation12 + $0xc1c] sm:$0xf]
        %v7451 = vld [vmem:[#allocation12 + $0xc20] sm:$0xf]
        %v7452 = vld [vmem:[#allocation12 + $0xc24] sm:$0xf]
        %v7453 = vld [vmem:[#allocation12 + $0xc28] sm:$0xf]
        %v7454 = vld [vmem:[#allocation12 + $0xc2c] sm:$0xf]
        %v7455 = vld [vmem:[#allocation12 + $0xc30] sm:$0xf]
        %v7456 = vld [vmem:[#allocation12 + $0xc34] sm:$0xf]
        %v7457 = vld [vmem:[#allocation12 + $0xc38] sm:$0xf]
        %v7458 = vld [vmem:[#allocation12 + $0xc3c] sm:$0xf]
        %v7459 = vld [vmem:[#allocation13] sm:$0x1]
        %v8244 = vunpack.c.l.b16 %v6675
        %v8245 = vunpack.c.l.b16 %v6676
        %v8246 = vunpack.c.l.b16 %v6677
        %v8247 = vunpack.c.l.b16 %v6678
        %v8248 = vunpack.c.l.b16 %v6679
        %v8249 = vunpack.c.l.b16 %v6680
        %v8250 = vunpack.c.l.b16 %v6681
        %v8251 = vunpack.c.l.b16 %v6682
        %v8252 = vunpack.c.l.b16 %v6683
        %v8253 = vunpack.c.l.b16 %v6684
        %v8254 = vunpack.c.l.b16 %v6685
        %v8255 = vunpack.c.l.b16 %v6686
        %v8256 = vunpack.c.l.b16 %v6687
        %v8257 = vunpack.c.l.b16 %v6688
        %v8258 = vunpack.c.l.b16 %v6689
        %v8259 = vunpack.c.l.b16 %v6690
        %v8260 = vunpack.c.l.b16 %v6691
        %v8261 = vunpack.c.l.b16 %v6692
        %v8262 = vunpack.c.l.b16 %v6693
        %v8263 = vunpack.c.l.b16 %v6694
        %v8264 = vunpack.c.l.b16 %v6695
        %v8265 = vunpack.c.l.b16 %v6696
        %v8266 = vunpack.c.l.b16 %v6697
        %v8267 = vunpack.c.l.b16 %v6698
        %v8268 = vunpack.c.l.b16 %v6699
        %v8269 = vunpack.c.l.b16 %v6700
        %v8270 = vunpack.c.l.b16 %v6701
        %v8271 = vunpack.c.l.b16 %v6702
        %v8272 = vunpack.c.l.b16 %v6703
        %v8273 = vunpack.c.l.b16 %v6704
        %v8274 = vunpack.c.l.b16 %v6705
        %v8275 = vunpack.c.l.b16 %v6706
        %v8276 = vunpack.c.l.b16 %v6707
        %v8277 = vunpack.c.l.b16 %v6708
        %v8278 = vunpack.c.l.b16 %v6709
        %v8279 = vunpack.c.l.b16 %v6710
        %v8280 = vunpack.c.l.b16 %v6711
        %v8281 = vunpack.c.l.b16 %v6712
        %v8282 = vunpack.c.l.b16 %v6713
        %v8283 = vunpack.c.l.b16 %v6714
        %v8284 = vunpack.c.l.b16 %v6715
        %v8285 = vunpack.c.l.b16 %v6716
        %v8286 = vunpack.c.l.b16 %v6717
        %v8287 = vunpack.c.l.b16 %v6718
        %v8288 = vunpack.c.l.b16 %v6719
        %v8289 = vunpack.c.l.b16 %v6720
        %v8290 = vunpack.c.l.b16 %v6721
        %v8291 = vunpack.c.l.b16 %v6722
        %v8292 = vunpack.c.l.b16 %v6723
        %v8293 = vunpack.c.l.b16 %v6724
        %v8294 = vunpack.c.l.b16 %v6725
        %v8295 = vunpack.c.l.b16 %v6726
        %v8296 = vunpack.c.l.b16 %v6727
        %v8297 = vunpack.c.l.b16 %v6728
        %v8298 = vunpack.c.l.b16 %v6729
        %v8299 = vunpack.c.l.b16 %v6730
        %v8300 = vunpack.c.l.b16 %v6731
        %v8301 = vunpack.c.l.b16 %v6732
        %v8302 = vunpack.c.l.b16 %v6733
        %v8303 = vunpack.c.l.b16 %v6734
        %v8304 = vunpack.c.l.b16 %v6735
        %v8305 = vunpack.c.l.b16 %v6736
        %v8306 = vunpack.c.l.b16 %v6737
        %v8307 = vunpack.c.l.b16 %v6738
        %v8308 = vunpack.c.l.b16 %v6739
        %v8309 = vunpack.c.l.b16 %v6740
        %v8310 = vunpack.c.l.b16 %v6741
        %v8311 = vunpack.c.l.b16 %v6742
        %v8312 = vunpack.c.l.b16 %v6743
        %v8313 = vunpack.c.l.b16 %v6744
        %v8314 = vunpack.c.l.b16 %v6745
        %v8315 = vunpack.c.l.b16 %v6746
        %v8316 = vunpack.c.l.b16 %v6747
        %v8317 = vunpack.c.l.b16 %v6748
        %v8318 = vunpack.c.l.b16 %v6749
        %v8319 = vunpack.c.l.b16 %v6750
        %v8320 = vunpack.c.l.b16 %v6751
        %v8321 = vunpack.c.l.b16 %v6752
        %v8322 = vunpack.c.l.b16 %v6753
        %v8323 = vunpack.c.l.b16 %v6754
        %v8324 = vunpack.c.l.b16 %v6755
        %v8325 = vunpack.c.l.b16 %v6756
        %v8326 = vunpack.c.l.b16 %v6757
        %v8327 = vunpack.c.l.b16 %v6758
        %v8328 = vunpack.c.l.b16 %v6759
        %v8329 = vunpack.c.l.b16 %v6760
        %v8330 = vunpack.c.l.b16 %v6761
        %v8331 = vunpack.c.l.b16 %v6762
        %v8332 = vunpack.c.l.b16 %v6763
        %v8333 = vunpack.c.l.b16 %v6764
        %v8334 = vunpack.c.l.b16 %v6765
        %v8335 = vunpack.c.l.b16 %v6766
        %v8336 = vunpack.c.l.b16 %v6767
        %v8337 = vunpack.c.l.b16 %v6768
        %v8338 = vunpack.c.l.b16 %v6769
        %v8339 = vunpack.c.l.b16 %v6770
        %v8340 = vunpack.c.l.b16 %v6771
        %v8341 = vunpack.c.l.b16 %v6772
        %v8342 = vunpack.c.l.b16 %v6773
        %v8343 = vunpack.c.l.b16 %v6774
        %v8344 = vunpack.c.l.b16 %v6775
        %v8345 = vunpack.c.l.b16 %v6776
        %v8346 = vunpack.c.l.b16 %v6777
        %v8347 = vunpack.c.l.b16 %v6778
        %v8348 = vunpack.c.l.b16 %v6779
        %v8349 = vunpack.c.l.b16 %v6780
        %v8350 = vunpack.c.l.b16 %v6781
        %v8351 = vunpack.c.l.b16 %v6782
        %v8352 = vunpack.c.l.b16 %v6783
        %v8353 = vunpack.c.l.b16 %v6784
        %v8354 = vunpack.c.l.b16 %v6785
        %v8355 = vunpack.c.l.b16 %v6786
        %v8356 = vunpack.c.l.b16 %v6787
        %v8357 = vunpack.c.l.b16 %v6788
        %v8358 = vunpack.c.l.b16 %v6789
        %v8359 = vunpack.c.l.b16 %v6790
        %v8360 = vunpack.c.l.b16 %v6791
        %v8361 = vunpack.c.l.b16 %v6792
        %v8362 = vunpack.c.l.b16 %v6793
        %v8363 = vunpack.c.l.b16 %v6794
        %v8364 = vunpack.c.l.b16 %v6795
        %v8365 = vunpack.c.l.b16 %v6796
        %v8366 = vunpack.c.l.b16 %v6797
        %v8367 = vunpack.c.l.b16 %v6798
        %v8368 = vunpack.c.l.b16 %v6799
        %v8369 = vunpack.c.l.b16 %v6800
        %v8370 = vunpack.c.l.b16 %v6801
        %v8371 = vunpack.c.l.b16 %v6802
        %v8372 = vunpack.c.l.b16 %v6803
        %v8373 = vunpack.c.l.b16 %v6804
        %v8374 = vunpack.c.l.b16 %v6805
        %v8375 = vunpack.c.l.b16 %v6806
        %v8376 = vunpack.c.l.b16 %v6807
        %v8377 = vunpack.c.l.b16 %v6808
        %v8378 = vunpack.c.l.b16 %v6809
        %v8379 = vunpack.c.l.b16 %v6810
        %v8380 = vunpack.c.l.b16 %v6811
        %v8381 = vunpack.c.l.b16 %v6812
        %v8382 = vunpack.c.l.b16 %v6813
        %v8383 = vunpack.c.l.b16 %v6814
        %v8384 = vunpack.c.l.b16 %v6815
        %v8385 = vunpack.c.l.b16 %v6816
        %v8386 = vunpack.c.l.b16 %v6817
        %v8387 = vunpack.c.l.b16 %v6818
        %v8388 = vunpack.c.l.b16 %v6819
        %v8389 = vunpack.c.l.b16 %v6820
        %v8390 = vunpack.c.l.b16 %v6821
        %v8391 = vunpack.c.l.b16 %v6822
        %v8392 = vunpack.c.l.b16 %v6823
        %v8393 = vunpack.c.l.b16 %v6824
        %v8394 = vunpack.c.l.b16 %v6825
        %v8395 = vunpack.c.l.b16 %v6826
        %v8396 = vunpack.c.l.b16 %v6827
        %v8397 = vunpack.c.l.b16 %v6828
        %v8398 = vunpack.c.l.b16 %v6829
        %v8399 = vunpack.c.l.b16 %v6830
        %v8400 = vunpack.c.l.b16 %v6831
        %v8401 = vunpack.c.l.b16 %v6832
        %v8402 = vunpack.c.l.b16 %v6833
        %v8403 = vunpack.c.l.b16 %v6834
        %v8404 = vunpack.c.l.b16 %v6835
        %v8405 = vunpack.c.l.b16 %v6836
        %v8406 = vunpack.c.l.b16 %v6837
        %v8407 = vunpack.c.l.b16 %v6838
        %v8408 = vunpack.c.l.b16 %v6839
        %v8409 = vunpack.c.l.b16 %v6840
        %v8410 = vunpack.c.l.b16 %v6841
        %v8411 = vunpack.c.l.b16 %v6842
        %v8412 = vunpack.c.l.b16 %v6843
        %v8413 = vunpack.c.l.b16 %v6844
        %v8414 = vunpack.c.l.b16 %v6845
        %v8415 = vunpack.c.l.b16 %v6846
        %v8416 = vunpack.c.l.b16 %v6847
        %v8417 = vunpack.c.l.b16 %v6848
        %v8418 = vunpack.c.l.b16 %v6849
        %v8419 = vunpack.c.l.b16 %v6850
        %v8420 = vunpack.c.l.b16 %v6851
        %v8421 = vunpack.c.l.b16 %v6852
        %v8422 = vunpack.c.l.b16 %v6853
        %v8423 = vunpack.c.l.b16 %v6854
        %v8424 = vunpack.c.l.b16 %v6855
        %v8425 = vunpack.c.l.b16 %v6856
        %v8426 = vunpack.c.l.b16 %v6857
        %v8427 = vunpack.c.l.b16 %v6858
        %v8428 = vunpack.c.l.b16 %v6859
        %v8429 = vunpack.c.l.b16 %v6860
        %v8430 = vunpack.c.l.b16 %v6861
        %v8431 = vunpack.c.l.b16 %v6862
        %v8432 = vunpack.c.l.b16 %v6863
        %v8433 = vunpack.c.l.b16 %v6864
        %v8434 = vunpack.c.l.b16 %v6865
        %v8435 = vunpack.c.l.b16 %v6866
        %v8436 = vunpack.c.l.b16 %v6867
        %v8437 = vunpack.c.l.b16 %v6868
        %v8438 = vunpack.c.l.b16 %v6869
        %v8439 = vunpack.c.l.b16 %v6870
        %v8440 = vunpack.c.l.b16 %v6871
        %v8441 = vunpack.c.l.b16 %v6872
        %v8442 = vunpack.c.l.b16 %v6873
        %v8443 = vunpack.c.l.b16 %v6874
        %v8444 = vunpack.c.l.b16 %v6875
        %v8445 = vunpack.c.l.b16 %v6876
        %v8446 = vunpack.c.l.b16 %v6877
        %v8447 = vunpack.c.l.b16 %v6878
        %v8448 = vunpack.c.l.b16 %v6879
        %v8449 = vunpack.c.l.b16 %v6880
        %v8450 = vunpack.c.l.b16 %v6881
        %v8451 = vunpack.c.l.b16 %v6882
        %v8452 = vunpack.c.l.b16 %v6883
        %v8453 = vunpack.c.l.b16 %v6884
        %v8454 = vunpack.c.l.b16 %v6885
        %v8455 = vunpack.c.l.b16 %v6886
        %v8456 = vunpack.c.l.b16 %v6887
        %v8457 = vunpack.c.l.b16 %v6888
        %v8458 = vunpack.c.l.b16 %v6889
        %v8459 = vunpack.c.l.b16 %v6890
        %v8460 = vunpack.c.l.b16 %v6891
        %v8461 = vunpack.c.l.b16 %v6892
        %v8462 = vunpack.c.l.b16 %v6893
        %v8463 = vunpack.c.l.b16 %v6894
        %v8464 = vunpack.c.l.b16 %v6895
        %v8465 = vunpack.c.l.b16 %v6896
        %v8466 = vunpack.c.l.b16 %v6897
        %v8467 = vunpack.c.l.b16 %v6898
        %v8468 = vunpack.c.l.b16 %v6899
        %v8469 = vunpack.c.l.b16 %v6900
        %v8470 = vunpack.c.l.b16 %v6901
        %v8471 = vunpack.c.l.b16 %v6902
        %v8472 = vunpack.c.l.b16 %v6903
        %v8473 = vunpack.c.l.b16 %v6904
        %v8474 = vunpack.c.l.b16 %v6905
        %v8475 = vunpack.c.l.b16 %v6906
        %v8476 = vunpack.c.l.b16 %v6907
        %v8477 = vunpack.c.l.b16 %v6908
        %v8478 = vunpack.c.l.b16 %v6909
        %v8479 = vunpack.c.l.b16 %v6910
        %v8480 = vunpack.c.l.b16 %v6911
        %v8481 = vunpack.c.l.b16 %v6912
        %v8482 = vunpack.c.l.b16 %v6913
        %v8483 = vunpack.c.l.b16 %v6914
        %v8484 = vunpack.c.l.b16 %v6915
        %v8485 = vunpack.c.l.b16 %v6916
        %v8486 = vunpack.c.l.b16 %v6917
        %v8487 = vunpack.c.l.b16 %v6918
        %v8488 = vunpack.c.l.b16 %v6919
        %v8489 = vunpack.c.l.b16 %v6920
        %v8490 = vunpack.c.l.b16 %v6921
        %v8491 = vunpack.c.l.b16 %v6922
        %v8492 = vunpack.c.l.b16 %v6923
        %v8493 = vunpack.c.l.b16 %v6924
        %v8494 = vunpack.c.l.b16 %v6925
        %v8495 = vunpack.c.l.b16 %v6926
        %v8496 = vunpack.c.l.b16 %v6927
        %v8497 = vunpack.c.l.b16 %v6928
        %v8498 = vunpack.c.l.b16 %v6929
        %v8499 = vunpack.c.l.b16 %v6930
        %v8500 = vunpack.c.l.b16 %v6931
        %v8501 = vunpack.c.l.b16 %v6932
        %v8502 = vunpack.c.l.b16 %v6933
        %v8503 = vunpack.c.l.b16 %v6934
        %v8504 = vunpack.c.l.b16 %v6935
        %v8505 = vunpack.c.l.b16 %v6936
        %v8506 = vunpack.c.l.b16 %v6937
        %v8507 = vunpack.c.l.b16 %v6938
        %v8508 = vunpack.c.l.b16 %v6939
        %v8509 = vunpack.c.l.b16 %v6940
        %v8510 = vunpack.c.l.b16 %v6941
        %v8511 = vunpack.c.l.b16 %v6942
        %v8512 = vunpack.c.l.b16 %v6943
        %v8513 = vunpack.c.l.b16 %v6944
        %v8514 = vunpack.c.l.b16 %v6945
        %v8515 = vunpack.c.l.b16 %v6946
        %v8516 = vunpack.c.l.b16 %v6947
        %v8517 = vunpack.c.l.b16 %v6948
        %v8518 = vunpack.c.l.b16 %v6949
        %v8519 = vunpack.c.l.b16 %v6950
        %v8520 = vunpack.c.l.b16 %v6951
        %v8521 = vunpack.c.l.b16 %v6952
        %v8522 = vunpack.c.l.b16 %v6953
        %v8523 = vunpack.c.l.b16 %v6954
        %v8524 = vunpack.c.l.b16 %v6955
        %v8525 = vunpack.c.l.b16 %v6956
        %v8526 = vunpack.c.l.b16 %v6957
        %v8527 = vunpack.c.l.b16 %v6958
        %v8528 = vunpack.c.l.b16 %v6959
        %v8529 = vunpack.c.l.b16 %v6960
        %v8530 = vunpack.c.l.b16 %v6961
        %v8531 = vunpack.c.l.b16 %v6962
        %v8532 = vunpack.c.l.b16 %v6963
        %v8533 = vunpack.c.l.b16 %v6964
        %v8534 = vunpack.c.l.b16 %v6965
        %v8535 = vunpack.c.l.b16 %v6966
        %v8536 = vunpack.c.l.b16 %v6967
        %v8537 = vunpack.c.l.b16 %v6968
        %v8538 = vunpack.c.l.b16 %v6969
        %v8539 = vunpack.c.l.b16 %v6970
        %v8540 = vunpack.c.l.b16 %v6971
        %v8541 = vunpack.c.l.b16 %v6972
        %v8542 = vunpack.c.l.b16 %v6973
        %v8543 = vunpack.c.l.b16 %v6974
        %v8544 = vunpack.c.l.b16 %v6975
        %v8545 = vunpack.c.l.b16 %v6976
        %v8546 = vunpack.c.l.b16 %v6977
        %v8547 = vunpack.c.l.b16 %v6978
        %v8548 = vunpack.c.l.b16 %v6979
        %v8549 = vunpack.c.l.b16 %v6980
        %v8550 = vunpack.c.l.b16 %v6981
        %v8551 = vunpack.c.l.b16 %v6982
        %v8552 = vunpack.c.l.b16 %v6983
        %v8553 = vunpack.c.l.b16 %v6984
        %v8554 = vunpack.c.l.b16 %v6985
        %v8555 = vunpack.c.l.b16 %v6986
        %v8556 = vunpack.c.l.b16 %v6987
        %v8557 = vunpack.c.l.b16 %v6988
        %v8558 = vunpack.c.l.b16 %v6989
        %v8559 = vunpack.c.l.b16 %v6990
        %v8560 = vunpack.c.l.b16 %v6991
        %v8561 = vunpack.c.l.b16 %v6992
        %v8562 = vunpack.c.l.b16 %v6993
        %v8563 = vunpack.c.l.b16 %v6994
        %v8564 = vunpack.c.l.b16 %v6995
        %v8565 = vunpack.c.l.b16 %v6996
        %v8566 = vunpack.c.l.b16 %v6997
        %v8567 = vunpack.c.l.b16 %v6998
        %v8568 = vunpack.c.l.b16 %v6999
        %v8569 = vunpack.c.l.b16 %v7000
        %v8570 = vunpack.c.l.b16 %v7001
        %v8571 = vunpack.c.l.b16 %v7002
        %v8572 = vunpack.c.l.b16 %v7003
        %v8573 = vunpack.c.l.b16 %v7004
        %v8574 = vunpack.c.l.b16 %v7005
        %v8575 = vunpack.c.l.b16 %v7006
        %v8576 = vunpack.c.l.b16 %v7007
        %v8577 = vunpack.c.l.b16 %v7008
        %v8578 = vunpack.c.l.b16 %v7009
        %v8579 = vunpack.c.l.b16 %v7010
        %v8580 = vunpack.c.l.b16 %v7011
        %v8581 = vunpack.c.l.b16 %v7012
        %v8582 = vunpack.c.l.b16 %v7013
        %v8583 = vunpack.c.l.b16 %v7014
        %v8584 = vunpack.c.l.b16 %v7015
        %v8585 = vunpack.c.l.b16 %v7016
        %v8586 = vunpack.c.l.b16 %v7017
        %v8587 = vunpack.c.l.b16 %v7018
        %v8588 = vunpack.c.l.b16 %v7019
        %v8589 = vunpack.c.l.b16 %v7020
        %v8590 = vunpack.c.l.b16 %v7021
        %v8591 = vunpack.c.l.b16 %v7022
        %v8592 = vunpack.c.l.b16 %v7023
        %v8593 = vunpack.c.l.b16 %v7024
        %v8594 = vunpack.c.l.b16 %v7025
        %v8595 = vunpack.c.l.b16 %v7026
        %v8596 = vunpack.c.l.b16 %v7027
        %v8597 = vunpack.c.l.b16 %v7028
        %v8598 = vunpack.c.l.b16 %v7029
        %v8599 = vunpack.c.l.b16 %v7030
        %v8600 = vunpack.c.l.b16 %v7031
        %v8601 = vunpack.c.l.b16 %v7032
        %v8602 = vunpack.c.l.b16 %v7033
        %v8603 = vunpack.c.l.b16 %v7034
        %v8604 = vunpack.c.l.b16 %v7035
        %v8605 = vunpack.c.l.b16 %v7036
        %v8606 = vunpack.c.l.b16 %v7037
        %v8607 = vunpack.c.l.b16 %v7038
        %v8608 = vunpack.c.l.b16 %v7039
        %v8609 = vunpack.c.l.b16 %v7040
        %v8610 = vunpack.c.l.b16 %v7041
        %v8611 = vunpack.c.l.b16 %v7042
        %v8612 = vunpack.c.l.b16 %v7043
        %v8613 = vunpack.c.l.b16 %v7044
        %v8614 = vunpack.c.l.b16 %v7045
        %v8615 = vunpack.c.l.b16 %v7046
        %v8616 = vunpack.c.l.b16 %v7047
        %v8617 = vunpack.c.l.b16 %v7048
        %v8618 = vunpack.c.l.b16 %v7049
        %v8619 = vunpack.c.l.b16 %v7050
        %v8620 = vunpack.c.l.b16 %v7051
        %v8621 = vunpack.c.l.b16 %v7052
        %v8622 = vunpack.c.l.b16 %v7053
        %v8623 = vunpack.c.l.b16 %v7054
        %v8624 = vunpack.c.l.b16 %v7055
        %v8625 = vunpack.c.l.b16 %v7056
        %v8626 = vunpack.c.l.b16 %v7057
        %v8627 = vunpack.c.l.b16 %v7058
        %v8628 = vunpack.c.l.b16 %v7059
        %v8629 = vunpack.c.l.b16 %v7060
        %v8630 = vunpack.c.l.b16 %v7061
        %v8631 = vunpack.c.l.b16 %v7062
        %v8632 = vunpack.c.l.b16 %v7063
        %v8633 = vunpack.c.l.b16 %v7064
        %v8634 = vunpack.c.l.b16 %v7065
        %v8635 = vunpack.c.l.b16 %v7066
        %v8636 = vunpack.c.l.b16 %v7067
        %v8637 = vunpack.c.l.b16 %v7068
        %v8638 = vunpack.c.l.b16 %v7069
        %v8639 = vunpack.c.l.b16 %v7070
        %v8640 = vunpack.c.l.b16 %v7071
        %v8641 = vunpack.c.l.b16 %v7072
        %v8642 = vunpack.c.l.b16 %v7073
        %v8643 = vunpack.c.l.b16 %v7074
        %v8644 = vunpack.c.l.b16 %v7075
        %v8645 = vunpack.c.l.b16 %v7076
        %v8646 = vunpack.c.l.b16 %v7077
        %v8647 = vunpack.c.l.b16 %v7078
        %v8648 = vunpack.c.l.b16 %v7079
        %v8649 = vunpack.c.l.b16 %v7080
        %v8650 = vunpack.c.l.b16 %v7081
        %v8651 = vunpack.c.l.b16 %v7082
        %v8652 = vunpack.c.l.b16 %v7083
        %v8653 = vunpack.c.l.b16 %v7084
        %v8654 = vunpack.c.l.b16 %v7085
        %v8655 = vunpack.c.l.b16 %v7086
        %v8656 = vunpack.c.l.b16 %v7087
        %v8657 = vunpack.c.l.b16 %v7088
        %v8658 = vunpack.c.l.b16 %v7089
        %v8659 = vunpack.c.l.b16 %v7090
        %v8660 = vunpack.c.l.b16 %v7091
        %v8661 = vunpack.c.l.b16 %v7092
        %v8662 = vunpack.c.l.b16 %v7093
        %v8663 = vunpack.c.l.b16 %v7094
        %v8664 = vunpack.c.l.b16 %v7095
        %v8665 = vunpack.c.l.b16 %v7096
        %v8666 = vunpack.c.l.b16 %v7097
        %v8667 = vunpack.c.l.b16 %v7098
        %v8668 = vunpack.c.l.b16 %v7099
        %v8669 = vunpack.c.l.b16 %v7100
        %v8670 = vunpack.c.l.b16 %v7101
        %v8671 = vunpack.c.l.b16 %v7102
        %v8672 = vunpack.c.l.b16 %v7103
        %v8673 = vunpack.c.l.b16 %v7104
        %v8674 = vunpack.c.l.b16 %v7105
        %v8675 = vunpack.c.l.b16 %v7106
        %v8676 = vunpack.c.l.b16 %v7107
        %v8677 = vunpack.c.l.b16 %v7108
        %v8678 = vunpack.c.l.b16 %v7109
        %v8679 = vunpack.c.l.b16 %v7110
        %v8680 = vunpack.c.l.b16 %v7111
        %v8681 = vunpack.c.l.b16 %v7112
        %v8682 = vunpack.c.l.b16 %v7113
        %v8683 = vunpack.c.l.b16 %v7114
        %v8684 = vunpack.c.l.b16 %v7115
        %v8685 = vunpack.c.l.b16 %v7116
        %v8686 = vunpack.c.l.b16 %v7117
        %v8687 = vunpack.c.l.b16 %v7118
        %v8688 = vunpack.c.l.b16 %v7119
        %v8689 = vunpack.c.l.b16 %v7120
        %v8690 = vunpack.c.l.b16 %v7121
        %v8691 = vunpack.c.l.b16 %v7122
        %v8692 = vunpack.c.l.b16 %v7123
        %v8693 = vunpack.c.l.b16 %v7124
        %v8694 = vunpack.c.l.b16 %v7125
        %v8695 = vunpack.c.l.b16 %v7126
        %v8696 = vunpack.c.l.b16 %v7127
        %v8697 = vunpack.c.l.b16 %v7128
        %v8698 = vunpack.c.l.b16 %v7129
        %v8699 = vunpack.c.l.b16 %v7130
        %v8700 = vunpack.c.l.b16 %v7131
        %v8701 = vunpack.c.l.b16 %v7132
        %v8702 = vunpack.c.l.b16 %v7133
        %v8703 = vunpack.c.l.b16 %v7134
        %v8704 = vunpack.c.l.b16 %v7135
        %v8705 = vunpack.c.l.b16 %v7136
        %v8706 = vunpack.c.l.b16 %v7137
        %v8707 = vunpack.c.l.b16 %v7138
        %v8708 = vunpack.c.l.b16 %v7139
        %v8709 = vunpack.c.l.b16 %v7140
        %v8710 = vunpack.c.l.b16 %v7141
        %v8711 = vunpack.c.l.b16 %v7142
        %v8712 = vunpack.c.l.b16 %v7143
        %v8713 = vunpack.c.l.b16 %v7144
        %v8714 = vunpack.c.l.b16 %v7145
        %v8715 = vunpack.c.l.b16 %v7146
        %v8716 = vunpack.c.l.b16 %v7147
        %v8717 = vunpack.c.l.b16 %v7148
        %v8718 = vunpack.c.l.b16 %v7149
        %v8719 = vunpack.c.l.b16 %v7150
        %v8720 = vunpack.c.l.b16 %v7151
        %v8721 = vunpack.c.l.b16 %v7152
        %v8722 = vunpack.c.l.b16 %v7153
        %v8723 = vunpack.c.l.b16 %v7154
        %v8724 = vunpack.c.l.b16 %v7155
        %v8725 = vunpack.c.l.b16 %v7156
        %v8726 = vunpack.c.l.b16 %v7157
        %v8727 = vunpack.c.l.b16 %v7158
        %v8728 = vunpack.c.l.b16 %v7159
        %v8729 = vunpack.c.l.b16 %v7160
        %v8730 = vunpack.c.l.b16 %v7161
        %v8731 = vunpack.c.l.b16 %v7162
        %v8732 = vunpack.c.l.b16 %v7163
        %v8733 = vunpack.c.l.b16 %v7164
        %v8734 = vunpack.c.l.b16 %v7165
        %v8735 = vunpack.c.l.b16 %v7166
        %v8736 = vunpack.c.l.b16 %v7167
        %v8737 = vunpack.c.l.b16 %v7168
        %v8738 = vunpack.c.l.b16 %v7169
        %v8739 = vunpack.c.l.b16 %v7170
        %v8740 = vunpack.c.l.b16 %v7171
        %v8741 = vunpack.c.l.b16 %v7172
        %v8742 = vunpack.c.l.b16 %v7173
        %v8743 = vunpack.c.l.b16 %v7174
        %v8744 = vunpack.c.l.b16 %v7175
        %v8745 = vunpack.c.l.b16 %v7176
        %v8746 = vunpack.c.l.b16 %v7177
        %v8747 = vunpack.c.l.b16 %v7178
        %v8748 = vunpack.c.l.b16 %v7179
        %v8749 = vunpack.c.l.b16 %v7180
        %v8750 = vunpack.c.l.b16 %v7181
        %v8751 = vunpack.c.l.b16 %v7182
        %v8752 = vunpack.c.l.b16 %v7183
        %v8753 = vunpack.c.l.b16 %v7184
        %v8754 = vunpack.c.l.b16 %v7185
        %v8755 = vunpack.c.l.b16 %v7186
        %v8756 = vunpack.c.l.b16 %v7187
        %v8757 = vunpack.c.l.b16 %v7188
        %v8758 = vunpack.c.l.b16 %v7189
        %v8759 = vunpack.c.l.b16 %v7190
        %v8760 = vunpack.c.l.b16 %v7191
        %v8761 = vunpack.c.l.b16 %v7192
        %v8762 = vunpack.c.l.b16 %v7193
        %v8763 = vunpack.c.l.b16 %v7194
        %v8764 = vunpack.c.l.b16 %v7195
        %v8765 = vunpack.c.l.b16 %v7196
        %v8766 = vunpack.c.l.b16 %v7197
        %v8767 = vunpack.c.l.b16 %v7198
        %v8768 = vunpack.c.l.b16 %v7199
        %v8769 = vunpack.c.l.b16 %v7200
        %v8770 = vunpack.c.l.b16 %v7201
        %v8771 = vunpack.c.l.b16 %v7202
        %v8772 = vunpack.c.l.b16 %v7203
        %v8773 = vunpack.c.l.b16 %v7204
        %v8774 = vunpack.c.l.b16 %v7205
        %v8775 = vunpack.c.l.b16 %v7206
        %v8776 = vunpack.c.l.b16 %v7207
        %v8777 = vunpack.c.l.b16 %v7208
        %v8778 = vunpack.c.l.b16 %v7209
        %v8779 = vunpack.c.l.b16 %v7210
        %v8780 = vunpack.c.l.b16 %v7211
        %v8781 = vunpack.c.l.b16 %v7212
        %v8782 = vunpack.c.l.b16 %v7213
        %v8783 = vunpack.c.l.b16 %v7214
        %v8784 = vunpack.c.l.b16 %v7215
        %v8785 = vunpack.c.l.b16 %v7216
        %v8786 = vunpack.c.l.b16 %v7217
        %v8787 = vunpack.c.l.b16 %v7218
        %v8788 = vunpack.c.l.b16 %v7219
        %v8789 = vunpack.c.l.b16 %v7220
        %v8790 = vunpack.c.l.b16 %v7221
        %v8791 = vunpack.c.l.b16 %v7222
        %v8792 = vunpack.c.l.b16 %v7223
        %v8793 = vunpack.c.l.b16 %v7224
        %v8794 = vunpack.c.l.b16 %v7225
        %v8795 = vunpack.c.l.b16 %v7226
        %v8796 = vunpack.c.l.b16 %v7227
        %v8797 = vunpack.c.l.b16 %v7228
        %v8798 = vunpack.c.l.b16 %v7229
        %v8799 = vunpack.c.l.b16 %v7230
        %v8800 = vunpack.c.l.b16 %v7231
        %v8801 = vunpack.c.l.b16 %v7232
        %v8802 = vunpack.c.l.b16 %v7233
        %v8803 = vunpack.c.l.b16 %v7234
        %v8804 = vunpack.c.l.b16 %v7235
        %v8805 = vunpack.c.l.b16 %v7236
        %v8806 = vunpack.c.l.b16 %v7237
        %v8807 = vunpack.c.l.b16 %v7238
        %v8808 = vunpack.c.l.b16 %v7239
        %v8809 = vunpack.c.l.b16 %v7240
        %v8810 = vunpack.c.l.b16 %v7241
        %v8811 = vunpack.c.l.b16 %v7242
        %v8812 = vunpack.c.l.b16 %v7243
        %v8813 = vunpack.c.l.b16 %v7244
        %v8814 = vunpack.c.l.b16 %v7245
        %v8815 = vunpack.c.l.b16 %v7246
        %v8816 = vunpack.c.l.b16 %v7247
        %v8817 = vunpack.c.l.b16 %v7248
        %v8818 = vunpack.c.l.b16 %v7249
        %v8819 = vunpack.c.l.b16 %v7250
        %v8820 = vunpack.c.l.b16 %v7251
        %v8821 = vunpack.c.l.b16 %v7252
        %v8822 = vunpack.c.l.b16 %v7253
        %v8823 = vunpack.c.l.b16 %v7254
        %v8824 = vunpack.c.l.b16 %v7255
        %v8825 = vunpack.c.l.b16 %v7256
        %v8826 = vunpack.c.l.b16 %v7257
        %v8827 = vunpack.c.l.b16 %v7258
        %v8828 = vunpack.c.l.b16 %v7259
        %v8829 = vunpack.c.l.b16 %v7260
        %v8830 = vunpack.c.l.b16 %v7261
        %v8831 = vunpack.c.l.b16 %v7262
        %v8832 = vunpack.c.l.b16 %v7263
        %v8833 = vunpack.c.l.b16 %v7264
        %v8834 = vunpack.c.l.b16 %v7265
        %v8835 = vunpack.c.l.b16 %v7266
        %v8836 = vunpack.c.l.b16 %v7267
        %v8837 = vunpack.c.l.b16 %v7268
        %v8838 = vunpack.c.l.b16 %v7269
        %v8839 = vunpack.c.l.b16 %v7270
        %v8840 = vunpack.c.l.b16 %v7271
        %v8841 = vunpack.c.l.b16 %v7272
        %v8842 = vunpack.c.l.b16 %v7273
        %v8843 = vunpack.c.l.b16 %v7274
        %v8844 = vunpack.c.l.b16 %v7275
        %v8845 = vunpack.c.l.b16 %v7276
        %v8846 = vunpack.c.l.b16 %v7277
        %v8847 = vunpack.c.l.b16 %v7278
        %v8848 = vunpack.c.l.b16 %v7279
        %v8849 = vunpack.c.l.b16 %v7280
        %v8850 = vunpack.c.l.b16 %v7281
        %v8851 = vunpack.c.l.b16 %v7282
        %v8852 = vunpack.c.l.b16 %v7283
        %v8853 = vunpack.c.l.b16 %v7284
        %v8854 = vunpack.c.l.b16 %v7285
        %v8855 = vunpack.c.l.b16 %v7286
        %v8856 = vunpack.c.l.b16 %v7287
        %v8857 = vunpack.c.l.b16 %v7288
        %v8858 = vunpack.c.l.b16 %v7289
        %v8859 = vunpack.c.l.b16 %v7290
        %v8860 = vunpack.c.l.b16 %v7291
        %v8861 = vunpack.c.l.b16 %v7292
        %v8862 = vunpack.c.l.b16 %v7293
        %v8863 = vunpack.c.l.b16 %v7294
        %v8864 = vunpack.c.l.b16 %v7295
        %v8865 = vunpack.c.l.b16 %v7296
        %v8866 = vunpack.c.l.b16 %v7297
        %v8867 = vunpack.c.l.b16 %v7298
        %v8868 = vunpack.c.l.b16 %v7299
        %v8869 = vunpack.c.l.b16 %v7300
        %v8870 = vunpack.c.l.b16 %v7301
        %v8871 = vunpack.c.l.b16 %v7302
        %v8872 = vunpack.c.l.b16 %v7303
        %v8873 = vunpack.c.l.b16 %v7304
        %v8874 = vunpack.c.l.b16 %v7305
        %v8875 = vunpack.c.l.b16 %v7306
        %v8876 = vunpack.c.l.b16 %v7307
        %v8877 = vunpack.c.l.b16 %v7308
        %v8878 = vunpack.c.l.b16 %v7309
        %v8879 = vunpack.c.l.b16 %v7310
        %v8880 = vunpack.c.l.b16 %v7311
        %v8881 = vunpack.c.l.b16 %v7312
        %v8882 = vunpack.c.l.b16 %v7313
        %v8883 = vunpack.c.l.b16 %v7314
        %v8884 = vunpack.c.l.b16 %v7315
        %v8885 = vunpack.c.l.b16 %v7316
        %v8886 = vunpack.c.l.b16 %v7317
        %v8887 = vunpack.c.l.b16 %v7318
        %v8888 = vunpack.c.l.b16 %v7319
        %v8889 = vunpack.c.l.b16 %v7320
        %v8890 = vunpack.c.l.b16 %v7321
        %v8891 = vunpack.c.l.b16 %v7322
        %v8892 = vunpack.c.l.b16 %v7323
        %v8893 = vunpack.c.l.b16 %v7324
        %v8894 = vunpack.c.l.b16 %v7325
        %v8895 = vunpack.c.l.b16 %v7326
        %v8896 = vunpack.c.l.b16 %v7327
        %v8897 = vunpack.c.l.b16 %v7328
        %v8898 = vunpack.c.l.b16 %v7329
        %v8899 = vunpack.c.l.b16 %v7330
        %v8900 = vunpack.c.l.b16 %v7331
        %v8901 = vunpack.c.l.b16 %v7332
        %v8902 = vunpack.c.l.b16 %v7333
        %v8903 = vunpack.c.l.b16 %v7334
        %v8904 = vunpack.c.l.b16 %v7335
        %v8905 = vunpack.c.l.b16 %v7336
        %v8906 = vunpack.c.l.b16 %v7337
        %v8907 = vunpack.c.l.b16 %v7338
        %v8908 = vunpack.c.l.b16 %v7339
        %v8909 = vunpack.c.l.b16 %v7340
        %v8910 = vunpack.c.l.b16 %v7341
        %v8911 = vunpack.c.l.b16 %v7342
        %v8912 = vunpack.c.l.b16 %v7343
        %v8913 = vunpack.c.l.b16 %v7344
        %v8914 = vunpack.c.l.b16 %v7345
        %v8915 = vunpack.c.l.b16 %v7346
        %v8916 = vunpack.c.l.b16 %v7347
        %v8917 = vunpack.c.l.b16 %v7348
        %v8918 = vunpack.c.l.b16 %v7349
        %v8919 = vunpack.c.l.b16 %v7350
        %v8920 = vunpack.c.l.b16 %v7351
        %v8921 = vunpack.c.l.b16 %v7352
        %v8922 = vunpack.c.l.b16 %v7353
        %v8923 = vunpack.c.l.b16 %v7354
        %v8924 = vunpack.c.l.b16 %v7355
        %v8925 = vunpack.c.l.b16 %v7356
        %v8926 = vunpack.c.l.b16 %v7357
        %v8927 = vunpack.c.l.b16 %v7358
        %v8928 = vunpack.c.l.b16 %v7359
        %v8929 = vunpack.c.l.b16 %v7360
        %v8930 = vunpack.c.l.b16 %v7361
        %v8931 = vunpack.c.l.b16 %v7362
        %v8932 = vunpack.c.l.b16 %v7363
        %v8933 = vunpack.c.l.b16 %v7364
        %v8934 = vunpack.c.l.b16 %v7365
        %v8935 = vunpack.c.l.b16 %v7366
        %v8936 = vunpack.c.l.b16 %v7367
        %v8937 = vunpack.c.l.b16 %v7368
        %v8938 = vunpack.c.l.b16 %v7369
        %v8939 = vunpack.c.l.b16 %v7370
        %v8940 = vunpack.c.l.b16 %v7371
        %v8941 = vunpack.c.l.b16 %v7372
        %v8942 = vunpack.c.l.b16 %v7373
        %v8943 = vunpack.c.l.b16 %v7374
        %v8944 = vunpack.c.l.b16 %v7375
        %v8945 = vunpack.c.l.b16 %v7376
        %v8946 = vunpack.c.l.b16 %v7377
        %v8947 = vunpack.c.l.b16 %v7378
        %v8948 = vunpack.c.l.b16 %v7379
        %v8949 = vunpack.c.l.b16 %v7380
        %v8950 = vunpack.c.l.b16 %v7381
        %v8951 = vunpack.c.l.b16 %v7382
        %v8952 = vunpack.c.l.b16 %v7383
        %v8953 = vunpack.c.l.b16 %v7384
        %v8954 = vunpack.c.l.b16 %v7385
        %v8955 = vunpack.c.l.b16 %v7386
        %v8956 = vunpack.c.l.b16 %v7387
        %v8957 = vunpack.c.l.b16 %v7388
        %v8958 = vunpack.c.l.b16 %v7389
        %v8959 = vunpack.c.l.b16 %v7390
        %v8960 = vunpack.c.l.b16 %v7391
        %v8961 = vunpack.c.l.b16 %v7392
        %v8962 = vunpack.c.l.b16 %v7393
        %v8963 = vunpack.c.l.b16 %v7394
        %v8964 = vunpack.c.l.b16 %v7395
        %v8965 = vunpack.c.l.b16 %v7396
        %v8966 = vunpack.c.l.b16 %v7397
        %v8967 = vunpack.c.l.b16 %v7398
        %v8968 = vunpack.c.l.b16 %v7399
        %v8969 = vunpack.c.l.b16 %v7400
        %v8970 = vunpack.c.l.b16 %v7401
        %v8971 = vunpack.c.l.b16 %v7402
        %v8972 = vunpack.c.l.b16 %v7403
        %v8973 = vunpack.c.l.b16 %v7404
        %v8974 = vunpack.c.l.b16 %v7405
        %v8975 = vunpack.c.l.b16 %v7406
        %v8976 = vunpack.c.l.b16 %v7407
        %v8977 = vunpack.c.l.b16 %v7408
        %v8978 = vunpack.c.l.b16 %v7409
        %v8979 = vunpack.c.l.b16 %v7410
        %v8980 = vunpack.c.l.b16 %v7411
        %v8981 = vunpack.c.l.b16 %v7412
        %v8982 = vunpack.c.l.b16 %v7413
        %v8983 = vunpack.c.l.b16 %v7414
        %v8984 = vunpack.c.l.b16 %v7415
        %v8985 = vunpack.c.l.b16 %v7416
        %v8986 = vunpack.c.l.b16 %v7417
        %v8987 = vunpack.c.l.b16 %v7418
        %v8988 = vunpack.c.l.b16 %v7419
        %v8989 = vunpack.c.l.b16 %v7420
        %v8990 = vunpack.c.l.b16 %v7421
        %v8991 = vunpack.c.l.b16 %v7422
        %v8992 = vunpack.c.l.b16 %v7423
        %v8993 = vunpack.c.l.b16 %v7424
        %v8994 = vunpack.c.l.b16 %v7425
        %v8995 = vunpack.c.l.b16 %v7426
        %v8996 = vunpack.c.l.b16 %v7427
        %v8997 = vunpack.c.l.b16 %v7428
        %v8998 = vunpack.c.l.b16 %v7429
        %v8999 = vunpack.c.l.b16 %v7430
        %v9000 = vunpack.c.l.b16 %v7431
        %v9001 = vunpack.c.l.b16 %v7432
        %v9002 = vunpack.c.l.b16 %v7433
        %v9003 = vunpack.c.l.b16 %v7434
        %v9004 = vunpack.c.l.b16 %v7435
        %v9005 = vunpack.c.l.b16 %v7436
        %v9006 = vunpack.c.l.b16 %v7437
        %v9007 = vunpack.c.l.b16 %v7438
        %v9008 = vunpack.c.l.b16 %v7439
        %v9009 = vunpack.c.l.b16 %v7440
        %v9010 = vunpack.c.l.b16 %v7441
        %v9011 = vunpack.c.l.b16 %v7442
        %v9012 = vunpack.c.l.b16 %v7443
        %v9013 = vunpack.c.l.b16 %v7444
        %v9014 = vunpack.c.l.b16 %v7445
        %v9015 = vunpack.c.l.b16 %v7446
        %v9016 = vunpack.c.l.b16 %v7447
        %v9017 = vunpack.c.l.b16 %v7448
        %v9018 = vunpack.c.l.b16 %v7449
        %v9019 = vunpack.c.l.b16 %v7450
        %v9020 = vunpack.c.l.b16 %v7451
        %v9021 = vunpack.c.l.b16 %v7452
        %v9022 = vunpack.c.l.b16 %v7453
        %v9023 = vunpack.c.l.b16 %v7454
        %v9024 = vunpack.c.l.b16 %v7455
        %v9025 = vunpack.c.l.b16 %v7456
        %v9026 = vunpack.c.l.b16 %v7457
        %v9027 = vunpack.c.l.b16 %v7458
        %v9028 = vpack.c.b16 %v8245, %v8244
        %v9029 = vpack.c.b16 %v8247, %v8246
        %v9030 = vpack.c.b16 %v8249, %v8248
        %v9031 = vpack.c.b16 %v8251, %v8250
        %v9032 = vpack.c.b16 %v8253, %v8252
        %v9033 = vpack.c.b16 %v8255, %v8254
        %v9034 = vpack.c.b16 %v8257, %v8256
        %v9035 = vpack.c.b16 %v8259, %v8258
        %v9036 = vpack.c.b16 %v8261, %v8260
        %v9037 = vpack.c.b16 %v8263, %v8262
        %v9038 = vpack.c.b16 %v8265, %v8264
        %v9039 = vpack.c.b16 %v8267, %v8266
        %v9040 = vpack.c.b16 %v8269, %v8268
        %v9041 = vpack.c.b16 %v8271, %v8270
        %v9042 = vpack.c.b16 %v8273, %v8272
        %v9043 = vpack.c.b16 %v8275, %v8274
        %v9044 = vpack.c.b16 %v8277, %v8276
        %v9045 = vpack.c.b16 %v8279, %v8278
        %v9046 = vpack.c.b16 %v8281, %v8280
        %v9047 = vpack.c.b16 %v8283, %v8282
        %v9048 = vpack.c.b16 %v8285, %v8284
        %v9049 = vpack.c.b16 %v8287, %v8286
        %v9050 = vpack.c.b16 %v8289, %v8288
        %v9051 = vpack.c.b16 %v8291, %v8290
        %v9052 = vpack.c.b16 %v8293, %v8292
        %v9053 = vpack.c.b16 %v8295, %v8294
        %v9054 = vpack.c.b16 %v8297, %v8296
        %v9055 = vpack.c.b16 %v8299, %v8298
        %v9056 = vpack.c.b16 %v8301, %v8300
        %v9057 = vpack.c.b16 %v8303, %v8302
        %v9058 = vpack.c.b16 %v8305, %v8304
        %v9059 = vpack.c.b16 %v8307, %v8306
        %v9060 = vpack.c.b16 %v8309, %v8308
        %v9061 = vpack.c.b16 %v8311, %v8310
        %v9062 = vpack.c.b16 %v8313, %v8312
        %v9063 = vpack.c.b16 %v8315, %v8314
        %v9064 = vpack.c.b16 %v8317, %v8316
        %v9065 = vpack.c.b16 %v8319, %v8318
        %v9066 = vpack.c.b16 %v8321, %v8320
        %v9067 = vpack.c.b16 %v8323, %v8322
        %v9068 = vpack.c.b16 %v8325, %v8324
        %v9069 = vpack.c.b16 %v8327, %v8326
        %v9070 = vpack.c.b16 %v8329, %v8328
        %v9071 = vpack.c.b16 %v8331, %v8330
        %v9072 = vpack.c.b16 %v8333, %v8332
        %v9073 = vpack.c.b16 %v8335, %v8334
        %v9074 = vpack.c.b16 %v8337, %v8336
        %v9075 = vpack.c.b16 %v8339, %v8338
        %v9076 = vpack.c.b16 %v8341, %v8340
        %v9077 = vpack.c.b16 %v8343, %v8342
        %v9078 = vpack.c.b16 %v8345, %v8344
        %v9079 = vpack.c.b16 %v8347, %v8346
        %v9080 = vpack.c.b16 %v8349, %v8348
        %v9081 = vpack.c.b16 %v8351, %v8350
        %v9082 = vpack.c.b16 %v8353, %v8352
        %v9083 = vpack.c.b16 %v8355, %v8354
        %v9084 = vpack.c.b16 %v8357, %v8356
        %v9085 = vpack.c.b16 %v8359, %v8358
        %v9086 = vpack.c.b16 %v8361, %v8360
        %v9087 = vpack.c.b16 %v8363, %v8362
        %v9088 = vpack.c.b16 %v8365, %v8364
        %v9089 = vpack.c.b16 %v8367, %v8366
        %v9090 = vpack.c.b16 %v8369, %v8368
        %v9091 = vpack.c.b16 %v8371, %v8370
        %v9092 = vpack.c.b16 %v8373, %v8372
        %v9093 = vpack.c.b16 %v8375, %v8374
        %v9094 = vpack.c.b16 %v8377, %v8376
        %v9095 = vpack.c.b16 %v8379, %v8378
        %v9096 = vpack.c.b16 %v8381, %v8380
        %v9097 = vpack.c.b16 %v8383, %v8382
        %v9098 = vpack.c.b16 %v8385, %v8384
        %v9099 = vpack.c.b16 %v8387, %v8386
        %v9100 = vpack.c.b16 %v8389, %v8388
        %v9101 = vpack.c.b16 %v8391, %v8390
        %v9102 = vpack.c.b16 %v8393, %v8392
        %v9103 = vpack.c.b16 %v8395, %v8394
        %v9104 = vpack.c.b16 %v8397, %v8396
        %v9105 = vpack.c.b16 %v8399, %v8398
        %v9106 = vpack.c.b16 %v8401, %v8400
        %v9107 = vpack.c.b16 %v8403, %v8402
        %v9108 = vpack.c.b16 %v8405, %v8404
        %v9109 = vpack.c.b16 %v8407, %v8406
        %v9110 = vpack.c.b16 %v8409, %v8408
        %v9111 = vpack.c.b16 %v8411, %v8410
        %v9112 = vpack.c.b16 %v8413, %v8412
        %v9113 = vpack.c.b16 %v8415, %v8414
        %v9114 = vpack.c.b16 %v8417, %v8416
        %v9115 = vpack.c.b16 %v8419, %v8418
        %v9116 = vpack.c.b16 %v8421, %v8420
        %v9117 = vpack.c.b16 %v8423, %v8422
        %v9118 = vpack.c.b16 %v8425, %v8424
        %v9119 = vpack.c.b16 %v8427, %v8426
        %v9120 = vpack.c.b16 %v8429, %v8428
        %v9121 = vpack.c.b16 %v8431, %v8430
        %v9122 = vpack.c.b16 %v8433, %v8432
        %v9123 = vpack.c.b16 %v8435, %v8434
        %v9124 = vpack.c.b16 %v8437, %v8436
        %v9125 = vpack.c.b16 %v8439, %v8438
        %v9126 = vpack.c.b16 %v8441, %v8440
        %v9127 = vpack.c.b16 %v8443, %v8442
        %v9128 = vpack.c.b16 %v8445, %v8444
        %v9129 = vpack.c.b16 %v8447, %v8446
        %v9130 = vpack.c.b16 %v8449, %v8448
        %v9131 = vpack.c.b16 %v8451, %v8450
        %v9132 = vpack.c.b16 %v8453, %v8452
        %v9133 = vpack.c.b16 %v8455, %v8454
        %v9134 = vpack.c.b16 %v8457, %v8456
        %v9135 = vpack.c.b16 %v8459, %v8458
        %v9136 = vpack.c.b16 %v8461, %v8460
        %v9137 = vpack.c.b16 %v8463, %v8462
        %v9138 = vpack.c.b16 %v8465, %v8464
        %v9139 = vpack.c.b16 %v8467, %v8466
        %v9140 = vpack.c.b16 %v8469, %v8468
        %v9141 = vpack.c.b16 %v8471, %v8470
        %v9142 = vpack.c.b16 %v8473, %v8472
        %v9143 = vpack.c.b16 %v8475, %v8474
        %v9144 = vpack.c.b16 %v8477, %v8476
        %v9145 = vpack.c.b16 %v8479, %v8478
        %v9146 = vpack.c.b16 %v8481, %v8480
        %v9147 = vpack.c.b16 %v8483, %v8482
        %v9148 = vpack.c.b16 %v8485, %v8484
        %v9149 = vpack.c.b16 %v8487, %v8486
        %v9150 = vpack.c.b16 %v8489, %v8488
        %v9151 = vpack.c.b16 %v8491, %v8490
        %v9152 = vpack.c.b16 %v8493, %v8492
        %v9153 = vpack.c.b16 %v8495, %v8494
        %v9154 = vpack.c.b16 %v8497, %v8496
        %v9155 = vpack.c.b16 %v8499, %v8498
        %v9156 = vpack.c.b16 %v8501, %v8500
        %v9157 = vpack.c.b16 %v8503, %v8502
        %v9158 = vpack.c.b16 %v8505, %v8504
        %v9159 = vpack.c.b16 %v8507, %v8506
        %v9160 = vpack.c.b16 %v8509, %v8508
        %v9161 = vpack.c.b16 %v8511, %v8510
        %v9162 = vpack.c.b16 %v8513, %v8512
        %v9163 = vpack.c.b16 %v8515, %v8514
        %v9164 = vpack.c.b16 %v8517, %v8516
        %v9165 = vpack.c.b16 %v8519, %v8518
        %v9166 = vpack.c.b16 %v8521, %v8520
        %v9167 = vpack.c.b16 %v8523, %v8522
        %v9168 = vpack.c.b16 %v8525, %v8524
        %v9169 = vpack.c.b16 %v8527, %v8526
        %v9170 = vpack.c.b16 %v8529, %v8528
        %v9171 = vpack.c.b16 %v8531, %v8530
        %v9172 = vpack.c.b16 %v8533, %v8532
        %v9173 = vpack.c.b16 %v8535, %v8534
        %v9174 = vpack.c.b16 %v8537, %v8536
        %v9175 = vpack.c.b16 %v8539, %v8538
        %v9176 = vpack.c.b16 %v8541, %v8540
        %v9177 = vpack.c.b16 %v8543, %v8542
        %v9178 = vpack.c.b16 %v8545, %v8544
        %v9179 = vpack.c.b16 %v8547, %v8546
        %v9180 = vpack.c.b16 %v8549, %v8548
        %v9181 = vpack.c.b16 %v8551, %v8550
        %v9182 = vpack.c.b16 %v8553, %v8552
        %v9183 = vpack.c.b16 %v8555, %v8554
        %v9184 = vpack.c.b16 %v8557, %v8556
        %v9185 = vpack.c.b16 %v8559, %v8558
        %v9186 = vpack.c.b16 %v8561, %v8560
        %v9187 = vpack.c.b16 %v8563, %v8562
        %v9188 = vpack.c.b16 %v8565, %v8564
        %v9189 = vpack.c.b16 %v8567, %v8566
        %v9190 = vpack.c.b16 %v8569, %v8568
        %v9191 = vpack.c.b16 %v8571, %v8570
        %v9192 = vpack.c.b16 %v8573, %v8572
        %v9193 = vpack.c.b16 %v8575, %v8574
        %v9194 = vpack.c.b16 %v8577, %v8576
        %v9195 = vpack.c.b16 %v8579, %v8578
        %v9196 = vpack.c.b16 %v8581, %v8580
        %v9197 = vpack.c.b16 %v8583, %v8582
        %v9198 = vpack.c.b16 %v8585, %v8584
        %v9199 = vpack.c.b16 %v8587, %v8586
        %v9200 = vpack.c.b16 %v8589, %v8588
        %v9201 = vpack.c.b16 %v8591, %v8590
        %v9202 = vpack.c.b16 %v8593, %v8592
        %v9203 = vpack.c.b16 %v8595, %v8594
        %v9204 = vpack.c.b16 %v8597, %v8596
        %v9205 = vpack.c.b16 %v8599, %v8598
        %v9206 = vpack.c.b16 %v8601, %v8600
        %v9207 = vpack.c.b16 %v8603, %v8602
        %v9208 = vpack.c.b16 %v8605, %v8604
        %v9209 = vpack.c.b16 %v8607, %v8606
        %v9210 = vpack.c.b16 %v8609, %v8608
        %v9211 = vpack.c.b16 %v8611, %v8610
        %v9212 = vpack.c.b16 %v8613, %v8612
        %v9213 = vpack.c.b16 %v8615, %v8614
        %v9214 = vpack.c.b16 %v8617, %v8616
        %v9215 = vpack.c.b16 %v8619, %v8618
        %v9216 = vpack.c.b16 %v8621, %v8620
        %v9217 = vpack.c.b16 %v8623, %v8622
        %v9218 = vpack.c.b16 %v8625, %v8624
        %v9219 = vpack.c.b16 %v8627, %v8626
        %v9220 = vpack.c.b16 %v8629, %v8628
        %v9221 = vpack.c.b16 %v8631, %v8630
        %v9222 = vpack.c.b16 %v8633, %v8632
        %v9223 = vpack.c.b16 %v8635, %v8634
        %v9224 = vpack.c.b16 %v8637, %v8636
        %v9225 = vpack.c.b16 %v8639, %v8638
        %v9226 = vpack.c.b16 %v8641, %v8640
        %v9227 = vpack.c.b16 %v8643, %v8642
        %v9228 = vpack.c.b16 %v8645, %v8644
        %v9229 = vpack.c.b16 %v8647, %v8646
        %v9230 = vpack.c.b16 %v8649, %v8648
        %v9231 = vpack.c.b16 %v8651, %v8650
        %v9232 = vpack.c.b16 %v8653, %v8652
        %v9233 = vpack.c.b16 %v8655, %v8654
        %v9234 = vpack.c.b16 %v8657, %v8656
        %v9235 = vpack.c.b16 %v8659, %v8658
        %v9236 = vpack.c.b16 %v8661, %v8660
        %v9237 = vpack.c.b16 %v8663, %v8662
        %v9238 = vpack.c.b16 %v8665, %v8664
        %v9239 = vpack.c.b16 %v8667, %v8666
        %v9240 = vpack.c.b16 %v8669, %v8668
        %v9241 = vpack.c.b16 %v8671, %v8670
        %v9242 = vpack.c.b16 %v8673, %v8672
        %v9243 = vpack.c.b16 %v8675, %v8674
        %v9244 = vpack.c.b16 %v8677, %v8676
        %v9245 = vpack.c.b16 %v8679, %v8678
        %v9246 = vpack.c.b16 %v8681, %v8680
        %v9247 = vpack.c.b16 %v8683, %v8682
        %v9248 = vpack.c.b16 %v8685, %v8684
        %v9249 = vpack.c.b16 %v8687, %v8686
        %v9250 = vpack.c.b16 %v8689, %v8688
        %v9251 = vpack.c.b16 %v8691, %v8690
        %v9252 = vpack.c.b16 %v8693, %v8692
        %v9253 = vpack.c.b16 %v8695, %v8694
        %v9254 = vpack.c.b16 %v8697, %v8696
        %v9255 = vpack.c.b16 %v8699, %v8698
        %v9256 = vpack.c.b16 %v8701, %v8700
        %v9257 = vpack.c.b16 %v8703, %v8702
        %v9258 = vpack.c.b16 %v8705, %v8704
        %v9259 = vpack.c.b16 %v8707, %v8706
        %v9260 = vpack.c.b16 %v8709, %v8708
        %v9261 = vpack.c.b16 %v8711, %v8710
        %v9262 = vpack.c.b16 %v8713, %v8712
        %v9263 = vpack.c.b16 %v8715, %v8714
        %v9264 = vpack.c.b16 %v8717, %v8716
        %v9265 = vpack.c.b16 %v8719, %v8718
        %v9266 = vpack.c.b16 %v8721, %v8720
        %v9267 = vpack.c.b16 %v8723, %v8722
        %v9268 = vpack.c.b16 %v8725, %v8724
        %v9269 = vpack.c.b16 %v8727, %v8726
        %v9270 = vpack.c.b16 %v8729, %v8728
        %v9271 = vpack.c.b16 %v8731, %v8730
        %v9272 = vpack.c.b16 %v8733, %v8732
        %v9273 = vpack.c.b16 %v8735, %v8734
        %v9274 = vpack.c.b16 %v8737, %v8736
        %v9275 = vpack.c.b16 %v8739, %v8738
        %v9276 = vpack.c.b16 %v8741, %v8740
        %v9277 = vpack.c.b16 %v8743, %v8742
        %v9278 = vpack.c.b16 %v8745, %v8744
        %v9279 = vpack.c.b16 %v8747, %v8746
        %v9280 = vpack.c.b16 %v8749, %v8748
        %v9281 = vpack.c.b16 %v8751, %v8750
        %v9282 = vpack.c.b16 %v8753, %v8752
        %v9283 = vpack.c.b16 %v8755, %v8754
        %v9284 = vpack.c.b16 %v8757, %v8756
        %v9285 = vpack.c.b16 %v8759, %v8758
        %v9286 = vpack.c.b16 %v8761, %v8760
        %v9287 = vpack.c.b16 %v8763, %v8762
        %v9288 = vpack.c.b16 %v8765, %v8764
        %v9289 = vpack.c.b16 %v8767, %v8766
        %v9290 = vpack.c.b16 %v8769, %v8768
        %v9291 = vpack.c.b16 %v8771, %v8770
        %v9292 = vpack.c.b16 %v8773, %v8772
        %v9293 = vpack.c.b16 %v8775, %v8774
        %v9294 = vpack.c.b16 %v8777, %v8776
        %v9295 = vpack.c.b16 %v8779, %v8778
        %v9296 = vpack.c.b16 %v8781, %v8780
        %v9297 = vpack.c.b16 %v8783, %v8782
        %v9298 = vpack.c.b16 %v8785, %v8784
        %v9299 = vpack.c.b16 %v8787, %v8786
        %v9300 = vpack.c.b16 %v8789, %v8788
        %v9301 = vpack.c.b16 %v8791, %v8790
        %v9302 = vpack.c.b16 %v8793, %v8792
        %v9303 = vpack.c.b16 %v8795, %v8794
        %v9304 = vpack.c.b16 %v8797, %v8796
        %v9305 = vpack.c.b16 %v8799, %v8798
        %v9306 = vpack.c.b16 %v8801, %v8800
        %v9307 = vpack.c.b16 %v8803, %v8802
        %v9308 = vpack.c.b16 %v8805, %v8804
        %v9309 = vpack.c.b16 %v8807, %v8806
        %v9310 = vpack.c.b16 %v8809, %v8808
        %v9311 = vpack.c.b16 %v8811, %v8810
        %v9312 = vpack.c.b16 %v8813, %v8812
        %v9313 = vpack.c.b16 %v8815, %v8814
        %v9314 = vpack.c.b16 %v8817, %v8816
        %v9315 = vpack.c.b16 %v8819, %v8818
        %v9316 = vpack.c.b16 %v8821, %v8820
        %v9317 = vpack.c.b16 %v8823, %v8822
        %v9318 = vpack.c.b16 %v8825, %v8824
        %v9319 = vpack.c.b16 %v8827, %v8826
        %v9320 = vpack.c.b16 %v8829, %v8828
        %v9321 = vpack.c.b16 %v8831, %v8830
        %v9322 = vpack.c.b16 %v8833, %v8832
        %v9323 = vpack.c.b16 %v8835, %v8834
        %v9324 = vpack.c.b16 %v8837, %v8836
        %v9325 = vpack.c.b16 %v8839, %v8838
        %v9326 = vpack.c.b16 %v8841, %v8840
        %v9327 = vpack.c.b16 %v8843, %v8842
        %v9328 = vpack.c.b16 %v8845, %v8844
        %v9329 = vpack.c.b16 %v8847, %v8846
        %v9330 = vpack.c.b16 %v8849, %v8848
        %v9331 = vpack.c.b16 %v8851, %v8850
        %v9332 = vpack.c.b16 %v8853, %v8852
        %v9333 = vpack.c.b16 %v8855, %v8854
        %v9334 = vpack.c.b16 %v8857, %v8856
        %v9335 = vpack.c.b16 %v8859, %v8858
        %v9336 = vpack.c.b16 %v8861, %v8860
        %v9337 = vpack.c.b16 %v8863, %v8862
        %v9338 = vpack.c.b16 %v8865, %v8864
        %v9339 = vpack.c.b16 %v8867, %v8866
        %v9340 = vpack.c.b16 %v8869, %v8868
        %v9341 = vpack.c.b16 %v8871, %v8870
        %v9342 = vpack.c.b16 %v8873, %v8872
        %v9343 = vpack.c.b16 %v8875, %v8874
        %v9344 = vpack.c.b16 %v8877, %v8876
        %v9345 = vpack.c.b16 %v8879, %v8878
        %v9346 = vpack.c.b16 %v8881, %v8880
        %v9347 = vpack.c.b16 %v8883, %v8882
        %v9348 = vpack.c.b16 %v8885, %v8884
        %v9349 = vpack.c.b16 %v8887, %v8886
        %v9350 = vpack.c.b16 %v8889, %v8888
        %v9351 = vpack.c.b16 %v8891, %v8890
        %v9352 = vpack.c.b16 %v8893, %v8892
        %v9353 = vpack.c.b16 %v8895, %v8894
        %v9354 = vpack.c.b16 %v8897, %v8896
        %v9355 = vpack.c.b16 %v8899, %v8898
        %v9356 = vpack.c.b16 %v8901, %v8900
        %v9357 = vpack.c.b16 %v8903, %v8902
        %v9358 = vpack.c.b16 %v8905, %v8904
        %v9359 = vpack.c.b16 %v8907, %v8906
        %v9360 = vpack.c.b16 %v8909, %v8908
        %v9361 = vpack.c.b16 %v8911, %v8910
        %v9362 = vpack.c.b16 %v8913, %v8912
        %v9363 = vpack.c.b16 %v8915, %v8914
        %v9364 = vpack.c.b16 %v8917, %v8916
        %v9365 = vpack.c.b16 %v8919, %v8918
        %v9366 = vpack.c.b16 %v8921, %v8920
        %v9367 = vpack.c.b16 %v8923, %v8922
        %v9368 = vpack.c.b16 %v8925, %v8924
        %v9369 = vpack.c.b16 %v8927, %v8926
        %v9370 = vpack.c.b16 %v8929, %v8928
        %v9371 = vpack.c.b16 %v8931, %v8930
        %v9372 = vpack.c.b16 %v8933, %v8932
        %v9373 = vpack.c.b16 %v8935, %v8934
        %v9374 = vpack.c.b16 %v8937, %v8936
        %v9375 = vpack.c.b16 %v8939, %v8938
        %v9376 = vpack.c.b16 %v8941, %v8940
        %v9377 = vpack.c.b16 %v8943, %v8942
        %v9378 = vpack.c.b16 %v8945, %v8944
        %v9379 = vpack.c.b16 %v8947, %v8946
        %v9380 = vpack.c.b16 %v8949, %v8948
        %v9381 = vpack.c.b16 %v8951, %v8950
        %v9382 = vpack.c.b16 %v8953, %v8952
        %v9383 = vpack.c.b16 %v8955, %v8954
        %v9384 = vpack.c.b16 %v8957, %v8956
        %v9385 = vpack.c.b16 %v8959, %v8958
        %v9386 = vpack.c.b16 %v8961, %v8960
        %v9387 = vpack.c.b16 %v8963, %v8962
        %v9388 = vpack.c.b16 %v8965, %v8964
        %v9389 = vpack.c.b16 %v8967, %v8966
        %v9390 = vpack.c.b16 %v8969, %v8968
        %v9391 = vpack.c.b16 %v8971, %v8970
        %v9392 = vpack.c.b16 %v8973, %v8972
        %v9393 = vpack.c.b16 %v8975, %v8974
        %v9394 = vpack.c.b16 %v8977, %v8976
        %v9395 = vpack.c.b16 %v8979, %v8978
        %v9396 = vpack.c.b16 %v8981, %v8980
        %v9397 = vpack.c.b16 %v8983, %v8982
        %v9398 = vpack.c.b16 %v8985, %v8984
        %v9399 = vpack.c.b16 %v8987, %v8986
        %v9400 = vpack.c.b16 %v8989, %v8988
        %v9401 = vpack.c.b16 %v8991, %v8990
        %v9402 = vpack.c.b16 %v8993, %v8992
        %v9403 = vpack.c.b16 %v8995, %v8994
        %v9404 = vpack.c.b16 %v8997, %v8996
        %v9405 = vpack.c.b16 %v8999, %v8998
        %v9406 = vpack.c.b16 %v9001, %v9000
        %v9407 = vpack.c.b16 %v9003, %v9002
        %v9408 = vpack.c.b16 %v9005, %v9004
        %v9409 = vpack.c.b16 %v9007, %v9006
        %v9410 = vpack.c.b16 %v9009, %v9008
        %v9411 = vpack.c.b16 %v9011, %v9010
        %v9412 = vpack.c.b16 %v9013, %v9012
        %v9413 = vpack.c.b16 %v9015, %v9014
        %v9414 = vpack.c.b16 %v9017, %v9016
        %v9415 = vpack.c.b16 %v9019, %v9018
        %v9416 = vpack.c.b16 %v9021, %v9020
        %v9417 = vpack.c.b16 %v9023, %v9022
        %v9418 = vpack.c.b16 %v9025, %v9024
        %v9419 = vpack.c.b16 %v9027, %v9026
        %9812 = vmatprep.subr.bf16.mxu0 0
        %9813 = vmatpush1.bf16.msra.mxu0 %v9035
        %9814 = vmatprep.subr.bf16.mxu0 0
        %9815 = vmatpush1.bf16.msra.mxu0 %v9034
        %9816 = vmatprep.subr.bf16.mxu0 0
        %9817 = vmatpush1.bf16.msra.mxu0 %v9033
        %9818 = vmatprep.subr.bf16.mxu0 0
        %9819 = vmatpush1.bf16.msra.mxu0 %v9032
        %9820 = vmatprep.subr.bf16.mxu0 0
        %9821 = vmatpush1.bf16.msra.mxu0 %v9031
        %9822 = vmatprep.subr.bf16.mxu0 0
        %9823 = vmatpush1.bf16.msra.mxu0 %v9030
        %9824 = vmatprep.subr.bf16.mxu0 0
        %9825 = vmatpush1.bf16.msra.mxu0 %v9029
        %9826 = vmatprep.subr.bf16.mxu0 0
        %9827 = vmatpush1.bf16.msra.mxu0 %v9028
        %9828 = vmatprep.subr.bf16.mxu0 0
        %9829 = vmatpush2.bf16.msra.mxu0 %v9043
        %9830 = vmatprep.subr.bf16.mxu0 0
        %9831 = vmatpush2.bf16.msra.mxu0 %v9042
        %9832 = vmatprep.subr.bf16.mxu0 0
        %9833 = vmatpush2.bf16.msra.mxu0 %v9041
        %9834 = vmatprep.subr.bf16.mxu0 0
        %9835 = vmatpush2.bf16.msra.mxu0 %v9040
        %9836 = vmatprep.subr.bf16.mxu0 0
        %9837 = vmatpush2.bf16.msra.mxu0 %v9039
        %9838 = vmatprep.subr.bf16.mxu0 0
        %9839 = vmatpush2.bf16.msra.mxu0 %v9038
        %9840 = vmatprep.subr.bf16.mxu0 0
        %9841 = vmatpush2.bf16.msra.mxu0 %v9037
        %9842 = vmatprep.subr.bf16.mxu0 0
        %9843 = vmatpush2.bf16.msra.mxu0 %v9036
        %9844 = vmatprep.mubr.bf16.mxu0 %v6627
        %9845 = vmatmul.mubr.bf16.gmra.mxu0 %v6626
        %v9846 = vpop.f32.mrf.mxu0
        %v9847 = vadd.f32 %v7459, %v9846
        %v9848 = vpop.f32.mrf.mxu0
        %v9849 = vpop.f32.mrf.mxu0
        %v9850 = vpop.f32.mrf.mxu0
        %9851 = vdwg.mxu0
        %9852 = vmatprep.subr.bf16.mxu0 0
        %9853 = vmatpush1.bf16.msra.mxu0 %v9051
        %9854 = vmatprep.subr.bf16.mxu0 0
        %9855 = vmatpush1.bf16.msra.mxu0 %v9050
        %9856 = vmatprep.subr.bf16.mxu0 0
        %9857 = vmatpush1.bf16.msra.mxu0 %v9049
        %9858 = vmatprep.subr.bf16.mxu0 0
        %9859 = vmatpush1.bf16.msra.mxu0 %v9048
        %9860 = vmatprep.subr.bf16.mxu0 0
        %9861 = vmatpush1.bf16.msra.mxu0 %v9047
        %9862 = vmatprep.subr.bf16.mxu0 0
        %9863 = vmatpush1.bf16.msra.mxu0 %v9046
        %9864 = vmatprep.subr.bf16.mxu0 0
        %9865 = vmatpush1.bf16.msra.mxu0 %v9045
        %9866 = vmatprep.subr.bf16.mxu0 0
        %9867 = vmatpush1.bf16.msra.mxu0 %v9044
        %9868 = vmatprep.subr.bf16.mxu0 0
        %9869 = vmatpush2.bf16.msra.mxu0 %v9059
        %9870 = vmatprep.subr.bf16.mxu0 0
        %9871 = vmatpush2.bf16.msra.mxu0 %v9058
        %9872 = vmatprep.subr.bf16.mxu0 0
        %9873 = vmatpush2.bf16.msra.mxu0 %v9057
        %9874 = vmatprep.subr.bf16.mxu0 0
        %9875 = vmatpush2.bf16.msra.mxu0 %v9056
        %9876 = vmatprep.subr.bf16.mxu0 0
        %9877 = vmatpush2.bf16.msra.mxu0 %v9055
        %9878 = vmatprep.subr.bf16.mxu0 0
        %9879 = vmatpush2.bf16.msra.mxu0 %v9054
        %9880 = vmatprep.subr.bf16.mxu0 0
        %9881 = vmatpush2.bf16.msra.mxu0 %v9053
        %9882 = vmatprep.subr.bf16.mxu0 0
        %9883 = vmatpush2.bf16.msra.mxu0 %v9052
        %9884 = vmatprep.mubr.bf16.mxu0 %v6629
        %9885 = vmatmul.mubr.bf16.gmra.mxu0 %v6628
        %v9886 = vpop.f32.mrf.mxu0
        %v9887 = vadd.f32 %v9847, %v9886
        %v9888 = vpop.f32.mrf.mxu0
        %v9889 = vpop.f32.mrf.mxu0
        %v9890 = vpop.f32.mrf.mxu0
        %9891 = vdwg.mxu0
        %9892 = vmatprep.subr.bf16.mxu0 0
        %9893 = vmatpush1.bf16.msra.mxu0 %v9067
        %9894 = vmatprep.subr.bf16.mxu0 0
        %9895 = vmatpush1.bf16.msra.mxu0 %v9066
        %9896 = vmatprep.subr.bf16.mxu0 0
        %9897 = vmatpush1.bf16.msra.mxu0 %v9065
        %9898 = vmatprep.subr.bf16.mxu0 0
        %9899 = vmatpush1.bf16.msra.mxu0 %v9064
        %9900 = vmatprep.subr.bf16.mxu0 0
        %9901 = vmatpush1.bf16.msra.mxu0 %v9063
        %9902 = vmatprep.subr.bf16.mxu0 0
        %9903 = vmatpush1.bf16.msra.mxu0 %v9062
        %9904 = vmatprep.subr.bf16.mxu0 0
        %9905 = vmatpush1.bf16.msra.mxu0 %v9061
        %9906 = vmatprep.subr.bf16.mxu0 0
        %9907 = vmatpush1.bf16.msra.mxu0 %v9060
        %9908 = vmatprep.subr.bf16.mxu0 0
        %9909 = vmatpush2.bf16.msra.mxu0 %v9075
        %9910 = vmatprep.subr.bf16.mxu0 0
        %9911 = vmatpush2.bf16.msra.mxu0 %v9074
        %9912 = vmatprep.subr.bf16.mxu0 0
        %9913 = vmatpush2.bf16.msra.mxu0 %v9073
        %9914 = vmatprep.subr.bf16.mxu0 0
        %9915 = vmatpush2.bf16.msra.mxu0 %v9072
        %9916 = vmatprep.subr.bf16.mxu0 0
        %9917 = vmatpush2.bf16.msra.mxu0 %v9071
        %9918 = vmatprep.subr.bf16.mxu0 0
        %9919 = vmatpush2.bf16.msra.mxu0 %v9070
        %9920 = vmatprep.subr.bf16.mxu0 0
        %9921 = vmatpush2.bf16.msra.mxu0 %v9069
        %9922 = vmatprep.subr.bf16.mxu0 0
        %9923 = vmatpush2.bf16.msra.mxu0 %v9068
        %9924 = vmatprep.mubr.bf16.mxu0 %v6631
        %9925 = vmatmul.mubr.bf16.gmra.mxu0 %v6630
        %v9926 = vpop.f32.mrf.mxu0
        %v9927 = vadd.f32 %v9887, %v9926
        %v9928 = vpop.f32.mrf.mxu0
        %v9929 = vpop.f32.mrf.mxu0
        %v9930 = vpop.f32.mrf.mxu0
        %9931 = vdwg.mxu0
        %9932 = vmatprep.subr.bf16.mxu0 0
        %9933 = vmatpush1.bf16.msra.mxu0 %v9083
        %9934 = vmatprep.subr.bf16.mxu0 0
        %9935 = vmatpush1.bf16.msra.mxu0 %v9082
        %9936 = vmatprep.subr.bf16.mxu0 0
        %9937 = vmatpush1.bf16.msra.mxu0 %v9081
        %9938 = vmatprep.subr.bf16.mxu0 0
        %9939 = vmatpush1.bf16.msra.mxu0 %v9080
        %9940 = vmatprep.subr.bf16.mxu0 0
        %9941 = vmatpush1.bf16.msra.mxu0 %v9079
        %9942 = vmatprep.subr.bf16.mxu0 0
        %9943 = vmatpush1.bf16.msra.mxu0 %v9078
        %9944 = vmatprep.subr.bf16.mxu0 0
        %9945 = vmatpush1.bf16.msra.mxu0 %v9077
        %9946 = vmatprep.subr.bf16.mxu0 0
        %9947 = vmatpush1.bf16.msra.mxu0 %v9076
        %9948 = vmatprep.subr.bf16.mxu0 0
        %9949 = vmatpush2.bf16.msra.mxu0 %v9091
        %9950 = vmatprep.subr.bf16.mxu0 0
        %9951 = vmatpush2.bf16.msra.mxu0 %v9090
        %9952 = vmatprep.subr.bf16.mxu0 0
        %9953 = vmatpush2.bf16.msra.mxu0 %v9089
        %9954 = vmatprep.subr.bf16.mxu0 0
        %9955 = vmatpush2.bf16.msra.mxu0 %v9088
        %9956 = vmatprep.subr.bf16.mxu0 0
        %9957 = vmatpush2.bf16.msra.mxu0 %v9087
        %9958 = vmatprep.subr.bf16.mxu0 0
        %9959 = vmatpush2.bf16.msra.mxu0 %v9086
        %9960 = vmatprep.subr.bf16.mxu0 0
        %9961 = vmatpush2.bf16.msra.mxu0 %v9085
        %9962 = vmatprep.subr.bf16.mxu0 0
        %9963 = vmatpush2.bf16.msra.mxu0 %v9084
        %9964 = vmatprep.mubr.bf16.mxu0 %v6633
        %9965 = vmatmul.mubr.bf16.gmra.mxu0 %v6632
        %v9966 = vpop.f32.mrf.mxu0
        %v9967 = vadd.f32 %v9927, %v9966
        %v9968 = vpop.f32.mrf.mxu0
        %v9969 = vpop.f32.mrf.mxu0
        %v9970 = vpop.f32.mrf.mxu0
        %9971 = vdwg.mxu0
        %9972 = vmatprep.subr.bf16.mxu0 0
        %9973 = vmatpush1.bf16.msra.mxu0 %v9099
        %9974 = vmatprep.subr.bf16.mxu0 0
        %9975 = vmatpush1.bf16.msra.mxu0 %v9098
        %9976 = vmatprep.subr.bf16.mxu0 0
        %9977 = vmatpush1.bf16.msra.mxu0 %v9097
        %9978 = vmatprep.subr.bf16.mxu0 0
        %9979 = vmatpush1.bf16.msra.mxu0 %v9096
        %9980 = vmatprep.subr.bf16.mxu0 0
        %9981 = vmatpush1.bf16.msra.mxu0 %v9095
        %9982 = vmatprep.subr.bf16.mxu0 0
        %9983 = vmatpush1.bf16.msra.mxu0 %v9094
        %9984 = vmatprep.subr.bf16.mxu0 0
        %9985 = vmatpush1.bf16.msra.mxu0 %v9093
        %9986 = vmatprep.subr.bf16.mxu0 0
        %9987 = vmatpush1.bf16.msra.mxu0 %v9092
        %9988 = vmatprep.subr.bf16.mxu0 0
        %9989 = vmatpush2.bf16.msra.mxu0 %v9107
        %9990 = vmatprep.subr.bf16.mxu0 0
        %9991 = vmatpush2.bf16.msra.mxu0 %v9106
        %9992 = vmatprep.subr.bf16.mxu0 0
        %9993 = vmatpush2.bf16.msra.mxu0 %v9105
        %9994 = vmatprep.subr.bf16.mxu0 0
        %9995 = vmatpush2.bf16.msra.mxu0 %v9104
        %9996 = vmatprep.subr.bf16.mxu0 0
        %9997 = vmatpush2.bf16.msra.mxu0 %v9103
        %9998 = vmatprep.subr.bf16.mxu0 0
        %9999 = vmatpush2.bf16.msra.mxu0 %v9102
        %10000 = vmatprep.subr.bf16.mxu0 0
        %10001 = vmatpush2.bf16.msra.mxu0 %v9101
        %10002 = vmatprep.subr.bf16.mxu0 0
        %10003 = vmatpush2.bf16.msra.mxu0 %v9100
        %10004 = vmatprep.mubr.bf16.mxu0 %v6635
        %10005 = vmatmul.mubr.bf16.gmra.mxu0 %v6634
        %v10006 = vpop.f32.mrf.mxu0
        %v10007 = vadd.f32 %v9967, %v10006
        %v10008 = vpop.f32.mrf.mxu0
        %v10009 = vpop.f32.mrf.mxu0
        %v10010 = vpop.f32.mrf.mxu0
        %10011 = vdwg.mxu0
        %10012 = vmatprep.subr.bf16.mxu0 0
        %10013 = vmatpush1.bf16.msra.mxu0 %v9115
        %10014 = vmatprep.subr.bf16.mxu0 0
        %10015 = vmatpush1.bf16.msra.mxu0 %v9114
        %10016 = vmatprep.subr.bf16.mxu0 0
        %10017 = vmatpush1.bf16.msra.mxu0 %v9113
        %10018 = vmatprep.subr.bf16.mxu0 0
        %10019 = vmatpush1.bf16.msra.mxu0 %v9112
        %10020 = vmatprep.subr.bf16.mxu0 0
        %10021 = vmatpush1.bf16.msra.mxu0 %v9111
        %10022 = vmatprep.subr.bf16.mxu0 0
        %10023 = vmatpush1.bf16.msra.mxu0 %v9110
        %10024 = vmatprep.subr.bf16.mxu0 0
        %10025 = vmatpush1.bf16.msra.mxu0 %v9109
        %10026 = vmatprep.subr.bf16.mxu0 0
        %10027 = vmatpush1.bf16.msra.mxu0 %v9108
        %10028 = vmatprep.subr.bf16.mxu0 0
        %10029 = vmatpush2.bf16.msra.mxu0 %v9123
        %10030 = vmatprep.subr.bf16.mxu0 0
        %10031 = vmatpush2.bf16.msra.mxu0 %v9122
        %10032 = vmatprep.subr.bf16.mxu0 0
        %10033 = vmatpush2.bf16.msra.mxu0 %v9121
        %10034 = vmatprep.subr.bf16.mxu0 0
        %10035 = vmatpush2.bf16.msra.mxu0 %v9120
        %10036 = vmatprep.subr.bf16.mxu0 0
        %10037 = vmatpush2.bf16.msra.mxu0 %v9119
        %10038 = vmatprep.subr.bf16.mxu0 0
        %10039 = vmatpush2.bf16.msra.mxu0 %v9118
        %10040 = vmatprep.subr.bf16.mxu0 0
        %10041 = vmatpush2.bf16.msra.mxu0 %v9117
        %10042 = vmatprep.subr.bf16.mxu0 0
        %10043 = vmatpush2.bf16.msra.mxu0 %v9116
        %10044 = vmatprep.mubr.bf16.mxu0 %v6637
        %10045 = vmatmul.mubr.bf16.gmra.mxu0 %v6636
        %v10046 = vpop.f32.mrf.mxu0
        %v10047 = vadd.f32 %v10007, %v10046
        %v10048 = vpop.f32.mrf.mxu0
        %v10049 = vpop.f32.mrf.mxu0
        %v10050 = vpop.f32.mrf.mxu0
        %10051 = vdwg.mxu0
        %10052 = vmatprep.subr.bf16.mxu0 0
        %10053 = vmatpush1.bf16.msra.mxu0 %v9131
        %10054 = vmatprep.subr.bf16.mxu0 0
        %10055 = vmatpush1.bf16.msra.mxu0 %v9130
        %10056 = vmatprep.subr.bf16.mxu0 0
        %10057 = vmatpush1.bf16.msra.mxu0 %v9129
        %10058 = vmatprep.subr.bf16.mxu0 0
        %10059 = vmatpush1.bf16.msra.mxu0 %v9128
        %10060 = vmatprep.subr.bf16.mxu0 0
        %10061 = vmatpush1.bf16.msra.mxu0 %v9127
        %10062 = vmatprep.subr.bf16.mxu0 0
        %10063 = vmatpush1.bf16.msra.mxu0 %v9126
        %10064 = vmatprep.subr.bf16.mxu0 0
        %10065 = vmatpush1.bf16.msra.mxu0 %v9125
        %10066 = vmatprep.subr.bf16.mxu0 0
        %10067 = vmatpush1.bf16.msra.mxu0 %v9124
        %10068 = vmatprep.subr.bf16.mxu0 0
        %10069 = vmatpush2.bf16.msra.mxu0 %v9139
        %10070 = vmatprep.subr.bf16.mxu0 0
        %10071 = vmatpush2.bf16.msra.mxu0 %v9138
        %10072 = vmatprep.subr.bf16.mxu0 0
        %10073 = vmatpush2.bf16.msra.mxu0 %v9137
        %10074 = vmatprep.subr.bf16.mxu0 0
        %10075 = vmatpush2.bf16.msra.mxu0 %v9136
        %10076 = vmatprep.subr.bf16.mxu0 0
        %10077 = vmatpush2.bf16.msra.mxu0 %v9135
        %10078 = vmatprep.subr.bf16.mxu0 0
        %10079 = vmatpush2.bf16.msra.mxu0 %v9134
        %10080 = vmatprep.subr.bf16.mxu0 0
        %10081 = vmatpush2.bf16.msra.mxu0 %v9133
        %10082 = vmatprep.subr.bf16.mxu0 0
        %10083 = vmatpush2.bf16.msra.mxu0 %v9132
        %10084 = vmatprep.mubr.bf16.mxu0 %v6639
        %10085 = vmatmul.mubr.bf16.gmra.mxu0 %v6638
        %v10086 = vpop.f32.mrf.mxu0
        %v10087 = vadd.f32 %v10047, %v10086
        %v10088 = vpop.f32.mrf.mxu0
        %v10089 = vpop.f32.mrf.mxu0
        %v10090 = vpop.f32.mrf.mxu0
        %10091 = vdwg.mxu0
        %10092 = vmatprep.subr.bf16.mxu0 0
        %10093 = vmatpush1.bf16.msra.mxu0 %v9147
        %10094 = vmatprep.subr.bf16.mxu0 0
        %10095 = vmatpush1.bf16.msra.mxu0 %v9146
        %10096 = vmatprep.subr.bf16.mxu0 0
        %10097 = vmatpush1.bf16.msra.mxu0 %v9145
        %10098 = vmatprep.subr.bf16.mxu0 0
        %10099 = vmatpush1.bf16.msra.mxu0 %v9144
        %10100 = vmatprep.subr.bf16.mxu0 0
        %10101 = vmatpush1.bf16.msra.mxu0 %v9143
        %10102 = vmatprep.subr.bf16.mxu0 0
        %10103 = vmatpush1.bf16.msra.mxu0 %v9142
        %10104 = vmatprep.subr.bf16.mxu0 0
        %10105 = vmatpush1.bf16.msra.mxu0 %v9141
        %10106 = vmatprep.subr.bf16.mxu0 0
        %10107 = vmatpush1.bf16.msra.mxu0 %v9140
        %10108 = vmatprep.subr.bf16.mxu0 0
        %10109 = vmatpush2.bf16.msra.mxu0 %v9155
        %10110 = vmatprep.subr.bf16.mxu0 0
        %10111 = vmatpush2.bf16.msra.mxu0 %v9154
        %10112 = vmatprep.subr.bf16.mxu0 0
        %10113 = vmatpush2.bf16.msra.mxu0 %v9153
        %10114 = vmatprep.subr.bf16.mxu0 0
        %10115 = vmatpush2.bf16.msra.mxu0 %v9152
        %10116 = vmatprep.subr.bf16.mxu0 0
        %10117 = vmatpush2.bf16.msra.mxu0 %v9151
        %10118 = vmatprep.subr.bf16.mxu0 0
        %10119 = vmatpush2.bf16.msra.mxu0 %v9150
        %10120 = vmatprep.subr.bf16.mxu0 0
        %10121 = vmatpush2.bf16.msra.mxu0 %v9149
        %10122 = vmatprep.subr.bf16.mxu0 0
        %10123 = vmatpush2.bf16.msra.mxu0 %v9148
        %10124 = vmatprep.mubr.bf16.mxu0 %v6641
        %10125 = vmatmul.mubr.bf16.gmra.mxu0 %v6640
        %v10126 = vpop.f32.mrf.mxu0
        %v10127 = vadd.f32 %v10087, %v10126
        %v10128 = vpop.f32.mrf.mxu0
        %v10129 = vpop.f32.mrf.mxu0
        %v10130 = vpop.f32.mrf.mxu0
        %10131 = vdwg.mxu0
        %10132 = vmatprep.subr.bf16.mxu0 0
        %10133 = vmatpush1.bf16.msra.mxu0 %v9163
        %10134 = vmatprep.subr.bf16.mxu0 0
        %10135 = vmatpush1.bf16.msra.mxu0 %v9162
        %10136 = vmatprep.subr.bf16.mxu0 0
        %10137 = vmatpush1.bf16.msra.mxu0 %v9161
        %10138 = vmatprep.subr.bf16.mxu0 0
        %10139 = vmatpush1.bf16.msra.mxu0 %v9160
        %10140 = vmatprep.subr.bf16.mxu0 0
        %10141 = vmatpush1.bf16.msra.mxu0 %v9159
        %10142 = vmatprep.subr.bf16.mxu0 0
        %10143 = vmatpush1.bf16.msra.mxu0 %v9158
        %10144 = vmatprep.subr.bf16.mxu0 0
        %10145 = vmatpush1.bf16.msra.mxu0 %v9157
        %10146 = vmatprep.subr.bf16.mxu0 0
        %10147 = vmatpush1.bf16.msra.mxu0 %v9156
        %10148 = vmatprep.subr.bf16.mxu0 0
        %10149 = vmatpush2.bf16.msra.mxu0 %v9171
        %10150 = vmatprep.subr.bf16.mxu0 0
        %10151 = vmatpush2.bf16.msra.mxu0 %v9170
        %10152 = vmatprep.subr.bf16.mxu0 0
        %10153 = vmatpush2.bf16.msra.mxu0 %v9169
        %10154 = vmatprep.subr.bf16.mxu0 0
        %10155 = vmatpush2.bf16.msra.mxu0 %v9168
        %10156 = vmatprep.subr.bf16.mxu0 0
        %10157 = vmatpush2.bf16.msra.mxu0 %v9167
        %10158 = vmatprep.subr.bf16.mxu0 0
        %10159 = vmatpush2.bf16.msra.mxu0 %v9166
        %10160 = vmatprep.subr.bf16.mxu0 0
        %10161 = vmatpush2.bf16.msra.mxu0 %v9165
        %10162 = vmatprep.subr.bf16.mxu0 0
        %10163 = vmatpush2.bf16.msra.mxu0 %v9164
        %10164 = vmatprep.mubr.bf16.mxu0 %v6643
        %10165 = vmatmul.mubr.bf16.gmra.mxu0 %v6642
        %v10166 = vpop.f32.mrf.mxu0
        %v10167 = vadd.f32 %v10127, %v10166
        %v10168 = vpop.f32.mrf.mxu0
        %v10169 = vpop.f32.mrf.mxu0
        %v10170 = vpop.f32.mrf.mxu0
        %10171 = vdwg.mxu0
        %10172 = vmatprep.subr.bf16.mxu0 0
        %10173 = vmatpush1.bf16.msra.mxu0 %v9179
        %10174 = vmatprep.subr.bf16.mxu0 0
        %10175 = vmatpush1.bf16.msra.mxu0 %v9178
        %10176 = vmatprep.subr.bf16.mxu0 0
        %10177 = vmatpush1.bf16.msra.mxu0 %v9177
        %10178 = vmatprep.subr.bf16.mxu0 0
        %10179 = vmatpush1.bf16.msra.mxu0 %v9176
        %10180 = vmatprep.subr.bf16.mxu0 0
        %10181 = vmatpush1.bf16.msra.mxu0 %v9175
        %10182 = vmatprep.subr.bf16.mxu0 0
        %10183 = vmatpush1.bf16.msra.mxu0 %v9174
        %10184 = vmatprep.subr.bf16.mxu0 0
        %10185 = vmatpush1.bf16.msra.mxu0 %v9173
        %10186 = vmatprep.subr.bf16.mxu0 0
        %10187 = vmatpush1.bf16.msra.mxu0 %v9172
        %10188 = vmatprep.subr.bf16.mxu0 0
        %10189 = vmatpush2.bf16.msra.mxu0 %v9187
        %10190 = vmatprep.subr.bf16.mxu0 0
        %10191 = vmatpush2.bf16.msra.mxu0 %v9186
        %10192 = vmatprep.subr.bf16.mxu0 0
        %10193 = vmatpush2.bf16.msra.mxu0 %v9185
        %10194 = vmatprep.subr.bf16.mxu0 0
        %10195 = vmatpush2.bf16.msra.mxu0 %v9184
        %10196 = vmatprep.subr.bf16.mxu0 0
        %10197 = vmatpush2.bf16.msra.mxu0 %v9183
        %10198 = vmatprep.subr.bf16.mxu0 0
        %10199 = vmatpush2.bf16.msra.mxu0 %v9182
        %10200 = vmatprep.subr.bf16.mxu0 0
        %10201 = vmatpush2.bf16.msra.mxu0 %v9181
        %10202 = vmatprep.subr.bf16.mxu0 0
        %10203 = vmatpush2.bf16.msra.mxu0 %v9180
        %10204 = vmatprep.mubr.bf16.mxu0 %v6645
        %10205 = vmatmul.mubr.bf16.gmra.mxu0 %v6644
        %v10206 = vpop.f32.mrf.mxu0
        %v10207 = vadd.f32 %v10167, %v10206
        %v10208 = vpop.f32.mrf.mxu0
        %v10209 = vpop.f32.mrf.mxu0
        %v10210 = vpop.f32.mrf.mxu0
        %10211 = vdwg.mxu0
        %10212 = vmatprep.subr.bf16.mxu0 0
        %10213 = vmatpush1.bf16.msra.mxu0 %v9195
        %10214 = vmatprep.subr.bf16.mxu0 0
        %10215 = vmatpush1.bf16.msra.mxu0 %v9194
        %10216 = vmatprep.subr.bf16.mxu0 0
        %10217 = vmatpush1.bf16.msra.mxu0 %v9193
        %10218 = vmatprep.subr.bf16.mxu0 0
        %10219 = vmatpush1.bf16.msra.mxu0 %v9192
        %10220 = vmatprep.subr.bf16.mxu0 0
        %10221 = vmatpush1.bf16.msra.mxu0 %v9191
        %10222 = vmatprep.subr.bf16.mxu0 0
        %10223 = vmatpush1.bf16.msra.mxu0 %v9190
        %10224 = vmatprep.subr.bf16.mxu0 0
        %10225 = vmatpush1.bf16.msra.mxu0 %v9189
        %10226 = vmatprep.subr.bf16.mxu0 0
        %10227 = vmatpush1.bf16.msra.mxu0 %v9188
        %10228 = vmatprep.subr.bf16.mxu0 0
        %10229 = vmatpush2.bf16.msra.mxu0 %v9203
        %10230 = vmatprep.subr.bf16.mxu0 0
        %10231 = vmatpush2.bf16.msra.mxu0 %v9202
        %10232 = vmatprep.subr.bf16.mxu0 0
        %10233 = vmatpush2.bf16.msra.mxu0 %v9201
        %10234 = vmatprep.subr.bf16.mxu0 0
        %10235 = vmatpush2.bf16.msra.mxu0 %v9200
        %10236 = vmatprep.subr.bf16.mxu0 0
        %10237 = vmatpush2.bf16.msra.mxu0 %v9199
        %10238 = vmatprep.subr.bf16.mxu0 0
        %10239 = vmatpush2.bf16.msra.mxu0 %v9198
        %10240 = vmatprep.subr.bf16.mxu0 0
        %10241 = vmatpush2.bf16.msra.mxu0 %v9197
        %10242 = vmatprep.subr.bf16.mxu0 0
        %10243 = vmatpush2.bf16.msra.mxu0 %v9196
        %10244 = vmatprep.mubr.bf16.mxu0 %v6647
        %10245 = vmatmul.mubr.bf16.gmra.mxu0 %v6646
        %v10246 = vpop.f32.mrf.mxu0
        %v10247 = vadd.f32 %v10207, %v10246
        %v10248 = vpop.f32.mrf.mxu0
        %v10249 = vpop.f32.mrf.mxu0
        %v10250 = vpop.f32.mrf.mxu0
        %10251 = vdwg.mxu0
        %10252 = vmatprep.subr.bf16.mxu0 0
        %10253 = vmatpush1.bf16.msra.mxu0 %v9211
        %10254 = vmatprep.subr.bf16.mxu0 0
        %10255 = vmatpush1.bf16.msra.mxu0 %v9210
        %10256 = vmatprep.subr.bf16.mxu0 0
        %10257 = vmatpush1.bf16.msra.mxu0 %v9209
        %10258 = vmatprep.subr.bf16.mxu0 0
        %10259 = vmatpush1.bf16.msra.mxu0 %v9208
        %10260 = vmatprep.subr.bf16.mxu0 0
        %10261 = vmatpush1.bf16.msra.mxu0 %v9207
        %10262 = vmatprep.subr.bf16.mxu0 0
        %10263 = vmatpush1.bf16.msra.mxu0 %v9206
        %10264 = vmatprep.subr.bf16.mxu0 0
        %10265 = vmatpush1.bf16.msra.mxu0 %v9205
        %10266 = vmatprep.subr.bf16.mxu0 0
        %10267 = vmatpush1.bf16.msra.mxu0 %v9204
        %10268 = vmatprep.subr.bf16.mxu0 0
        %10269 = vmatpush2.bf16.msra.mxu0 %v9219
        %10270 = vmatprep.subr.bf16.mxu0 0
        %10271 = vmatpush2.bf16.msra.mxu0 %v9218
        %10272 = vmatprep.subr.bf16.mxu0 0
        %10273 = vmatpush2.bf16.msra.mxu0 %v9217
        %10274 = vmatprep.subr.bf16.mxu0 0
        %10275 = vmatpush2.bf16.msra.mxu0 %v9216
        %10276 = vmatprep.subr.bf16.mxu0 0
        %10277 = vmatpush2.bf16.msra.mxu0 %v9215
        %10278 = vmatprep.subr.bf16.mxu0 0
        %10279 = vmatpush2.bf16.msra.mxu0 %v9214
        %10280 = vmatprep.subr.bf16.mxu0 0
        %10281 = vmatpush2.bf16.msra.mxu0 %v9213
        %10282 = vmatprep.subr.bf16.mxu0 0
        %10283 = vmatpush2.bf16.msra.mxu0 %v9212
        %10284 = vmatprep.mubr.bf16.mxu0 %v6649
        %10285 = vmatmul.mubr.bf16.gmra.mxu0 %v6648
        %v10286 = vpop.f32.mrf.mxu0
        %v10287 = vadd.f32 %v10247, %v10286
        %v10288 = vpop.f32.mrf.mxu0
        %v10289 = vpop.f32.mrf.mxu0
        %v10290 = vpop.f32.mrf.mxu0
        %10291 = vdwg.mxu0
        %10292 = vmatprep.subr.bf16.mxu0 0
        %10293 = vmatpush1.bf16.msra.mxu0 %v9227
        %10294 = vmatprep.subr.bf16.mxu0 0
        %10295 = vmatpush1.bf16.msra.mxu0 %v9226
        %10296 = vmatprep.subr.bf16.mxu0 0
        %10297 = vmatpush1.bf16.msra.mxu0 %v9225
        %10298 = vmatprep.subr.bf16.mxu0 0
        %10299 = vmatpush1.bf16.msra.mxu0 %v9224
        %10300 = vmatprep.subr.bf16.mxu0 0
        %10301 = vmatpush1.bf16.msra.mxu0 %v9223
        %10302 = vmatprep.subr.bf16.mxu0 0
        %10303 = vmatpush1.bf16.msra.mxu0 %v9222
        %10304 = vmatprep.subr.bf16.mxu0 0
        %10305 = vmatpush1.bf16.msra.mxu0 %v9221
        %10306 = vmatprep.subr.bf16.mxu0 0
        %10307 = vmatpush1.bf16.msra.mxu0 %v9220
        %10308 = vmatprep.subr.bf16.mxu0 0
        %10309 = vmatpush2.bf16.msra.mxu0 %v9235
        %10310 = vmatprep.subr.bf16.mxu0 0
        %10311 = vmatpush2.bf16.msra.mxu0 %v9234
        %10312 = vmatprep.subr.bf16.mxu0 0
        %10313 = vmatpush2.bf16.msra.mxu0 %v9233
        %10314 = vmatprep.subr.bf16.mxu0 0
        %10315 = vmatpush2.bf16.msra.mxu0 %v9232
        %10316 = vmatprep.subr.bf16.mxu0 0
        %10317 = vmatpush2.bf16.msra.mxu0 %v9231
        %10318 = vmatprep.subr.bf16.mxu0 0
        %10319 = vmatpush2.bf16.msra.mxu0 %v9230
        %10320 = vmatprep.subr.bf16.mxu0 0
        %10321 = vmatpush2.bf16.msra.mxu0 %v9229
        %10322 = vmatprep.subr.bf16.mxu0 0
        %10323 = vmatpush2.bf16.msra.mxu0 %v9228
        %10324 = vmatprep.mubr.bf16.mxu0 %v6651
        %10325 = vmatmul.mubr.bf16.gmra.mxu0 %v6650
        %v10326 = vpop.f32.mrf.mxu0
        %v10327 = vadd.f32 %v10287, %v10326
        %v10328 = vpop.f32.mrf.mxu0
        %v10329 = vpop.f32.mrf.mxu0
        %v10330 = vpop.f32.mrf.mxu0
        %10331 = vdwg.mxu0
        %10332 = vmatprep.subr.bf16.mxu0 0
        %10333 = vmatpush1.bf16.msra.mxu0 %v9243
        %10334 = vmatprep.subr.bf16.mxu0 0
        %10335 = vmatpush1.bf16.msra.mxu0 %v9242
        %10336 = vmatprep.subr.bf16.mxu0 0
        %10337 = vmatpush1.bf16.msra.mxu0 %v9241
        %10338 = vmatprep.subr.bf16.mxu0 0
        %10339 = vmatpush1.bf16.msra.mxu0 %v9240
        %10340 = vmatprep.subr.bf16.mxu0 0
        %10341 = vmatpush1.bf16.msra.mxu0 %v9239
        %10342 = vmatprep.subr.bf16.mxu0 0
        %10343 = vmatpush1.bf16.msra.mxu0 %v9238
        %10344 = vmatprep.subr.bf16.mxu0 0
        %10345 = vmatpush1.bf16.msra.mxu0 %v9237
        %10346 = vmatprep.subr.bf16.mxu0 0
        %10347 = vmatpush1.bf16.msra.mxu0 %v9236
        %10348 = vmatprep.subr.bf16.mxu0 0
        %10349 = vmatpush2.bf16.msra.mxu0 %v9251
        %10350 = vmatprep.subr.bf16.mxu0 0
        %10351 = vmatpush2.bf16.msra.mxu0 %v9250
        %10352 = vmatprep.subr.bf16.mxu0 0
        %10353 = vmatpush2.bf16.msra.mxu0 %v9249
        %10354 = vmatprep.subr.bf16.mxu0 0
        %10355 = vmatpush2.bf16.msra.mxu0 %v9248
        %10356 = vmatprep.subr.bf16.mxu0 0
        %10357 = vmatpush2.bf16.msra.mxu0 %v9247
        %10358 = vmatprep.subr.bf16.mxu0 0
        %10359 = vmatpush2.bf16.msra.mxu0 %v9246
        %10360 = vmatprep.subr.bf16.mxu0 0
        %10361 = vmatpush2.bf16.msra.mxu0 %v9245
        %10362 = vmatprep.subr.bf16.mxu0 0
        %10363 = vmatpush2.bf16.msra.mxu0 %v9244
        %10364 = vmatprep.mubr.bf16.mxu0 %v6653
        %10365 = vmatmul.mubr.bf16.gmra.mxu0 %v6652
        %v10366 = vpop.f32.mrf.mxu0
        %v10367 = vadd.f32 %v10327, %v10366
        %v10368 = vpop.f32.mrf.mxu0
        %v10369 = vpop.f32.mrf.mxu0
        %v10370 = vpop.f32.mrf.mxu0
        %10371 = vdwg.mxu0
        %10372 = vmatprep.subr.bf16.mxu0 0
        %10373 = vmatpush1.bf16.msra.mxu0 %v9259
        %10374 = vmatprep.subr.bf16.mxu0 0
        %10375 = vmatpush1.bf16.msra.mxu0 %v9258
        %10376 = vmatprep.subr.bf16.mxu0 0
        %10377 = vmatpush1.bf16.msra.mxu0 %v9257
        %10378 = vmatprep.subr.bf16.mxu0 0
        %10379 = vmatpush1.bf16.msra.mxu0 %v9256
        %10380 = vmatprep.subr.bf16.mxu0 0
        %10381 = vmatpush1.bf16.msra.mxu0 %v9255
        %10382 = vmatprep.subr.bf16.mxu0 0
        %10383 = vmatpush1.bf16.msra.mxu0 %v9254
        %10384 = vmatprep.subr.bf16.mxu0 0
        %10385 = vmatpush1.bf16.msra.mxu0 %v9253
        %10386 = vmatprep.subr.bf16.mxu0 0
        %10387 = vmatpush1.bf16.msra.mxu0 %v9252
        %10388 = vmatprep.subr.bf16.mxu0 0
        %10389 = vmatpush2.bf16.msra.mxu0 %v9267
        %10390 = vmatprep.subr.bf16.mxu0 0
        %10391 = vmatpush2.bf16.msra.mxu0 %v9266
        %10392 = vmatprep.subr.bf16.mxu0 0
        %10393 = vmatpush2.bf16.msra.mxu0 %v9265
        %10394 = vmatprep.subr.bf16.mxu0 0
        %10395 = vmatpush2.bf16.msra.mxu0 %v9264
        %10396 = vmatprep.subr.bf16.mxu0 0
        %10397 = vmatpush2.bf16.msra.mxu0 %v9263
        %10398 = vmatprep.subr.bf16.mxu0 0
        %10399 = vmatpush2.bf16.msra.mxu0 %v9262
        %10400 = vmatprep.subr.bf16.mxu0 0
        %10401 = vmatpush2.bf16.msra.mxu0 %v9261
        %10402 = vmatprep.subr.bf16.mxu0 0
        %10403 = vmatpush2.bf16.msra.mxu0 %v9260
        %10404 = vmatprep.mubr.bf16.mxu0 %v6655
        %10405 = vmatmul.mubr.bf16.gmra.mxu0 %v6654
        %v10406 = vpop.f32.mrf.mxu0
        %v10407 = vadd.f32 %v10367, %v10406
        %v10408 = vpop.f32.mrf.mxu0
        %v10409 = vpop.f32.mrf.mxu0
        %v10410 = vpop.f32.mrf.mxu0
        %10411 = vdwg.mxu0
        %10412 = vmatprep.subr.bf16.mxu0 0
        %10413 = vmatpush1.bf16.msra.mxu0 %v9275
        %10414 = vmatprep.subr.bf16.mxu0 0
        %10415 = vmatpush1.bf16.msra.mxu0 %v9274
        %10416 = vmatprep.subr.bf16.mxu0 0
        %10417 = vmatpush1.bf16.msra.mxu0 %v9273
        %10418 = vmatprep.subr.bf16.mxu0 0
        %10419 = vmatpush1.bf16.msra.mxu0 %v9272
        %10420 = vmatprep.subr.bf16.mxu0 0
        %10421 = vmatpush1.bf16.msra.mxu0 %v9271
        %10422 = vmatprep.subr.bf16.mxu0 0
        %10423 = vmatpush1.bf16.msra.mxu0 %v9270
        %10424 = vmatprep.subr.bf16.mxu0 0
        %10425 = vmatpush1.bf16.msra.mxu0 %v9269
        %10426 = vmatprep.subr.bf16.mxu0 0
        %10427 = vmatpush1.bf16.msra.mxu0 %v9268
        %10428 = vmatprep.subr.bf16.mxu0 0
        %10429 = vmatpush2.bf16.msra.mxu0 %v9283
        %10430 = vmatprep.subr.bf16.mxu0 0
        %10431 = vmatpush2.bf16.msra.mxu0 %v9282
        %10432 = vmatprep.subr.bf16.mxu0 0
        %10433 = vmatpush2.bf16.msra.mxu0 %v9281
        %10434 = vmatprep.subr.bf16.mxu0 0
        %10435 = vmatpush2.bf16.msra.mxu0 %v9280
        %10436 = vmatprep.subr.bf16.mxu0 0
        %10437 = vmatpush2.bf16.msra.mxu0 %v9279
        %10438 = vmatprep.subr.bf16.mxu0 0
        %10439 = vmatpush2.bf16.msra.mxu0 %v9278
        %10440 = vmatprep.subr.bf16.mxu0 0
        %10441 = vmatpush2.bf16.msra.mxu0 %v9277
        %10442 = vmatprep.subr.bf16.mxu0 0
        %10443 = vmatpush2.bf16.msra.mxu0 %v9276
        %10444 = vmatprep.mubr.bf16.mxu0 %v6657
        %10445 = vmatmul.mubr.bf16.gmra.mxu0 %v6656
        %v10446 = vpop.f32.mrf.mxu0
        %v10447 = vadd.f32 %v10407, %v10446
        %v10448 = vpop.f32.mrf.mxu0
        %v10449 = vpop.f32.mrf.mxu0
        %v10450 = vpop.f32.mrf.mxu0
        %10451 = vdwg.mxu0
        %10452 = vmatprep.subr.bf16.mxu0 0
        %10453 = vmatpush1.bf16.msra.mxu0 %v9291
        %10454 = vmatprep.subr.bf16.mxu0 0
        %10455 = vmatpush1.bf16.msra.mxu0 %v9290
        %10456 = vmatprep.subr.bf16.mxu0 0
        %10457 = vmatpush1.bf16.msra.mxu0 %v9289
        %10458 = vmatprep.subr.bf16.mxu0 0
        %10459 = vmatpush1.bf16.msra.mxu0 %v9288
        %10460 = vmatprep.subr.bf16.mxu0 0
        %10461 = vmatpush1.bf16.msra.mxu0 %v9287
        %10462 = vmatprep.subr.bf16.mxu0 0
        %10463 = vmatpush1.bf16.msra.mxu0 %v9286
        %10464 = vmatprep.subr.bf16.mxu0 0
        %10465 = vmatpush1.bf16.msra.mxu0 %v9285
        %10466 = vmatprep.subr.bf16.mxu0 0
        %10467 = vmatpush1.bf16.msra.mxu0 %v9284
        %10468 = vmatprep.subr.bf16.mxu0 0
        %10469 = vmatpush2.bf16.msra.mxu0 %v9299
        %10470 = vmatprep.subr.bf16.mxu0 0
        %10471 = vmatpush2.bf16.msra.mxu0 %v9298
        %10472 = vmatprep.subr.bf16.mxu0 0
        %10473 = vmatpush2.bf16.msra.mxu0 %v9297
        %10474 = vmatprep.subr.bf16.mxu0 0
        %10475 = vmatpush2.bf16.msra.mxu0 %v9296
        %10476 = vmatprep.subr.bf16.mxu0 0
        %10477 = vmatpush2.bf16.msra.mxu0 %v9295
        %10478 = vmatprep.subr.bf16.mxu0 0
        %10479 = vmatpush2.bf16.msra.mxu0 %v9294
        %10480 = vmatprep.subr.bf16.mxu0 0
        %10481 = vmatpush2.bf16.msra.mxu0 %v9293
        %10482 = vmatprep.subr.bf16.mxu0 0
        %10483 = vmatpush2.bf16.msra.mxu0 %v9292
        %10484 = vmatprep.mubr.bf16.mxu0 %v6659
        %10485 = vmatmul.mubr.bf16.gmra.mxu0 %v6658
        %v10486 = vpop.f32.mrf.mxu0
        %v10487 = vadd.f32 %v10447, %v10486
        %v10488 = vpop.f32.mrf.mxu0
        %v10489 = vpop.f32.mrf.mxu0
        %v10490 = vpop.f32.mrf.mxu0
        %10491 = vdwg.mxu0
        %10492 = vmatprep.subr.bf16.mxu0 0
        %10493 = vmatpush1.bf16.msra.mxu0 %v9307
        %10494 = vmatprep.subr.bf16.mxu0 0
        %10495 = vmatpush1.bf16.msra.mxu0 %v9306
        %10496 = vmatprep.subr.bf16.mxu0 0
        %10497 = vmatpush1.bf16.msra.mxu0 %v9305
        %10498 = vmatprep.subr.bf16.mxu0 0
        %10499 = vmatpush1.bf16.msra.mxu0 %v9304
        %10500 = vmatprep.subr.bf16.mxu0 0
        %10501 = vmatpush1.bf16.msra.mxu0 %v9303
        %10502 = vmatprep.subr.bf16.mxu0 0
        %10503 = vmatpush1.bf16.msra.mxu0 %v9302
        %10504 = vmatprep.subr.bf16.mxu0 0
        %10505 = vmatpush1.bf16.msra.mxu0 %v9301
        %10506 = vmatprep.subr.bf16.mxu0 0
        %10507 = vmatpush1.bf16.msra.mxu0 %v9300
        %10508 = vmatprep.subr.bf16.mxu0 0
        %10509 = vmatpush2.bf16.msra.mxu0 %v9315
        %10510 = vmatprep.subr.bf16.mxu0 0
        %10511 = vmatpush2.bf16.msra.mxu0 %v9314
        %10512 = vmatprep.subr.bf16.mxu0 0
        %10513 = vmatpush2.bf16.msra.mxu0 %v9313
        %10514 = vmatprep.subr.bf16.mxu0 0
        %10515 = vmatpush2.bf16.msra.mxu0 %v9312
        %10516 = vmatprep.subr.bf16.mxu0 0
        %10517 = vmatpush2.bf16.msra.mxu0 %v9311
        %10518 = vmatprep.subr.bf16.mxu0 0
        %10519 = vmatpush2.bf16.msra.mxu0 %v9310
        %10520 = vmatprep.subr.bf16.mxu0 0
        %10521 = vmatpush2.bf16.msra.mxu0 %v9309
        %10522 = vmatprep.subr.bf16.mxu0 0
        %10523 = vmatpush2.bf16.msra.mxu0 %v9308
        %10524 = vmatprep.mubr.bf16.mxu0 %v6661
        %10525 = vmatmul.mubr.bf16.gmra.mxu0 %v6660
        %v10526 = vpop.f32.mrf.mxu0
        %v10527 = vadd.f32 %v10487, %v10526
        %v10528 = vpop.f32.mrf.mxu0
        %v10529 = vpop.f32.mrf.mxu0
        %v10530 = vpop.f32.mrf.mxu0
        %10531 = vdwg.mxu0
        %10532 = vmatprep.subr.bf16.mxu0 0
        %10533 = vmatpush1.bf16.msra.mxu0 %v9323
        %10534 = vmatprep.subr.bf16.mxu0 0
        %10535 = vmatpush1.bf16.msra.mxu0 %v9322
        %10536 = vmatprep.subr.bf16.mxu0 0
        %10537 = vmatpush1.bf16.msra.mxu0 %v9321
        %10538 = vmatprep.subr.bf16.mxu0 0
        %10539 = vmatpush1.bf16.msra.mxu0 %v9320
        %10540 = vmatprep.subr.bf16.mxu0 0
        %10541 = vmatpush1.bf16.msra.mxu0 %v9319
        %10542 = vmatprep.subr.bf16.mxu0 0
        %10543 = vmatpush1.bf16.msra.mxu0 %v9318
        %10544 = vmatprep.subr.bf16.mxu0 0
        %10545 = vmatpush1.bf16.msra.mxu0 %v9317
        %10546 = vmatprep.subr.bf16.mxu0 0
        %10547 = vmatpush1.bf16.msra.mxu0 %v9316
        %10548 = vmatprep.subr.bf16.mxu0 0
        %10549 = vmatpush2.bf16.msra.mxu0 %v9331
        %10550 = vmatprep.subr.bf16.mxu0 0
        %10551 = vmatpush2.bf16.msra.mxu0 %v9330
        %10552 = vmatprep.subr.bf16.mxu0 0
        %10553 = vmatpush2.bf16.msra.mxu0 %v9329
        %10554 = vmatprep.subr.bf16.mxu0 0
        %10555 = vmatpush2.bf16.msra.mxu0 %v9328
        %10556 = vmatprep.subr.bf16.mxu0 0
        %10557 = vmatpush2.bf16.msra.mxu0 %v9327
        %10558 = vmatprep.subr.bf16.mxu0 0
        %10559 = vmatpush2.bf16.msra.mxu0 %v9326
        %10560 = vmatprep.subr.bf16.mxu0 0
        %10561 = vmatpush2.bf16.msra.mxu0 %v9325
        %10562 = vmatprep.subr.bf16.mxu0 0
        %10563 = vmatpush2.bf16.msra.mxu0 %v9324
        %10564 = vmatprep.mubr.bf16.mxu0 %v6663
        %10565 = vmatmul.mubr.bf16.gmra.mxu0 %v6662
        %v10566 = vpop.f32.mrf.mxu0
        %v10567 = vadd.f32 %v10527, %v10566
        %v10568 = vpop.f32.mrf.mxu0
        %v10569 = vpop.f32.mrf.mxu0
        %v10570 = vpop.f32.mrf.mxu0
        %10571 = vdwg.mxu0
        %10572 = vmatprep.subr.bf16.mxu0 0
        %10573 = vmatpush1.bf16.msra.mxu0 %v9339
        %10574 = vmatprep.subr.bf16.mxu0 0
        %10575 = vmatpush1.bf16.msra.mxu0 %v9338
        %10576 = vmatprep.subr.bf16.mxu0 0
        %10577 = vmatpush1.bf16.msra.mxu0 %v9337
        %10578 = vmatprep.subr.bf16.mxu0 0
        %10579 = vmatpush1.bf16.msra.mxu0 %v9336
        %10580 = vmatprep.subr.bf16.mxu0 0
        %10581 = vmatpush1.bf16.msra.mxu0 %v9335
        %10582 = vmatprep.subr.bf16.mxu0 0
        %10583 = vmatpush1.bf16.msra.mxu0 %v9334
        %10584 = vmatprep.subr.bf16.mxu0 0
        %10585 = vmatpush1.bf16.msra.mxu0 %v9333
        %10586 = vmatprep.subr.bf16.mxu0 0
        %10587 = vmatpush1.bf16.msra.mxu0 %v9332
        %10588 = vmatprep.subr.bf16.mxu0 0
        %10589 = vmatpush2.bf16.msra.mxu0 %v9347
        %10590 = vmatprep.subr.bf16.mxu0 0
        %10591 = vmatpush2.bf16.msra.mxu0 %v9346
        %10592 = vmatprep.subr.bf16.mxu0 0
        %10593 = vmatpush2.bf16.msra.mxu0 %v9345
        %10594 = vmatprep.subr.bf16.mxu0 0
        %10595 = vmatpush2.bf16.msra.mxu0 %v9344
        %10596 = vmatprep.subr.bf16.mxu0 0
        %10597 = vmatpush2.bf16.msra.mxu0 %v9343
        %10598 = vmatprep.subr.bf16.mxu0 0
        %10599 = vmatpush2.bf16.msra.mxu0 %v9342
        %10600 = vmatprep.subr.bf16.mxu0 0
        %10601 = vmatpush2.bf16.msra.mxu0 %v9341
        %10602 = vmatprep.subr.bf16.mxu0 0
        %10603 = vmatpush2.bf16.msra.mxu0 %v9340
        %10604 = vmatprep.mubr.bf16.mxu0 %v6665
        %10605 = vmatmul.mubr.bf16.gmra.mxu0 %v6664
        %v10606 = vpop.f32.mrf.mxu0
        %v10607 = vadd.f32 %v10567, %v10606
        %v10608 = vpop.f32.mrf.mxu0
        %v10609 = vpop.f32.mrf.mxu0
        %v10610 = vpop.f32.mrf.mxu0
        %10611 = vdwg.mxu0
        %10612 = vmatprep.subr.bf16.mxu0 0
        %10613 = vmatpush1.bf16.msra.mxu0 %v9355
        %10614 = vmatprep.subr.bf16.mxu0 0
        %10615 = vmatpush1.bf16.msra.mxu0 %v9354
        %10616 = vmatprep.subr.bf16.mxu0 0
        %10617 = vmatpush1.bf16.msra.mxu0 %v9353
        %10618 = vmatprep.subr.bf16.mxu0 0
        %10619 = vmatpush1.bf16.msra.mxu0 %v9352
        %10620 = vmatprep.subr.bf16.mxu0 0
        %10621 = vmatpush1.bf16.msra.mxu0 %v9351
        %10622 = vmatprep.subr.bf16.mxu0 0
        %10623 = vmatpush1.bf16.msra.mxu0 %v9350
        %10624 = vmatprep.subr.bf16.mxu0 0
        %10625 = vmatpush1.bf16.msra.mxu0 %v9349
        %10626 = vmatprep.subr.bf16.mxu0 0
        %10627 = vmatpush1.bf16.msra.mxu0 %v9348
        %10628 = vmatprep.subr.bf16.mxu0 0
        %10629 = vmatpush2.bf16.msra.mxu0 %v9363
        %10630 = vmatprep.subr.bf16.mxu0 0
        %10631 = vmatpush2.bf16.msra.mxu0 %v9362
        %10632 = vmatprep.subr.bf16.mxu0 0
        %10633 = vmatpush2.bf16.msra.mxu0 %v9361
        %10634 = vmatprep.subr.bf16.mxu0 0
        %10635 = vmatpush2.bf16.msra.mxu0 %v9360
        %10636 = vmatprep.subr.bf16.mxu0 0
        %10637 = vmatpush2.bf16.msra.mxu0 %v9359
        %10638 = vmatprep.subr.bf16.mxu0 0
        %10639 = vmatpush2.bf16.msra.mxu0 %v9358
        %10640 = vmatprep.subr.bf16.mxu0 0
        %10641 = vmatpush2.bf16.msra.mxu0 %v9357
        %10642 = vmatprep.subr.bf16.mxu0 0
        %10643 = vmatpush2.bf16.msra.mxu0 %v9356
        %10644 = vmatprep.mubr.bf16.mxu0 %v6667
        %10645 = vmatmul.mubr.bf16.gmra.mxu0 %v6666
        %v10646 = vpop.f32.mrf.mxu0
        %v10647 = vadd.f32 %v10607, %v10646
        %v10648 = vpop.f32.mrf.mxu0
        %v10649 = vpop.f32.mrf.mxu0
        %v10650 = vpop.f32.mrf.mxu0
        %10651 = vdwg.mxu0
        %10652 = vmatprep.subr.bf16.mxu0 0
        %10653 = vmatpush1.bf16.msra.mxu0 %v9371
        %10654 = vmatprep.subr.bf16.mxu0 0
        %10655 = vmatpush1.bf16.msra.mxu0 %v9370
        %10656 = vmatprep.subr.bf16.mxu0 0
        %10657 = vmatpush1.bf16.msra.mxu0 %v9369
        %10658 = vmatprep.subr.bf16.mxu0 0
        %10659 = vmatpush1.bf16.msra.mxu0 %v9368
        %10660 = vmatprep.subr.bf16.mxu0 0
        %10661 = vmatpush1.bf16.msra.mxu0 %v9367
        %10662 = vmatprep.subr.bf16.mxu0 0
        %10663 = vmatpush1.bf16.msra.mxu0 %v9366
        %10664 = vmatprep.subr.bf16.mxu0 0
        %10665 = vmatpush1.bf16.msra.mxu0 %v9365
        %10666 = vmatprep.subr.bf16.mxu0 0
        %10667 = vmatpush1.bf16.msra.mxu0 %v9364
        %10668 = vmatprep.subr.bf16.mxu0 0
        %10669 = vmatpush2.bf16.msra.mxu0 %v9379
        %10670 = vmatprep.subr.bf16.mxu0 0
        %10671 = vmatpush2.bf16.msra.mxu0 %v9378
        %10672 = vmatprep.subr.bf16.mxu0 0
        %10673 = vmatpush2.bf16.msra.mxu0 %v9377
        %10674 = vmatprep.subr.bf16.mxu0 0
        %10675 = vmatpush2.bf16.msra.mxu0 %v9376
        %10676 = vmatprep.subr.bf16.mxu0 0
        %10677 = vmatpush2.bf16.msra.mxu0 %v9375
        %10678 = vmatprep.subr.bf16.mxu0 0
        %10679 = vmatpush2.bf16.msra.mxu0 %v9374
        %10680 = vmatprep.subr.bf16.mxu0 0
        %10681 = vmatpush2.bf16.msra.mxu0 %v9373
        %10682 = vmatprep.subr.bf16.mxu0 0
        %10683 = vmatpush2.bf16.msra.mxu0 %v9372
        %10684 = vmatprep.mubr.bf16.mxu0 %v6669
        %10685 = vmatmul.mubr.bf16.gmra.mxu0 %v6668
        %v10686 = vpop.f32.mrf.mxu0
        %v10687 = vadd.f32 %v10647, %v10686
        %v10688 = vpop.f32.mrf.mxu0
        %v10689 = vpop.f32.mrf.mxu0
        %v10690 = vpop.f32.mrf.mxu0
        %10691 = vdwg.mxu0
        %10692 = vmatprep.subr.bf16.mxu0 0
        %10693 = vmatpush1.bf16.msra.mxu0 %v9387
        %10694 = vmatprep.subr.bf16.mxu0 0
        %10695 = vmatpush1.bf16.msra.mxu0 %v9386
        %10696 = vmatprep.subr.bf16.mxu0 0
        %10697 = vmatpush1.bf16.msra.mxu0 %v9385
        %10698 = vmatprep.subr.bf16.mxu0 0
        %10699 = vmatpush1.bf16.msra.mxu0 %v9384
        %10700 = vmatprep.subr.bf16.mxu0 0
        %10701 = vmatpush1.bf16.msra.mxu0 %v9383
        %10702 = vmatprep.subr.bf16.mxu0 0
        %10703 = vmatpush1.bf16.msra.mxu0 %v9382
        %10704 = vmatprep.subr.bf16.mxu0 0
        %10705 = vmatpush1.bf16.msra.mxu0 %v9381
        %10706 = vmatprep.subr.bf16.mxu0 0
        %10707 = vmatpush1.bf16.msra.mxu0 %v9380
        %10708 = vmatprep.subr.bf16.mxu0 0
        %10709 = vmatpush2.bf16.msra.mxu0 %v9395
        %10710 = vmatprep.subr.bf16.mxu0 0
        %10711 = vmatpush2.bf16.msra.mxu0 %v9394
        %10712 = vmatprep.subr.bf16.mxu0 0
        %10713 = vmatpush2.bf16.msra.mxu0 %v9393
        %10714 = vmatprep.subr.bf16.mxu0 0
        %10715 = vmatpush2.bf16.msra.mxu0 %v9392
        %10716 = vmatprep.subr.bf16.mxu0 0
        %10717 = vmatpush2.bf16.msra.mxu0 %v9391
        %10718 = vmatprep.subr.bf16.mxu0 0
        %10719 = vmatpush2.bf16.msra.mxu0 %v9390
        %10720 = vmatprep.subr.bf16.mxu0 0
        %10721 = vmatpush2.bf16.msra.mxu0 %v9389
        %10722 = vmatprep.subr.bf16.mxu0 0
        %10723 = vmatpush2.bf16.msra.mxu0 %v9388
        %10724 = vmatprep.mubr.bf16.mxu0 %v6671
        %10725 = vmatmul.mubr.bf16.gmra.mxu0 %v6670
        %v10726 = vpop.f32.mrf.mxu0
        %v10727 = vadd.f32 %v10687, %v10726
        %v10728 = vpop.f32.mrf.mxu0
        %v10729 = vpop.f32.mrf.mxu0
        %v10730 = vpop.f32.mrf.mxu0
        %10731 = vdwg.mxu0
        %10732 = vmatprep.subr.bf16.mxu0 0
        %10733 = vmatpush1.bf16.msra.mxu0 %v9403
        %10734 = vmatprep.subr.bf16.mxu0 0
        %10735 = vmatpush1.bf16.msra.mxu0 %v9402
        %10736 = vmatprep.subr.bf16.mxu0 0
        %10737 = vmatpush1.bf16.msra.mxu0 %v9401
        %10738 = vmatprep.subr.bf16.mxu0 0
        %10739 = vmatpush1.bf16.msra.mxu0 %v9400
        %10740 = vmatprep.subr.bf16.mxu0 0
        %10741 = vmatpush1.bf16.msra.mxu0 %v9399
        %10742 = vmatprep.subr.bf16.mxu0 0
        %10743 = vmatpush1.bf16.msra.mxu0 %v9398
        %10744 = vmatprep.subr.bf16.mxu0 0
        %10745 = vmatpush1.bf16.msra.mxu0 %v9397
        %10746 = vmatprep.subr.bf16.mxu0 0
        %10747 = vmatpush1.bf16.msra.mxu0 %v9396
        %10748 = vmatprep.subr.bf16.mxu0 0
        %10749 = vmatpush2.bf16.msra.mxu0 %v9411
        %10750 = vmatprep.subr.bf16.mxu0 0
        %10751 = vmatpush2.bf16.msra.mxu0 %v9410
        %10752 = vmatprep.subr.bf16.mxu0 0
        %10753 = vmatpush2.bf16.msra.mxu0 %v9409
        %10754 = vmatprep.subr.bf16.mxu0 0
        %10755 = vmatpush2.bf16.msra.mxu0 %v9408
        %10756 = vmatprep.subr.bf16.mxu0 0
        %10757 = vmatpush2.bf16.msra.mxu0 %v9407
        %10758 = vmatprep.subr.bf16.mxu0 0
        %10759 = vmatpush2.bf16.msra.mxu0 %v9406
        %10760 = vmatprep.subr.bf16.mxu0 0
        %10761 = vmatpush2.bf16.msra.mxu0 %v9405
        %10762 = vmatprep.subr.bf16.mxu0 0
        %10763 = vmatpush2.bf16.msra.mxu0 %v9404
        %10764 = vmatprep.mubr.bf16.mxu0 %v6673
        %10765 = vmatmul.mubr.bf16.gmra.mxu0 %v6672
        %v10766 = vpop.f32.mrf.mxu0
        %v10767 = vadd.f32 %v10727, %v10766
        %v10768 = vpop.f32.mrf.mxu0
        %v10769 = vpop.f32.mrf.mxu0
        %v10770 = vpop.f32.mrf.mxu0
        %10771 = vdwg.mxu0
        %10772 = vmatprep.subr.bf16.mxu0 0
        %10773 = vmatpush1.bf16.msra.mxu0 %v9419
        %10774 = vmatprep.subr.bf16.mxu0 0
        %10775 = vmatpush1.bf16.msra.mxu0 %v9418
        %10776 = vmatprep.subr.bf16.mxu0 0
        %10777 = vmatpush1.bf16.msra.mxu0 %v9417
        %10778 = vmatprep.subr.bf16.mxu0 0
        %10779 = vmatpush1.bf16.msra.mxu0 %v9416
        %10780 = vmatprep.subr.bf16.mxu0 0
        %10781 = vmatpush1.bf16.msra.mxu0 %v9415
        %10782 = vmatprep.subr.bf16.mxu0 0
        %10783 = vmatpush1.bf16.msra.mxu0 %v9414
        %10784 = vmatprep.subr.bf16.mxu0 0
        %10785 = vmatpush1.bf16.msra.mxu0 %v9413
        %10786 = vmatprep.subr.bf16.mxu0 0
        %10787 = vmatpush1.bf16.msra.mxu0 %v9412
        %10788 = vmatprep.subr.bf16.mxu0 0
        %10789 = vmatpush2.bf16.msra.mxu0 0
        %10790 = vmatprep.subr.bf16.mxu0 0
        %10791 = vmatpush2.bf16.msra.mxu0 0
        %10792 = vmatprep.subr.bf16.mxu0 0
        %10793 = vmatpush2.bf16.msra.mxu0 0
        %10794 = vmatprep.subr.bf16.mxu0 0
        %10795 = vmatpush2.bf16.msra.mxu0 0
        %10796 = vmatprep.subr.bf16.mxu0 0
        %10797 = vmatpush2.bf16.msra.mxu0 0
        %10798 = vmatprep.subr.bf16.mxu0 0
        %10799 = vmatpush2.bf16.msra.mxu0 0
        %10800 = vmatprep.subr.bf16.mxu0 0
        %10801 = vmatpush2.bf16.msra.mxu0 0
        %10802 = vmatprep.subr.bf16.mxu0 0
        %10803 = vmatpush2.bf16.msra.mxu0 0
        %10804 = vmatprep.mubr.bf16.mxu0 0
        %10805 = vmatmul.mubr.bf16.gmra.mxu0 %v6674
        %v10806 = vpop.f32.mrf.mxu0
        %v10807 = vadd.f32 %v10767, %v10806
        %v10808 = vpop.f32.mrf.mxu0
        %v10809 = vpop.f32.mrf.mxu0
        %v10810 = vpop.f32.mrf.mxu0
        %10811 = vdwg.mxu0
        %v10812 = vmax.f32 %v10807, 0.0
        %v10813 = vld [vmem:[%s8] sm:$0xff]
        %v10814 = vld [vmem:[%s8 + $0x8] sm:$0xff]
        %v10815 = vld [vmem:[%s8 + $0x10] sm:$0xff]
        %v10816 = vld [vmem:[%s8 + $0x18] sm:$0xff]
        %v10817 = vld [vmem:[%s8 + $0x20] sm:$0xff]
        %v10818 = vld [vmem:[%s8 + $0x28] sm:$0xff]
        %v10819 = vld [vmem:[%s8 + $0x30] sm:$0xff]
        %v10820 = vld [vmem:[%s8 + $0x38] sm:$0xff]
        %v10821 = vld [vmem:[%s8 + $0x40] sm:$0xff]
        %v10822 = vld [vmem:[%s8 + $0x48] sm:$0xff]
        %v10823 = vld [vmem:[%s8 + $0x50] sm:$0xff]
        %v10824 = vld [vmem:[%s8 + $0x58] sm:$0xff]
        %v10825 = vld [vmem:[%s8 + $0x60] sm:$0xff]
        %v10826 = vld [vmem:[%s8 + $0x68] sm:$0xff]
        %v10827 = vld [vmem:[%s8 + $0x70] sm:$0xff]
        %v10828 = vld [vmem:[%s8 + $0x78] sm:$0xff]
        %v10829 = vld [vmem:[#allocation15] sm:$0x1]
        %10830 = vmatprep.subr.mxu0 0.0
        %10831 = vmatpush1.msra.mxu0 %v10828
        %10832 = vmatprep.subr.mxu0 0.0
        %10833 = vmatpush1.msra.mxu0 %v10827
        %10834 = vmatprep.subr.mxu0 0.0
        %10835 = vmatpush1.msra.mxu0 %v10826
        %10836 = vmatprep.subr.mxu0 0.0
        %10837 = vmatpush1.msra.mxu0 %v10825
        %10838 = vmatprep.subr.mxu0 0.0
        %10839 = vmatpush1.msra.mxu0 %v10824
        %10840 = vmatprep.subr.mxu0 0.0
        %10841 = vmatpush1.msra.mxu0 %v10823
        %10842 = vmatprep.subr.mxu0 0.0
        %10843 = vmatpush1.msra.mxu0 %v10822
        %10844 = vmatprep.subr.mxu0 0.0
        %10845 = vmatpush1.msra.mxu0 %v10821
        %10846 = vmatprep.subr.mxu0 0.0
        %10847 = vmatpush1.msra.mxu0 %v10820
        %10848 = vmatprep.subr.mxu0 0.0
        %10849 = vmatpush1.msra.mxu0 %v10819
        %10850 = vmatprep.subr.mxu0 0.0
        %10851 = vmatpush1.msra.mxu0 %v10818
        %10852 = vmatprep.subr.mxu0 0.0
        %10853 = vmatpush1.msra.mxu0 %v10817
        %10854 = vmatprep.subr.mxu0 0.0
        %10855 = vmatpush1.msra.mxu0 %v10816
        %10856 = vmatprep.subr.mxu0 0.0
        %10857 = vmatpush1.msra.mxu0 %v10815
        %10858 = vmatprep.subr.mxu0 0.0
        %10859 = vmatpush1.msra.mxu0 %v10814
        %10860 = vmatprep.subr.mxu0 0.0
        %10861 = vmatpush1.msra.mxu0 %v10813
        %10862 = vmatprep.subr.mxu0 0.0
        %10863 = vmatpush2.msra.mxu0 0.0
        %10864 = vmatprep.subr.mxu0 0.0
        %10865 = vmatpush2.msra.mxu0 0.0
        %10866 = vmatprep.subr.mxu0 0.0
        %10867 = vmatpush2.msra.mxu0 0.0
        %10868 = vmatprep.subr.mxu0 0.0
        %10869 = vmatpush2.msra.mxu0 0.0
        %10870 = vmatprep.subr.mxu0 0.0
        %10871 = vmatpush2.msra.mxu0 0.0
        %10872 = vmatprep.subr.mxu0 0.0
        %10873 = vmatpush2.msra.mxu0 0.0
        %10874 = vmatprep.subr.mxu0 0.0
        %10875 = vmatpush2.msra.mxu0 0.0
        %10876 = vmatprep.subr.mxu0 0.0
        %10877 = vmatpush2.msra.mxu0 0.0
        %10878 = vmatprep.subr.mxu0 0.0
        %10879 = vmatpush2.msra.mxu0 0.0
        %10880 = vmatprep.subr.mxu0 0.0
        %10881 = vmatpush2.msra.mxu0 0.0
        %10882 = vmatprep.subr.mxu0 0.0
        %10883 = vmatpush2.msra.mxu0 0.0
        %10884 = vmatprep.subr.mxu0 0.0
        %10885 = vmatpush2.msra.mxu0 0.0
        %10886 = vmatprep.subr.mxu0 0.0
        %10887 = vmatpush2.msra.mxu0 0.0
        %10888 = vmatprep.subr.mxu0 0.0
        %10889 = vmatpush2.msra.mxu0 0.0
        %10890 = vmatprep.subr.mxu0 0.0
        %10891 = vmatpush2.msra.mxu0 0.0
        %10892 = vmatprep.subr.mxu0 0.0
        %10893 = vmatpush2.msra.mxu0 0.0
        %10894 = vmatprep.mubr.f32.mxu0 0.0
        %10895 = vmatmul.mubr.f32.gmra.mxu0 %v10812
        %v10896 = vpop.f32.mrf.mxu0
        %v10897 = vadd.f32 %v10829, %v10896
        %v10898 = vpop.f32.mrf.mxu0
        %10899 = vdwg.mxu0
        %vm10900 = vcmask 73728
        %10901 = vst.msk [vmem:[%s420] sm:$0x1] %vm10900, %v10897
        %s10902 = sand.u32 %s250, 1
        %s10903 = scalar_lea.sflag [#allocation9], %s10902
        %s10904 = sand.u32 %s250, 1
        %s10905 = scalar_lea.vmem [#allocation16], %s10904
        // Predicated region
        $region81: #{cnn_forward_pallas.1} parent=59 // pred_check
          %p10906 = pneg %p260
        $region82: #{cnn_forward_pallas.1} parent=59 // pred_check_branch
          %10908 = sbr.rel (%p10906) target = $region84
        $region83: #{cnn_forward_pallas.1} parent=59 // pred_region
          %s10910 = ssub.s32 16, 16
          %10911 = vsyncadd %s10903, %s10910
          %s10912 = smul.addr %s27, 16
          %s10913 = scalar_lea.hbm %s10, %s10912
          %s10915 = sshll.u32 %s10905, 4
          %s10916 = int_to_ptr.vmem [resolvable:$true] %s10915
          %10918 = dma.vmem_to_hbm [thread:$0]  %s10916, 16, %s10913, %s10903
        $region84: #{cnn_forward_pallas.1} parent=59 // pred_fallthru
          _
      $region60: #{cnn_forward_pallas.1} parent=5 // pred_fallthru
        _
      %p10919 = scmp.le.s32.totalorder 2, %s22
      // Predicated region
      $region85: #{cnn_forward_pallas.1} parent=5 // pred_check
        %p10920 = pneg %p10919
      $region86: #{cnn_forward_pallas.1} parent=5 // pred_check_branch
        %10922 = sbr.rel (%p10920) target = $region88
      $region87: #{cnn_forward_pallas.1} parent=5 // pred_region
        %s10923 = ssub.s32 %s22, 2
        // Predicated region
        $region89: #{cnn_forward_pallas.1} parent=87 // pred_check
          %p10924 = pneg %p266
        $region90: #{cnn_forward_pallas.1} parent=87 // pred_check_branch
          %10926 = sbr.rel (%p10924) target = $region92
        $region91: #{cnn_forward_pallas.1} parent=87 // pred_region
          %s10927 = sand.u32 %s251, 1
          %s10928 = scalar_lea.sflag [#allocation9], %s10927
          %s10929 = sand.u32 %s251, 1
          %s10930 = scalar_lea.vmem [#allocation16], %s10929
          %10931 = dma.done %s10928, 16
        $region92: #{cnn_forward_pallas.1} parent=87 // pred_fallthru
          _
      $region88: #{cnn_forward_pallas.1} parent=5 // pred_fallthru
        _
    $region6: #{cnn_forward_pallas.1} parent=1 // loop_footer
      %s26 = sadd.s32 1, %s22
    $region7: #{cnn_forward_pallas.1} parent=1 // loop_footer_branch
      %21 = sbr.rel target = $region3
    $region8: #{cnn_forward_pallas.1} parent=1 // loop_exit
      _
    %10932 = vsyncpa [#allocation8], 1
    %s10933 = scalar_lea.sflag [#allocation8], 1
    %10934 = vsyncpa %s10933, 1
    %10935 = vsyncpa [#allocation11], 1
    %10936 = vsyncpa [#allocation14], 1
    %10937 = vsyncpa [#allocation9], 1
    %s10938 = scalar_lea.sflag [#allocation9], 1
    %10939 = vsyncpa %s10938, 1

</llo_original>
